<compile_context>
chip_gen: v7x
topology: tpu7x:2x2x1
jax: 0.10.0
libtpu: 0.0.40
codegen_flags: <defaults>
</compile_context>

<pallas_src>
import time
import functools

import jax
import jax.numpy as jnp
from jax.experimental import pallas as pl
from jax.experimental.pallas import tpu as pltpu

FNUM = 4                 # len(cfg.fuc_k); external config, fixed deterministically.
RRGN_IN_CH = 2           # RRGN(2) in the reference module.
HEAD_CH = (2, 2, 4)      # stand-in backbone heads: up1[0] (p0), up1[1] (p1->RRGN), out64.


# --------------------------------------------------------------------------
# Deterministic parameter init (PyTorch Conv2d default: U(-1/sqrt(fan_in), .))
# --------------------------------------------------------------------------
def init_conv(key, cout, cin, kh, kw):
    k1, k2 = jax.random.split(key)
    fan_in = cin * kh * kw
    bound = 1.0 / (fan_in ** 0.5)
    w = jax.random.uniform(k1, (cout, cin, kh, kw), jnp.float32, -bound, bound)
    b = jax.random.uniform(k2, (cout,), jnp.float32, -bound, bound)
    return w, b


def init_backbone(key, cin):
    # TODO(synk): deterministic 1x1-conv stand-in for the external VNet backbone
    # (and its checkpoint); swap in the real VNet if its definition becomes available.
    keys = jax.random.split(key, len(HEAD_CH))
    return tuple(init_conv(k, co, cin, 1, 1) for k, co in zip(keys, HEAD_CH))


def init_rrgn(key, in_channels=RRGN_IN_CH):
    keys = jax.random.split(key, 6)
    c2 = in_channels + 1
    separe0 = (
        init_conv(keys[0], in_channels, in_channels, 5, 1),  # (5,1), pad=(1,1)
        init_conv(keys[1], in_channels, in_channels, 1, 5),  # (1,5), pad=(1,1)
        init_conv(keys[2], 1, in_channels, 1, 1),            # 1x1
    )
    separe1 = (
        init_conv(keys[3], c2, c2, 5, 1),
        init_conv(keys[4], c2, c2, 1, 5),
        init_conv(keys[5], 1, c2, 1, 1),
    )
    return separe0, separe1


# --------------------------------------------------------------------------
# One-time weight packing: everything into one flat SMEM scalar vector
# --------------------------------------------------------------------------
def _param_layout(cin, rrgn_cin):
    ctot = sum(HEAD_CH)
    c2 = rrgn_cin + 1
    sizes = (
        ctot * cin, ctot,                       # head 1x1 weights, biases
        rrgn_cin * rrgn_cin * 5, rrgn_cin,      # separe0 (5,1) w, b
        rrgn_cin * rrgn_cin * 5, rrgn_cin,      # separe0 (1,5) w, b
        rrgn_cin, 1,                            # separe0 1x1   w, b
        c2 * c2 * 5, c2,                        # separe1 (5,1) w, b
        c2 * c2 * 5, c2,                        # separe1 (1,5) w, b
        c2, 1,                                  # separe1 1x1   w, b
    )
    offs, o = [], 0
    for s in sizes:
        offs.append(o)
        o += s
    return tuple(offs), o


def pack_params(bb_params, rrgn_params):
    head_w = jnp.concatenate([w.reshape(w.shape[0], -1) for (w, _) in bb_params], 0)
    head_b = jnp.concatenate([b for (_, b) in bb_params])
    parts = [head_w.reshape(-1), head_b]
    separe0, separe1 = rrgn_params
    for (w0, b0), (w1, b1), (w2, b2) in (separe0, separe1):
        parts += [w0.reshape(-1), b0, w1.reshape(-1), b1, w2.reshape(-1), b2]
    return jnp.concatenate(parts).astype(jnp.float32)


# --------------------------------------------------------------------------
# Fused TextNet kernel: heads (1x1) + RRGN chain, one grid step per batch elem
# --------------------------------------------------------------------------
def _textnet_kernel(x_ref, p_ref, o_ref, xc_ref, t1_ref,
                    *, h, w, cin, fnum, rrgn_cin, head_ch, offs):
    # x_ref : (1, cin, h, w)           input block (one batch element)
    # p_ref : (P,) SMEM                all weights/biases, flat scalars
    # o_ref : (1, c0+c2h+fnum, h, w)   merged output [p0 | out64 | predict]
    # xc_ref: (rrgn_cin+1, h+2, w+2)   zero-padded [p1, f_prev] concat (VMEM scratch)
    # t1_ref: (rrgn_cin+1, h, w+4)     zero-padded (5,1)-conv output   (VMEM scratch)
    c0, c1, c2h = head_ch
    cr = rrgn_cin                       # == c1
    cc = cr + 1
    (HW_, HB_, W50, B50, W150, B150, W110, B110,
     W51, B51, W151, B151, W111, B111) = offs

    # ---- FPN heads (stand-in): 1x1 convs as scalar-broadcast FMAs (VPU) ----
    # Each x channel is loaded once and reused by all 8 head output channels.
    xch = [x_ref[0, ci] for ci in range(cin)]

    def head(co):
        acc = jnp.zeros((h, w), jnp.float32) + p_ref[HB_ + co]
        for ci in range(cin):
            acc = acc + p_ref[HW_ + co * cin + ci] * xch[ci]
        return acc

    for co in range(c0):                       # p0 -> output channels [0, c0)
        o_ref[0, co] = head(co)
    for k in range(c2h):                       # out64 -> [c0, c0+c2h)
        o_ref[0, c0 + k] = head(c0 + c1 + k)
    p1 = [head(c0 + c) for c in range(c1)]     # p1 stays in registers; never hits HBM

    # ---- RRGN on p1: FNUM separable-conv chains, fully in VMEM --------------
    xc_ref[...] = jnp.zeros_like(xc_ref)
    t1_ref[...] = jnp.zeros_like(t1_ref)
    for ci in range(cr):
        xc_ref[ci, 1:h + 1, 1:w + 1] = p1[ci]  # written once, reused by all iterations

    def conv51(nc, woff, boff):
        # Conv2d (5,1), stride 1, padding (1,1): (nc,h,w) -> (nc,h-2,w+2),
        # written into t1's interior.  Taps loaded once per (ci, i) and reused
        # across every output channel (review rec: hoist loads out of co loop).
        taps = [[xc_ref[ci, i:i + h - 2, 0:w + 2] for i in range(5)]
                for ci in range(nc)]
        for co in range(nc):
            acc = jnp.zeros((h - 2, w + 2), jnp.float32) + p_ref[boff + co]
            for ci in range(nc):
                for i in range(5):
                    acc = acc + p_ref[woff + (co * nc + ci) * 5 + i] * taps[ci][i]
            t1_ref[co, 1:h - 1, 1:w + 3] = acc

    def conv15(nc, woff, boff):
        # Conv2d (1,5), stride 1, padding (1,1): (nc,h-2,w+2) -> (nc,h,w).
        taps = [[t1_ref[ci, 0:h, j:j + w] for j in range(5)]
                for ci in range(nc)]
        outs = []
        for co in range(nc):
            acc = jnp.zeros((h, w), jnp.float32) + p_ref[boff + co]
            for ci in range(nc):
                for j in range(5):
                    acc = acc + p_ref[woff + (co * nc + ci) * 5 + j] * taps[ci][j]
            outs.append(acc)
        return outs

    def conv11(nc, feats, woff, boff):
        # 1x1 conv to one channel: tiny (nc <= 3) contraction, kept on the VPU.
        acc = jnp.zeros((h, w), jnp.float32) + p_ref[boff]
        for ci in range(nc):
            acc = acc + p_ref[woff + ci] * feats[ci]
        return acc

    for it in range(fnum):
        if it == 0:
            conv51(cr, W50, B50)
            f = conv11(cr, conv15(cr, W150, B150), W110, B110)
        else:
            conv51(cc, W51, B51)
            f = conv11(cc, conv15(cc, W151, B151), W111, B111)
        o_ref[0, c0 + c2h + it] = f            # predict channels [c0+c2h, c0+c2h+fnum)
        if it + 1 < fnum:
            # Only the extra concat channel changes; p1 channels stay in place.
            xc_ref[cr, 1:h + 1, 1:w + 1] = f


@jax.jit
def textnet_apply(x, packed_params):
    n, cin, h, w = x.shape
    c0, c1, c2h = HEAD_CH
    cout = c0 + c2h + FNUM                     # merged output [p0 | out64 | predict]
    offs, _ = _param_layout(cin, RRGN_IN_CH)
    kern = functools.partial(_textnet_kernel, h=h, w=w, cin=cin, fnum=FNUM,
                             rrgn_cin=RRGN_IN_CH, head_ch=HEAD_CH, offs=offs)
    out = pl.pallas_call(
        kern,
        out_shape=jax.ShapeDtypeStruct((n, cout, h, w), jnp.float32),
        grid=(n,),
        in_specs=[
            pl.BlockSpec((1, cin, h, w), lambda i: (i, 0, 0, 0)),
            pl.BlockSpec(memory_space=pltpu.MemorySpace.SMEM),
        ],
        out_specs=pl.BlockSpec((1, cout, h, w), lambda i: (i, 0, 0, 0)),
        scratch_shapes=[
            pltpu.VMEM((RRGN_IN_CH + 1, h + 2, w + 2), jnp.float32),
            pltpu.VMEM((RRGN_IN_CH + 1, h, w + 4), jnp.float32),
        ],
        compiler_params=pltpu.CompilerParams(dimension_semantics=("parallel",)),
    )(x, packed_params)
    predict_out0 = out[:, :c0]
    out64 = out[:, c0:c0 + c2h]
    predict_out = out[:, c0 + c2h:]
    return predict_out0, predict_out, x, out64


# --------------------------------------------------------------------------
# TextNet forward (single fused dispatch; timings measured around the block)
# --------------------------------------------------------------------------
def textnet_forward(x, packed_params):
    # The original module timed FPN and RRGN separately; here both stages live
    # in ONE pallas_call, so b_time covers the fused kernel and iter_time only
    # the (already-available) RRGN output hand-off (~0).
    end = time.time()
    predict_out0, predict_out, x_tw, out64 = textnet_apply(x, packed_params)
    jax.block_until_ready(predict_out0)
    b_time = time.time() - end

    end = time.time()
    jax.block_until_ready(predict_out)
    iter_time = time.time() - end
    return predict_out0, predict_out, x_tw, out64, b_time, iter_time


# --------------------------------------------------------------------------
# Pure-JAX reference (same math, used to validate the fused kernel)
# --------------------------------------------------------------------------
def _conv2d_ref(z, w, b, ph, pw):
    n, ci, H, W = z.shape
    co, _, kh, kw = w.shape
    zp = jnp.pad(z, ((0, 0), (0, 0), (ph, ph), (pw, pw)))
    Ho, Wo = H + 2 * ph - kh + 1, W + 2 * pw - kw + 1
    chans = []
    for o in range(co):
        acc = jnp.zeros((n, Ho, Wo), jnp.float32) + b[o]
        for i in range(ci):
            for a in range(kh):
                for c in range(kw):
                    acc = acc + w[o, i, a, c] * zp[:, i, a:a + Ho, c:c + Wo]
        chans.append(acc)
    return jnp.stack(chans, axis=1)


def _ref_forward(x, bb_params, rrgn_params):
    heads = [_conv2d_ref(x, w_, b_, 0, 0) for (w_, b_) in bb_params]
    p0, p1, out64 = heads
    separe0, separe1 = rrgn_params

    def separe(z, params):
        (w0, b0), (w1, b1), (w2, b2) = params
        z = _conv2d_ref(z, w0, b0, 1, 1)
        z = _conv2d_ref(z, w1, b1, 1, 1)
        z = _conv2d_ref(z, w2, b2, 0, 0)
        return z

    f_map = []
    for i in range(FNUM):
        if i == 0:
            f = separe(p1, separe0)
        else:
            f = separe(jnp.concatenate([p1, f_map[i - 1]], axis=1), separe1)
        f_map.append(f)
    return p0, jnp.concatenate(f_map, axis=1), x, out64


if __name__ == "__main__":
    key = jax.random.PRNGKey(0)
    k_x, k_bb, k_rrgn = jax.random.split(key, 3)

    N, C, H, W = 2, 4, 16, 16
    x = jax.random.normal(k_x, (N, C, H, W), jnp.float32)

    bb_params = init_backbone(k_bb, C)
    rrgn_params = init_rrgn(k_rrgn, in_channels=RRGN_IN_CH)
    packed = pack_params(bb_params, rrgn_params)          # packed once, outside jit

    # Warm-up (compile) pass, then the measured pass.
    textnet_forward(x, packed)
    p0, p_out, x_tw, out64, b_time, iter_time = textnet_forward(x, packed)
    jax.block_until_ready((p0, p_out, x_tw, out64))

    assert p0.shape == (N, HEAD_CH[0], H, W)
    assert p_out.shape == (N, FNUM, H, W)
    assert x_tw.shape == (N, C, H, W)
    assert out64.shape == (N, HEAD_CH[2], H, W)
    assert bool(jnp.all(jnp.isfinite(p0)))
    assert bool(jnp.all(jnp.isfinite(p_out)))

    # Validate against the pure-JAX reference of the same forward.
    p0_r, pred_r, xtw_r, out64_r = _ref_forward(x, bb_params, rrgn_params)
    assert bool(jnp.allclose(p0, p0_r, atol=1e-4, rtol=1e-4))
    assert bool(jnp.allclose(p_out, pred_r, atol=1e-4, rtol=1e-4))
    assert bool(jnp.allclose(out64, out64_r, atol=1e-4, rtol=1e-4))

    print("KERNEL_OK")
</pallas_src>

<mosaic_0001>
module attributes {stable_mosaic.version = 11 : i64} {
  func.func @_textnet_kernel(%arg0: i32, %arg1: memref<1x4x16x16xf32, #tpu.memory_space<vmem>>, %arg2: memref<187xf32, #tpu.memory_space<smem>>, %arg3: memref<1x10x16x16xf32, #tpu.memory_space<vmem>>, %arg4: memref<3x18x18xf32, #tpu.memory_space<vmem>>, %arg5: memref<3x16x20xf32, #tpu.memory_space<vmem>>) attributes {dimension_semantics = [#tpu.dimension_semantics<parallel>], iteration_bounds = array<i64: 2>, scalar_prefetch = 0 : i64, scratch_operands = 2 : i64, tpu.core_type = #tpu.core_type<tc>, window_params = [{transform_indices = @transform_0, window_bounds = array<i64: 1, 4, 16, 16>}, {transform_indices = @transform_1, window_bounds = array<i64: 187>}, {transform_indices = @transform_2, window_bounds = array<i64: 1, 10, 16, 16>}]} {
    %c0 = arith.constant 0 : index
    %c0_0 = arith.constant 0 : index
    %c0_1 = arith.constant 0 : index
    %c0_2 = arith.constant 0 : index
    %0 = vector.load %arg1[%c0, %c0_0, %c0_1, %c0_2] : memref<1x4x16x16xf32, #tpu.memory_space<vmem>>, vector<1x1x16x16xf32>
    %1 = vector.shape_cast %0 : vector<1x1x16x16xf32> to vector<16x16xf32>
    %c0_3 = arith.constant 0 : index
    %c1 = arith.constant 1 : index
    %c0_4 = arith.constant 0 : index
    %c0_5 = arith.constant 0 : index
    %2 = vector.load %arg1[%c0_3, %c1, %c0_4, %c0_5] : memref<1x4x16x16xf32, #tpu.memory_space<vmem>>, vector<1x1x16x16xf32>
    %3 = vector.shape_cast %2 : vector<1x1x16x16xf32> to vector<16x16xf32>
    %c0_6 = arith.constant 0 : index
    %c2 = arith.constant 2 : index
    %c0_7 = arith.constant 0 : index
    %c0_8 = arith.constant 0 : index
    %4 = vector.load %arg1[%c0_6, %c2, %c0_7, %c0_8] : memref<1x4x16x16xf32, #tpu.memory_space<vmem>>, vector<1x1x16x16xf32>
    %5 = vector.shape_cast %4 : vector<1x1x16x16xf32> to vector<16x16xf32>
    %c0_9 = arith.constant 0 : index
    %c3 = arith.constant 3 : index
    %c0_10 = arith.constant 0 : index
    %c0_11 = arith.constant 0 : index
    %6 = vector.load %arg1[%c0_9, %c3, %c0_10, %c0_11] : memref<1x4x16x16xf32, #tpu.memory_space<vmem>>, vector<1x1x16x16xf32>
    %7 = vector.shape_cast %6 : vector<1x1x16x16xf32> to vector<16x16xf32>
    %cst = arith.constant 0.000000e+00 : f32
    %8 = vector.broadcast %cst : f32 to vector<16x16xf32>
    %c32 = arith.constant 32 : index
    %9 = memref.load %arg2[%c32] : memref<187xf32, #tpu.memory_space<smem>>
    %10 = vector.broadcast %9 : f32 to vector<16x16xf32>
    %11 = arith.addf %8, %10 : vector<16x16xf32>
    %c0_12 = arith.constant 0 : index
    %12 = memref.load %arg2[%c0_12] : memref<187xf32, #tpu.memory_space<smem>>
    %13 = vector.broadcast %12 : f32 to vector<16x16xf32>
    %14 = arith.mulf %13, %1 : vector<16x16xf32>
    %15 = arith.addf %11, %14 : vector<16x16xf32>
    %c1_13 = arith.constant 1 : index
    %16 = memref.load %arg2[%c1_13] : memref<187xf32, #tpu.memory_space<smem>>
    %17 = vector.broadcast %16 : f32 to vector<16x16xf32>
    %18 = arith.mulf %17, %3 : vector<16x16xf32>
    %19 = arith.addf %15, %18 : vector<16x16xf32>
    %c2_14 = arith.constant 2 : index
    %20 = memref.load %arg2[%c2_14] : memref<187xf32, #tpu.memory_space<smem>>
    %21 = vector.broadcast %20 : f32 to vector<16x16xf32>
    %22 = arith.mulf %21, %5 : vector<16x16xf32>
    %23 = arith.addf %19, %22 : vector<16x16xf32>
    %c3_15 = arith.constant 3 : index
    %24 = memref.load %arg2[%c3_15] : memref<187xf32, #tpu.memory_space<smem>>
    %25 = vector.broadcast %24 : f32 to vector<16x16xf32>
    %26 = arith.mulf %25, %7 : vector<16x16xf32>
    %27 = arith.addf %23, %26 : vector<16x16xf32>
    %c0_16 = arith.constant 0 : index
    %c0_17 = arith.constant 0 : index
    %c0_18 = arith.constant 0 : index
    %c0_19 = arith.constant 0 : index
    %28 = vector.load %arg3[%c0_16, %c0_17, %c0_18, %c0_19] : memref<1x10x16x16xf32, #tpu.memory_space<vmem>>, vector<1x1x16x16xf32>
    %29 = vector.shape_cast %28 : vector<1x1x16x16xf32> to vector<16x16xf32>
    %30 = vector.shape_cast %27 : vector<16x16xf32> to vector<1x1x16x16xf32>
    tpu.vector_store %arg3[%c0_16, %c0_17, %c0_18, %c0_19], %30 {strides = array<i32>} : memref<1x10x16x16xf32, #tpu.memory_space<vmem>>, vector<1x1x16x16xf32>,
    %cst_20 = arith.constant 0.000000e+00 : f32
    %31 = vector.broadcast %cst_20 : f32 to vector<16x16xf32>
    %c33 = arith.constant 33 : index
    %32 = memref.load %arg2[%c33] : memref<187xf32, #tpu.memory_space<smem>>
    %33 = vector.broadcast %32 : f32 to vector<16x16xf32>
    %34 = arith.addf %31, %33 : vector<16x16xf32>
    %c4 = arith.constant 4 : index
    %35 = memref.load %arg2[%c4] : memref<187xf32, #tpu.memory_space<smem>>
    %36 = vector.broadcast %35 : f32 to vector<16x16xf32>
    %37 = arith.mulf %36, %1 : vector<16x16xf32>
    %38 = arith.addf %34, %37 : vector<16x16xf32>
    %c5 = arith.constant 5 : index
    %39 = memref.load %arg2[%c5] : memref<187xf32, #tpu.memory_space<smem>>
    %40 = vector.broadcast %39 : f32 to vector<16x16xf32>
    %41 = arith.mulf %40, %3 : vector<16x16xf32>
    %42 = arith.addf %38, %41 : vector<16x16xf32>
    %c6 = arith.constant 6 : index
    %43 = memref.load %arg2[%c6] : memref<187xf32, #tpu.memory_space<smem>>
    %44 = vector.broadcast %43 : f32 to vector<16x16xf32>
    %45 = arith.mulf %44, %5 : vector<16x16xf32>
    %46 = arith.addf %42, %45 : vector<16x16xf32>
    %c7 = arith.constant 7 : index
    %47 = memref.load %arg2[%c7] : memref<187xf32, #tpu.memory_space<smem>>
    %48 = vector.broadcast %47 : f32 to vector<16x16xf32>
    %49 = arith.mulf %48, %7 : vector<16x16xf32>
    %50 = arith.addf %46, %49 : vector<16x16xf32>
    %c0_21 = arith.constant 0 : index
    %c1_22 = arith.constant 1 : index
    %c0_23 = arith.constant 0 : index
    %c0_24 = arith.constant 0 : index
    %51 = vector.load %arg3[%c0_21, %c1_22, %c0_23, %c0_24] : memref<1x10x16x16xf32, #tpu.memory_space<vmem>>, vector<1x1x16x16xf32>
    %52 = vector.shape_cast %51 : vector<1x1x16x16xf32> to vector<16x16xf32>
    %53 = vector.shape_cast %50 : vector<16x16xf32> to vector<1x1x16x16xf32>
    tpu.vector_store %arg3[%c0_21, %c1_22, %c0_23, %c0_24], %53 {strides = array<i32>} : memref<1x10x16x16xf32, #tpu.memory_space<vmem>>, vector<1x1x16x16xf32>,
    %cst_25 = arith.constant 0.000000e+00 : f32
    %54 = vector.broadcast %cst_25 : f32 to vector<16x16xf32>
    %c36 = arith.constant 36 : index
    %55 = memref.load %arg2[%c36] : memref<187xf32, #tpu.memory_space<smem>>
    %56 = vector.broadcast %55 : f32 to vector<16x16xf32>
    %57 = arith.addf %54, %56 : vector<16x16xf32>
    %c16 = arith.constant 16 : index
    %58 = memref.load %arg2[%c16] : memref<187xf32, #tpu.memory_space<smem>>
    %59 = vector.broadcast %58 : f32 to vector<16x16xf32>
    %60 = arith.mulf %59, %1 : vector<16x16xf32>
    %61 = arith.addf %57, %60 : vector<16x16xf32>
    %c17 = arith.constant 17 : index
    %62 = memref.load %arg2[%c17] : memref<187xf32, #tpu.memory_space<smem>>
    %63 = vector.broadcast %62 : f32 to vector<16x16xf32>
    %64 = arith.mulf %63, %3 : vector<16x16xf32>
    %65 = arith.addf %61, %64 : vector<16x16xf32>
    %c18 = arith.constant 18 : index
    %66 = memref.load %arg2[%c18] : memref<187xf32, #tpu.memory_space<smem>>
    %67 = vector.broadcast %66 : f32 to vector<16x16xf32>
    %68 = arith.mulf %67, %5 : vector<16x16xf32>
    %69 = arith.addf %65, %68 : vector<16x16xf32>
    %c19 = arith.constant 19 : index
    %70 = memref.load %arg2[%c19] : memref<187xf32, #tpu.memory_space<smem>>
    %71 = vector.broadcast %70 : f32 to vector<16x16xf32>
    %72 = arith.mulf %71, %7 : vector<16x16xf32>
    %73 = arith.addf %69, %72 : vector<16x16xf32>
    %c0_26 = arith.constant 0 : index
    %c2_27 = arith.constant 2 : index
    %c0_28 = arith.constant 0 : index
    %c0_29 = arith.constant 0 : index
    %74 = vector.load %arg3[%c0_26, %c2_27, %c0_28, %c0_29] : memref<1x10x16x16xf32, #tpu.memory_space<vmem>>, vector<1x1x16x16xf32>
    %75 = vector.shape_cast %74 : vector<1x1x16x16xf32> to vector<16x16xf32>
    %76 = vector.shape_cast %73 : vector<16x16xf32> to vector<1x1x16x16xf32>
    tpu.vector_store %arg3[%c0_26, %c2_27, %c0_28, %c0_29], %76 {strides = array<i32>} : memref<1x10x16x16xf32, #tpu.memory_space<vmem>>, vector<1x1x16x16xf32>,
    %cst_30 = arith.constant 0.000000e+00 : f32
    %77 = vector.broadcast %cst_30 : f32 to vector<16x16xf32>
    %c37 = arith.constant 37 : index
    %78 = memref.load %arg2[%c37] : memref<187xf32, #tpu.memory_space<smem>>
    %79 = vector.broadcast %78 : f32 to vector<16x16xf32>
    %80 = arith.addf %77, %79 : vector<16x16xf32>
    %c20 = arith.constant 20 : index
    %81 = memref.load %arg2[%c20] : memref<187xf32, #tpu.memory_space<smem>>
    %82 = vector.broadcast %81 : f32 to vector<16x16xf32>
    %83 = arith.mulf %82, %1 : vector<16x16xf32>
    %84 = arith.addf %80, %83 : vector<16x16xf32>
    %c21 = arith.constant 21 : index
    %85 = memref.load %arg2[%c21] : memref<187xf32, #tpu.memory_space<smem>>
    %86 = vector.broadcast %85 : f32 to vector<16x16xf32>
    %87 = arith.mulf %86, %3 : vector<16x16xf32>
    %88 = arith.addf %84, %87 : vector<16x16xf32>
    %c22 = arith.constant 22 : index
    %89 = memref.load %arg2[%c22] : memref<187xf32, #tpu.memory_space<smem>>
    %90 = vector.broadcast %89 : f32 to vector<16x16xf32>
    %91 = arith.mulf %90, %5 : vector<16x16xf32>
    %92 = arith.addf %88, %91 : vector<16x16xf32>
    %c23 = arith.constant 23 : index
    %93 = memref.load %arg2[%c23] : memref<187xf32, #tpu.memory_space<smem>>
    %94 = vector.broadcast %93 : f32 to vector<16x16xf32>
    %95 = arith.mulf %94, %7 : vector<16x16xf32>
    %96 = arith.addf %92, %95 : vector<16x16xf32>
    %c0_31 = arith.constant 0 : index
    %c3_32 = arith.constant 3 : index
    %c0_33 = arith.constant 0 : index
    %c0_34 = arith.constant 0 : index
    %97 = vector.load %arg3[%c0_31, %c3_32, %c0_33, %c0_34] : memref<1x10x16x16xf32, #tpu.memory_space<vmem>>, vector<1x1x16x16xf32>
    %98 = vector.shape_cast %97 : vector<1x1x16x16xf32> to vector<16x16xf32>
    %99 = vector.shape_cast %96 : vector<16x16xf32> to vector<1x1x16x16xf32>
    tpu.vector_store %arg3[%c0_31, %c3_32, %c0_33, %c0_34], %99 {strides = array<i32>} : memref<1x10x16x16xf32, #tpu.memory_space<vmem>>, vector<1x1x16x16xf32>,
    %cst_35 = arith.constant 0.000000e+00 : f32
    %100 = vector.broadcast %cst_35 : f32 to vector<16x16xf32>
    %c38 = arith.constant 38 : index
    %101 = memref.load %arg2[%c38] : memref<187xf32, #tpu.memory_space<smem>>
    %102 = vector.broadcast %101 : f32 to vector<16x16xf32>
    %103 = arith.addf %100, %102 : vector<16x16xf32>
    %c24 = arith.constant 24 : index
    %104 = memref.load %arg2[%c24] : memref<187xf32, #tpu.memory_space<smem>>
    %105 = vector.broadcast %104 : f32 to vector<16x16xf32>
    %106 = arith.mulf %105, %1 : vector<16x16xf32>
    %107 = arith.addf %103, %106 : vector<16x16xf32>
    %c25 = arith.constant 25 : index
    %108 = memref.load %arg2[%c25] : memref<187xf32, #tpu.memory_space<smem>>
    %109 = vector.broadcast %108 : f32 to vector<16x16xf32>
    %110 = arith.mulf %109, %3 : vector<16x16xf32>
    %111 = arith.addf %107, %110 : vector<16x16xf32>
    %c26 = arith.constant 26 : index
    %112 = memref.load %arg2[%c26] : memref<187xf32, #tpu.memory_space<smem>>
    %113 = vector.broadcast %112 : f32 to vector<16x16xf32>
    %114 = arith.mulf %113, %5 : vector<16x16xf32>
    %115 = arith.addf %111, %114 : vector<16x16xf32>
    %c27 = arith.constant 27 : index
    %116 = memref.load %arg2[%c27] : memref<187xf32, #tpu.memory_space<smem>>
    %117 = vector.broadcast %116 : f32 to vector<16x16xf32>
    %118 = arith.mulf %117, %7 : vector<16x16xf32>
    %119 = arith.addf %115, %118 : vector<16x16xf32>
    %c0_36 = arith.constant 0 : index
    %c4_37 = arith.constant 4 : index
    %c0_38 = arith.constant 0 : index
    %c0_39 = arith.constant 0 : index
    %120 = vector.load %arg3[%c0_36, %c4_37, %c0_38, %c0_39] : memref<1x10x16x16xf32, #tpu.memory_space<vmem>>, vector<1x1x16x16xf32>
    %121 = vector.shape_cast %120 : vector<1x1x16x16xf32> to vector<16x16xf32>
    %122 = vector.shape_cast %119 : vector<16x16xf32> to vector<1x1x16x16xf32>
    tpu.vector_store %arg3[%c0_36, %c4_37, %c0_38, %c0_39], %122 {strides = array<i32>} : memref<1x10x16x16xf32, #tpu.memory_space<vmem>>, vector<1x1x16x16xf32>,
    %cst_40 = arith.constant 0.000000e+00 : f32
    %123 = vector.broadcast %cst_40 : f32 to vector<16x16xf32>
    %c39 = arith.constant 39 : index
    %124 = memref.load %arg2[%c39] : memref<187xf32, #tpu.memory_space<smem>>
    %125 = vector.broadcast %124 : f32 to vector<16x16xf32>
    %126 = arith.addf %123, %125 : vector<16x16xf32>
    %c28 = arith.constant 28 : index
    %127 = memref.load %arg2[%c28] : memref<187xf32, #tpu.memory_space<smem>>
    %128 = vector.broadcast %127 : f32 to vector<16x16xf32>
    %129 = arith.mulf %128, %1 : vector<16x16xf32>
    %130 = arith.addf %126, %129 : vector<16x16xf32>
    %c29 = arith.constant 29 : index
    %131 = memref.load %arg2[%c29] : memref<187xf32, #tpu.memory_space<smem>>
    %132 = vector.broadcast %131 : f32 to vector<16x16xf32>
    %133 = arith.mulf %132, %3 : vector<16x16xf32>
    %134 = arith.addf %130, %133 : vector<16x16xf32>
    %c30 = arith.constant 30 : index
    %135 = memref.load %arg2[%c30] : memref<187xf32, #tpu.memory_space<smem>>
    %136 = vector.broadcast %135 : f32 to vector<16x16xf32>
    %137 = arith.mulf %136, %5 : vector<16x16xf32>
    %138 = arith.addf %134, %137 : vector<16x16xf32>
    %c31 = arith.constant 31 : index
    %139 = memref.load %arg2[%c31] : memref<187xf32, #tpu.memory_space<smem>>
    %140 = vector.broadcast %139 : f32 to vector<16x16xf32>
    %141 = arith.mulf %140, %7 : vector<16x16xf32>
    %142 = arith.addf %138, %141 : vector<16x16xf32>
    %c0_41 = arith.constant 0 : index
    %c5_42 = arith.constant 5 : index
    %c0_43 = arith.constant 0 : index
    %c0_44 = arith.constant 0 : index
    %143 = vector.load %arg3[%c0_41, %c5_42, %c0_43, %c0_44] : memref<1x10x16x16xf32, #tpu.memory_space<vmem>>, vector<1x1x16x16xf32>
    %144 = vector.shape_cast %143 : vector<1x1x16x16xf32> to vector<16x16xf32>
    %145 = vector.shape_cast %142 : vector<16x16xf32> to vector<1x1x16x16xf32>
    tpu.vector_store %arg3[%c0_41, %c5_42, %c0_43, %c0_44], %145 {strides = array<i32>} : memref<1x10x16x16xf32, #tpu.memory_space<vmem>>, vector<1x1x16x16xf32>,
    %cst_45 = arith.constant 0.000000e+00 : f32
    %146 = vector.broadcast %cst_45 : f32 to vector<16x16xf32>
    %c34 = arith.constant 34 : index
    %147 = memref.load %arg2[%c34] : memref<187xf32, #tpu.memory_space<smem>>
    %148 = vector.broadcast %147 : f32 to vector<16x16xf32>
    %149 = arith.addf %146, %148 : vector<16x16xf32>
    %c8 = arith.constant 8 : index
    %150 = memref.load %arg2[%c8] : memref<187xf32, #tpu.memory_space<smem>>
    %151 = vector.broadcast %150 : f32 to vector<16x16xf32>
    %152 = arith.mulf %151, %1 : vector<16x16xf32>
    %153 = arith.addf %149, %152 : vector<16x16xf32>
    %c9 = arith.constant 9 : index
    %154 = memref.load %arg2[%c9] : memref<187xf32, #tpu.memory_space<smem>>
    %155 = vector.broadcast %154 : f32 to vector<16x16xf32>
    %156 = arith.mulf %155, %3 : vector<16x16xf32>
    %157 = arith.addf %153, %156 : vector<16x16xf32>
    %c10 = arith.constant 10 : index
    %158 = memref.load %arg2[%c10] : memref<187xf32, #tpu.memory_space<smem>>
    %159 = vector.broadcast %158 : f32 to vector<16x16xf32>
    %160 = arith.mulf %159, %5 : vector<16x16xf32>
    %161 = arith.addf %157, %160 : vector<16x16xf32>
    %c11 = arith.constant 11 : index
    %162 = memref.load %arg2[%c11] : memref<187xf32, #tpu.memory_space<smem>>
    %163 = vector.broadcast %162 : f32 to vector<16x16xf32>
    %164 = arith.mulf %163, %7 : vector<16x16xf32>
    %165 = arith.addf %161, %164 : vector<16x16xf32>
    %cst_46 = arith.constant 0.000000e+00 : f32
    %166 = vector.broadcast %cst_46 : f32 to vector<16x16xf32>
    %c35 = arith.constant 35 : index
    %167 = memref.load %arg2[%c35] : memref<187xf32, #tpu.memory_space<smem>>
    %168 = vector.broadcast %167 : f32 to vector<16x16xf32>
    %169 = arith.addf %166, %168 : vector<16x16xf32>
    %c12 = arith.constant 12 : index
    %170 = memref.load %arg2[%c12] : memref<187xf32, #tpu.memory_space<smem>>
    %171 = vector.broadcast %170 : f32 to vector<16x16xf32>
    %172 = arith.mulf %171, %1 : vector<16x16xf32>
    %173 = arith.addf %169, %172 : vector<16x16xf32>
    %c13 = arith.constant 13 : index
    %174 = memref.load %arg2[%c13] : memref<187xf32, #tpu.memory_space<smem>>
    %175 = vector.broadcast %174 : f32 to vector<16x16xf32>
    %176 = arith.mulf %175, %3 : vector<16x16xf32>
    %177 = arith.addf %173, %176 : vector<16x16xf32>
    %c14 = arith.constant 14 : index
    %178 = memref.load %arg2[%c14] : memref<187xf32, #tpu.memory_space<smem>>
    %179 = vector.broadcast %178 : f32 to vector<16x16xf32>
    %180 = arith.mulf %179, %5 : vector<16x16xf32>
    %181 = arith.addf %177, %180 : vector<16x16xf32>
    %c15 = arith.constant 15 : index
    %182 = memref.load %arg2[%c15] : memref<187xf32, #tpu.memory_space<smem>>
    %183 = vector.broadcast %182 : f32 to vector<16x16xf32>
    %184 = arith.mulf %183, %7 : vector<16x16xf32>
    %185 = arith.addf %181, %184 : vector<16x16xf32>
    %cst_47 = arith.constant 0.000000e+00 : f32
    %186 = vector.broadcast %cst_47 : f32 to vector<3x18x18xf32>
    %c0_48 = arith.constant 0 : index
    %c0_49 = arith.constant 0 : index
    %c0_50 = arith.constant 0 : index
    %187 = vector.load %arg4[%c0_48, %c0_49, %c0_50] : memref<3x18x18xf32, #tpu.memory_space<vmem>>, vector<3x18x18xf32>
    tpu.vector_store %arg4[%c0_48, %c0_49, %c0_50], %186 {strides = array<i32>} : memref<3x18x18xf32, #tpu.memory_space<vmem>>, vector<3x18x18xf32>,
    %cst_51 = arith.constant 0.000000e+00 : f32
    %188 = vector.broadcast %cst_51 : f32 to vector<3x16x20xf32>
    %c0_52 = arith.constant 0 : index
    %c0_53 = arith.constant 0 : index
    %c0_54 = arith.constant 0 : index
    %189 = vector.load %arg5[%c0_52, %c0_53, %c0_54] : memref<3x16x20xf32, #tpu.memory_space<vmem>>, vector<3x16x20xf32>
    tpu.vector_store %arg5[%c0_52, %c0_53, %c0_54], %188 {strides = array<i32>} : memref<3x16x20xf32, #tpu.memory_space<vmem>>, vector<3x16x20xf32>,
    %c0_55 = arith.constant 0 : index
    %c1_56 = arith.constant 1 : index
    %c1_57 = arith.constant 1 : index
    %190 = vector.load %arg4[%c0_55, %c1_56, %c1_57] : memref<3x18x18xf32, #tpu.memory_space<vmem>>, vector<1x16x16xf32>
    %191 = vector.shape_cast %190 : vector<1x16x16xf32> to vector<16x16xf32>
    %192 = vector.shape_cast %165 : vector<16x16xf32> to vector<1x16x16xf32>
    tpu.vector_store %arg4[%c0_55, %c1_56, %c1_57], %192 {strides = array<i32>} : memref<3x18x18xf32, #tpu.memory_space<vmem>>, vector<1x16x16xf32>,
    %c1_58 = arith.constant 1 : index
    %c1_59 = arith.constant 1 : index
    %c1_60 = arith.constant 1 : index
    %193 = vector.load %arg4[%c1_58, %c1_59, %c1_60] : memref<3x18x18xf32, #tpu.memory_space<vmem>>, vector<1x16x16xf32>
    %194 = vector.shape_cast %193 : vector<1x16x16xf32> to vector<16x16xf32>
    %195 = vector.shape_cast %185 : vector<16x16xf32> to vector<1x16x16xf32>
    tpu.vector_store %arg4[%c1_58, %c1_59, %c1_60], %195 {strides = array<i32>} : memref<3x18x18xf32, #tpu.memory_space<vmem>>, vector<1x16x16xf32>,
    %c0_61 = arith.constant 0 : index
    %c0_62 = arith.constant 0 : index
    %c0_63 = arith.constant 0 : index
    %196 = vector.load %arg4[%c0_61, %c0_62, %c0_63] : memref<3x18x18xf32, #tpu.memory_space<vmem>>, vector<1x14x18xf32>
    %197 = vector.shape_cast %196 : vector<1x14x18xf32> to vector<14x18xf32>
    %c0_64 = arith.constant 0 : index
    %c1_65 = arith.constant 1 : index
    %c0_66 = arith.constant 0 : index
    %198 = vector.load %arg4[%c0_64, %c1_65, %c0_66] : memref<3x18x18xf32, #tpu.memory_space<vmem>>, vector<1x14x18xf32>
    %199 = vector.shape_cast %198 : vector<1x14x18xf32> to vector<14x18xf32>
    %c0_67 = arith.constant 0 : index
    %c2_68 = arith.constant 2 : index
    %c0_69 = arith.constant 0 : index
    %200 = vector.load %arg4[%c0_67, %c2_68, %c0_69] : memref<3x18x18xf32, #tpu.memory_space<vmem>>, vector<1x14x18xf32>
    %201 = vector.shape_cast %200 : vector<1x14x18xf32> to vector<14x18xf32>
    %c0_70 = arith.constant 0 : index
    %c3_71 = arith.constant 3 : index
    %c0_72 = arith.constant 0 : index
    %202 = vector.load %arg4[%c0_70, %c3_71, %c0_72] : memref<3x18x18xf32, #tpu.memory_space<vmem>>, vector<1x14x18xf32>
    %203 = vector.shape_cast %202 : vector<1x14x18xf32> to vector<14x18xf32>
    %c0_73 = arith.constant 0 : index
    %c4_74 = arith.constant 4 : index
    %c0_75 = arith.constant 0 : index
    %204 = vector.load %arg4[%c0_73, %c4_74, %c0_75] : memref<3x18x18xf32, #tpu.memory_space<vmem>>, vector<1x14x18xf32>
    %205 = vector.shape_cast %204 : vector<1x14x18xf32> to vector<14x18xf32>
    %c1_76 = arith.constant 1 : index
    %c0_77 = arith.constant 0 : index
    %c0_78 = arith.constant 0 : index
    %206 = vector.load %arg4[%c1_76, %c0_77, %c0_78] : memref<3x18x18xf32, #tpu.memory_space<vmem>>, vector<1x14x18xf32>
    %207 = vector.shape_cast %206 : vector<1x14x18xf32> to vector<14x18xf32>
    %c1_79 = arith.constant 1 : index
    %c1_80 = arith.constant 1 : index
    %c0_81 = arith.constant 0 : index
    %208 = vector.load %arg4[%c1_79, %c1_80, %c0_81] : memref<3x18x18xf32, #tpu.memory_space<vmem>>, vector<1x14x18xf32>
    %209 = vector.shape_cast %208 : vector<1x14x18xf32> to vector<14x18xf32>
    %c1_82 = arith.constant 1 : index
    %c2_83 = arith.constant 2 : index
    %c0_84 = arith.constant 0 : index
    %210 = vector.load %arg4[%c1_82, %c2_83, %c0_84] : memref<3x18x18xf32, #tpu.memory_space<vmem>>, vector<1x14x18xf32>
    %211 = vector.shape_cast %210 : vector<1x14x18xf32> to vector<14x18xf32>
    %c1_85 = arith.constant 1 : index
    %c3_86 = arith.constant 3 : index
    %c0_87 = arith.constant 0 : index
    %212 = vector.load %arg4[%c1_85, %c3_86, %c0_87] : memref<3x18x18xf32, #tpu.memory_space<vmem>>, vector<1x14x18xf32>
    %213 = vector.shape_cast %212 : vector<1x14x18xf32> to vector<14x18xf32>
    %c1_88 = arith.constant 1 : index
    %c4_89 = arith.constant 4 : index
    %c0_90 = arith.constant 0 : index
    %214 = vector.load %arg4[%c1_88, %c4_89, %c0_90] : memref<3x18x18xf32, #tpu.memory_space<vmem>>, vector<1x14x18xf32>
    %215 = vector.shape_cast %214 : vector<1x14x18xf32> to vector<14x18xf32>
    %cst_91 = arith.constant 0.000000e+00 : f32
    %216 = vector.broadcast %cst_91 : f32 to vector<14x18xf32>
    %c60 = arith.constant 60 : index
    %217 = memref.load %arg2[%c60] : memref<187xf32, #tpu.memory_space<smem>>
    %218 = vector.broadcast %217 : f32 to vector<14x18xf32>
    %219 = arith.addf %216, %218 : vector<14x18xf32>
    %c40 = arith.constant 40 : index
    %220 = memref.load %arg2[%c40] : memref<187xf32, #tpu.memory_space<smem>>
    %221 = vector.broadcast %220 : f32 to vector<14x18xf32>
    %222 = arith.mulf %221, %197 : vector<14x18xf32>
    %223 = arith.addf %219, %222 : vector<14x18xf32>
    %c41 = arith.constant 41 : index
    %224 = memref.load %arg2[%c41] : memref<187xf32, #tpu.memory_space<smem>>
    %225 = vector.broadcast %224 : f32 to vector<14x18xf32>
    %226 = arith.mulf %225, %199 : vector<14x18xf32>
    %227 = arith.addf %223, %226 : vector<14x18xf32>
    %c42 = arith.constant 42 : index
    %228 = memref.load %arg2[%c42] : memref<187xf32, #tpu.memory_space<smem>>
    %229 = vector.broadcast %228 : f32 to vector<14x18xf32>
    %230 = arith.mulf %229, %201 : vector<14x18xf32>
    %231 = arith.addf %227, %230 : vector<14x18xf32>
    %c43 = arith.constant 43 : index
    %232 = memref.load %arg2[%c43] : memref<187xf32, #tpu.memory_space<smem>>
    %233 = vector.broadcast %232 : f32 to vector<14x18xf32>
    %234 = arith.mulf %233, %203 : vector<14x18xf32>
    %235 = arith.addf %231, %234 : vector<14x18xf32>
    %c44 = arith.constant 44 : index
    %236 = memref.load %arg2[%c44] : memref<187xf32, #tpu.memory_space<smem>>
    %237 = vector.broadcast %236 : f32 to vector<14x18xf32>
    %238 = arith.mulf %237, %205 : vector<14x18xf32>
    %239 = arith.addf %235, %238 : vector<14x18xf32>
    %c45 = arith.constant 45 : index
    %240 = memref.load %arg2[%c45] : memref<187xf32, #tpu.memory_space<smem>>
    %241 = vector.broadcast %240 : f32 to vector<14x18xf32>
    %242 = arith.mulf %241, %207 : vector<14x18xf32>
    %243 = arith.addf %239, %242 : vector<14x18xf32>
    %c46 = arith.constant 46 : index
    %244 = memref.load %arg2[%c46] : memref<187xf32, #tpu.memory_space<smem>>
    %245 = vector.broadcast %244 : f32 to vector<14x18xf32>
    %246 = arith.mulf %245, %209 : vector<14x18xf32>
    %247 = arith.addf %243, %246 : vector<14x18xf32>
    %c47 = arith.constant 47 : index
    %248 = memref.load %arg2[%c47] : memref<187xf32, #tpu.memory_space<smem>>
    %249 = vector.broadcast %248 : f32 to vector<14x18xf32>
    %250 = arith.mulf %249, %211 : vector<14x18xf32>
    %251 = arith.addf %247, %250 : vector<14x18xf32>
    %c48 = arith.constant 48 : index
    %252 = memref.load %arg2[%c48] : memref<187xf32, #tpu.memory_space<smem>>
    %253 = vector.broadcast %252 : f32 to vector<14x18xf32>
    %254 = arith.mulf %253, %213 : vector<14x18xf32>
    %255 = arith.addf %251, %254 : vector<14x18xf32>
    %c49 = arith.constant 49 : index
    %256 = memref.load %arg2[%c49] : memref<187xf32, #tpu.memory_space<smem>>
    %257 = vector.broadcast %256 : f32 to vector<14x18xf32>
    %258 = arith.mulf %257, %215 : vector<14x18xf32>
    %259 = arith.addf %255, %258 : vector<14x18xf32>
    %c0_92 = arith.constant 0 : index
    %c1_93 = arith.constant 1 : index
    %c1_94 = arith.constant 1 : index
    %260 = vector.load %arg5[%c0_92, %c1_93, %c1_94] : memref<3x16x20xf32, #tpu.memory_space<vmem>>, vector<1x14x18xf32>
    %261 = vector.shape_cast %260 : vector<1x14x18xf32> to vector<14x18xf32>
    %262 = vector.shape_cast %259 : vector<14x18xf32> to vector<1x14x18xf32>
    tpu.vector_store %arg5[%c0_92, %c1_93, %c1_94], %262 {strides = array<i32>} : memref<3x16x20xf32, #tpu.memory_space<vmem>>, vector<1x14x18xf32>,
    %cst_95 = arith.constant 0.000000e+00 : f32
    %263 = vector.broadcast %cst_95 : f32 to vector<14x18xf32>
    %c61 = arith.constant 61 : index
    %264 = memref.load %arg2[%c61] : memref<187xf32, #tpu.memory_space<smem>>
    %265 = vector.broadcast %264 : f32 to vector<14x18xf32>
    %266 = arith.addf %263, %265 : vector<14x18xf32>
    %c50 = arith.constant 50 : index
    %267 = memref.load %arg2[%c50] : memref<187xf32, #tpu.memory_space<smem>>
    %268 = vector.broadcast %267 : f32 to vector<14x18xf32>
    %269 = arith.mulf %268, %197 : vector<14x18xf32>
    %270 = arith.addf %266, %269 : vector<14x18xf32>
    %c51 = arith.constant 51 : index
    %271 = memref.load %arg2[%c51] : memref<187xf32, #tpu.memory_space<smem>>
    %272 = vector.broadcast %271 : f32 to vector<14x18xf32>
    %273 = arith.mulf %272, %199 : vector<14x18xf32>
    %274 = arith.addf %270, %273 : vector<14x18xf32>
    %c52 = arith.constant 52 : index
    %275 = memref.load %arg2[%c52] : memref<187xf32, #tpu.memory_space<smem>>
    %276 = vector.broadcast %275 : f32 to vector<14x18xf32>
    %277 = arith.mulf %276, %201 : vector<14x18xf32>
    %278 = arith.addf %274, %277 : vector<14x18xf32>
    %c53 = arith.constant 53 : index
    %279 = memref.load %arg2[%c53] : memref<187xf32, #tpu.memory_space<smem>>
    %280 = vector.broadcast %279 : f32 to vector<14x18xf32>
    %281 = arith.mulf %280, %203 : vector<14x18xf32>
    %282 = arith.addf %278, %281 : vector<14x18xf32>
    %c54 = arith.constant 54 : index
    %283 = memref.load %arg2[%c54] : memref<187xf32, #tpu.memory_space<smem>>
    %284 = vector.broadcast %283 : f32 to vector<14x18xf32>
    %285 = arith.mulf %284, %205 : vector<14x18xf32>
    %286 = arith.addf %282, %285 : vector<14x18xf32>
    %c55 = arith.constant 55 : index
    %287 = memref.load %arg2[%c55] : memref<187xf32, #tpu.memory_space<smem>>
    %288 = vector.broadcast %287 : f32 to vector<14x18xf32>
    %289 = arith.mulf %288, %207 : vector<14x18xf32>
    %290 = arith.addf %286, %289 : vector<14x18xf32>
    %c56 = arith.constant 56 : index
    %291 = memref.load %arg2[%c56] : memref<187xf32, #tpu.memory_space<smem>>
    %292 = vector.broadcast %291 : f32 to vector<14x18xf32>
    %293 = arith.mulf %292, %209 : vector<14x18xf32>
    %294 = arith.addf %290, %293 : vector<14x18xf32>
    %c57 = arith.constant 57 : index
    %295 = memref.load %arg2[%c57] : memref<187xf32, #tpu.memory_space<smem>>
    %296 = vector.broadcast %295 : f32 to vector<14x18xf32>
    %297 = arith.mulf %296, %211 : vector<14x18xf32>
    %298 = arith.addf %294, %297 : vector<14x18xf32>
    %c58 = arith.constant 58 : index
    %299 = memref.load %arg2[%c58] : memref<187xf32, #tpu.memory_space<smem>>
    %300 = vector.broadcast %299 : f32 to vector<14x18xf32>
    %301 = arith.mulf %300, %213 : vector<14x18xf32>
    %302 = arith.addf %298, %301 : vector<14x18xf32>
    %c59 = arith.constant 59 : index
    %303 = memref.load %arg2[%c59] : memref<187xf32, #tpu.memory_space<smem>>
    %304 = vector.broadcast %303 : f32 to vector<14x18xf32>
    %305 = arith.mulf %304, %215 : vector<14x18xf32>
    %306 = arith.addf %302, %305 : vector<14x18xf32>
    %c1_96 = arith.constant 1 : index
    %c1_97 = arith.constant 1 : index
    %c1_98 = arith.constant 1 : index
    %307 = vector.load %arg5[%c1_96, %c1_97, %c1_98] : memref<3x16x20xf32, #tpu.memory_space<vmem>>, vector<1x14x18xf32>
    %308 = vector.shape_cast %307 : vector<1x14x18xf32> to vector<14x18xf32>
    %309 = vector.shape_cast %306 : vector<14x18xf32> to vector<1x14x18xf32>
    tpu.vector_store %arg5[%c1_96, %c1_97, %c1_98], %309 {strides = array<i32>} : memref<3x16x20xf32, #tpu.memory_space<vmem>>, vector<1x14x18xf32>,
    %c0_99 = arith.constant 0 : index
    %c0_100 = arith.constant 0 : index
    %c0_101 = arith.constant 0 : index
    %310 = vector.load %arg5[%c0_99, %c0_100, %c0_101] : memref<3x16x20xf32, #tpu.memory_space<vmem>>, vector<1x16x16xf32>
    %311 = vector.shape_cast %310 : vector<1x16x16xf32> to vector<16x16xf32>
    %c0_102 = arith.constant 0 : index
    %c0_103 = arith.constant 0 : index
    %c1_104 = arith.constant 1 : index
    %312 = vector.load %arg5[%c0_102, %c0_103, %c1_104] : memref<3x16x20xf32, #tpu.memory_space<vmem>>, vector<1x16x16xf32>
    %313 = vector.shape_cast %312 : vector<1x16x16xf32> to vector<16x16xf32>
    %c0_105 = arith.constant 0 : index
    %c0_106 = arith.constant 0 : index
    %c2_107 = arith.constant 2 : index
    %314 = vector.load %arg5[%c0_105, %c0_106, %c2_107] : memref<3x16x20xf32, #tpu.memory_space<vmem>>, vector<1x16x16xf32>
    %315 = vector.shape_cast %314 : vector<1x16x16xf32> to vector<16x16xf32>
    %c0_108 = arith.constant 0 : index
    %c0_109 = arith.constant 0 : index
    %c3_110 = arith.constant 3 : index
    %316 = vector.load %arg5[%c0_108, %c0_109, %c3_110] : memref<3x16x20xf32, #tpu.memory_space<vmem>>, vector<1x16x16xf32>
    %317 = vector.shape_cast %316 : vector<1x16x16xf32> to vector<16x16xf32>
    %c0_111 = arith.constant 0 : index
    %c0_112 = arith.constant 0 : index
    %c4_113 = arith.constant 4 : index
    %318 = vector.load %arg5[%c0_111, %c0_112, %c4_113] : memref<3x16x20xf32, #tpu.memory_space<vmem>>, vector<1x16x16xf32>
    %319 = vector.shape_cast %318 : vector<1x16x16xf32> to vector<16x16xf32>
    %c1_114 = arith.constant 1 : index
    %c0_115 = arith.constant 0 : index
    %c0_116 = arith.constant 0 : index
    %320 = vector.load %arg5[%c1_114, %c0_115, %c0_116] : memref<3x16x20xf32, #tpu.memory_space<vmem>>, vector<1x16x16xf32>
    %321 = vector.shape_cast %320 : vector<1x16x16xf32> to vector<16x16xf32>
    %c1_117 = arith.constant 1 : index
    %c0_118 = arith.constant 0 : index
    %c1_119 = arith.constant 1 : index
    %322 = vector.load %arg5[%c1_117, %c0_118, %c1_119] : memref<3x16x20xf32, #tpu.memory_space<vmem>>, vector<1x16x16xf32>
    %323 = vector.shape_cast %322 : vector<1x16x16xf32> to vector<16x16xf32>
    %c1_120 = arith.constant 1 : index
    %c0_121 = arith.constant 0 : index
    %c2_122 = arith.constant 2 : index
    %324 = vector.load %arg5[%c1_120, %c0_121, %c2_122] : memref<3x16x20xf32, #tpu.memory_space<vmem>>, vector<1x16x16xf32>
    %325 = vector.shape_cast %324 : vector<1x16x16xf32> to vector<16x16xf32>
    %c1_123 = arith.constant 1 : index
    %c0_124 = arith.constant 0 : index
    %c3_125 = arith.constant 3 : index
    %326 = vector.load %arg5[%c1_123, %c0_124, %c3_125] : memref<3x16x20xf32, #tpu.memory_space<vmem>>, vector<1x16x16xf32>
    %327 = vector.shape_cast %326 : vector<1x16x16xf32> to vector<16x16xf32>
    %c1_126 = arith.constant 1 : index
    %c0_127 = arith.constant 0 : index
    %c4_128 = arith.constant 4 : index
    %328 = vector.load %arg5[%c1_126, %c0_127, %c4_128] : memref<3x16x20xf32, #tpu.memory_space<vmem>>, vector<1x16x16xf32>
    %329 = vector.shape_cast %328 : vector<1x16x16xf32> to vector<16x16xf32>
    %cst_129 = arith.constant 0.000000e+00 : f32
    %330 = vector.broadcast %cst_129 : f32 to vector<16x16xf32>
    %c82 = arith.constant 82 : index
    %331 = memref.load %arg2[%c82] : memref<187xf32, #tpu.memory_space<smem>>
    %332 = vector.broadcast %331 : f32 to vector<16x16xf32>
    %333 = arith.addf %330, %332 : vector<16x16xf32>
    %c62 = arith.constant 62 : index
    %334 = memref.load %arg2[%c62] : memref<187xf32, #tpu.memory_space<smem>>
    %335 = vector.broadcast %334 : f32 to vector<16x16xf32>
    %336 = arith.mulf %335, %311 : vector<16x16xf32>
    %337 = arith.addf %333, %336 : vector<16x16xf32>
    %c63 = arith.constant 63 : index
    %338 = memref.load %arg2[%c63] : memref<187xf32, #tpu.memory_space<smem>>
    %339 = vector.broadcast %338 : f32 to vector<16x16xf32>
    %340 = arith.mulf %339, %313 : vector<16x16xf32>
    %341 = arith.addf %337, %340 : vector<16x16xf32>
    %c64 = arith.constant 64 : index
    %342 = memref.load %arg2[%c64] : memref<187xf32, #tpu.memory_space<smem>>
    %343 = vector.broadcast %342 : f32 to vector<16x16xf32>
    %344 = arith.mulf %343, %315 : vector<16x16xf32>
    %345 = arith.addf %341, %344 : vector<16x16xf32>
    %c65 = arith.constant 65 : index
    %346 = memref.load %arg2[%c65] : memref<187xf32, #tpu.memory_space<smem>>
    %347 = vector.broadcast %346 : f32 to vector<16x16xf32>
    %348 = arith.mulf %347, %317 : vector<16x16xf32>
    %349 = arith.addf %345, %348 : vector<16x16xf32>
    %c66 = arith.constant 66 : index
    %350 = memref.load %arg2[%c66] : memref<187xf32, #tpu.memory_space<smem>>
    %351 = vector.broadcast %350 : f32 to vector<16x16xf32>
    %352 = arith.mulf %351, %319 : vector<16x16xf32>
    %353 = arith.addf %349, %352 : vector<16x16xf32>
    %c67 = arith.constant 67 : index
    %354 = memref.load %arg2[%c67] : memref<187xf32, #tpu.memory_space<smem>>
    %355 = vector.broadcast %354 : f32 to vector<16x16xf32>
    %356 = arith.mulf %355, %321 : vector<16x16xf32>
    %357 = arith.addf %353, %356 : vector<16x16xf32>
    %c68 = arith.constant 68 : index
    %358 = memref.load %arg2[%c68] : memref<187xf32, #tpu.memory_space<smem>>
    %359 = vector.broadcast %358 : f32 to vector<16x16xf32>
    %360 = arith.mulf %359, %323 : vector<16x16xf32>
    %361 = arith.addf %357, %360 : vector<16x16xf32>
    %c69 = arith.constant 69 : index
    %362 = memref.load %arg2[%c69] : memref<187xf32, #tpu.memory_space<smem>>
    %363 = vector.broadcast %362 : f32 to vector<16x16xf32>
    %364 = arith.mulf %363, %325 : vector<16x16xf32>
    %365 = arith.addf %361, %364 : vector<16x16xf32>
    %c70 = arith.constant 70 : index
    %366 = memref.load %arg2[%c70] : memref<187xf32, #tpu.memory_space<smem>>
    %367 = vector.broadcast %366 : f32 to vector<16x16xf32>
    %368 = arith.mulf %367, %327 : vector<16x16xf32>
    %369 = arith.addf %365, %368 : vector<16x16xf32>
    %c71 = arith.constant 71 : index
    %370 = memref.load %arg2[%c71] : memref<187xf32, #tpu.memory_space<smem>>
    %371 = vector.broadcast %370 : f32 to vector<16x16xf32>
    %372 = arith.mulf %371, %329 : vector<16x16xf32>
    %373 = arith.addf %369, %372 : vector<16x16xf32>
    %cst_130 = arith.constant 0.000000e+00 : f32
    %374 = vector.broadcast %cst_130 : f32 to vector<16x16xf32>
    %c83 = arith.constant 83 : index
    %375 = memref.load %arg2[%c83] : memref<187xf32, #tpu.memory_space<smem>>
    %376 = vector.broadcast %375 : f32 to vector<16x16xf32>
    %377 = arith.addf %374, %376 : vector<16x16xf32>
    %c72 = arith.constant 72 : index
    %378 = memref.load %arg2[%c72] : memref<187xf32, #tpu.memory_space<smem>>
    %379 = vector.broadcast %378 : f32 to vector<16x16xf32>
    %380 = arith.mulf %379, %311 : vector<16x16xf32>
    %381 = arith.addf %377, %380 : vector<16x16xf32>
    %c73 = arith.constant 73 : index
    %382 = memref.load %arg2[%c73] : memref<187xf32, #tpu.memory_space<smem>>
    %383 = vector.broadcast %382 : f32 to vector<16x16xf32>
    %384 = arith.mulf %383, %313 : vector<16x16xf32>
    %385 = arith.addf %381, %384 : vector<16x16xf32>
    %c74 = arith.constant 74 : index
    %386 = memref.load %arg2[%c74] : memref<187xf32, #tpu.memory_space<smem>>
    %387 = vector.broadcast %386 : f32 to vector<16x16xf32>
    %388 = arith.mulf %387, %315 : vector<16x16xf32>
    %389 = arith.addf %385, %388 : vector<16x16xf32>
    %c75 = arith.constant 75 : index
    %390 = memref.load %arg2[%c75] : memref<187xf32, #tpu.memory_space<smem>>
    %391 = vector.broadcast %390 : f32 to vector<16x16xf32>
    %392 = arith.mulf %391, %317 : vector<16x16xf32>
    %393 = arith.addf %389, %392 : vector<16x16xf32>
    %c76 = arith.constant 76 : index
    %394 = memref.load %arg2[%c76] : memref<187xf32, #tpu.memory_space<smem>>
    %395 = vector.broadcast %394 : f32 to vector<16x16xf32>
    %396 = arith.mulf %395, %319 : vector<16x16xf32>
    %397 = arith.addf %393, %396 : vector<16x16xf32>
    %c77 = arith.constant 77 : index
    %398 = memref.load %arg2[%c77] : memref<187xf32, #tpu.memory_space<smem>>
    %399 = vector.broadcast %398 : f32 to vector<16x16xf32>
    %400 = arith.mulf %399, %321 : vector<16x16xf32>
    %401 = arith.addf %397, %400 : vector<16x16xf32>
    %c78 = arith.constant 78 : index
    %402 = memref.load %arg2[%c78] : memref<187xf32, #tpu.memory_space<smem>>
    %403 = vector.broadcast %402 : f32 to vector<16x16xf32>
    %404 = arith.mulf %403, %323 : vector<16x16xf32>
    %405 = arith.addf %401, %404 : vector<16x16xf32>
    %c79 = arith.constant 79 : index
    %406 = memref.load %arg2[%c79] : memref<187xf32, #tpu.memory_space<smem>>
    %407 = vector.broadcast %406 : f32 to vector<16x16xf32>
    %408 = arith.mulf %407, %325 : vector<16x16xf32>
    %409 = arith.addf %405, %408 : vector<16x16xf32>
    %c80 = arith.constant 80 : index
    %410 = memref.load %arg2[%c80] : memref<187xf32, #tpu.memory_space<smem>>
    %411 = vector.broadcast %410 : f32 to vector<16x16xf32>
    %412 = arith.mulf %411, %327 : vector<16x16xf32>
    %413 = arith.addf %409, %412 : vector<16x16xf32>
    %c81 = arith.constant 81 : index
    %414 = memref.load %arg2[%c81] : memref<187xf32, #tpu.memory_space<smem>>
    %415 = vector.broadcast %414 : f32 to vector<16x16xf32>
    %416 = arith.mulf %415, %329 : vector<16x16xf32>
    %417 = arith.addf %413, %416 : vector<16x16xf32>
    %cst_131 = arith.constant 0.000000e+00 : f32
    %418 = vector.broadcast %cst_131 : f32 to vector<16x16xf32>
    %c86 = arith.constant 86 : index
    %419 = memref.load %arg2[%c86] : memref<187xf32, #tpu.memory_space<smem>>
    %420 = vector.broadcast %419 : f32 to vector<16x16xf32>
    %421 = arith.addf %418, %420 : vector<16x16xf32>
    %c84 = arith.constant 84 : index
    %422 = memref.load %arg2[%c84] : memref<187xf32, #tpu.memory_space<smem>>
    %423 = vector.broadcast %422 : f32 to vector<16x16xf32>
    %424 = arith.mulf %423, %373 : vector<16x16xf32>
    %425 = arith.addf %421, %424 : vector<16x16xf32>
    %c85 = arith.constant 85 : index
    %426 = memref.load %arg2[%c85] : memref<187xf32, #tpu.memory_space<smem>>
    %427 = vector.broadcast %426 : f32 to vector<16x16xf32>
    %428 = arith.mulf %427, %417 : vector<16x16xf32>
    %429 = arith.addf %425, %428 : vector<16x16xf32>
    %c0_132 = arith.constant 0 : index
    %c6_133 = arith.constant 6 : index
    %c0_134 = arith.constant 0 : index
    %c0_135 = arith.constant 0 : index
    %430 = vector.load %arg3[%c0_132, %c6_133, %c0_134, %c0_135] : memref<1x10x16x16xf32, #tpu.memory_space<vmem>>, vector<1x1x16x16xf32>
    %431 = vector.shape_cast %430 : vector<1x1x16x16xf32> to vector<16x16xf32>
    %432 = vector.shape_cast %429 : vector<16x16xf32> to vector<1x1x16x16xf32>
    tpu.vector_store %arg3[%c0_132, %c6_133, %c0_134, %c0_135], %432 {strides = array<i32>} : memref<1x10x16x16xf32, #tpu.memory_space<vmem>>, vector<1x1x16x16xf32>,
    %c2_136 = arith.constant 2 : index
    %c1_137 = arith.constant 1 : index
    %c1_138 = arith.constant 1 : index
    %433 = vector.load %arg4[%c2_136, %c1_137, %c1_138] : memref<3x18x18xf32, #tpu.memory_space<vmem>>, vector<1x16x16xf32>
    %434 = vector.shape_cast %433 : vector<1x16x16xf32> to vector<16x16xf32>
    %435 = vector.shape_cast %429 : vector<16x16xf32> to vector<1x16x16xf32>
    tpu.vector_store %arg4[%c2_136, %c1_137, %c1_138], %435 {strides = array<i32>} : memref<3x18x18xf32, #tpu.memory_space<vmem>>, vector<1x16x16xf32>,
    %c0_139 = arith.constant 0 : index
    %c0_140 = arith.constant 0 : index
    %c0_141 = arith.constant 0 : index
    %436 = vector.load %arg4[%c0_139, %c0_140, %c0_141] : memref<3x18x18xf32, #tpu.memory_space<vmem>>, vector<1x14x18xf32>
    %437 = vector.shape_cast %436 : vector<1x14x18xf32> to vector<14x18xf32>
    %c0_142 = arith.constant 0 : index
    %c1_143 = arith.constant 1 : index
    %c0_144 = arith.constant 0 : index
    %438 = vector.load %arg4[%c0_142, %c1_143, %c0_144] : memref<3x18x18xf32, #tpu.memory_space<vmem>>, vector<1x14x18xf32>
    %439 = vector.shape_cast %438 : vector<1x14x18xf32> to vector<14x18xf32>
    %c0_145 = arith.constant 0 : index
    %c2_146 = arith.constant 2 : index
    %c0_147 = arith.constant 0 : index
    %440 = vector.load %arg4[%c0_145, %c2_146, %c0_147] : memref<3x18x18xf32, #tpu.memory_space<vmem>>, vector<1x14x18xf32>
    %441 = vector.shape_cast %440 : vector<1x14x18xf32> to vector<14x18xf32>
    %c0_148 = arith.constant 0 : index
    %c3_149 = arith.constant 3 : index
    %c0_150 = arith.constant 0 : index
    %442 = vector.load %arg4[%c0_148, %c3_149, %c0_150] : memref<3x18x18xf32, #tpu.memory_space<vmem>>, vector<1x14x18xf32>
    %443 = vector.shape_cast %442 : vector<1x14x18xf32> to vector<14x18xf32>
    %c0_151 = arith.constant 0 : index
    %c4_152 = arith.constant 4 : index
    %c0_153 = arith.constant 0 : index
    %444 = vector.load %arg4[%c0_151, %c4_152, %c0_153] : memref<3x18x18xf32, #tpu.memory_space<vmem>>, vector<1x14x18xf32>
    %445 = vector.shape_cast %444 : vector<1x14x18xf32> to vector<14x18xf32>
    %c1_154 = arith.constant 1 : index
    %c0_155 = arith.constant 0 : index
    %c0_156 = arith.constant 0 : index
    %446 = vector.load %arg4[%c1_154, %c0_155, %c0_156] : memref<3x18x18xf32, #tpu.memory_space<vmem>>, vector<1x14x18xf32>
    %447 = vector.shape_cast %446 : vector<1x14x18xf32> to vector<14x18xf32>
    %c1_157 = arith.constant 1 : index
    %c1_158 = arith.constant 1 : index
    %c0_159 = arith.constant 0 : index
    %448 = vector.load %arg4[%c1_157, %c1_158, %c0_159] : memref<3x18x18xf32, #tpu.memory_space<vmem>>, vector<1x14x18xf32>
    %449 = vector.shape_cast %448 : vector<1x14x18xf32> to vector<14x18xf32>
    %c1_160 = arith.constant 1 : index
    %c2_161 = arith.constant 2 : index
    %c0_162 = arith.constant 0 : index
    %450 = vector.load %arg4[%c1_160, %c2_161, %c0_162] : memref<3x18x18xf32, #tpu.memory_space<vmem>>, vector<1x14x18xf32>
    %451 = vector.shape_cast %450 : vector<1x14x18xf32> to vector<14x18xf32>
    %c1_163 = arith.constant 1 : index
    %c3_164 = arith.constant 3 : index
    %c0_165 = arith.constant 0 : index
    %452 = vector.load %arg4[%c1_163, %c3_164, %c0_165] : memref<3x18x18xf32, #tpu.memory_space<vmem>>, vector<1x14x18xf32>
    %453 = vector.shape_cast %452 : vector<1x14x18xf32> to vector<14x18xf32>
    %c1_166 = arith.constant 1 : index
    %c4_167 = arith.constant 4 : index
    %c0_168 = arith.constant 0 : index
    %454 = vector.load %arg4[%c1_166, %c4_167, %c0_168] : memref<3x18x18xf32, #tpu.memory_space<vmem>>, vector<1x14x18xf32>
    %455 = vector.shape_cast %454 : vector<1x14x18xf32> to vector<14x18xf32>
    %c2_169 = arith.constant 2 : index
    %c0_170 = arith.constant 0 : index
    %c0_171 = arith.constant 0 : index
    %456 = vector.load %arg4[%c2_169, %c0_170, %c0_171] : memref<3x18x18xf32, #tpu.memory_space<vmem>>, vector<1x14x18xf32>
    %457 = vector.shape_cast %456 : vector<1x14x18xf32> to vector<14x18xf32>
    %c2_172 = arith.constant 2 : index
    %c1_173 = arith.constant 1 : index
    %c0_174 = arith.constant 0 : index
    %458 = vector.load %arg4[%c2_172, %c1_173, %c0_174] : memref<3x18x18xf32, #tpu.memory_space<vmem>>, vector<1x14x18xf32>
    %459 = vector.shape_cast %458 : vector<1x14x18xf32> to vector<14x18xf32>
    %c2_175 = arith.constant 2 : index
    %c2_176 = arith.constant 2 : index
    %c0_177 = arith.constant 0 : index
    %460 = vector.load %arg4[%c2_175, %c2_176, %c0_177] : memref<3x18x18xf32, #tpu.memory_space<vmem>>, vector<1x14x18xf32>
    %461 = vector.shape_cast %460 : vector<1x14x18xf32> to vector<14x18xf32>
    %c2_178 = arith.constant 2 : index
    %c3_179 = arith.constant 3 : index
    %c0_180 = arith.constant 0 : index
    %462 = vector.load %arg4[%c2_178, %c3_179, %c0_180] : memref<3x18x18xf32, #tpu.memory_space<vmem>>, vector<1x14x18xf32>
    %463 = vector.shape_cast %462 : vector<1x14x18xf32> to vector<14x18xf32>
    %c2_181 = arith.constant 2 : index
    %c4_182 = arith.constant 4 : index
    %c0_183 = arith.constant 0 : index
    %464 = vector.load %arg4[%c2_181, %c4_182, %c0_183] : memref<3x18x18xf32, #tpu.memory_space<vmem>>, vector<1x14x18xf32>
    %465 = vector.shape_cast %464 : vector<1x14x18xf32> to vector<14x18xf32>
    %cst_184 = arith.constant 0.000000e+00 : f32
    %466 = vector.broadcast %cst_184 : f32 to vector<14x18xf32>
    %c132 = arith.constant 132 : index
    %467 = memref.load %arg2[%c132] : memref<187xf32, #tpu.memory_space<smem>>
    %468 = vector.broadcast %467 : f32 to vector<14x18xf32>
    %469 = arith.addf %466, %468 : vector<14x18xf32>
    %c87 = arith.constant 87 : index
    %470 = memref.load %arg2[%c87] : memref<187xf32, #tpu.memory_space<smem>>
    %471 = vector.broadcast %470 : f32 to vector<14x18xf32>
    %472 = arith.mulf %471, %437 : vector<14x18xf32>
    %473 = arith.addf %469, %472 : vector<14x18xf32>
    %c88 = arith.constant 88 : index
    %474 = memref.load %arg2[%c88] : memref<187xf32, #tpu.memory_space<smem>>
    %475 = vector.broadcast %474 : f32 to vector<14x18xf32>
    %476 = arith.mulf %475, %439 : vector<14x18xf32>
    %477 = arith.addf %473, %476 : vector<14x18xf32>
    %c89 = arith.constant 89 : index
    %478 = memref.load %arg2[%c89] : memref<187xf32, #tpu.memory_space<smem>>
    %479 = vector.broadcast %478 : f32 to vector<14x18xf32>
    %480 = arith.mulf %479, %441 : vector<14x18xf32>
    %481 = arith.addf %477, %480 : vector<14x18xf32>
    %c90 = arith.constant 90 : index
    %482 = memref.load %arg2[%c90] : memref<187xf32, #tpu.memory_space<smem>>
    %483 = vector.broadcast %482 : f32 to vector<14x18xf32>
    %484 = arith.mulf %483, %443 : vector<14x18xf32>
    %485 = arith.addf %481, %484 : vector<14x18xf32>
    %c91 = arith.constant 91 : index
    %486 = memref.load %arg2[%c91] : memref<187xf32, #tpu.memory_space<smem>>
    %487 = vector.broadcast %486 : f32 to vector<14x18xf32>
    %488 = arith.mulf %487, %445 : vector<14x18xf32>
    %489 = arith.addf %485, %488 : vector<14x18xf32>
    %c92 = arith.constant 92 : index
    %490 = memref.load %arg2[%c92] : memref<187xf32, #tpu.memory_space<smem>>
    %491 = vector.broadcast %490 : f32 to vector<14x18xf32>
    %492 = arith.mulf %491, %447 : vector<14x18xf32>
    %493 = arith.addf %489, %492 : vector<14x18xf32>
    %c93 = arith.constant 93 : index
    %494 = memref.load %arg2[%c93] : memref<187xf32, #tpu.memory_space<smem>>
    %495 = vector.broadcast %494 : f32 to vector<14x18xf32>
    %496 = arith.mulf %495, %449 : vector<14x18xf32>
    %497 = arith.addf %493, %496 : vector<14x18xf32>
    %c94 = arith.constant 94 : index
    %498 = memref.load %arg2[%c94] : memref<187xf32, #tpu.memory_space<smem>>
    %499 = vector.broadcast %498 : f32 to vector<14x18xf32>
    %500 = arith.mulf %499, %451 : vector<14x18xf32>
    %501 = arith.addf %497, %500 : vector<14x18xf32>
    %c95 = arith.constant 95 : index
    %502 = memref.load %arg2[%c95] : memref<187xf32, #tpu.memory_space<smem>>
    %503 = vector.broadcast %502 : f32 to vector<14x18xf32>
    %504 = arith.mulf %503, %453 : vector<14x18xf32>
    %505 = arith.addf %501, %504 : vector<14x18xf32>
    %c96 = arith.constant 96 : index
    %506 = memref.load %arg2[%c96] : memref<187xf32, #tpu.memory_space<smem>>
    %507 = vector.broadcast %506 : f32 to vector<14x18xf32>
    %508 = arith.mulf %507, %455 : vector<14x18xf32>
    %509 = arith.addf %505, %508 : vector<14x18xf32>
    %c97 = arith.constant 97 : index
    %510 = memref.load %arg2[%c97] : memref<187xf32, #tpu.memory_space<smem>>
    %511 = vector.broadcast %510 : f32 to vector<14x18xf32>
    %512 = arith.mulf %511, %457 : vector<14x18xf32>
    %513 = arith.addf %509, %512 : vector<14x18xf32>
    %c98 = arith.constant 98 : index
    %514 = memref.load %arg2[%c98] : memref<187xf32, #tpu.memory_space<smem>>
    %515 = vector.broadcast %514 : f32 to vector<14x18xf32>
    %516 = arith.mulf %515, %459 : vector<14x18xf32>
    %517 = arith.addf %513, %516 : vector<14x18xf32>
    %c99 = arith.constant 99 : index
    %518 = memref.load %arg2[%c99] : memref<187xf32, #tpu.memory_space<smem>>
    %519 = vector.broadcast %518 : f32 to vector<14x18xf32>
    %520 = arith.mulf %519, %461 : vector<14x18xf32>
    %521 = arith.addf %517, %520 : vector<14x18xf32>
    %c100 = arith.constant 100 : index
    %522 = memref.load %arg2[%c100] : memref<187xf32, #tpu.memory_space<smem>>
    %523 = vector.broadcast %522 : f32 to vector<14x18xf32>
    %524 = arith.mulf %523, %463 : vector<14x18xf32>
    %525 = arith.addf %521, %524 : vector<14x18xf32>
    %c101 = arith.constant 101 : index
    %526 = memref.load %arg2[%c101] : memref<187xf32, #tpu.memory_space<smem>>
    %527 = vector.broadcast %526 : f32 to vector<14x18xf32>
    %528 = arith.mulf %527, %465 : vector<14x18xf32>
    %529 = arith.addf %525, %528 : vector<14x18xf32>
    %c0_185 = arith.constant 0 : index
    %c1_186 = arith.constant 1 : index
    %c1_187 = arith.constant 1 : index
    %530 = vector.load %arg5[%c0_185, %c1_186, %c1_187] : memref<3x16x20xf32, #tpu.memory_space<vmem>>, vector<1x14x18xf32>
    %531 = vector.shape_cast %530 : vector<1x14x18xf32> to vector<14x18xf32>
    %532 = vector.shape_cast %529 : vector<14x18xf32> to vector<1x14x18xf32>
    tpu.vector_store %arg5[%c0_185, %c1_186, %c1_187], %532 {strides = array<i32>} : memref<3x16x20xf32, #tpu.memory_space<vmem>>, vector<1x14x18xf32>,
    %cst_188 = arith.constant 0.000000e+00 : f32
    %533 = vector.broadcast %cst_188 : f32 to vector<14x18xf32>
    %c133 = arith.constant 133 : index
    %534 = memref.load %arg2[%c133] : memref<187xf32, #tpu.memory_space<smem>>
    %535 = vector.broadcast %534 : f32 to vector<14x18xf32>
    %536 = arith.addf %533, %535 : vector<14x18xf32>
    %c102 = arith.constant 102 : index
    %537 = memref.load %arg2[%c102] : memref<187xf32, #tpu.memory_space<smem>>
    %538 = vector.broadcast %537 : f32 to vector<14x18xf32>
    %539 = arith.mulf %538, %437 : vector<14x18xf32>
    %540 = arith.addf %536, %539 : vector<14x18xf32>
    %c103 = arith.constant 103 : index
    %541 = memref.load %arg2[%c103] : memref<187xf32, #tpu.memory_space<smem>>
    %542 = vector.broadcast %541 : f32 to vector<14x18xf32>
    %543 = arith.mulf %542, %439 : vector<14x18xf32>
    %544 = arith.addf %540, %543 : vector<14x18xf32>
    %c104 = arith.constant 104 : index
    %545 = memref.load %arg2[%c104] : memref<187xf32, #tpu.memory_space<smem>>
    %546 = vector.broadcast %545 : f32 to vector<14x18xf32>
    %547 = arith.mulf %546, %441 : vector<14x18xf32>
    %548 = arith.addf %544, %547 : vector<14x18xf32>
    %c105 = arith.constant 105 : index
    %549 = memref.load %arg2[%c105] : memref<187xf32, #tpu.memory_space<smem>>
    %550 = vector.broadcast %549 : f32 to vector<14x18xf32>
    %551 = arith.mulf %550, %443 : vector<14x18xf32>
    %552 = arith.addf %548, %551 : vector<14x18xf32>
    %c106 = arith.constant 106 : index
    %553 = memref.load %arg2[%c106] : memref<187xf32, #tpu.memory_space<smem>>
    %554 = vector.broadcast %553 : f32 to vector<14x18xf32>
    %555 = arith.mulf %554, %445 : vector<14x18xf32>
    %556 = arith.addf %552, %555 : vector<14x18xf32>
    %c107 = arith.constant 107 : index
    %557 = memref.load %arg2[%c107] : memref<187xf32, #tpu.memory_space<smem>>
    %558 = vector.broadcast %557 : f32 to vector<14x18xf32>
    %559 = arith.mulf %558, %447 : vector<14x18xf32>
    %560 = arith.addf %556, %559 : vector<14x18xf32>
    %c108 = arith.constant 108 : index
    %561 = memref.load %arg2[%c108] : memref<187xf32, #tpu.memory_space<smem>>
    %562 = vector.broadcast %561 : f32 to vector<14x18xf32>
    %563 = arith.mulf %562, %449 : vector<14x18xf32>
    %564 = arith.addf %560, %563 : vector<14x18xf32>
    %c109 = arith.constant 109 : index
    %565 = memref.load %arg2[%c109] : memref<187xf32, #tpu.memory_space<smem>>
    %566 = vector.broadcast %565 : f32 to vector<14x18xf32>
    %567 = arith.mulf %566, %451 : vector<14x18xf32>
    %568 = arith.addf %564, %567 : vector<14x18xf32>
    %c110 = arith.constant 110 : index
    %569 = memref.load %arg2[%c110] : memref<187xf32, #tpu.memory_space<smem>>
    %570 = vector.broadcast %569 : f32 to vector<14x18xf32>
    %571 = arith.mulf %570, %453 : vector<14x18xf32>
    %572 = arith.addf %568, %571 : vector<14x18xf32>
    %c111 = arith.constant 111 : index
    %573 = memref.load %arg2[%c111] : memref<187xf32, #tpu.memory_space<smem>>
    %574 = vector.broadcast %573 : f32 to vector<14x18xf32>
    %575 = arith.mulf %574, %455 : vector<14x18xf32>
    %576 = arith.addf %572, %575 : vector<14x18xf32>
    %c112 = arith.constant 112 : index
    %577 = memref.load %arg2[%c112] : memref<187xf32, #tpu.memory_space<smem>>
    %578 = vector.broadcast %577 : f32 to vector<14x18xf32>
    %579 = arith.mulf %578, %457 : vector<14x18xf32>
    %580 = arith.addf %576, %579 : vector<14x18xf32>
    %c113 = arith.constant 113 : index
    %581 = memref.load %arg2[%c113] : memref<187xf32, #tpu.memory_space<smem>>
    %582 = vector.broadcast %581 : f32 to vector<14x18xf32>
    %583 = arith.mulf %582, %459 : vector<14x18xf32>
    %584 = arith.addf %580, %583 : vector<14x18xf32>
    %c114 = arith.constant 114 : index
    %585 = memref.load %arg2[%c114] : memref<187xf32, #tpu.memory_space<smem>>
    %586 = vector.broadcast %585 : f32 to vector<14x18xf32>
    %587 = arith.mulf %586, %461 : vector<14x18xf32>
    %588 = arith.addf %584, %587 : vector<14x18xf32>
    %c115 = arith.constant 115 : index
    %589 = memref.load %arg2[%c115] : memref<187xf32, #tpu.memory_space<smem>>
    %590 = vector.broadcast %589 : f32 to vector<14x18xf32>
    %591 = arith.mulf %590, %463 : vector<14x18xf32>
    %592 = arith.addf %588, %591 : vector<14x18xf32>
    %c116 = arith.constant 116 : index
    %593 = memref.load %arg2[%c116] : memref<187xf32, #tpu.memory_space<smem>>
    %594 = vector.broadcast %593 : f32 to vector<14x18xf32>
    %595 = arith.mulf %594, %465 : vector<14x18xf32>
    %596 = arith.addf %592, %595 : vector<14x18xf32>
    %c1_189 = arith.constant 1 : index
    %c1_190 = arith.constant 1 : index
    %c1_191 = arith.constant 1 : index
    %597 = vector.load %arg5[%c1_189, %c1_190, %c1_191] : memref<3x16x20xf32, #tpu.memory_space<vmem>>, vector<1x14x18xf32>
    %598 = vector.shape_cast %597 : vector<1x14x18xf32> to vector<14x18xf32>
    %599 = vector.shape_cast %596 : vector<14x18xf32> to vector<1x14x18xf32>
    tpu.vector_store %arg5[%c1_189, %c1_190, %c1_191], %599 {strides = array<i32>} : memref<3x16x20xf32, #tpu.memory_space<vmem>>, vector<1x14x18xf32>,
    %cst_192 = arith.constant 0.000000e+00 : f32
    %600 = vector.broadcast %cst_192 : f32 to vector<14x18xf32>
    %c134 = arith.constant 134 : index
    %601 = memref.load %arg2[%c134] : memref<187xf32, #tpu.memory_space<smem>>
    %602 = vector.broadcast %601 : f32 to vector<14x18xf32>
    %603 = arith.addf %600, %602 : vector<14x18xf32>
    %c117 = arith.constant 117 : index
    %604 = memref.load %arg2[%c117] : memref<187xf32, #tpu.memory_space<smem>>
    %605 = vector.broadcast %604 : f32 to vector<14x18xf32>
    %606 = arith.mulf %605, %437 : vector<14x18xf32>
    %607 = arith.addf %603, %606 : vector<14x18xf32>
    %c118 = arith.constant 118 : index
    %608 = memref.load %arg2[%c118] : memref<187xf32, #tpu.memory_space<smem>>
    %609 = vector.broadcast %608 : f32 to vector<14x18xf32>
    %610 = arith.mulf %609, %439 : vector<14x18xf32>
    %611 = arith.addf %607, %610 : vector<14x18xf32>
    %c119 = arith.constant 119 : index
    %612 = memref.load %arg2[%c119] : memref<187xf32, #tpu.memory_space<smem>>
    %613 = vector.broadcast %612 : f32 to vector<14x18xf32>
    %614 = arith.mulf %613, %441 : vector<14x18xf32>
    %615 = arith.addf %611, %614 : vector<14x18xf32>
    %c120 = arith.constant 120 : index
    %616 = memref.load %arg2[%c120] : memref<187xf32, #tpu.memory_space<smem>>
    %617 = vector.broadcast %616 : f32 to vector<14x18xf32>
    %618 = arith.mulf %617, %443 : vector<14x18xf32>
    %619 = arith.addf %615, %618 : vector<14x18xf32>
    %c121 = arith.constant 121 : index
    %620 = memref.load %arg2[%c121] : memref<187xf32, #tpu.memory_space<smem>>
    %621 = vector.broadcast %620 : f32 to vector<14x18xf32>
    %622 = arith.mulf %621, %445 : vector<14x18xf32>
    %623 = arith.addf %619, %622 : vector<14x18xf32>
    %c122 = arith.constant 122 : index
    %624 = memref.load %arg2[%c122] : memref<187xf32, #tpu.memory_space<smem>>
    %625 = vector.broadcast %624 : f32 to vector<14x18xf32>
    %626 = arith.mulf %625, %447 : vector<14x18xf32>
    %627 = arith.addf %623, %626 : vector<14x18xf32>
    %c123 = arith.constant 123 : index
    %628 = memref.load %arg2[%c123] : memref<187xf32, #tpu.memory_space<smem>>
    %629 = vector.broadcast %628 : f32 to vector<14x18xf32>
    %630 = arith.mulf %629, %449 : vector<14x18xf32>
    %631 = arith.addf %627, %630 : vector<14x18xf32>
    %c124 = arith.constant 124 : index
    %632 = memref.load %arg2[%c124] : memref<187xf32, #tpu.memory_space<smem>>
    %633 = vector.broadcast %632 : f32 to vector<14x18xf32>
    %634 = arith.mulf %633, %451 : vector<14x18xf32>
    %635 = arith.addf %631, %634 : vector<14x18xf32>
    %c125 = arith.constant 125 : index
    %636 = memref.load %arg2[%c125] : memref<187xf32, #tpu.memory_space<smem>>
    %637 = vector.broadcast %636 : f32 to vector<14x18xf32>
    %638 = arith.mulf %637, %453 : vector<14x18xf32>
    %639 = arith.addf %635, %638 : vector<14x18xf32>
    %c126 = arith.constant 126 : index
    %640 = memref.load %arg2[%c126] : memref<187xf32, #tpu.memory_space<smem>>
    %641 = vector.broadcast %640 : f32 to vector<14x18xf32>
    %642 = arith.mulf %641, %455 : vector<14x18xf32>
    %643 = arith.addf %639, %642 : vector<14x18xf32>
    %c127 = arith.constant 127 : index
    %644 = memref.load %arg2[%c127] : memref<187xf32, #tpu.memory_space<smem>>
    %645 = vector.broadcast %644 : f32 to vector<14x18xf32>
    %646 = arith.mulf %645, %457 : vector<14x18xf32>
    %647 = arith.addf %643, %646 : vector<14x18xf32>
    %c128 = arith.constant 128 : index
    %648 = memref.load %arg2[%c128] : memref<187xf32, #tpu.memory_space<smem>>
    %649 = vector.broadcast %648 : f32 to vector<14x18xf32>
    %650 = arith.mulf %649, %459 : vector<14x18xf32>
    %651 = arith.addf %647, %650 : vector<14x18xf32>
    %c129 = arith.constant 129 : index
    %652 = memref.load %arg2[%c129] : memref<187xf32, #tpu.memory_space<smem>>
    %653 = vector.broadcast %652 : f32 to vector<14x18xf32>
    %654 = arith.mulf %653, %461 : vector<14x18xf32>
    %655 = arith.addf %651, %654 : vector<14x18xf32>
    %c130 = arith.constant 130 : index
    %656 = memref.load %arg2[%c130] : memref<187xf32, #tpu.memory_space<smem>>
    %657 = vector.broadcast %656 : f32 to vector<14x18xf32>
    %658 = arith.mulf %657, %463 : vector<14x18xf32>
    %659 = arith.addf %655, %658 : vector<14x18xf32>
    %c131 = arith.constant 131 : index
    %660 = memref.load %arg2[%c131] : memref<187xf32, #tpu.memory_space<smem>>
    %661 = vector.broadcast %660 : f32 to vector<14x18xf32>
    %662 = arith.mulf %661, %465 : vector<14x18xf32>
    %663 = arith.addf %659, %662 : vector<14x18xf32>
    %c2_193 = arith.constant 2 : index
    %c1_194 = arith.constant 1 : index
    %c1_195 = arith.constant 1 : index
    %664 = vector.load %arg5[%c2_193, %c1_194, %c1_195] : memref<3x16x20xf32, #tpu.memory_space<vmem>>, vector<1x14x18xf32>
    %665 = vector.shape_cast %664 : vector<1x14x18xf32> to vector<14x18xf32>
    %666 = vector.shape_cast %663 : vector<14x18xf32> to vector<1x14x18xf32>
    tpu.vector_store %arg5[%c2_193, %c1_194, %c1_195], %666 {strides = array<i32>} : memref<3x16x20xf32, #tpu.memory_space<vmem>>, vector<1x14x18xf32>,
    %c0_196 = arith.constant 0 : index
    %c0_197 = arith.constant 0 : index
    %c0_198 = arith.constant 0 : index
    %667 = vector.load %arg5[%c0_196, %c0_197, %c0_198] : memref<3x16x20xf32, #tpu.memory_space<vmem>>, vector<1x16x16xf32>
    %668 = vector.shape_cast %667 : vector<1x16x16xf32> to vector<16x16xf32>
    %c0_199 = arith.constant 0 : index
    %c0_200 = arith.constant 0 : index
    %c1_201 = arith.constant 1 : index
    %669 = vector.load %arg5[%c0_199, %c0_200, %c1_201] : memref<3x16x20xf32, #tpu.memory_space<vmem>>, vector<1x16x16xf32>
    %670 = vector.shape_cast %669 : vector<1x16x16xf32> to vector<16x16xf32>
    %c0_202 = arith.constant 0 : index
    %c0_203 = arith.constant 0 : index
    %c2_204 = arith.constant 2 : index
    %671 = vector.load %arg5[%c0_202, %c0_203, %c2_204] : memref<3x16x20xf32, #tpu.memory_space<vmem>>, vector<1x16x16xf32>
    %672 = vector.shape_cast %671 : vector<1x16x16xf32> to vector<16x16xf32>
    %c0_205 = arith.constant 0 : index
    %c0_206 = arith.constant 0 : index
    %c3_207 = arith.constant 3 : index
    %673 = vector.load %arg5[%c0_205, %c0_206, %c3_207] : memref<3x16x20xf32, #tpu.memory_space<vmem>>, vector<1x16x16xf32>
    %674 = vector.shape_cast %673 : vector<1x16x16xf32> to vector<16x16xf32>
    %c0_208 = arith.constant 0 : index
    %c0_209 = arith.constant 0 : index
    %c4_210 = arith.constant 4 : index
    %675 = vector.load %arg5[%c0_208, %c0_209, %c4_210] : memref<3x16x20xf32, #tpu.memory_space<vmem>>, vector<1x16x16xf32>
    %676 = vector.shape_cast %675 : vector<1x16x16xf32> to vector<16x16xf32>
    %c1_211 = arith.constant 1 : index
    %c0_212 = arith.constant 0 : index
    %c0_213 = arith.constant 0 : index
    %677 = vector.load %arg5[%c1_211, %c0_212, %c0_213] : memref<3x16x20xf32, #tpu.memory_space<vmem>>, vector<1x16x16xf32>
    %678 = vector.shape_cast %677 : vector<1x16x16xf32> to vector<16x16xf32>
    %c1_214 = arith.constant 1 : index
    %c0_215 = arith.constant 0 : index
    %c1_216 = arith.constant 1 : index
    %679 = vector.load %arg5[%c1_214, %c0_215, %c1_216] : memref<3x16x20xf32, #tpu.memory_space<vmem>>, vector<1x16x16xf32>
    %680 = vector.shape_cast %679 : vector<1x16x16xf32> to vector<16x16xf32>
    %c1_217 = arith.constant 1 : index
    %c0_218 = arith.constant 0 : index
    %c2_219 = arith.constant 2 : index
    %681 = vector.load %arg5[%c1_217, %c0_218, %c2_219] : memref<3x16x20xf32, #tpu.memory_space<vmem>>, vector<1x16x16xf32>
    %682 = vector.shape_cast %681 : vector<1x16x16xf32> to vector<16x16xf32>
    %c1_220 = arith.constant 1 : index
    %c0_221 = arith.constant 0 : index
    %c3_222 = arith.constant 3 : index
    %683 = vector.load %arg5[%c1_220, %c0_221, %c3_222] : memref<3x16x20xf32, #tpu.memory_space<vmem>>, vector<1x16x16xf32>
    %684 = vector.shape_cast %683 : vector<1x16x16xf32> to vector<16x16xf32>
    %c1_223 = arith.constant 1 : index
    %c0_224 = arith.constant 0 : index
    %c4_225 = arith.constant 4 : index
    %685 = vector.load %arg5[%c1_223, %c0_224, %c4_225] : memref<3x16x20xf32, #tpu.memory_space<vmem>>, vector<1x16x16xf32>
    %686 = vector.shape_cast %685 : vector<1x16x16xf32> to vector<16x16xf32>
    %c2_226 = arith.constant 2 : index
    %c0_227 = arith.constant 0 : index
    %c0_228 = arith.constant 0 : index
    %687 = vector.load %arg5[%c2_226, %c0_227, %c0_228] : memref<3x16x20xf32, #tpu.memory_space<vmem>>, vector<1x16x16xf32>
    %688 = vector.shape_cast %687 : vector<1x16x16xf32> to vector<16x16xf32>
    %c2_229 = arith.constant 2 : index
    %c0_230 = arith.constant 0 : index
    %c1_231 = arith.constant 1 : index
    %689 = vector.load %arg5[%c2_229, %c0_230, %c1_231] : memref<3x16x20xf32, #tpu.memory_space<vmem>>, vector<1x16x16xf32>
    %690 = vector.shape_cast %689 : vector<1x16x16xf32> to vector<16x16xf32>
    %c2_232 = arith.constant 2 : index
    %c0_233 = arith.constant 0 : index
    %c2_234 = arith.constant 2 : index
    %691 = vector.load %arg5[%c2_232, %c0_233, %c2_234] : memref<3x16x20xf32, #tpu.memory_space<vmem>>, vector<1x16x16xf32>
    %692 = vector.shape_cast %691 : vector<1x16x16xf32> to vector<16x16xf32>
    %c2_235 = arith.constant 2 : index
    %c0_236 = arith.constant 0 : index
    %c3_237 = arith.constant 3 : index
    %693 = vector.load %arg5[%c2_235, %c0_236, %c3_237] : memref<3x16x20xf32, #tpu.memory_space<vmem>>, vector<1x16x16xf32>
    %694 = vector.shape_cast %693 : vector<1x16x16xf32> to vector<16x16xf32>
    %c2_238 = arith.constant 2 : index
    %c0_239 = arith.constant 0 : index
    %c4_240 = arith.constant 4 : index
    %695 = vector.load %arg5[%c2_238, %c0_239, %c4_240] : memref<3x16x20xf32, #tpu.memory_space<vmem>>, vector<1x16x16xf32>
    %696 = vector.shape_cast %695 : vector<1x16x16xf32> to vector<16x16xf32>
    %cst_241 = arith.constant 0.000000e+00 : f32
    %697 = vector.broadcast %cst_241 : f32 to vector<16x16xf32>
    %c180 = arith.constant 180 : index
    %698 = memref.load %arg2[%c180] : memref<187xf32, #tpu.memory_space<smem>>
    %699 = vector.broadcast %698 : f32 to vector<16x16xf32>
    %700 = arith.addf %697, %699 : vector<16x16xf32>
    %c135 = arith.constant 135 : index
    %701 = memref.load %arg2[%c135] : memref<187xf32, #tpu.memory_space<smem>>
    %702 = vector.broadcast %701 : f32 to vector<16x16xf32>
    %703 = arith.mulf %702, %668 : vector<16x16xf32>
    %704 = arith.addf %700, %703 : vector<16x16xf32>
    %c136 = arith.constant 136 : index
    %705 = memref.load %arg2[%c136] : memref<187xf32, #tpu.memory_space<smem>>
    %706 = vector.broadcast %705 : f32 to vector<16x16xf32>
    %707 = arith.mulf %706, %670 : vector<16x16xf32>
    %708 = arith.addf %704, %707 : vector<16x16xf32>
    %c137 = arith.constant 137 : index
    %709 = memref.load %arg2[%c137] : memref<187xf32, #tpu.memory_space<smem>>
    %710 = vector.broadcast %709 : f32 to vector<16x16xf32>
    %711 = arith.mulf %710, %672 : vector<16x16xf32>
    %712 = arith.addf %708, %711 : vector<16x16xf32>
    %c138 = arith.constant 138 : index
    %713 = memref.load %arg2[%c138] : memref<187xf32, #tpu.memory_space<smem>>
    %714 = vector.broadcast %713 : f32 to vector<16x16xf32>
    %715 = arith.mulf %714, %674 : vector<16x16xf32>
    %716 = arith.addf %712, %715 : vector<16x16xf32>
    %c139 = arith.constant 139 : index
    %717 = memref.load %arg2[%c139] : memref<187xf32, #tpu.memory_space<smem>>
    %718 = vector.broadcast %717 : f32 to vector<16x16xf32>
    %719 = arith.mulf %718, %676 : vector<16x16xf32>
    %720 = arith.addf %716, %719 : vector<16x16xf32>
    %c140 = arith.constant 140 : index
    %721 = memref.load %arg2[%c140] : memref<187xf32, #tpu.memory_space<smem>>
    %722 = vector.broadcast %721 : f32 to vector<16x16xf32>
    %723 = arith.mulf %722, %678 : vector<16x16xf32>
    %724 = arith.addf %720, %723 : vector<16x16xf32>
    %c141 = arith.constant 141 : index
    %725 = memref.load %arg2[%c141] : memref<187xf32, #tpu.memory_space<smem>>
    %726 = vector.broadcast %725 : f32 to vector<16x16xf32>
    %727 = arith.mulf %726, %680 : vector<16x16xf32>
    %728 = arith.addf %724, %727 : vector<16x16xf32>
    %c142 = arith.constant 142 : index
    %729 = memref.load %arg2[%c142] : memref<187xf32, #tpu.memory_space<smem>>
    %730 = vector.broadcast %729 : f32 to vector<16x16xf32>
    %731 = arith.mulf %730, %682 : vector<16x16xf32>
    %732 = arith.addf %728, %731 : vector<16x16xf32>
    %c143 = arith.constant 143 : index
    %733 = memref.load %arg2[%c143] : memref<187xf32, #tpu.memory_space<smem>>
    %734 = vector.broadcast %733 : f32 to vector<16x16xf32>
    %735 = arith.mulf %734, %684 : vector<16x16xf32>
    %736 = arith.addf %732, %735 : vector<16x16xf32>
    %c144 = arith.constant 144 : index
    %737 = memref.load %arg2[%c144] : memref<187xf32, #tpu.memory_space<smem>>
    %738 = vector.broadcast %737 : f32 to vector<16x16xf32>
    %739 = arith.mulf %738, %686 : vector<16x16xf32>
    %740 = arith.addf %736, %739 : vector<16x16xf32>
    %c145 = arith.constant 145 : index
    %741 = memref.load %arg2[%c145] : memref<187xf32, #tpu.memory_space<smem>>
    %742 = vector.broadcast %741 : f32 to vector<16x16xf32>
    %743 = arith.mulf %742, %688 : vector<16x16xf32>
    %744 = arith.addf %740, %743 : vector<16x16xf32>
    %c146 = arith.constant 146 : index
    %745 = memref.load %arg2[%c146] : memref<187xf32, #tpu.memory_space<smem>>
    %746 = vector.broadcast %745 : f32 to vector<16x16xf32>
    %747 = arith.mulf %746, %690 : vector<16x16xf32>
    %748 = arith.addf %744, %747 : vector<16x16xf32>
    %c147 = arith.constant 147 : index
    %749 = memref.load %arg2[%c147] : memref<187xf32, #tpu.memory_space<smem>>
    %750 = vector.broadcast %749 : f32 to vector<16x16xf32>
    %751 = arith.mulf %750, %692 : vector<16x16xf32>
    %752 = arith.addf %748, %751 : vector<16x16xf32>
    %c148 = arith.constant 148 : index
    %753 = memref.load %arg2[%c148] : memref<187xf32, #tpu.memory_space<smem>>
    %754 = vector.broadcast %753 : f32 to vector<16x16xf32>
    %755 = arith.mulf %754, %694 : vector<16x16xf32>
    %756 = arith.addf %752, %755 : vector<16x16xf32>
    %c149 = arith.constant 149 : index
    %757 = memref.load %arg2[%c149] : memref<187xf32, #tpu.memory_space<smem>>
    %758 = vector.broadcast %757 : f32 to vector<16x16xf32>
    %759 = arith.mulf %758, %696 : vector<16x16xf32>
    %760 = arith.addf %756, %759 : vector<16x16xf32>
    %cst_242 = arith.constant 0.000000e+00 : f32
    %761 = vector.broadcast %cst_242 : f32 to vector<16x16xf32>
    %c181 = arith.constant 181 : index
    %762 = memref.load %arg2[%c181] : memref<187xf32, #tpu.memory_space<smem>>
    %763 = vector.broadcast %762 : f32 to vector<16x16xf32>
    %764 = arith.addf %761, %763 : vector<16x16xf32>
    %c150 = arith.constant 150 : index
    %765 = memref.load %arg2[%c150] : memref<187xf32, #tpu.memory_space<smem>>
    %766 = vector.broadcast %765 : f32 to vector<16x16xf32>
    %767 = arith.mulf %766, %668 : vector<16x16xf32>
    %768 = arith.addf %764, %767 : vector<16x16xf32>
    %c151 = arith.constant 151 : index
    %769 = memref.load %arg2[%c151] : memref<187xf32, #tpu.memory_space<smem>>
    %770 = vector.broadcast %769 : f32 to vector<16x16xf32>
    %771 = arith.mulf %770, %670 : vector<16x16xf32>
    %772 = arith.addf %768, %771 : vector<16x16xf32>
    %c152 = arith.constant 152 : index
    %773 = memref.load %arg2[%c152] : memref<187xf32, #tpu.memory_space<smem>>
    %774 = vector.broadcast %773 : f32 to vector<16x16xf32>
    %775 = arith.mulf %774, %672 : vector<16x16xf32>
    %776 = arith.addf %772, %775 : vector<16x16xf32>
    %c153 = arith.constant 153 : index
    %777 = memref.load %arg2[%c153] : memref<187xf32, #tpu.memory_space<smem>>
    %778 = vector.broadcast %777 : f32 to vector<16x16xf32>
    %779 = arith.mulf %778, %674 : vector<16x16xf32>
    %780 = arith.addf %776, %779 : vector<16x16xf32>
    %c154 = arith.constant 154 : index
    %781 = memref.load %arg2[%c154] : memref<187xf32, #tpu.memory_space<smem>>
    %782 = vector.broadcast %781 : f32 to vector<16x16xf32>
    %783 = arith.mulf %782, %676 : vector<16x16xf32>
    %784 = arith.addf %780, %783 : vector<16x16xf32>
    %c155 = arith.constant 155 : index
    %785 = memref.load %arg2[%c155] : memref<187xf32, #tpu.memory_space<smem>>
    %786 = vector.broadcast %785 : f32 to vector<16x16xf32>
    %787 = arith.mulf %786, %678 : vector<16x16xf32>
    %788 = arith.addf %784, %787 : vector<16x16xf32>
    %c156 = arith.constant 156 : index
    %789 = memref.load %arg2[%c156] : memref<187xf32, #tpu.memory_space<smem>>
    %790 = vector.broadcast %789 : f32 to vector<16x16xf32>
    %791 = arith.mulf %790, %680 : vector<16x16xf32>
    %792 = arith.addf %788, %791 : vector<16x16xf32>
    %c157 = arith.constant 157 : index
    %793 = memref.load %arg2[%c157] : memref<187xf32, #tpu.memory_space<smem>>
    %794 = vector.broadcast %793 : f32 to vector<16x16xf32>
    %795 = arith.mulf %794, %682 : vector<16x16xf32>
    %796 = arith.addf %792, %795 : vector<16x16xf32>
    %c158 = arith.constant 158 : index
    %797 = memref.load %arg2[%c158] : memref<187xf32, #tpu.memory_space<smem>>
    %798 = vector.broadcast %797 : f32 to vector<16x16xf32>
    %799 = arith.mulf %798, %684 : vector<16x16xf32>
    %800 = arith.addf %796, %799 : vector<16x16xf32>
    %c159 = arith.constant 159 : index
    %801 = memref.load %arg2[%c159] : memref<187xf32, #tpu.memory_space<smem>>
    %802 = vector.broadcast %801 : f32 to vector<16x16xf32>
    %803 = arith.mulf %802, %686 : vector<16x16xf32>
    %804 = arith.addf %800, %803 : vector<16x16xf32>
    %c160 = arith.constant 160 : index
    %805 = memref.load %arg2[%c160] : memref<187xf32, #tpu.memory_space<smem>>
    %806 = vector.broadcast %805 : f32 to vector<16x16xf32>
    %807 = arith.mulf %806, %688 : vector<16x16xf32>
    %808 = arith.addf %804, %807 : vector<16x16xf32>
    %c161 = arith.constant 161 : index
    %809 = memref.load %arg2[%c161] : memref<187xf32, #tpu.memory_space<smem>>
    %810 = vector.broadcast %809 : f32 to vector<16x16xf32>
    %811 = arith.mulf %810, %690 : vector<16x16xf32>
    %812 = arith.addf %808, %811 : vector<16x16xf32>
    %c162 = arith.constant 162 : index
    %813 = memref.load %arg2[%c162] : memref<187xf32, #tpu.memory_space<smem>>
    %814 = vector.broadcast %813 : f32 to vector<16x16xf32>
    %815 = arith.mulf %814, %692 : vector<16x16xf32>
    %816 = arith.addf %812, %815 : vector<16x16xf32>
    %c163 = arith.constant 163 : index
    %817 = memref.load %arg2[%c163] : memref<187xf32, #tpu.memory_space<smem>>
    %818 = vector.broadcast %817 : f32 to vector<16x16xf32>
    %819 = arith.mulf %818, %694 : vector<16x16xf32>
    %820 = arith.addf %816, %819 : vector<16x16xf32>
    %c164 = arith.constant 164 : index
    %821 = memref.load %arg2[%c164] : memref<187xf32, #tpu.memory_space<smem>>
    %822 = vector.broadcast %821 : f32 to vector<16x16xf32>
    %823 = arith.mulf %822, %696 : vector<16x16xf32>
    %824 = arith.addf %820, %823 : vector<16x16xf32>
    %cst_243 = arith.constant 0.000000e+00 : f32
    %825 = vector.broadcast %cst_243 : f32 to vector<16x16xf32>
    %c182 = arith.constant 182 : index
    %826 = memref.load %arg2[%c182] : memref<187xf32, #tpu.memory_space<smem>>
    %827 = vector.broadcast %826 : f32 to vector<16x16xf32>
    %828 = arith.addf %825, %827 : vector<16x16xf32>
    %c165 = arith.constant 165 : index
    %829 = memref.load %arg2[%c165] : memref<187xf32, #tpu.memory_space<smem>>
    %830 = vector.broadcast %829 : f32 to vector<16x16xf32>
    %831 = arith.mulf %830, %668 : vector<16x16xf32>
    %832 = arith.addf %828, %831 : vector<16x16xf32>
    %c166 = arith.constant 166 : index
    %833 = memref.load %arg2[%c166] : memref<187xf32, #tpu.memory_space<smem>>
    %834 = vector.broadcast %833 : f32 to vector<16x16xf32>
    %835 = arith.mulf %834, %670 : vector<16x16xf32>
    %836 = arith.addf %832, %835 : vector<16x16xf32>
    %c167 = arith.constant 167 : index
    %837 = memref.load %arg2[%c167] : memref<187xf32, #tpu.memory_space<smem>>
    %838 = vector.broadcast %837 : f32 to vector<16x16xf32>
    %839 = arith.mulf %838, %672 : vector<16x16xf32>
    %840 = arith.addf %836, %839 : vector<16x16xf32>
    %c168 = arith.constant 168 : index
    %841 = memref.load %arg2[%c168] : memref<187xf32, #tpu.memory_space<smem>>
    %842 = vector.broadcast %841 : f32 to vector<16x16xf32>
    %843 = arith.mulf %842, %674 : vector<16x16xf32>
    %844 = arith.addf %840, %843 : vector<16x16xf32>
    %c169 = arith.constant 169 : index
    %845 = memref.load %arg2[%c169] : memref<187xf32, #tpu.memory_space<smem>>
    %846 = vector.broadcast %845 : f32 to vector<16x16xf32>
    %847 = arith.mulf %846, %676 : vector<16x16xf32>
    %848 = arith.addf %844, %847 : vector<16x16xf32>
    %c170 = arith.constant 170 : index
    %849 = memref.load %arg2[%c170] : memref<187xf32, #tpu.memory_space<smem>>
    %850 = vector.broadcast %849 : f32 to vector<16x16xf32>
    %851 = arith.mulf %850, %678 : vector<16x16xf32>
    %852 = arith.addf %848, %851 : vector<16x16xf32>
    %c171 = arith.constant 171 : index
    %853 = memref.load %arg2[%c171] : memref<187xf32, #tpu.memory_space<smem>>
    %854 = vector.broadcast %853 : f32 to vector<16x16xf32>
    %855 = arith.mulf %854, %680 : vector<16x16xf32>
    %856 = arith.addf %852, %855 : vector<16x16xf32>
    %c172 = arith.constant 172 : index
    %857 = memref.load %arg2[%c172] : memref<187xf32, #tpu.memory_space<smem>>
    %858 = vector.broadcast %857 : f32 to vector<16x16xf32>
    %859 = arith.mulf %858, %682 : vector<16x16xf32>
    %860 = arith.addf %856, %859 : vector<16x16xf32>
    %c173 = arith.constant 173 : index
    %861 = memref.load %arg2[%c173] : memref<187xf32, #tpu.memory_space<smem>>
    %862 = vector.broadcast %861 : f32 to vector<16x16xf32>
    %863 = arith.mulf %862, %684 : vector<16x16xf32>
    %864 = arith.addf %860, %863 : vector<16x16xf32>
    %c174 = arith.constant 174 : index
    %865 = memref.load %arg2[%c174] : memref<187xf32, #tpu.memory_space<smem>>
    %866 = vector.broadcast %865 : f32 to vector<16x16xf32>
    %867 = arith.mulf %866, %686 : vector<16x16xf32>
    %868 = arith.addf %864, %867 : vector<16x16xf32>
    %c175 = arith.constant 175 : index
    %869 = memref.load %arg2[%c175] : memref<187xf32, #tpu.memory_space<smem>>
    %870 = vector.broadcast %869 : f32 to vector<16x16xf32>
    %871 = arith.mulf %870, %688 : vector<16x16xf32>
    %872 = arith.addf %868, %871 : vector<16x16xf32>
    %c176 = arith.constant 176 : index
    %873 = memref.load %arg2[%c176] : memref<187xf32, #tpu.memory_space<smem>>
    %874 = vector.broadcast %873 : f32 to vector<16x16xf32>
    %875 = arith.mulf %874, %690 : vector<16x16xf32>
    %876 = arith.addf %872, %875 : vector<16x16xf32>
    %c177 = arith.constant 177 : index
    %877 = memref.load %arg2[%c177] : memref<187xf32, #tpu.memory_space<smem>>
    %878 = vector.broadcast %877 : f32 to vector<16x16xf32>
    %879 = arith.mulf %878, %692 : vector<16x16xf32>
    %880 = arith.addf %876, %879 : vector<16x16xf32>
    %c178 = arith.constant 178 : index
    %881 = memref.load %arg2[%c178] : memref<187xf32, #tpu.memory_space<smem>>
    %882 = vector.broadcast %881 : f32 to vector<16x16xf32>
    %883 = arith.mulf %882, %694 : vector<16x16xf32>
    %884 = arith.addf %880, %883 : vector<16x16xf32>
    %c179 = arith.constant 179 : index
    %885 = memref.load %arg2[%c179] : memref<187xf32, #tpu.memory_space<smem>>
    %886 = vector.broadcast %885 : f32 to vector<16x16xf32>
    %887 = arith.mulf %886, %696 : vector<16x16xf32>
    %888 = arith.addf %884, %887 : vector<16x16xf32>
    %cst_244 = arith.constant 0.000000e+00 : f32
    %889 = vector.broadcast %cst_244 : f32 to vector<16x16xf32>
    %c186 = arith.constant 186 : index
    %890 = memref.load %arg2[%c186] : memref<187xf32, #tpu.memory_space<smem>>
    %891 = vector.broadcast %890 : f32 to vector<16x16xf32>
    %892 = arith.addf %889, %891 : vector<16x16xf32>
    %c183 = arith.constant 183 : index
    %893 = memref.load %arg2[%c183] : memref<187xf32, #tpu.memory_space<smem>>
    %894 = vector.broadcast %893 : f32 to vector<16x16xf32>
    %895 = arith.mulf %894, %760 : vector<16x16xf32>
    %896 = arith.addf %892, %895 : vector<16x16xf32>
    %c184 = arith.constant 184 : index
    %897 = memref.load %arg2[%c184] : memref<187xf32, #tpu.memory_space<smem>>
    %898 = vector.broadcast %897 : f32 to vector<16x16xf32>
    %899 = arith.mulf %898, %824 : vector<16x16xf32>
    %900 = arith.addf %896, %899 : vector<16x16xf32>
    %c185 = arith.constant 185 : index
    %901 = memref.load %arg2[%c185] : memref<187xf32, #tpu.memory_space<smem>>
    %902 = vector.broadcast %901 : f32 to vector<16x16xf32>
    %903 = arith.mulf %902, %888 : vector<16x16xf32>
    %904 = arith.addf %900, %903 : vector<16x16xf32>
    %c0_245 = arith.constant 0 : index
    %c7_246 = arith.constant 7 : index
    %c0_247 = arith.constant 0 : index
    %c0_248 = arith.constant 0 : index
    %905 = vector.load %arg3[%c0_245, %c7_246, %c0_247, %c0_248] : memref<1x10x16x16xf32, #tpu.memory_space<vmem>>, vector<1x1x16x16xf32>
    %906 = vector.shape_cast %905 : vector<1x1x16x16xf32> to vector<16x16xf32>
    %907 = vector.shape_cast %904 : vector<16x16xf32> to vector<1x1x16x16xf32>
    tpu.vector_store %arg3[%c0_245, %c7_246, %c0_247, %c0_248], %907 {strides = array<i32>} : memref<1x10x16x16xf32, #tpu.memory_space<vmem>>, vector<1x1x16x16xf32>,
    %c2_249 = arith.constant 2 : index
    %c1_250 = arith.constant 1 : index
    %c1_251 = arith.constant 1 : index
    %908 = vector.load %arg4[%c2_249, %c1_250, %c1_251] : memref<3x18x18xf32, #tpu.memory_space<vmem>>, vector<1x16x16xf32>
    %909 = vector.shape_cast %908 : vector<1x16x16xf32> to vector<16x16xf32>
    %910 = vector.shape_cast %904 : vector<16x16xf32> to vector<1x16x16xf32>
    tpu.vector_store %arg4[%c2_249, %c1_250, %c1_251], %910 {strides = array<i32>} : memref<3x18x18xf32, #tpu.memory_space<vmem>>, vector<1x16x16xf32>,
    %c0_252 = arith.constant 0 : index
    %c0_253 = arith.constant 0 : index
    %c0_254 = arith.constant 0 : index
    %911 = vector.load %arg4[%c0_252, %c0_253, %c0_254] : memref<3x18x18xf32, #tpu.memory_space<vmem>>, vector<1x14x18xf32>
    %912 = vector.shape_cast %911 : vector<1x14x18xf32> to vector<14x18xf32>
    %c0_255 = arith.constant 0 : index
    %c1_256 = arith.constant 1 : index
    %c0_257 = arith.constant 0 : index
    %913 = vector.load %arg4[%c0_255, %c1_256, %c0_257] : memref<3x18x18xf32, #tpu.memory_space<vmem>>, vector<1x14x18xf32>
    %914 = vector.shape_cast %913 : vector<1x14x18xf32> to vector<14x18xf32>
    %c0_258 = arith.constant 0 : index
    %c2_259 = arith.constant 2 : index
    %c0_260 = arith.constant 0 : index
    %915 = vector.load %arg4[%c0_258, %c2_259, %c0_260] : memref<3x18x18xf32, #tpu.memory_space<vmem>>, vector<1x14x18xf32>
    %916 = vector.shape_cast %915 : vector<1x14x18xf32> to vector<14x18xf32>
    %c0_261 = arith.constant 0 : index
    %c3_262 = arith.constant 3 : index
    %c0_263 = arith.constant 0 : index
    %917 = vector.load %arg4[%c0_261, %c3_262, %c0_263] : memref<3x18x18xf32, #tpu.memory_space<vmem>>, vector<1x14x18xf32>
    %918 = vector.shape_cast %917 : vector<1x14x18xf32> to vector<14x18xf32>
    %c0_264 = arith.constant 0 : index
    %c4_265 = arith.constant 4 : index
    %c0_266 = arith.constant 0 : index
    %919 = vector.load %arg4[%c0_264, %c4_265, %c0_266] : memref<3x18x18xf32, #tpu.memory_space<vmem>>, vector<1x14x18xf32>
    %920 = vector.shape_cast %919 : vector<1x14x18xf32> to vector<14x18xf32>
    %c1_267 = arith.constant 1 : index
    %c0_268 = arith.constant 0 : index
    %c0_269 = arith.constant 0 : index
    %921 = vector.load %arg4[%c1_267, %c0_268, %c0_269] : memref<3x18x18xf32, #tpu.memory_space<vmem>>, vector<1x14x18xf32>
    %922 = vector.shape_cast %921 : vector<1x14x18xf32> to vector<14x18xf32>
    %c1_270 = arith.constant 1 : index
    %c1_271 = arith.constant 1 : index
    %c0_272 = arith.constant 0 : index
    %923 = vector.load %arg4[%c1_270, %c1_271, %c0_272] : memref<3x18x18xf32, #tpu.memory_space<vmem>>, vector<1x14x18xf32>
    %924 = vector.shape_cast %923 : vector<1x14x18xf32> to vector<14x18xf32>
    %c1_273 = arith.constant 1 : index
    %c2_274 = arith.constant 2 : index
    %c0_275 = arith.constant 0 : index
    %925 = vector.load %arg4[%c1_273, %c2_274, %c0_275] : memref<3x18x18xf32, #tpu.memory_space<vmem>>, vector<1x14x18xf32>
    %926 = vector.shape_cast %925 : vector<1x14x18xf32> to vector<14x18xf32>
    %c1_276 = arith.constant 1 : index
    %c3_277 = arith.constant 3 : index
    %c0_278 = arith.constant 0 : index
    %927 = vector.load %arg4[%c1_276, %c3_277, %c0_278] : memref<3x18x18xf32, #tpu.memory_space<vmem>>, vector<1x14x18xf32>
    %928 = vector.shape_cast %927 : vector<1x14x18xf32> to vector<14x18xf32>
    %c1_279 = arith.constant 1 : index
    %c4_280 = arith.constant 4 : index
    %c0_281 = arith.constant 0 : index
    %929 = vector.load %arg4[%c1_279, %c4_280, %c0_281] : memref<3x18x18xf32, #tpu.memory_space<vmem>>, vector<1x14x18xf32>
    %930 = vector.shape_cast %929 : vector<1x14x18xf32> to vector<14x18xf32>
    %c2_282 = arith.constant 2 : index
    %c0_283 = arith.constant 0 : index
    %c0_284 = arith.constant 0 : index
    %931 = vector.load %arg4[%c2_282, %c0_283, %c0_284] : memref<3x18x18xf32, #tpu.memory_space<vmem>>, vector<1x14x18xf32>
    %932 = vector.shape_cast %931 : vector<1x14x18xf32> to vector<14x18xf32>
    %c2_285 = arith.constant 2 : index
    %c1_286 = arith.constant 1 : index
    %c0_287 = arith.constant 0 : index
    %933 = vector.load %arg4[%c2_285, %c1_286, %c0_287] : memref<3x18x18xf32, #tpu.memory_space<vmem>>, vector<1x14x18xf32>
    %934 = vector.shape_cast %933 : vector<1x14x18xf32> to vector<14x18xf32>
    %c2_288 = arith.constant 2 : index
    %c2_289 = arith.constant 2 : index
    %c0_290 = arith.constant 0 : index
    %935 = vector.load %arg4[%c2_288, %c2_289, %c0_290] : memref<3x18x18xf32, #tpu.memory_space<vmem>>, vector<1x14x18xf32>
    %936 = vector.shape_cast %935 : vector<1x14x18xf32> to vector<14x18xf32>
    %c2_291 = arith.constant 2 : index
    %c3_292 = arith.constant 3 : index
    %c0_293 = arith.constant 0 : index
    %937 = vector.load %arg4[%c2_291, %c3_292, %c0_293] : memref<3x18x18xf32, #tpu.memory_space<vmem>>, vector<1x14x18xf32>
    %938 = vector.shape_cast %937 : vector<1x14x18xf32> to vector<14x18xf32>
    %c2_294 = arith.constant 2 : index
    %c4_295 = arith.constant 4 : index
    %c0_296 = arith.constant 0 : index
    %939 = vector.load %arg4[%c2_294, %c4_295, %c0_296] : memref<3x18x18xf32, #tpu.memory_space<vmem>>, vector<1x14x18xf32>
    %940 = vector.shape_cast %939 : vector<1x14x18xf32> to vector<14x18xf32>
    %cst_297 = arith.constant 0.000000e+00 : f32
    %941 = vector.broadcast %cst_297 : f32 to vector<14x18xf32>
    %c132_298 = arith.constant 132 : index
    %942 = memref.load %arg2[%c132_298] : memref<187xf32, #tpu.memory_space<smem>>
    %943 = vector.broadcast %942 : f32 to vector<14x18xf32>
    %944 = arith.addf %941, %943 : vector<14x18xf32>
    %c87_299 = arith.constant 87 : index
    %945 = memref.load %arg2[%c87_299] : memref<187xf32, #tpu.memory_space<smem>>
    %946 = vector.broadcast %945 : f32 to vector<14x18xf32>
    %947 = arith.mulf %946, %912 : vector<14x18xf32>
    %948 = arith.addf %944, %947 : vector<14x18xf32>
    %c88_300 = arith.constant 88 : index
    %949 = memref.load %arg2[%c88_300] : memref<187xf32, #tpu.memory_space<smem>>
    %950 = vector.broadcast %949 : f32 to vector<14x18xf32>
    %951 = arith.mulf %950, %914 : vector<14x18xf32>
    %952 = arith.addf %948, %951 : vector<14x18xf32>
    %c89_301 = arith.constant 89 : index
    %953 = memref.load %arg2[%c89_301] : memref<187xf32, #tpu.memory_space<smem>>
    %954 = vector.broadcast %953 : f32 to vector<14x18xf32>
    %955 = arith.mulf %954, %916 : vector<14x18xf32>
    %956 = arith.addf %952, %955 : vector<14x18xf32>
    %c90_302 = arith.constant 90 : index
    %957 = memref.load %arg2[%c90_302] : memref<187xf32, #tpu.memory_space<smem>>
    %958 = vector.broadcast %957 : f32 to vector<14x18xf32>
    %959 = arith.mulf %958, %918 : vector<14x18xf32>
    %960 = arith.addf %956, %959 : vector<14x18xf32>
    %c91_303 = arith.constant 91 : index
    %961 = memref.load %arg2[%c91_303] : memref<187xf32, #tpu.memory_space<smem>>
    %962 = vector.broadcast %961 : f32 to vector<14x18xf32>
    %963 = arith.mulf %962, %920 : vector<14x18xf32>
    %964 = arith.addf %960, %963 : vector<14x18xf32>
    %c92_304 = arith.constant 92 : index
    %965 = memref.load %arg2[%c92_304] : memref<187xf32, #tpu.memory_space<smem>>
    %966 = vector.broadcast %965 : f32 to vector<14x18xf32>
    %967 = arith.mulf %966, %922 : vector<14x18xf32>
    %968 = arith.addf %964, %967 : vector<14x18xf32>
    %c93_305 = arith.constant 93 : index
    %969 = memref.load %arg2[%c93_305] : memref<187xf32, #tpu.memory_space<smem>>
    %970 = vector.broadcast %969 : f32 to vector<14x18xf32>
    %971 = arith.mulf %970, %924 : vector<14x18xf32>
    %972 = arith.addf %968, %971 : vector<14x18xf32>
    %c94_306 = arith.constant 94 : index
    %973 = memref.load %arg2[%c94_306] : memref<187xf32, #tpu.memory_space<smem>>
    %974 = vector.broadcast %973 : f32 to vector<14x18xf32>
    %975 = arith.mulf %974, %926 : vector<14x18xf32>
    %976 = arith.addf %972, %975 : vector<14x18xf32>
    %c95_307 = arith.constant 95 : index
    %977 = memref.load %arg2[%c95_307] : memref<187xf32, #tpu.memory_space<smem>>
    %978 = vector.broadcast %977 : f32 to vector<14x18xf32>
    %979 = arith.mulf %978, %928 : vector<14x18xf32>
    %980 = arith.addf %976, %979 : vector<14x18xf32>
    %c96_308 = arith.constant 96 : index
    %981 = memref.load %arg2[%c96_308] : memref<187xf32, #tpu.memory_space<smem>>
    %982 = vector.broadcast %981 : f32 to vector<14x18xf32>
    %983 = arith.mulf %982, %930 : vector<14x18xf32>
    %984 = arith.addf %980, %983 : vector<14x18xf32>
    %c97_309 = arith.constant 97 : index
    %985 = memref.load %arg2[%c97_309] : memref<187xf32, #tpu.memory_space<smem>>
    %986 = vector.broadcast %985 : f32 to vector<14x18xf32>
    %987 = arith.mulf %986, %932 : vector<14x18xf32>
    %988 = arith.addf %984, %987 : vector<14x18xf32>
    %c98_310 = arith.constant 98 : index
    %989 = memref.load %arg2[%c98_310] : memref<187xf32, #tpu.memory_space<smem>>
    %990 = vector.broadcast %989 : f32 to vector<14x18xf32>
    %991 = arith.mulf %990, %934 : vector<14x18xf32>
    %992 = arith.addf %988, %991 : vector<14x18xf32>
    %c99_311 = arith.constant 99 : index
    %993 = memref.load %arg2[%c99_311] : memref<187xf32, #tpu.memory_space<smem>>
    %994 = vector.broadcast %993 : f32 to vector<14x18xf32>
    %995 = arith.mulf %994, %936 : vector<14x18xf32>
    %996 = arith.addf %992, %995 : vector<14x18xf32>
    %c100_312 = arith.constant 100 : index
    %997 = memref.load %arg2[%c100_312] : memref<187xf32, #tpu.memory_space<smem>>
    %998 = vector.broadcast %997 : f32 to vector<14x18xf32>
    %999 = arith.mulf %998, %938 : vector<14x18xf32>
    %1000 = arith.addf %996, %999 : vector<14x18xf32>
    %c101_313 = arith.constant 101 : index
    %1001 = memref.load %arg2[%c101_313] : memref<187xf32, #tpu.memory_space<smem>>
    %1002 = vector.broadcast %1001 : f32 to vector<14x18xf32>
    %1003 = arith.mulf %1002, %940 : vector<14x18xf32>
    %1004 = arith.addf %1000, %1003 : vector<14x18xf32>
    %c0_314 = arith.constant 0 : index
    %c1_315 = arith.constant 1 : index
    %c1_316 = arith.constant 1 : index
    %1005 = vector.load %arg5[%c0_314, %c1_315, %c1_316] : memref<3x16x20xf32, #tpu.memory_space<vmem>>, vector<1x14x18xf32>
    %1006 = vector.shape_cast %1005 : vector<1x14x18xf32> to vector<14x18xf32>
    %1007 = vector.shape_cast %1004 : vector<14x18xf32> to vector<1x14x18xf32>
    tpu.vector_store %arg5[%c0_314, %c1_315, %c1_316], %1007 {strides = array<i32>} : memref<3x16x20xf32, #tpu.memory_space<vmem>>, vector<1x14x18xf32>,
    %cst_317 = arith.constant 0.000000e+00 : f32
    %1008 = vector.broadcast %cst_317 : f32 to vector<14x18xf32>
    %c133_318 = arith.constant 133 : index
    %1009 = memref.load %arg2[%c133_318] : memref<187xf32, #tpu.memory_space<smem>>
    %1010 = vector.broadcast %1009 : f32 to vector<14x18xf32>
    %1011 = arith.addf %1008, %1010 : vector<14x18xf32>
    %c102_319 = arith.constant 102 : index
    %1012 = memref.load %arg2[%c102_319] : memref<187xf32, #tpu.memory_space<smem>>
    %1013 = vector.broadcast %1012 : f32 to vector<14x18xf32>
    %1014 = arith.mulf %1013, %912 : vector<14x18xf32>
    %1015 = arith.addf %1011, %1014 : vector<14x18xf32>
    %c103_320 = arith.constant 103 : index
    %1016 = memref.load %arg2[%c103_320] : memref<187xf32, #tpu.memory_space<smem>>
    %1017 = vector.broadcast %1016 : f32 to vector<14x18xf32>
    %1018 = arith.mulf %1017, %914 : vector<14x18xf32>
    %1019 = arith.addf %1015, %1018 : vector<14x18xf32>
    %c104_321 = arith.constant 104 : index
    %1020 = memref.load %arg2[%c104_321] : memref<187xf32, #tpu.memory_space<smem>>
    %1021 = vector.broadcast %1020 : f32 to vector<14x18xf32>
    %1022 = arith.mulf %1021, %916 : vector<14x18xf32>
    %1023 = arith.addf %1019, %1022 : vector<14x18xf32>
    %c105_322 = arith.constant 105 : index
    %1024 = memref.load %arg2[%c105_322] : memref<187xf32, #tpu.memory_space<smem>>
    %1025 = vector.broadcast %1024 : f32 to vector<14x18xf32>
    %1026 = arith.mulf %1025, %918 : vector<14x18xf32>
    %1027 = arith.addf %1023, %1026 : vector<14x18xf32>
    %c106_323 = arith.constant 106 : index
    %1028 = memref.load %arg2[%c106_323] : memref<187xf32, #tpu.memory_space<smem>>
    %1029 = vector.broadcast %1028 : f32 to vector<14x18xf32>
    %1030 = arith.mulf %1029, %920 : vector<14x18xf32>
    %1031 = arith.addf %1027, %1030 : vector<14x18xf32>
    %c107_324 = arith.constant 107 : index
    %1032 = memref.load %arg2[%c107_324] : memref<187xf32, #tpu.memory_space<smem>>
    %1033 = vector.broadcast %1032 : f32 to vector<14x18xf32>
    %1034 = arith.mulf %1033, %922 : vector<14x18xf32>
    %1035 = arith.addf %1031, %1034 : vector<14x18xf32>
    %c108_325 = arith.constant 108 : index
    %1036 = memref.load %arg2[%c108_325] : memref<187xf32, #tpu.memory_space<smem>>
    %1037 = vector.broadcast %1036 : f32 to vector<14x18xf32>
    %1038 = arith.mulf %1037, %924 : vector<14x18xf32>
    %1039 = arith.addf %1035, %1038 : vector<14x18xf32>
    %c109_326 = arith.constant 109 : index
    %1040 = memref.load %arg2[%c109_326] : memref<187xf32, #tpu.memory_space<smem>>
    %1041 = vector.broadcast %1040 : f32 to vector<14x18xf32>
    %1042 = arith.mulf %1041, %926 : vector<14x18xf32>
    %1043 = arith.addf %1039, %1042 : vector<14x18xf32>
    %c110_327 = arith.constant 110 : index
    %1044 = memref.load %arg2[%c110_327] : memref<187xf32, #tpu.memory_space<smem>>
    %1045 = vector.broadcast %1044 : f32 to vector<14x18xf32>
    %1046 = arith.mulf %1045, %928 : vector<14x18xf32>
    %1047 = arith.addf %1043, %1046 : vector<14x18xf32>
    %c111_328 = arith.constant 111 : index
    %1048 = memref.load %arg2[%c111_328] : memref<187xf32, #tpu.memory_space<smem>>
    %1049 = vector.broadcast %1048 : f32 to vector<14x18xf32>
    %1050 = arith.mulf %1049, %930 : vector<14x18xf32>
    %1051 = arith.addf %1047, %1050 : vector<14x18xf32>
    %c112_329 = arith.constant 112 : index
    %1052 = memref.load %arg2[%c112_329] : memref<187xf32, #tpu.memory_space<smem>>
    %1053 = vector.broadcast %1052 : f32 to vector<14x18xf32>
    %1054 = arith.mulf %1053, %932 : vector<14x18xf32>
    %1055 = arith.addf %1051, %1054 : vector<14x18xf32>
    %c113_330 = arith.constant 113 : index
    %1056 = memref.load %arg2[%c113_330] : memref<187xf32, #tpu.memory_space<smem>>
    %1057 = vector.broadcast %1056 : f32 to vector<14x18xf32>
    %1058 = arith.mulf %1057, %934 : vector<14x18xf32>
    %1059 = arith.addf %1055, %1058 : vector<14x18xf32>
    %c114_331 = arith.constant 114 : index
    %1060 = memref.load %arg2[%c114_331] : memref<187xf32, #tpu.memory_space<smem>>
    %1061 = vector.broadcast %1060 : f32 to vector<14x18xf32>
    %1062 = arith.mulf %1061, %936 : vector<14x18xf32>
    %1063 = arith.addf %1059, %1062 : vector<14x18xf32>
    %c115_332 = arith.constant 115 : index
    %1064 = memref.load %arg2[%c115_332] : memref<187xf32, #tpu.memory_space<smem>>
    %1065 = vector.broadcast %1064 : f32 to vector<14x18xf32>
    %1066 = arith.mulf %1065, %938 : vector<14x18xf32>
    %1067 = arith.addf %1063, %1066 : vector<14x18xf32>
    %c116_333 = arith.constant 116 : index
    %1068 = memref.load %arg2[%c116_333] : memref<187xf32, #tpu.memory_space<smem>>
    %1069 = vector.broadcast %1068 : f32 to vector<14x18xf32>
    %1070 = arith.mulf %1069, %940 : vector<14x18xf32>
    %1071 = arith.addf %1067, %1070 : vector<14x18xf32>
    %c1_334 = arith.constant 1 : index
    %c1_335 = arith.constant 1 : index
    %c1_336 = arith.constant 1 : index
    %1072 = vector.load %arg5[%c1_334, %c1_335, %c1_336] : memref<3x16x20xf32, #tpu.memory_space<vmem>>, vector<1x14x18xf32>
    %1073 = vector.shape_cast %1072 : vector<1x14x18xf32> to vector<14x18xf32>
    %1074 = vector.shape_cast %1071 : vector<14x18xf32> to vector<1x14x18xf32>
    tpu.vector_store %arg5[%c1_334, %c1_335, %c1_336], %1074 {strides = array<i32>} : memref<3x16x20xf32, #tpu.memory_space<vmem>>, vector<1x14x18xf32>,
    %cst_337 = arith.constant 0.000000e+00 : f32
    %1075 = vector.broadcast %cst_337 : f32 to vector<14x18xf32>
    %c134_338 = arith.constant 134 : index
    %1076 = memref.load %arg2[%c134_338] : memref<187xf32, #tpu.memory_space<smem>>
    %1077 = vector.broadcast %1076 : f32 to vector<14x18xf32>
    %1078 = arith.addf %1075, %1077 : vector<14x18xf32>
    %c117_339 = arith.constant 117 : index
    %1079 = memref.load %arg2[%c117_339] : memref<187xf32, #tpu.memory_space<smem>>
    %1080 = vector.broadcast %1079 : f32 to vector<14x18xf32>
    %1081 = arith.mulf %1080, %912 : vector<14x18xf32>
    %1082 = arith.addf %1078, %1081 : vector<14x18xf32>
    %c118_340 = arith.constant 118 : index
    %1083 = memref.load %arg2[%c118_340] : memref<187xf32, #tpu.memory_space<smem>>
    %1084 = vector.broadcast %1083 : f32 to vector<14x18xf32>
    %1085 = arith.mulf %1084, %914 : vector<14x18xf32>
    %1086 = arith.addf %1082, %1085 : vector<14x18xf32>
    %c119_341 = arith.constant 119 : index
    %1087 = memref.load %arg2[%c119_341] : memref<187xf32, #tpu.memory_space<smem>>
    %1088 = vector.broadcast %1087 : f32 to vector<14x18xf32>
    %1089 = arith.mulf %1088, %916 : vector<14x18xf32>
    %1090 = arith.addf %1086, %1089 : vector<14x18xf32>
    %c120_342 = arith.constant 120 : index
    %1091 = memref.load %arg2[%c120_342] : memref<187xf32, #tpu.memory_space<smem>>
    %1092 = vector.broadcast %1091 : f32 to vector<14x18xf32>
    %1093 = arith.mulf %1092, %918 : vector<14x18xf32>
    %1094 = arith.addf %1090, %1093 : vector<14x18xf32>
    %c121_343 = arith.constant 121 : index
    %1095 = memref.load %arg2[%c121_343] : memref<187xf32, #tpu.memory_space<smem>>
    %1096 = vector.broadcast %1095 : f32 to vector<14x18xf32>
    %1097 = arith.mulf %1096, %920 : vector<14x18xf32>
    %1098 = arith.addf %1094, %1097 : vector<14x18xf32>
    %c122_344 = arith.constant 122 : index
    %1099 = memref.load %arg2[%c122_344] : memref<187xf32, #tpu.memory_space<smem>>
    %1100 = vector.broadcast %1099 : f32 to vector<14x18xf32>
    %1101 = arith.mulf %1100, %922 : vector<14x18xf32>
    %1102 = arith.addf %1098, %1101 : vector<14x18xf32>
    %c123_345 = arith.constant 123 : index
    %1103 = memref.load %arg2[%c123_345] : memref<187xf32, #tpu.memory_space<smem>>
    %1104 = vector.broadcast %1103 : f32 to vector<14x18xf32>
    %1105 = arith.mulf %1104, %924 : vector<14x18xf32>
    %1106 = arith.addf %1102, %1105 : vector<14x18xf32>
    %c124_346 = arith.constant 124 : index
    %1107 = memref.load %arg2[%c124_346] : memref<187xf32, #tpu.memory_space<smem>>
    %1108 = vector.broadcast %1107 : f32 to vector<14x18xf32>
    %1109 = arith.mulf %1108, %926 : vector<14x18xf32>
    %1110 = arith.addf %1106, %1109 : vector<14x18xf32>
    %c125_347 = arith.constant 125 : index
    %1111 = memref.load %arg2[%c125_347] : memref<187xf32, #tpu.memory_space<smem>>
    %1112 = vector.broadcast %1111 : f32 to vector<14x18xf32>
    %1113 = arith.mulf %1112, %928 : vector<14x18xf32>
    %1114 = arith.addf %1110, %1113 : vector<14x18xf32>
    %c126_348 = arith.constant 126 : index
    %1115 = memref.load %arg2[%c126_348] : memref<187xf32, #tpu.memory_space<smem>>
    %1116 = vector.broadcast %1115 : f32 to vector<14x18xf32>
    %1117 = arith.mulf %1116, %930 : vector<14x18xf32>
    %1118 = arith.addf %1114, %1117 : vector<14x18xf32>
    %c127_349 = arith.constant 127 : index
    %1119 = memref.load %arg2[%c127_349] : memref<187xf32, #tpu.memory_space<smem>>
    %1120 = vector.broadcast %1119 : f32 to vector<14x18xf32>
    %1121 = arith.mulf %1120, %932 : vector<14x18xf32>
    %1122 = arith.addf %1118, %1121 : vector<14x18xf32>
    %c128_350 = arith.constant 128 : index
    %1123 = memref.load %arg2[%c128_350] : memref<187xf32, #tpu.memory_space<smem>>
    %1124 = vector.broadcast %1123 : f32 to vector<14x18xf32>
    %1125 = arith.mulf %1124, %934 : vector<14x18xf32>
    %1126 = arith.addf %1122, %1125 : vector<14x18xf32>
    %c129_351 = arith.constant 129 : index
    %1127 = memref.load %arg2[%c129_351] : memref<187xf32, #tpu.memory_space<smem>>
    %1128 = vector.broadcast %1127 : f32 to vector<14x18xf32>
    %1129 = arith.mulf %1128, %936 : vector<14x18xf32>
    %1130 = arith.addf %1126, %1129 : vector<14x18xf32>
    %c130_352 = arith.constant 130 : index
    %1131 = memref.load %arg2[%c130_352] : memref<187xf32, #tpu.memory_space<smem>>
    %1132 = vector.broadcast %1131 : f32 to vector<14x18xf32>
    %1133 = arith.mulf %1132, %938 : vector<14x18xf32>
    %1134 = arith.addf %1130, %1133 : vector<14x18xf32>
    %c131_353 = arith.constant 131 : index
    %1135 = memref.load %arg2[%c131_353] : memref<187xf32, #tpu.memory_space<smem>>
    %1136 = vector.broadcast %1135 : f32 to vector<14x18xf32>
    %1137 = arith.mulf %1136, %940 : vector<14x18xf32>
    %1138 = arith.addf %1134, %1137 : vector<14x18xf32>
    %c2_354 = arith.constant 2 : index
    %c1_355 = arith.constant 1 : index
    %c1_356 = arith.constant 1 : index
    %1139 = vector.load %arg5[%c2_354, %c1_355, %c1_356] : memref<3x16x20xf32, #tpu.memory_space<vmem>>, vector<1x14x18xf32>
    %1140 = vector.shape_cast %1139 : vector<1x14x18xf32> to vector<14x18xf32>
    %1141 = vector.shape_cast %1138 : vector<14x18xf32> to vector<1x14x18xf32>
    tpu.vector_store %arg5[%c2_354, %c1_355, %c1_356], %1141 {strides = array<i32>} : memref<3x16x20xf32, #tpu.memory_space<vmem>>, vector<1x14x18xf32>,
    %c0_357 = arith.constant 0 : index
    %c0_358 = arith.constant 0 : index
    %c0_359 = arith.constant 0 : index
    %1142 = vector.load %arg5[%c0_357, %c0_358, %c0_359] : memref<3x16x20xf32, #tpu.memory_space<vmem>>, vector<1x16x16xf32>
    %1143 = vector.shape_cast %1142 : vector<1x16x16xf32> to vector<16x16xf32>
    %c0_360 = arith.constant 0 : index
    %c0_361 = arith.constant 0 : index
    %c1_362 = arith.constant 1 : index
    %1144 = vector.load %arg5[%c0_360, %c0_361, %c1_362] : memref<3x16x20xf32, #tpu.memory_space<vmem>>, vector<1x16x16xf32>
    %1145 = vector.shape_cast %1144 : vector<1x16x16xf32> to vector<16x16xf32>
    %c0_363 = arith.constant 0 : index
    %c0_364 = arith.constant 0 : index
    %c2_365 = arith.constant 2 : index
    %1146 = vector.load %arg5[%c0_363, %c0_364, %c2_365] : memref<3x16x20xf32, #tpu.memory_space<vmem>>, vector<1x16x16xf32>
    %1147 = vector.shape_cast %1146 : vector<1x16x16xf32> to vector<16x16xf32>
    %c0_366 = arith.constant 0 : index
    %c0_367 = arith.constant 0 : index
    %c3_368 = arith.constant 3 : index
    %1148 = vector.load %arg5[%c0_366, %c0_367, %c3_368] : memref<3x16x20xf32, #tpu.memory_space<vmem>>, vector<1x16x16xf32>
    %1149 = vector.shape_cast %1148 : vector<1x16x16xf32> to vector<16x16xf32>
    %c0_369 = arith.constant 0 : index
    %c0_370 = arith.constant 0 : index
    %c4_371 = arith.constant 4 : index
    %1150 = vector.load %arg5[%c0_369, %c0_370, %c4_371] : memref<3x16x20xf32, #tpu.memory_space<vmem>>, vector<1x16x16xf32>
    %1151 = vector.shape_cast %1150 : vector<1x16x16xf32> to vector<16x16xf32>
    %c1_372 = arith.constant 1 : index
    %c0_373 = arith.constant 0 : index
    %c0_374 = arith.constant 0 : index
    %1152 = vector.load %arg5[%c1_372, %c0_373, %c0_374] : memref<3x16x20xf32, #tpu.memory_space<vmem>>, vector<1x16x16xf32>
    %1153 = vector.shape_cast %1152 : vector<1x16x16xf32> to vector<16x16xf32>
    %c1_375 = arith.constant 1 : index
    %c0_376 = arith.constant 0 : index
    %c1_377 = arith.constant 1 : index
    %1154 = vector.load %arg5[%c1_375, %c0_376, %c1_377] : memref<3x16x20xf32, #tpu.memory_space<vmem>>, vector<1x16x16xf32>
    %1155 = vector.shape_cast %1154 : vector<1x16x16xf32> to vector<16x16xf32>
    %c1_378 = arith.constant 1 : index
    %c0_379 = arith.constant 0 : index
    %c2_380 = arith.constant 2 : index
    %1156 = vector.load %arg5[%c1_378, %c0_379, %c2_380] : memref<3x16x20xf32, #tpu.memory_space<vmem>>, vector<1x16x16xf32>
    %1157 = vector.shape_cast %1156 : vector<1x16x16xf32> to vector<16x16xf32>
    %c1_381 = arith.constant 1 : index
    %c0_382 = arith.constant 0 : index
    %c3_383 = arith.constant 3 : index
    %1158 = vector.load %arg5[%c1_381, %c0_382, %c3_383] : memref<3x16x20xf32, #tpu.memory_space<vmem>>, vector<1x16x16xf32>
    %1159 = vector.shape_cast %1158 : vector<1x16x16xf32> to vector<16x16xf32>
    %c1_384 = arith.constant 1 : index
    %c0_385 = arith.constant 0 : index
    %c4_386 = arith.constant 4 : index
    %1160 = vector.load %arg5[%c1_384, %c0_385, %c4_386] : memref<3x16x20xf32, #tpu.memory_space<vmem>>, vector<1x16x16xf32>
    %1161 = vector.shape_cast %1160 : vector<1x16x16xf32> to vector<16x16xf32>
    %c2_387 = arith.constant 2 : index
    %c0_388 = arith.constant 0 : index
    %c0_389 = arith.constant 0 : index
    %1162 = vector.load %arg5[%c2_387, %c0_388, %c0_389] : memref<3x16x20xf32, #tpu.memory_space<vmem>>, vector<1x16x16xf32>
    %1163 = vector.shape_cast %1162 : vector<1x16x16xf32> to vector<16x16xf32>
    %c2_390 = arith.constant 2 : index
    %c0_391 = arith.constant 0 : index
    %c1_392 = arith.constant 1 : index
    %1164 = vector.load %arg5[%c2_390, %c0_391, %c1_392] : memref<3x16x20xf32, #tpu.memory_space<vmem>>, vector<1x16x16xf32>
    %1165 = vector.shape_cast %1164 : vector<1x16x16xf32> to vector<16x16xf32>
    %c2_393 = arith.constant 2 : index
    %c0_394 = arith.constant 0 : index
    %c2_395 = arith.constant 2 : index
    %1166 = vector.load %arg5[%c2_393, %c0_394, %c2_395] : memref<3x16x20xf32, #tpu.memory_space<vmem>>, vector<1x16x16xf32>
    %1167 = vector.shape_cast %1166 : vector<1x16x16xf32> to vector<16x16xf32>
    %c2_396 = arith.constant 2 : index
    %c0_397 = arith.constant 0 : index
    %c3_398 = arith.constant 3 : index
    %1168 = vector.load %arg5[%c2_396, %c0_397, %c3_398] : memref<3x16x20xf32, #tpu.memory_space<vmem>>, vector<1x16x16xf32>
    %1169 = vector.shape_cast %1168 : vector<1x16x16xf32> to vector<16x16xf32>
    %c2_399 = arith.constant 2 : index
    %c0_400 = arith.constant 0 : index
    %c4_401 = arith.constant 4 : index
    %1170 = vector.load %arg5[%c2_399, %c0_400, %c4_401] : memref<3x16x20xf32, #tpu.memory_space<vmem>>, vector<1x16x16xf32>
    %1171 = vector.shape_cast %1170 : vector<1x16x16xf32> to vector<16x16xf32>
    %cst_402 = arith.constant 0.000000e+00 : f32
    %1172 = vector.broadcast %cst_402 : f32 to vector<16x16xf32>
    %c180_403 = arith.constant 180 : index
    %1173 = memref.load %arg2[%c180_403] : memref<187xf32, #tpu.memory_space<smem>>
    %1174 = vector.broadcast %1173 : f32 to vector<16x16xf32>
    %1175 = arith.addf %1172, %1174 : vector<16x16xf32>
    %c135_404 = arith.constant 135 : index
    %1176 = memref.load %arg2[%c135_404] : memref<187xf32, #tpu.memory_space<smem>>
    %1177 = vector.broadcast %1176 : f32 to vector<16x16xf32>
    %1178 = arith.mulf %1177, %1143 : vector<16x16xf32>
    %1179 = arith.addf %1175, %1178 : vector<16x16xf32>
    %c136_405 = arith.constant 136 : index
    %1180 = memref.load %arg2[%c136_405] : memref<187xf32, #tpu.memory_space<smem>>
    %1181 = vector.broadcast %1180 : f32 to vector<16x16xf32>
    %1182 = arith.mulf %1181, %1145 : vector<16x16xf32>
    %1183 = arith.addf %1179, %1182 : vector<16x16xf32>
    %c137_406 = arith.constant 137 : index
    %1184 = memref.load %arg2[%c137_406] : memref<187xf32, #tpu.memory_space<smem>>
    %1185 = vector.broadcast %1184 : f32 to vector<16x16xf32>
    %1186 = arith.mulf %1185, %1147 : vector<16x16xf32>
    %1187 = arith.addf %1183, %1186 : vector<16x16xf32>
    %c138_407 = arith.constant 138 : index
    %1188 = memref.load %arg2[%c138_407] : memref<187xf32, #tpu.memory_space<smem>>
    %1189 = vector.broadcast %1188 : f32 to vector<16x16xf32>
    %1190 = arith.mulf %1189, %1149 : vector<16x16xf32>
    %1191 = arith.addf %1187, %1190 : vector<16x16xf32>
    %c139_408 = arith.constant 139 : index
    %1192 = memref.load %arg2[%c139_408] : memref<187xf32, #tpu.memory_space<smem>>
    %1193 = vector.broadcast %1192 : f32 to vector<16x16xf32>
    %1194 = arith.mulf %1193, %1151 : vector<16x16xf32>
    %1195 = arith.addf %1191, %1194 : vector<16x16xf32>
    %c140_409 = arith.constant 140 : index
    %1196 = memref.load %arg2[%c140_409] : memref<187xf32, #tpu.memory_space<smem>>
    %1197 = vector.broadcast %1196 : f32 to vector<16x16xf32>
    %1198 = arith.mulf %1197, %1153 : vector<16x16xf32>
    %1199 = arith.addf %1195, %1198 : vector<16x16xf32>
    %c141_410 = arith.constant 141 : index
    %1200 = memref.load %arg2[%c141_410] : memref<187xf32, #tpu.memory_space<smem>>
    %1201 = vector.broadcast %1200 : f32 to vector<16x16xf32>
    %1202 = arith.mulf %1201, %1155 : vector<16x16xf32>
    %1203 = arith.addf %1199, %1202 : vector<16x16xf32>
    %c142_411 = arith.constant 142 : index
    %1204 = memref.load %arg2[%c142_411] : memref<187xf32, #tpu.memory_space<smem>>
    %1205 = vector.broadcast %1204 : f32 to vector<16x16xf32>
    %1206 = arith.mulf %1205, %1157 : vector<16x16xf32>
    %1207 = arith.addf %1203, %1206 : vector<16x16xf32>
    %c143_412 = arith.constant 143 : index
    %1208 = memref.load %arg2[%c143_412] : memref<187xf32, #tpu.memory_space<smem>>
    %1209 = vector.broadcast %1208 : f32 to vector<16x16xf32>
    %1210 = arith.mulf %1209, %1159 : vector<16x16xf32>
    %1211 = arith.addf %1207, %1210 : vector<16x16xf32>
    %c144_413 = arith.constant 144 : index
    %1212 = memref.load %arg2[%c144_413] : memref<187xf32, #tpu.memory_space<smem>>
    %1213 = vector.broadcast %1212 : f32 to vector<16x16xf32>
    %1214 = arith.mulf %1213, %1161 : vector<16x16xf32>
    %1215 = arith.addf %1211, %1214 : vector<16x16xf32>
    %c145_414 = arith.constant 145 : index
    %1216 = memref.load %arg2[%c145_414] : memref<187xf32, #tpu.memory_space<smem>>
    %1217 = vector.broadcast %1216 : f32 to vector<16x16xf32>
    %1218 = arith.mulf %1217, %1163 : vector<16x16xf32>
    %1219 = arith.addf %1215, %1218 : vector<16x16xf32>
    %c146_415 = arith.constant 146 : index
    %1220 = memref.load %arg2[%c146_415] : memref<187xf32, #tpu.memory_space<smem>>
    %1221 = vector.broadcast %1220 : f32 to vector<16x16xf32>
    %1222 = arith.mulf %1221, %1165 : vector<16x16xf32>
    %1223 = arith.addf %1219, %1222 : vector<16x16xf32>
    %c147_416 = arith.constant 147 : index
    %1224 = memref.load %arg2[%c147_416] : memref<187xf32, #tpu.memory_space<smem>>
    %1225 = vector.broadcast %1224 : f32 to vector<16x16xf32>
    %1226 = arith.mulf %1225, %1167 : vector<16x16xf32>
    %1227 = arith.addf %1223, %1226 : vector<16x16xf32>
    %c148_417 = arith.constant 148 : index
    %1228 = memref.load %arg2[%c148_417] : memref<187xf32, #tpu.memory_space<smem>>
    %1229 = vector.broadcast %1228 : f32 to vector<16x16xf32>
    %1230 = arith.mulf %1229, %1169 : vector<16x16xf32>
    %1231 = arith.addf %1227, %1230 : vector<16x16xf32>
    %c149_418 = arith.constant 149 : index
    %1232 = memref.load %arg2[%c149_418] : memref<187xf32, #tpu.memory_space<smem>>
    %1233 = vector.broadcast %1232 : f32 to vector<16x16xf32>
    %1234 = arith.mulf %1233, %1171 : vector<16x16xf32>
    %1235 = arith.addf %1231, %1234 : vector<16x16xf32>
    %cst_419 = arith.constant 0.000000e+00 : f32
    %1236 = vector.broadcast %cst_419 : f32 to vector<16x16xf32>
    %c181_420 = arith.constant 181 : index
    %1237 = memref.load %arg2[%c181_420] : memref<187xf32, #tpu.memory_space<smem>>
    %1238 = vector.broadcast %1237 : f32 to vector<16x16xf32>
    %1239 = arith.addf %1236, %1238 : vector<16x16xf32>
    %c150_421 = arith.constant 150 : index
    %1240 = memref.load %arg2[%c150_421] : memref<187xf32, #tpu.memory_space<smem>>
    %1241 = vector.broadcast %1240 : f32 to vector<16x16xf32>
    %1242 = arith.mulf %1241, %1143 : vector<16x16xf32>
    %1243 = arith.addf %1239, %1242 : vector<16x16xf32>
    %c151_422 = arith.constant 151 : index
    %1244 = memref.load %arg2[%c151_422] : memref<187xf32, #tpu.memory_space<smem>>
    %1245 = vector.broadcast %1244 : f32 to vector<16x16xf32>
    %1246 = arith.mulf %1245, %1145 : vector<16x16xf32>
    %1247 = arith.addf %1243, %1246 : vector<16x16xf32>
    %c152_423 = arith.constant 152 : index
    %1248 = memref.load %arg2[%c152_423] : memref<187xf32, #tpu.memory_space<smem>>
    %1249 = vector.broadcast %1248 : f32 to vector<16x16xf32>
    %1250 = arith.mulf %1249, %1147 : vector<16x16xf32>
    %1251 = arith.addf %1247, %1250 : vector<16x16xf32>
    %c153_424 = arith.constant 153 : index
    %1252 = memref.load %arg2[%c153_424] : memref<187xf32, #tpu.memory_space<smem>>
    %1253 = vector.broadcast %1252 : f32 to vector<16x16xf32>
    %1254 = arith.mulf %1253, %1149 : vector<16x16xf32>
    %1255 = arith.addf %1251, %1254 : vector<16x16xf32>
    %c154_425 = arith.constant 154 : index
    %1256 = memref.load %arg2[%c154_425] : memref<187xf32, #tpu.memory_space<smem>>
    %1257 = vector.broadcast %1256 : f32 to vector<16x16xf32>
    %1258 = arith.mulf %1257, %1151 : vector<16x16xf32>
    %1259 = arith.addf %1255, %1258 : vector<16x16xf32>
    %c155_426 = arith.constant 155 : index
    %1260 = memref.load %arg2[%c155_426] : memref<187xf32, #tpu.memory_space<smem>>
    %1261 = vector.broadcast %1260 : f32 to vector<16x16xf32>
    %1262 = arith.mulf %1261, %1153 : vector<16x16xf32>
    %1263 = arith.addf %1259, %1262 : vector<16x16xf32>
    %c156_427 = arith.constant 156 : index
    %1264 = memref.load %arg2[%c156_427] : memref<187xf32, #tpu.memory_space<smem>>
    %1265 = vector.broadcast %1264 : f32 to vector<16x16xf32>
    %1266 = arith.mulf %1265, %1155 : vector<16x16xf32>
    %1267 = arith.addf %1263, %1266 : vector<16x16xf32>
    %c157_428 = arith.constant 157 : index
    %1268 = memref.load %arg2[%c157_428] : memref<187xf32, #tpu.memory_space<smem>>
    %1269 = vector.broadcast %1268 : f32 to vector<16x16xf32>
    %1270 = arith.mulf %1269, %1157 : vector<16x16xf32>
    %1271 = arith.addf %1267, %1270 : vector<16x16xf32>
    %c158_429 = arith.constant 158 : index
    %1272 = memref.load %arg2[%c158_429] : memref<187xf32, #tpu.memory_space<smem>>
    %1273 = vector.broadcast %1272 : f32 to vector<16x16xf32>
    %1274 = arith.mulf %1273, %1159 : vector<16x16xf32>
    %1275 = arith.addf %1271, %1274 : vector<16x16xf32>
    %c159_430 = arith.constant 159 : index
    %1276 = memref.load %arg2[%c159_430] : memref<187xf32, #tpu.memory_space<smem>>
    %1277 = vector.broadcast %1276 : f32 to vector<16x16xf32>
    %1278 = arith.mulf %1277, %1161 : vector<16x16xf32>
    %1279 = arith.addf %1275, %1278 : vector<16x16xf32>
    %c160_431 = arith.constant 160 : index
    %1280 = memref.load %arg2[%c160_431] : memref<187xf32, #tpu.memory_space<smem>>
    %1281 = vector.broadcast %1280 : f32 to vector<16x16xf32>
    %1282 = arith.mulf %1281, %1163 : vector<16x16xf32>
    %1283 = arith.addf %1279, %1282 : vector<16x16xf32>
    %c161_432 = arith.constant 161 : index
    %1284 = memref.load %arg2[%c161_432] : memref<187xf32, #tpu.memory_space<smem>>
    %1285 = vector.broadcast %1284 : f32 to vector<16x16xf32>
    %1286 = arith.mulf %1285, %1165 : vector<16x16xf32>
    %1287 = arith.addf %1283, %1286 : vector<16x16xf32>
    %c162_433 = arith.constant 162 : index
    %1288 = memref.load %arg2[%c162_433] : memref<187xf32, #tpu.memory_space<smem>>
    %1289 = vector.broadcast %1288 : f32 to vector<16x16xf32>
    %1290 = arith.mulf %1289, %1167 : vector<16x16xf32>
    %1291 = arith.addf %1287, %1290 : vector<16x16xf32>
    %c163_434 = arith.constant 163 : index
    %1292 = memref.load %arg2[%c163_434] : memref<187xf32, #tpu.memory_space<smem>>
    %1293 = vector.broadcast %1292 : f32 to vector<16x16xf32>
    %1294 = arith.mulf %1293, %1169 : vector<16x16xf32>
    %1295 = arith.addf %1291, %1294 : vector<16x16xf32>
    %c164_435 = arith.constant 164 : index
    %1296 = memref.load %arg2[%c164_435] : memref<187xf32, #tpu.memory_space<smem>>
    %1297 = vector.broadcast %1296 : f32 to vector<16x16xf32>
    %1298 = arith.mulf %1297, %1171 : vector<16x16xf32>
    %1299 = arith.addf %1295, %1298 : vector<16x16xf32>
    %cst_436 = arith.constant 0.000000e+00 : f32
    %1300 = vector.broadcast %cst_436 : f32 to vector<16x16xf32>
    %c182_437 = arith.constant 182 : index
    %1301 = memref.load %arg2[%c182_437] : memref<187xf32, #tpu.memory_space<smem>>
    %1302 = vector.broadcast %1301 : f32 to vector<16x16xf32>
    %1303 = arith.addf %1300, %1302 : vector<16x16xf32>
    %c165_438 = arith.constant 165 : index
    %1304 = memref.load %arg2[%c165_438] : memref<187xf32, #tpu.memory_space<smem>>
    %1305 = vector.broadcast %1304 : f32 to vector<16x16xf32>
    %1306 = arith.mulf %1305, %1143 : vector<16x16xf32>
    %1307 = arith.addf %1303, %1306 : vector<16x16xf32>
    %c166_439 = arith.constant 166 : index
    %1308 = memref.load %arg2[%c166_439] : memref<187xf32, #tpu.memory_space<smem>>
    %1309 = vector.broadcast %1308 : f32 to vector<16x16xf32>
    %1310 = arith.mulf %1309, %1145 : vector<16x16xf32>
    %1311 = arith.addf %1307, %1310 : vector<16x16xf32>
    %c167_440 = arith.constant 167 : index
    %1312 = memref.load %arg2[%c167_440] : memref<187xf32, #tpu.memory_space<smem>>
    %1313 = vector.broadcast %1312 : f32 to vector<16x16xf32>
    %1314 = arith.mulf %1313, %1147 : vector<16x16xf32>
    %1315 = arith.addf %1311, %1314 : vector<16x16xf32>
    %c168_441 = arith.constant 168 : index
    %1316 = memref.load %arg2[%c168_441] : memref<187xf32, #tpu.memory_space<smem>>
    %1317 = vector.broadcast %1316 : f32 to vector<16x16xf32>
    %1318 = arith.mulf %1317, %1149 : vector<16x16xf32>
    %1319 = arith.addf %1315, %1318 : vector<16x16xf32>
    %c169_442 = arith.constant 169 : index
    %1320 = memref.load %arg2[%c169_442] : memref<187xf32, #tpu.memory_space<smem>>
    %1321 = vector.broadcast %1320 : f32 to vector<16x16xf32>
    %1322 = arith.mulf %1321, %1151 : vector<16x16xf32>
    %1323 = arith.addf %1319, %1322 : vector<16x16xf32>
    %c170_443 = arith.constant 170 : index
    %1324 = memref.load %arg2[%c170_443] : memref<187xf32, #tpu.memory_space<smem>>
    %1325 = vector.broadcast %1324 : f32 to vector<16x16xf32>
    %1326 = arith.mulf %1325, %1153 : vector<16x16xf32>
    %1327 = arith.addf %1323, %1326 : vector<16x16xf32>
    %c171_444 = arith.constant 171 : index
    %1328 = memref.load %arg2[%c171_444] : memref<187xf32, #tpu.memory_space<smem>>
    %1329 = vector.broadcast %1328 : f32 to vector<16x16xf32>
    %1330 = arith.mulf %1329, %1155 : vector<16x16xf32>
    %1331 = arith.addf %1327, %1330 : vector<16x16xf32>
    %c172_445 = arith.constant 172 : index
    %1332 = memref.load %arg2[%c172_445] : memref<187xf32, #tpu.memory_space<smem>>
    %1333 = vector.broadcast %1332 : f32 to vector<16x16xf32>
    %1334 = arith.mulf %1333, %1157 : vector<16x16xf32>
    %1335 = arith.addf %1331, %1334 : vector<16x16xf32>
    %c173_446 = arith.constant 173 : index
    %1336 = memref.load %arg2[%c173_446] : memref<187xf32, #tpu.memory_space<smem>>
    %1337 = vector.broadcast %1336 : f32 to vector<16x16xf32>
    %1338 = arith.mulf %1337, %1159 : vector<16x16xf32>
    %1339 = arith.addf %1335, %1338 : vector<16x16xf32>
    %c174_447 = arith.constant 174 : index
    %1340 = memref.load %arg2[%c174_447] : memref<187xf32, #tpu.memory_space<smem>>
    %1341 = vector.broadcast %1340 : f32 to vector<16x16xf32>
    %1342 = arith.mulf %1341, %1161 : vector<16x16xf32>
    %1343 = arith.addf %1339, %1342 : vector<16x16xf32>
    %c175_448 = arith.constant 175 : index
    %1344 = memref.load %arg2[%c175_448] : memref<187xf32, #tpu.memory_space<smem>>
    %1345 = vector.broadcast %1344 : f32 to vector<16x16xf32>
    %1346 = arith.mulf %1345, %1163 : vector<16x16xf32>
    %1347 = arith.addf %1343, %1346 : vector<16x16xf32>
    %c176_449 = arith.constant 176 : index
    %1348 = memref.load %arg2[%c176_449] : memref<187xf32, #tpu.memory_space<smem>>
    %1349 = vector.broadcast %1348 : f32 to vector<16x16xf32>
    %1350 = arith.mulf %1349, %1165 : vector<16x16xf32>
    %1351 = arith.addf %1347, %1350 : vector<16x16xf32>
    %c177_450 = arith.constant 177 : index
    %1352 = memref.load %arg2[%c177_450] : memref<187xf32, #tpu.memory_space<smem>>
    %1353 = vector.broadcast %1352 : f32 to vector<16x16xf32>
    %1354 = arith.mulf %1353, %1167 : vector<16x16xf32>
    %1355 = arith.addf %1351, %1354 : vector<16x16xf32>
    %c178_451 = arith.constant 178 : index
    %1356 = memref.load %arg2[%c178_451] : memref<187xf32, #tpu.memory_space<smem>>
    %1357 = vector.broadcast %1356 : f32 to vector<16x16xf32>
    %1358 = arith.mulf %1357, %1169 : vector<16x16xf32>
    %1359 = arith.addf %1355, %1358 : vector<16x16xf32>
    %c179_452 = arith.constant 179 : index
    %1360 = memref.load %arg2[%c179_452] : memref<187xf32, #tpu.memory_space<smem>>
    %1361 = vector.broadcast %1360 : f32 to vector<16x16xf32>
    %1362 = arith.mulf %1361, %1171 : vector<16x16xf32>
    %1363 = arith.addf %1359, %1362 : vector<16x16xf32>
    %cst_453 = arith.constant 0.000000e+00 : f32
    %1364 = vector.broadcast %cst_453 : f32 to vector<16x16xf32>
    %c186_454 = arith.constant 186 : index
    %1365 = memref.load %arg2[%c186_454] : memref<187xf32, #tpu.memory_space<smem>>
    %1366 = vector.broadcast %1365 : f32 to vector<16x16xf32>
    %1367 = arith.addf %1364, %1366 : vector<16x16xf32>
    %c183_455 = arith.constant 183 : index
    %1368 = memref.load %arg2[%c183_455] : memref<187xf32, #tpu.memory_space<smem>>
    %1369 = vector.broadcast %1368 : f32 to vector<16x16xf32>
    %1370 = arith.mulf %1369, %1235 : vector<16x16xf32>
    %1371 = arith.addf %1367, %1370 : vector<16x16xf32>
    %c184_456 = arith.constant 184 : index
    %1372 = memref.load %arg2[%c184_456] : memref<187xf32, #tpu.memory_space<smem>>
    %1373 = vector.broadcast %1372 : f32 to vector<16x16xf32>
    %1374 = arith.mulf %1373, %1299 : vector<16x16xf32>
    %1375 = arith.addf %1371, %1374 : vector<16x16xf32>
    %c185_457 = arith.constant 185 : index
    %1376 = memref.load %arg2[%c185_457] : memref<187xf32, #tpu.memory_space<smem>>
    %1377 = vector.broadcast %1376 : f32 to vector<16x16xf32>
    %1378 = arith.mulf %1377, %1363 : vector<16x16xf32>
    %1379 = arith.addf %1375, %1378 : vector<16x16xf32>
    %c0_458 = arith.constant 0 : index
    %c8_459 = arith.constant 8 : index
    %c0_460 = arith.constant 0 : index
    %c0_461 = arith.constant 0 : index
    %1380 = vector.load %arg3[%c0_458, %c8_459, %c0_460, %c0_461] : memref<1x10x16x16xf32, #tpu.memory_space<vmem>>, vector<1x1x16x16xf32>
    %1381 = vector.shape_cast %1380 : vector<1x1x16x16xf32> to vector<16x16xf32>
    %1382 = vector.shape_cast %1379 : vector<16x16xf32> to vector<1x1x16x16xf32>
    tpu.vector_store %arg3[%c0_458, %c8_459, %c0_460, %c0_461], %1382 {strides = array<i32>} : memref<1x10x16x16xf32, #tpu.memory_space<vmem>>, vector<1x1x16x16xf32>,
    %c2_462 = arith.constant 2 : index
    %c1_463 = arith.constant 1 : index
    %c1_464 = arith.constant 1 : index
    %1383 = vector.load %arg4[%c2_462, %c1_463, %c1_464] : memref<3x18x18xf32, #tpu.memory_space<vmem>>, vector<1x16x16xf32>
    %1384 = vector.shape_cast %1383 : vector<1x16x16xf32> to vector<16x16xf32>
    %1385 = vector.shape_cast %1379 : vector<16x16xf32> to vector<1x16x16xf32>
    tpu.vector_store %arg4[%c2_462, %c1_463, %c1_464], %1385 {strides = array<i32>} : memref<3x18x18xf32, #tpu.memory_space<vmem>>, vector<1x16x16xf32>,
    %c0_465 = arith.constant 0 : index
    %c0_466 = arith.constant 0 : index
    %c0_467 = arith.constant 0 : index
    %1386 = vector.load %arg4[%c0_465, %c0_466, %c0_467] : memref<3x18x18xf32, #tpu.memory_space<vmem>>, vector<1x14x18xf32>
    %1387 = vector.shape_cast %1386 : vector<1x14x18xf32> to vector<14x18xf32>
    %c0_468 = arith.constant 0 : index
    %c1_469 = arith.constant 1 : index
    %c0_470 = arith.constant 0 : index
    %1388 = vector.load %arg4[%c0_468, %c1_469, %c0_470] : memref<3x18x18xf32, #tpu.memory_space<vmem>>, vector<1x14x18xf32>
    %1389 = vector.shape_cast %1388 : vector<1x14x18xf32> to vector<14x18xf32>
    %c0_471 = arith.constant 0 : index
    %c2_472 = arith.constant 2 : index
    %c0_473 = arith.constant 0 : index
    %1390 = vector.load %arg4[%c0_471, %c2_472, %c0_473] : memref<3x18x18xf32, #tpu.memory_space<vmem>>, vector<1x14x18xf32>
    %1391 = vector.shape_cast %1390 : vector<1x14x18xf32> to vector<14x18xf32>
    %c0_474 = arith.constant 0 : index
    %c3_475 = arith.constant 3 : index
    %c0_476 = arith.constant 0 : index
    %1392 = vector.load %arg4[%c0_474, %c3_475, %c0_476] : memref<3x18x18xf32, #tpu.memory_space<vmem>>, vector<1x14x18xf32>
    %1393 = vector.shape_cast %1392 : vector<1x14x18xf32> to vector<14x18xf32>
    %c0_477 = arith.constant 0 : index
    %c4_478 = arith.constant 4 : index
    %c0_479 = arith.constant 0 : index
    %1394 = vector.load %arg4[%c0_477, %c4_478, %c0_479] : memref<3x18x18xf32, #tpu.memory_space<vmem>>, vector<1x14x18xf32>
    %1395 = vector.shape_cast %1394 : vector<1x14x18xf32> to vector<14x18xf32>
    %c1_480 = arith.constant 1 : index
    %c0_481 = arith.constant 0 : index
    %c0_482 = arith.constant 0 : index
    %1396 = vector.load %arg4[%c1_480, %c0_481, %c0_482] : memref<3x18x18xf32, #tpu.memory_space<vmem>>, vector<1x14x18xf32>
    %1397 = vector.shape_cast %1396 : vector<1x14x18xf32> to vector<14x18xf32>
    %c1_483 = arith.constant 1 : index
    %c1_484 = arith.constant 1 : index
    %c0_485 = arith.constant 0 : index
    %1398 = vector.load %arg4[%c1_483, %c1_484, %c0_485] : memref<3x18x18xf32, #tpu.memory_space<vmem>>, vector<1x14x18xf32>
    %1399 = vector.shape_cast %1398 : vector<1x14x18xf32> to vector<14x18xf32>
    %c1_486 = arith.constant 1 : index
    %c2_487 = arith.constant 2 : index
    %c0_488 = arith.constant 0 : index
    %1400 = vector.load %arg4[%c1_486, %c2_487, %c0_488] : memref<3x18x18xf32, #tpu.memory_space<vmem>>, vector<1x14x18xf32>
    %1401 = vector.shape_cast %1400 : vector<1x14x18xf32> to vector<14x18xf32>
    %c1_489 = arith.constant 1 : index
    %c3_490 = arith.constant 3 : index
    %c0_491 = arith.constant 0 : index
    %1402 = vector.load %arg4[%c1_489, %c3_490, %c0_491] : memref<3x18x18xf32, #tpu.memory_space<vmem>>, vector<1x14x18xf32>
    %1403 = vector.shape_cast %1402 : vector<1x14x18xf32> to vector<14x18xf32>
    %c1_492 = arith.constant 1 : index
    %c4_493 = arith.constant 4 : index
    %c0_494 = arith.constant 0 : index
    %1404 = vector.load %arg4[%c1_492, %c4_493, %c0_494] : memref<3x18x18xf32, #tpu.memory_space<vmem>>, vector<1x14x18xf32>
    %1405 = vector.shape_cast %1404 : vector<1x14x18xf32> to vector<14x18xf32>
    %c2_495 = arith.constant 2 : index
    %c0_496 = arith.constant 0 : index
    %c0_497 = arith.constant 0 : index
    %1406 = vector.load %arg4[%c2_495, %c0_496, %c0_497] : memref<3x18x18xf32, #tpu.memory_space<vmem>>, vector<1x14x18xf32>
    %1407 = vector.shape_cast %1406 : vector<1x14x18xf32> to vector<14x18xf32>
    %c2_498 = arith.constant 2 : index
    %c1_499 = arith.constant 1 : index
    %c0_500 = arith.constant 0 : index
    %1408 = vector.load %arg4[%c2_498, %c1_499, %c0_500] : memref<3x18x18xf32, #tpu.memory_space<vmem>>, vector<1x14x18xf32>
    %1409 = vector.shape_cast %1408 : vector<1x14x18xf32> to vector<14x18xf32>
    %c2_501 = arith.constant 2 : index
    %c2_502 = arith.constant 2 : index
    %c0_503 = arith.constant 0 : index
    %1410 = vector.load %arg4[%c2_501, %c2_502, %c0_503] : memref<3x18x18xf32, #tpu.memory_space<vmem>>, vector<1x14x18xf32>
    %1411 = vector.shape_cast %1410 : vector<1x14x18xf32> to vector<14x18xf32>
    %c2_504 = arith.constant 2 : index
    %c3_505 = arith.constant 3 : index
    %c0_506 = arith.constant 0 : index
    %1412 = vector.load %arg4[%c2_504, %c3_505, %c0_506] : memref<3x18x18xf32, #tpu.memory_space<vmem>>, vector<1x14x18xf32>
    %1413 = vector.shape_cast %1412 : vector<1x14x18xf32> to vector<14x18xf32>
    %c2_507 = arith.constant 2 : index
    %c4_508 = arith.constant 4 : index
    %c0_509 = arith.constant 0 : index
    %1414 = vector.load %arg4[%c2_507, %c4_508, %c0_509] : memref<3x18x18xf32, #tpu.memory_space<vmem>>, vector<1x14x18xf32>
    %1415 = vector.shape_cast %1414 : vector<1x14x18xf32> to vector<14x18xf32>
    %cst_510 = arith.constant 0.000000e+00 : f32
    %1416 = vector.broadcast %cst_510 : f32 to vector<14x18xf32>
    %c132_511 = arith.constant 132 : index
    %1417 = memref.load %arg2[%c132_511] : memref<187xf32, #tpu.memory_space<smem>>
    %1418 = vector.broadcast %1417 : f32 to vector<14x18xf32>
    %1419 = arith.addf %1416, %1418 : vector<14x18xf32>
    %c87_512 = arith.constant 87 : index
    %1420 = memref.load %arg2[%c87_512] : memref<187xf32, #tpu.memory_space<smem>>
    %1421 = vector.broadcast %1420 : f32 to vector<14x18xf32>
    %1422 = arith.mulf %1421, %1387 : vector<14x18xf32>
    %1423 = arith.addf %1419, %1422 : vector<14x18xf32>
    %c88_513 = arith.constant 88 : index
    %1424 = memref.load %arg2[%c88_513] : memref<187xf32, #tpu.memory_space<smem>>
    %1425 = vector.broadcast %1424 : f32 to vector<14x18xf32>
    %1426 = arith.mulf %1425, %1389 : vector<14x18xf32>
    %1427 = arith.addf %1423, %1426 : vector<14x18xf32>
    %c89_514 = arith.constant 89 : index
    %1428 = memref.load %arg2[%c89_514] : memref<187xf32, #tpu.memory_space<smem>>
    %1429 = vector.broadcast %1428 : f32 to vector<14x18xf32>
    %1430 = arith.mulf %1429, %1391 : vector<14x18xf32>
    %1431 = arith.addf %1427, %1430 : vector<14x18xf32>
    %c90_515 = arith.constant 90 : index
    %1432 = memref.load %arg2[%c90_515] : memref<187xf32, #tpu.memory_space<smem>>
    %1433 = vector.broadcast %1432 : f32 to vector<14x18xf32>
    %1434 = arith.mulf %1433, %1393 : vector<14x18xf32>
    %1435 = arith.addf %1431, %1434 : vector<14x18xf32>
    %c91_516 = arith.constant 91 : index
    %1436 = memref.load %arg2[%c91_516] : memref<187xf32, #tpu.memory_space<smem>>
    %1437 = vector.broadcast %1436 : f32 to vector<14x18xf32>
    %1438 = arith.mulf %1437, %1395 : vector<14x18xf32>
    %1439 = arith.addf %1435, %1438 : vector<14x18xf32>
    %c92_517 = arith.constant 92 : index
    %1440 = memref.load %arg2[%c92_517] : memref<187xf32, #tpu.memory_space<smem>>
    %1441 = vector.broadcast %1440 : f32 to vector<14x18xf32>
    %1442 = arith.mulf %1441, %1397 : vector<14x18xf32>
    %1443 = arith.addf %1439, %1442 : vector<14x18xf32>
    %c93_518 = arith.constant 93 : index
    %1444 = memref.load %arg2[%c93_518] : memref<187xf32, #tpu.memory_space<smem>>
    %1445 = vector.broadcast %1444 : f32 to vector<14x18xf32>
    %1446 = arith.mulf %1445, %1399 : vector<14x18xf32>
    %1447 = arith.addf %1443, %1446 : vector<14x18xf32>
    %c94_519 = arith.constant 94 : index
    %1448 = memref.load %arg2[%c94_519] : memref<187xf32, #tpu.memory_space<smem>>
    %1449 = vector.broadcast %1448 : f32 to vector<14x18xf32>
    %1450 = arith.mulf %1449, %1401 : vector<14x18xf32>
    %1451 = arith.addf %1447, %1450 : vector<14x18xf32>
    %c95_520 = arith.constant 95 : index
    %1452 = memref.load %arg2[%c95_520] : memref<187xf32, #tpu.memory_space<smem>>
    %1453 = vector.broadcast %1452 : f32 to vector<14x18xf32>
    %1454 = arith.mulf %1453, %1403 : vector<14x18xf32>
    %1455 = arith.addf %1451, %1454 : vector<14x18xf32>
    %c96_521 = arith.constant 96 : index
    %1456 = memref.load %arg2[%c96_521] : memref<187xf32, #tpu.memory_space<smem>>
    %1457 = vector.broadcast %1456 : f32 to vector<14x18xf32>
    %1458 = arith.mulf %1457, %1405 : vector<14x18xf32>
    %1459 = arith.addf %1455, %1458 : vector<14x18xf32>
    %c97_522 = arith.constant 97 : index
    %1460 = memref.load %arg2[%c97_522] : memref<187xf32, #tpu.memory_space<smem>>
    %1461 = vector.broadcast %1460 : f32 to vector<14x18xf32>
    %1462 = arith.mulf %1461, %1407 : vector<14x18xf32>
    %1463 = arith.addf %1459, %1462 : vector<14x18xf32>
    %c98_523 = arith.constant 98 : index
    %1464 = memref.load %arg2[%c98_523] : memref<187xf32, #tpu.memory_space<smem>>
    %1465 = vector.broadcast %1464 : f32 to vector<14x18xf32>
    %1466 = arith.mulf %1465, %1409 : vector<14x18xf32>
    %1467 = arith.addf %1463, %1466 : vector<14x18xf32>
    %c99_524 = arith.constant 99 : index
    %1468 = memref.load %arg2[%c99_524] : memref<187xf32, #tpu.memory_space<smem>>
    %1469 = vector.broadcast %1468 : f32 to vector<14x18xf32>
    %1470 = arith.mulf %1469, %1411 : vector<14x18xf32>
    %1471 = arith.addf %1467, %1470 : vector<14x18xf32>
    %c100_525 = arith.constant 100 : index
    %1472 = memref.load %arg2[%c100_525] : memref<187xf32, #tpu.memory_space<smem>>
    %1473 = vector.broadcast %1472 : f32 to vector<14x18xf32>
    %1474 = arith.mulf %1473, %1413 : vector<14x18xf32>
    %1475 = arith.addf %1471, %1474 : vector<14x18xf32>
    %c101_526 = arith.constant 101 : index
    %1476 = memref.load %arg2[%c101_526] : memref<187xf32, #tpu.memory_space<smem>>
    %1477 = vector.broadcast %1476 : f32 to vector<14x18xf32>
    %1478 = arith.mulf %1477, %1415 : vector<14x18xf32>
    %1479 = arith.addf %1475, %1478 : vector<14x18xf32>
    %c0_527 = arith.constant 0 : index
    %c1_528 = arith.constant 1 : index
    %c1_529 = arith.constant 1 : index
    %1480 = vector.load %arg5[%c0_527, %c1_528, %c1_529] : memref<3x16x20xf32, #tpu.memory_space<vmem>>, vector<1x14x18xf32>
    %1481 = vector.shape_cast %1480 : vector<1x14x18xf32> to vector<14x18xf32>
    %1482 = vector.shape_cast %1479 : vector<14x18xf32> to vector<1x14x18xf32>
    tpu.vector_store %arg5[%c0_527, %c1_528, %c1_529], %1482 {strides = array<i32>} : memref<3x16x20xf32, #tpu.memory_space<vmem>>, vector<1x14x18xf32>,
    %cst_530 = arith.constant 0.000000e+00 : f32
    %1483 = vector.broadcast %cst_530 : f32 to vector<14x18xf32>
    %c133_531 = arith.constant 133 : index
    %1484 = memref.load %arg2[%c133_531] : memref<187xf32, #tpu.memory_space<smem>>
    %1485 = vector.broadcast %1484 : f32 to vector<14x18xf32>
    %1486 = arith.addf %1483, %1485 : vector<14x18xf32>
    %c102_532 = arith.constant 102 : index
    %1487 = memref.load %arg2[%c102_532] : memref<187xf32, #tpu.memory_space<smem>>
    %1488 = vector.broadcast %1487 : f32 to vector<14x18xf32>
    %1489 = arith.mulf %1488, %1387 : vector<14x18xf32>
    %1490 = arith.addf %1486, %1489 : vector<14x18xf32>
    %c103_533 = arith.constant 103 : index
    %1491 = memref.load %arg2[%c103_533] : memref<187xf32, #tpu.memory_space<smem>>
    %1492 = vector.broadcast %1491 : f32 to vector<14x18xf32>
    %1493 = arith.mulf %1492, %1389 : vector<14x18xf32>
    %1494 = arith.addf %1490, %1493 : vector<14x18xf32>
    %c104_534 = arith.constant 104 : index
    %1495 = memref.load %arg2[%c104_534] : memref<187xf32, #tpu.memory_space<smem>>
    %1496 = vector.broadcast %1495 : f32 to vector<14x18xf32>
    %1497 = arith.mulf %1496, %1391 : vector<14x18xf32>
    %1498 = arith.addf %1494, %1497 : vector<14x18xf32>
    %c105_535 = arith.constant 105 : index
    %1499 = memref.load %arg2[%c105_535] : memref<187xf32, #tpu.memory_space<smem>>
    %1500 = vector.broadcast %1499 : f32 to vector<14x18xf32>
    %1501 = arith.mulf %1500, %1393 : vector<14x18xf32>
    %1502 = arith.addf %1498, %1501 : vector<14x18xf32>
    %c106_536 = arith.constant 106 : index
    %1503 = memref.load %arg2[%c106_536] : memref<187xf32, #tpu.memory_space<smem>>
    %1504 = vector.broadcast %1503 : f32 to vector<14x18xf32>
    %1505 = arith.mulf %1504, %1395 : vector<14x18xf32>
    %1506 = arith.addf %1502, %1505 : vector<14x18xf32>
    %c107_537 = arith.constant 107 : index
    %1507 = memref.load %arg2[%c107_537] : memref<187xf32, #tpu.memory_space<smem>>
    %1508 = vector.broadcast %1507 : f32 to vector<14x18xf32>
    %1509 = arith.mulf %1508, %1397 : vector<14x18xf32>
    %1510 = arith.addf %1506, %1509 : vector<14x18xf32>
    %c108_538 = arith.constant 108 : index
    %1511 = memref.load %arg2[%c108_538] : memref<187xf32, #tpu.memory_space<smem>>
    %1512 = vector.broadcast %1511 : f32 to vector<14x18xf32>
    %1513 = arith.mulf %1512, %1399 : vector<14x18xf32>
    %1514 = arith.addf %1510, %1513 : vector<14x18xf32>
    %c109_539 = arith.constant 109 : index
    %1515 = memref.load %arg2[%c109_539] : memref<187xf32, #tpu.memory_space<smem>>
    %1516 = vector.broadcast %1515 : f32 to vector<14x18xf32>
    %1517 = arith.mulf %1516, %1401 : vector<14x18xf32>
    %1518 = arith.addf %1514, %1517 : vector<14x18xf32>
    %c110_540 = arith.constant 110 : index
    %1519 = memref.load %arg2[%c110_540] : memref<187xf32, #tpu.memory_space<smem>>
    %1520 = vector.broadcast %1519 : f32 to vector<14x18xf32>
    %1521 = arith.mulf %1520, %1403 : vector<14x18xf32>
    %1522 = arith.addf %1518, %1521 : vector<14x18xf32>
    %c111_541 = arith.constant 111 : index
    %1523 = memref.load %arg2[%c111_541] : memref<187xf32, #tpu.memory_space<smem>>
    %1524 = vector.broadcast %1523 : f32 to vector<14x18xf32>
    %1525 = arith.mulf %1524, %1405 : vector<14x18xf32>
    %1526 = arith.addf %1522, %1525 : vector<14x18xf32>
    %c112_542 = arith.constant 112 : index
    %1527 = memref.load %arg2[%c112_542] : memref<187xf32, #tpu.memory_space<smem>>
    %1528 = vector.broadcast %1527 : f32 to vector<14x18xf32>
    %1529 = arith.mulf %1528, %1407 : vector<14x18xf32>
    %1530 = arith.addf %1526, %1529 : vector<14x18xf32>
    %c113_543 = arith.constant 113 : index
    %1531 = memref.load %arg2[%c113_543] : memref<187xf32, #tpu.memory_space<smem>>
    %1532 = vector.broadcast %1531 : f32 to vector<14x18xf32>
    %1533 = arith.mulf %1532, %1409 : vector<14x18xf32>
    %1534 = arith.addf %1530, %1533 : vector<14x18xf32>
    %c114_544 = arith.constant 114 : index
    %1535 = memref.load %arg2[%c114_544] : memref<187xf32, #tpu.memory_space<smem>>
    %1536 = vector.broadcast %1535 : f32 to vector<14x18xf32>
    %1537 = arith.mulf %1536, %1411 : vector<14x18xf32>
    %1538 = arith.addf %1534, %1537 : vector<14x18xf32>
    %c115_545 = arith.constant 115 : index
    %1539 = memref.load %arg2[%c115_545] : memref<187xf32, #tpu.memory_space<smem>>
    %1540 = vector.broadcast %1539 : f32 to vector<14x18xf32>
    %1541 = arith.mulf %1540, %1413 : vector<14x18xf32>
    %1542 = arith.addf %1538, %1541 : vector<14x18xf32>
    %c116_546 = arith.constant 116 : index
    %1543 = memref.load %arg2[%c116_546] : memref<187xf32, #tpu.memory_space<smem>>
    %1544 = vector.broadcast %1543 : f32 to vector<14x18xf32>
    %1545 = arith.mulf %1544, %1415 : vector<14x18xf32>
    %1546 = arith.addf %1542, %1545 : vector<14x18xf32>
    %c1_547 = arith.constant 1 : index
    %c1_548 = arith.constant 1 : index
    %c1_549 = arith.constant 1 : index
    %1547 = vector.load %arg5[%c1_547, %c1_548, %c1_549] : memref<3x16x20xf32, #tpu.memory_space<vmem>>, vector<1x14x18xf32>
    %1548 = vector.shape_cast %1547 : vector<1x14x18xf32> to vector<14x18xf32>
    %1549 = vector.shape_cast %1546 : vector<14x18xf32> to vector<1x14x18xf32>
    tpu.vector_store %arg5[%c1_547, %c1_548, %c1_549], %1549 {strides = array<i32>} : memref<3x16x20xf32, #tpu.memory_space<vmem>>, vector<1x14x18xf32>,
    %cst_550 = arith.constant 0.000000e+00 : f32
    %1550 = vector.broadcast %cst_550 : f32 to vector<14x18xf32>
    %c134_551 = arith.constant 134 : index
    %1551 = memref.load %arg2[%c134_551] : memref<187xf32, #tpu.memory_space<smem>>
    %1552 = vector.broadcast %1551 : f32 to vector<14x18xf32>
    %1553 = arith.addf %1550, %1552 : vector<14x18xf32>
    %c117_552 = arith.constant 117 : index
    %1554 = memref.load %arg2[%c117_552] : memref<187xf32, #tpu.memory_space<smem>>
    %1555 = vector.broadcast %1554 : f32 to vector<14x18xf32>
    %1556 = arith.mulf %1555, %1387 : vector<14x18xf32>
    %1557 = arith.addf %1553, %1556 : vector<14x18xf32>
    %c118_553 = arith.constant 118 : index
    %1558 = memref.load %arg2[%c118_553] : memref<187xf32, #tpu.memory_space<smem>>
    %1559 = vector.broadcast %1558 : f32 to vector<14x18xf32>
    %1560 = arith.mulf %1559, %1389 : vector<14x18xf32>
    %1561 = arith.addf %1557, %1560 : vector<14x18xf32>
    %c119_554 = arith.constant 119 : index
    %1562 = memref.load %arg2[%c119_554] : memref<187xf32, #tpu.memory_space<smem>>
    %1563 = vector.broadcast %1562 : f32 to vector<14x18xf32>
    %1564 = arith.mulf %1563, %1391 : vector<14x18xf32>
    %1565 = arith.addf %1561, %1564 : vector<14x18xf32>
    %c120_555 = arith.constant 120 : index
    %1566 = memref.load %arg2[%c120_555] : memref<187xf32, #tpu.memory_space<smem>>
    %1567 = vector.broadcast %1566 : f32 to vector<14x18xf32>
    %1568 = arith.mulf %1567, %1393 : vector<14x18xf32>
    %1569 = arith.addf %1565, %1568 : vector<14x18xf32>
    %c121_556 = arith.constant 121 : index
    %1570 = memref.load %arg2[%c121_556] : memref<187xf32, #tpu.memory_space<smem>>
    %1571 = vector.broadcast %1570 : f32 to vector<14x18xf32>
    %1572 = arith.mulf %1571, %1395 : vector<14x18xf32>
    %1573 = arith.addf %1569, %1572 : vector<14x18xf32>
    %c122_557 = arith.constant 122 : index
    %1574 = memref.load %arg2[%c122_557] : memref<187xf32, #tpu.memory_space<smem>>
    %1575 = vector.broadcast %1574 : f32 to vector<14x18xf32>
    %1576 = arith.mulf %1575, %1397 : vector<14x18xf32>
    %1577 = arith.addf %1573, %1576 : vector<14x18xf32>
    %c123_558 = arith.constant 123 : index
    %1578 = memref.load %arg2[%c123_558] : memref<187xf32, #tpu.memory_space<smem>>
    %1579 = vector.broadcast %1578 : f32 to vector<14x18xf32>
    %1580 = arith.mulf %1579, %1399 : vector<14x18xf32>
    %1581 = arith.addf %1577, %1580 : vector<14x18xf32>
    %c124_559 = arith.constant 124 : index
    %1582 = memref.load %arg2[%c124_559] : memref<187xf32, #tpu.memory_space<smem>>
    %1583 = vector.broadcast %1582 : f32 to vector<14x18xf32>
    %1584 = arith.mulf %1583, %1401 : vector<14x18xf32>
    %1585 = arith.addf %1581, %1584 : vector<14x18xf32>
    %c125_560 = arith.constant 125 : index
    %1586 = memref.load %arg2[%c125_560] : memref<187xf32, #tpu.memory_space<smem>>
    %1587 = vector.broadcast %1586 : f32 to vector<14x18xf32>
    %1588 = arith.mulf %1587, %1403 : vector<14x18xf32>
    %1589 = arith.addf %1585, %1588 : vector<14x18xf32>
    %c126_561 = arith.constant 126 : index
    %1590 = memref.load %arg2[%c126_561] : memref<187xf32, #tpu.memory_space<smem>>
    %1591 = vector.broadcast %1590 : f32 to vector<14x18xf32>
    %1592 = arith.mulf %1591, %1405 : vector<14x18xf32>
    %1593 = arith.addf %1589, %1592 : vector<14x18xf32>
    %c127_562 = arith.constant 127 : index
    %1594 = memref.load %arg2[%c127_562] : memref<187xf32, #tpu.memory_space<smem>>
    %1595 = vector.broadcast %1594 : f32 to vector<14x18xf32>
    %1596 = arith.mulf %1595, %1407 : vector<14x18xf32>
    %1597 = arith.addf %1593, %1596 : vector<14x18xf32>
    %c128_563 = arith.constant 128 : index
    %1598 = memref.load %arg2[%c128_563] : memref<187xf32, #tpu.memory_space<smem>>
    %1599 = vector.broadcast %1598 : f32 to vector<14x18xf32>
    %1600 = arith.mulf %1599, %1409 : vector<14x18xf32>
    %1601 = arith.addf %1597, %1600 : vector<14x18xf32>
    %c129_564 = arith.constant 129 : index
    %1602 = memref.load %arg2[%c129_564] : memref<187xf32, #tpu.memory_space<smem>>
    %1603 = vector.broadcast %1602 : f32 to vector<14x18xf32>
    %1604 = arith.mulf %1603, %1411 : vector<14x18xf32>
    %1605 = arith.addf %1601, %1604 : vector<14x18xf32>
    %c130_565 = arith.constant 130 : index
    %1606 = memref.load %arg2[%c130_565] : memref<187xf32, #tpu.memory_space<smem>>
    %1607 = vector.broadcast %1606 : f32 to vector<14x18xf32>
    %1608 = arith.mulf %1607, %1413 : vector<14x18xf32>
    %1609 = arith.addf %1605, %1608 : vector<14x18xf32>
    %c131_566 = arith.constant 131 : index
    %1610 = memref.load %arg2[%c131_566] : memref<187xf32, #tpu.memory_space<smem>>
    %1611 = vector.broadcast %1610 : f32 to vector<14x18xf32>
    %1612 = arith.mulf %1611, %1415 : vector<14x18xf32>
    %1613 = arith.addf %1609, %1612 : vector<14x18xf32>
    %c2_567 = arith.constant 2 : index
    %c1_568 = arith.constant 1 : index
    %c1_569 = arith.constant 1 : index
    %1614 = vector.load %arg5[%c2_567, %c1_568, %c1_569] : memref<3x16x20xf32, #tpu.memory_space<vmem>>, vector<1x14x18xf32>
    %1615 = vector.shape_cast %1614 : vector<1x14x18xf32> to vector<14x18xf32>
    %1616 = vector.shape_cast %1613 : vector<14x18xf32> to vector<1x14x18xf32>
    tpu.vector_store %arg5[%c2_567, %c1_568, %c1_569], %1616 {strides = array<i32>} : memref<3x16x20xf32, #tpu.memory_space<vmem>>, vector<1x14x18xf32>,
    %c0_570 = arith.constant 0 : index
    %c0_571 = arith.constant 0 : index
    %c0_572 = arith.constant 0 : index
    %1617 = vector.load %arg5[%c0_570, %c0_571, %c0_572] : memref<3x16x20xf32, #tpu.memory_space<vmem>>, vector<1x16x16xf32>
    %1618 = vector.shape_cast %1617 : vector<1x16x16xf32> to vector<16x16xf32>
    %c0_573 = arith.constant 0 : index
    %c0_574 = arith.constant 0 : index
    %c1_575 = arith.constant 1 : index
    %1619 = vector.load %arg5[%c0_573, %c0_574, %c1_575] : memref<3x16x20xf32, #tpu.memory_space<vmem>>, vector<1x16x16xf32>
    %1620 = vector.shape_cast %1619 : vector<1x16x16xf32> to vector<16x16xf32>
    %c0_576 = arith.constant 0 : index
    %c0_577 = arith.constant 0 : index
    %c2_578 = arith.constant 2 : index
    %1621 = vector.load %arg5[%c0_576, %c0_577, %c2_578] : memref<3x16x20xf32, #tpu.memory_space<vmem>>, vector<1x16x16xf32>
    %1622 = vector.shape_cast %1621 : vector<1x16x16xf32> to vector<16x16xf32>
    %c0_579 = arith.constant 0 : index
    %c0_580 = arith.constant 0 : index
    %c3_581 = arith.constant 3 : index
    %1623 = vector.load %arg5[%c0_579, %c0_580, %c3_581] : memref<3x16x20xf32, #tpu.memory_space<vmem>>, vector<1x16x16xf32>
    %1624 = vector.shape_cast %1623 : vector<1x16x16xf32> to vector<16x16xf32>
    %c0_582 = arith.constant 0 : index
    %c0_583 = arith.constant 0 : index
    %c4_584 = arith.constant 4 : index
    %1625 = vector.load %arg5[%c0_582, %c0_583, %c4_584] : memref<3x16x20xf32, #tpu.memory_space<vmem>>, vector<1x16x16xf32>
    %1626 = vector.shape_cast %1625 : vector<1x16x16xf32> to vector<16x16xf32>
    %c1_585 = arith.constant 1 : index
    %c0_586 = arith.constant 0 : index
    %c0_587 = arith.constant 0 : index
    %1627 = vector.load %arg5[%c1_585, %c0_586, %c0_587] : memref<3x16x20xf32, #tpu.memory_space<vmem>>, vector<1x16x16xf32>
    %1628 = vector.shape_cast %1627 : vector<1x16x16xf32> to vector<16x16xf32>
    %c1_588 = arith.constant 1 : index
    %c0_589 = arith.constant 0 : index
    %c1_590 = arith.constant 1 : index
    %1629 = vector.load %arg5[%c1_588, %c0_589, %c1_590] : memref<3x16x20xf32, #tpu.memory_space<vmem>>, vector<1x16x16xf32>
    %1630 = vector.shape_cast %1629 : vector<1x16x16xf32> to vector<16x16xf32>
    %c1_591 = arith.constant 1 : index
    %c0_592 = arith.constant 0 : index
    %c2_593 = arith.constant 2 : index
    %1631 = vector.load %arg5[%c1_591, %c0_592, %c2_593] : memref<3x16x20xf32, #tpu.memory_space<vmem>>, vector<1x16x16xf32>
    %1632 = vector.shape_cast %1631 : vector<1x16x16xf32> to vector<16x16xf32>
    %c1_594 = arith.constant 1 : index
    %c0_595 = arith.constant 0 : index
    %c3_596 = arith.constant 3 : index
    %1633 = vector.load %arg5[%c1_594, %c0_595, %c3_596] : memref<3x16x20xf32, #tpu.memory_space<vmem>>, vector<1x16x16xf32>
    %1634 = vector.shape_cast %1633 : vector<1x16x16xf32> to vector<16x16xf32>
    %c1_597 = arith.constant 1 : index
    %c0_598 = arith.constant 0 : index
    %c4_599 = arith.constant 4 : index
    %1635 = vector.load %arg5[%c1_597, %c0_598, %c4_599] : memref<3x16x20xf32, #tpu.memory_space<vmem>>, vector<1x16x16xf32>
    %1636 = vector.shape_cast %1635 : vector<1x16x16xf32> to vector<16x16xf32>
    %c2_600 = arith.constant 2 : index
    %c0_601 = arith.constant 0 : index
    %c0_602 = arith.constant 0 : index
    %1637 = vector.load %arg5[%c2_600, %c0_601, %c0_602] : memref<3x16x20xf32, #tpu.memory_space<vmem>>, vector<1x16x16xf32>
    %1638 = vector.shape_cast %1637 : vector<1x16x16xf32> to vector<16x16xf32>
    %c2_603 = arith.constant 2 : index
    %c0_604 = arith.constant 0 : index
    %c1_605 = arith.constant 1 : index
    %1639 = vector.load %arg5[%c2_603, %c0_604, %c1_605] : memref<3x16x20xf32, #tpu.memory_space<vmem>>, vector<1x16x16xf32>
    %1640 = vector.shape_cast %1639 : vector<1x16x16xf32> to vector<16x16xf32>
    %c2_606 = arith.constant 2 : index
    %c0_607 = arith.constant 0 : index
    %c2_608 = arith.constant 2 : index
    %1641 = vector.load %arg5[%c2_606, %c0_607, %c2_608] : memref<3x16x20xf32, #tpu.memory_space<vmem>>, vector<1x16x16xf32>
    %1642 = vector.shape_cast %1641 : vector<1x16x16xf32> to vector<16x16xf32>
    %c2_609 = arith.constant 2 : index
    %c0_610 = arith.constant 0 : index
    %c3_611 = arith.constant 3 : index
    %1643 = vector.load %arg5[%c2_609, %c0_610, %c3_611] : memref<3x16x20xf32, #tpu.memory_space<vmem>>, vector<1x16x16xf32>
    %1644 = vector.shape_cast %1643 : vector<1x16x16xf32> to vector<16x16xf32>
    %c2_612 = arith.constant 2 : index
    %c0_613 = arith.constant 0 : index
    %c4_614 = arith.constant 4 : index
    %1645 = vector.load %arg5[%c2_612, %c0_613, %c4_614] : memref<3x16x20xf32, #tpu.memory_space<vmem>>, vector<1x16x16xf32>
    %1646 = vector.shape_cast %1645 : vector<1x16x16xf32> to vector<16x16xf32>
    %cst_615 = arith.constant 0.000000e+00 : f32
    %1647 = vector.broadcast %cst_615 : f32 to vector<16x16xf32>
    %c180_616 = arith.constant 180 : index
    %1648 = memref.load %arg2[%c180_616] : memref<187xf32, #tpu.memory_space<smem>>
    %1649 = vector.broadcast %1648 : f32 to vector<16x16xf32>
    %1650 = arith.addf %1647, %1649 : vector<16x16xf32>
    %c135_617 = arith.constant 135 : index
    %1651 = memref.load %arg2[%c135_617] : memref<187xf32, #tpu.memory_space<smem>>
    %1652 = vector.broadcast %1651 : f32 to vector<16x16xf32>
    %1653 = arith.mulf %1652, %1618 : vector<16x16xf32>
    %1654 = arith.addf %1650, %1653 : vector<16x16xf32>
    %c136_618 = arith.constant 136 : index
    %1655 = memref.load %arg2[%c136_618] : memref<187xf32, #tpu.memory_space<smem>>
    %1656 = vector.broadcast %1655 : f32 to vector<16x16xf32>
    %1657 = arith.mulf %1656, %1620 : vector<16x16xf32>
    %1658 = arith.addf %1654, %1657 : vector<16x16xf32>
    %c137_619 = arith.constant 137 : index
    %1659 = memref.load %arg2[%c137_619] : memref<187xf32, #tpu.memory_space<smem>>
    %1660 = vector.broadcast %1659 : f32 to vector<16x16xf32>
    %1661 = arith.mulf %1660, %1622 : vector<16x16xf32>
    %1662 = arith.addf %1658, %1661 : vector<16x16xf32>
    %c138_620 = arith.constant 138 : index
    %1663 = memref.load %arg2[%c138_620] : memref<187xf32, #tpu.memory_space<smem>>
    %1664 = vector.broadcast %1663 : f32 to vector<16x16xf32>
    %1665 = arith.mulf %1664, %1624 : vector<16x16xf32>
    %1666 = arith.addf %1662, %1665 : vector<16x16xf32>
    %c139_621 = arith.constant 139 : index
    %1667 = memref.load %arg2[%c139_621] : memref<187xf32, #tpu.memory_space<smem>>
    %1668 = vector.broadcast %1667 : f32 to vector<16x16xf32>
    %1669 = arith.mulf %1668, %1626 : vector<16x16xf32>
    %1670 = arith.addf %1666, %1669 : vector<16x16xf32>
    %c140_622 = arith.constant 140 : index
    %1671 = memref.load %arg2[%c140_622] : memref<187xf32, #tpu.memory_space<smem>>
    %1672 = vector.broadcast %1671 : f32 to vector<16x16xf32>
    %1673 = arith.mulf %1672, %1628 : vector<16x16xf32>
    %1674 = arith.addf %1670, %1673 : vector<16x16xf32>
    %c141_623 = arith.constant 141 : index
    %1675 = memref.load %arg2[%c141_623] : memref<187xf32, #tpu.memory_space<smem>>
    %1676 = vector.broadcast %1675 : f32 to vector<16x16xf32>
    %1677 = arith.mulf %1676, %1630 : vector<16x16xf32>
    %1678 = arith.addf %1674, %1677 : vector<16x16xf32>
    %c142_624 = arith.constant 142 : index
    %1679 = memref.load %arg2[%c142_624] : memref<187xf32, #tpu.memory_space<smem>>
    %1680 = vector.broadcast %1679 : f32 to vector<16x16xf32>
    %1681 = arith.mulf %1680, %1632 : vector<16x16xf32>
    %1682 = arith.addf %1678, %1681 : vector<16x16xf32>
    %c143_625 = arith.constant 143 : index
    %1683 = memref.load %arg2[%c143_625] : memref<187xf32, #tpu.memory_space<smem>>
    %1684 = vector.broadcast %1683 : f32 to vector<16x16xf32>
    %1685 = arith.mulf %1684, %1634 : vector<16x16xf32>
    %1686 = arith.addf %1682, %1685 : vector<16x16xf32>
    %c144_626 = arith.constant 144 : index
    %1687 = memref.load %arg2[%c144_626] : memref<187xf32, #tpu.memory_space<smem>>
    %1688 = vector.broadcast %1687 : f32 to vector<16x16xf32>
    %1689 = arith.mulf %1688, %1636 : vector<16x16xf32>
    %1690 = arith.addf %1686, %1689 : vector<16x16xf32>
    %c145_627 = arith.constant 145 : index
    %1691 = memref.load %arg2[%c145_627] : memref<187xf32, #tpu.memory_space<smem>>
    %1692 = vector.broadcast %1691 : f32 to vector<16x16xf32>
    %1693 = arith.mulf %1692, %1638 : vector<16x16xf32>
    %1694 = arith.addf %1690, %1693 : vector<16x16xf32>
    %c146_628 = arith.constant 146 : index
    %1695 = memref.load %arg2[%c146_628] : memref<187xf32, #tpu.memory_space<smem>>
    %1696 = vector.broadcast %1695 : f32 to vector<16x16xf32>
    %1697 = arith.mulf %1696, %1640 : vector<16x16xf32>
    %1698 = arith.addf %1694, %1697 : vector<16x16xf32>
    %c147_629 = arith.constant 147 : index
    %1699 = memref.load %arg2[%c147_629] : memref<187xf32, #tpu.memory_space<smem>>
    %1700 = vector.broadcast %1699 : f32 to vector<16x16xf32>
    %1701 = arith.mulf %1700, %1642 : vector<16x16xf32>
    %1702 = arith.addf %1698, %1701 : vector<16x16xf32>
    %c148_630 = arith.constant 148 : index
    %1703 = memref.load %arg2[%c148_630] : memref<187xf32, #tpu.memory_space<smem>>
    %1704 = vector.broadcast %1703 : f32 to vector<16x16xf32>
    %1705 = arith.mulf %1704, %1644 : vector<16x16xf32>
    %1706 = arith.addf %1702, %1705 : vector<16x16xf32>
    %c149_631 = arith.constant 149 : index
    %1707 = memref.load %arg2[%c149_631] : memref<187xf32, #tpu.memory_space<smem>>
    %1708 = vector.broadcast %1707 : f32 to vector<16x16xf32>
    %1709 = arith.mulf %1708, %1646 : vector<16x16xf32>
    %1710 = arith.addf %1706, %1709 : vector<16x16xf32>
    %cst_632 = arith.constant 0.000000e+00 : f32
    %1711 = vector.broadcast %cst_632 : f32 to vector<16x16xf32>
    %c181_633 = arith.constant 181 : index
    %1712 = memref.load %arg2[%c181_633] : memref<187xf32, #tpu.memory_space<smem>>
    %1713 = vector.broadcast %1712 : f32 to vector<16x16xf32>
    %1714 = arith.addf %1711, %1713 : vector<16x16xf32>
    %c150_634 = arith.constant 150 : index
    %1715 = memref.load %arg2[%c150_634] : memref<187xf32, #tpu.memory_space<smem>>
    %1716 = vector.broadcast %1715 : f32 to vector<16x16xf32>
    %1717 = arith.mulf %1716, %1618 : vector<16x16xf32>
    %1718 = arith.addf %1714, %1717 : vector<16x16xf32>
    %c151_635 = arith.constant 151 : index
    %1719 = memref.load %arg2[%c151_635] : memref<187xf32, #tpu.memory_space<smem>>
    %1720 = vector.broadcast %1719 : f32 to vector<16x16xf32>
    %1721 = arith.mulf %1720, %1620 : vector<16x16xf32>
    %1722 = arith.addf %1718, %1721 : vector<16x16xf32>
    %c152_636 = arith.constant 152 : index
    %1723 = memref.load %arg2[%c152_636] : memref<187xf32, #tpu.memory_space<smem>>
    %1724 = vector.broadcast %1723 : f32 to vector<16x16xf32>
    %1725 = arith.mulf %1724, %1622 : vector<16x16xf32>
    %1726 = arith.addf %1722, %1725 : vector<16x16xf32>
    %c153_637 = arith.constant 153 : index
    %1727 = memref.load %arg2[%c153_637] : memref<187xf32, #tpu.memory_space<smem>>
    %1728 = vector.broadcast %1727 : f32 to vector<16x16xf32>
    %1729 = arith.mulf %1728, %1624 : vector<16x16xf32>
    %1730 = arith.addf %1726, %1729 : vector<16x16xf32>
    %c154_638 = arith.constant 154 : index
    %1731 = memref.load %arg2[%c154_638] : memref<187xf32, #tpu.memory_space<smem>>
    %1732 = vector.broadcast %1731 : f32 to vector<16x16xf32>
    %1733 = arith.mulf %1732, %1626 : vector<16x16xf32>
    %1734 = arith.addf %1730, %1733 : vector<16x16xf32>
    %c155_639 = arith.constant 155 : index
    %1735 = memref.load %arg2[%c155_639] : memref<187xf32, #tpu.memory_space<smem>>
    %1736 = vector.broadcast %1735 : f32 to vector<16x16xf32>
    %1737 = arith.mulf %1736, %1628 : vector<16x16xf32>
    %1738 = arith.addf %1734, %1737 : vector<16x16xf32>
    %c156_640 = arith.constant 156 : index
    %1739 = memref.load %arg2[%c156_640] : memref<187xf32, #tpu.memory_space<smem>>
    %1740 = vector.broadcast %1739 : f32 to vector<16x16xf32>
    %1741 = arith.mulf %1740, %1630 : vector<16x16xf32>
    %1742 = arith.addf %1738, %1741 : vector<16x16xf32>
    %c157_641 = arith.constant 157 : index
    %1743 = memref.load %arg2[%c157_641] : memref<187xf32, #tpu.memory_space<smem>>
    %1744 = vector.broadcast %1743 : f32 to vector<16x16xf32>
    %1745 = arith.mulf %1744, %1632 : vector<16x16xf32>
    %1746 = arith.addf %1742, %1745 : vector<16x16xf32>
    %c158_642 = arith.constant 158 : index
    %1747 = memref.load %arg2[%c158_642] : memref<187xf32, #tpu.memory_space<smem>>
    %1748 = vector.broadcast %1747 : f32 to vector<16x16xf32>
    %1749 = arith.mulf %1748, %1634 : vector<16x16xf32>
    %1750 = arith.addf %1746, %1749 : vector<16x16xf32>
    %c159_643 = arith.constant 159 : index
    %1751 = memref.load %arg2[%c159_643] : memref<187xf32, #tpu.memory_space<smem>>
    %1752 = vector.broadcast %1751 : f32 to vector<16x16xf32>
    %1753 = arith.mulf %1752, %1636 : vector<16x16xf32>
    %1754 = arith.addf %1750, %1753 : vector<16x16xf32>
    %c160_644 = arith.constant 160 : index
    %1755 = memref.load %arg2[%c160_644] : memref<187xf32, #tpu.memory_space<smem>>
    %1756 = vector.broadcast %1755 : f32 to vector<16x16xf32>
    %1757 = arith.mulf %1756, %1638 : vector<16x16xf32>
    %1758 = arith.addf %1754, %1757 : vector<16x16xf32>
    %c161_645 = arith.constant 161 : index
    %1759 = memref.load %arg2[%c161_645] : memref<187xf32, #tpu.memory_space<smem>>
    %1760 = vector.broadcast %1759 : f32 to vector<16x16xf32>
    %1761 = arith.mulf %1760, %1640 : vector<16x16xf32>
    %1762 = arith.addf %1758, %1761 : vector<16x16xf32>
    %c162_646 = arith.constant 162 : index
    %1763 = memref.load %arg2[%c162_646] : memref<187xf32, #tpu.memory_space<smem>>
    %1764 = vector.broadcast %1763 : f32 to vector<16x16xf32>
    %1765 = arith.mulf %1764, %1642 : vector<16x16xf32>
    %1766 = arith.addf %1762, %1765 : vector<16x16xf32>
    %c163_647 = arith.constant 163 : index
    %1767 = memref.load %arg2[%c163_647] : memref<187xf32, #tpu.memory_space<smem>>
    %1768 = vector.broadcast %1767 : f32 to vector<16x16xf32>
    %1769 = arith.mulf %1768, %1644 : vector<16x16xf32>
    %1770 = arith.addf %1766, %1769 : vector<16x16xf32>
    %c164_648 = arith.constant 164 : index
    %1771 = memref.load %arg2[%c164_648] : memref<187xf32, #tpu.memory_space<smem>>
    %1772 = vector.broadcast %1771 : f32 to vector<16x16xf32>
    %1773 = arith.mulf %1772, %1646 : vector<16x16xf32>
    %1774 = arith.addf %1770, %1773 : vector<16x16xf32>
    %cst_649 = arith.constant 0.000000e+00 : f32
    %1775 = vector.broadcast %cst_649 : f32 to vector<16x16xf32>
    %c182_650 = arith.constant 182 : index
    %1776 = memref.load %arg2[%c182_650] : memref<187xf32, #tpu.memory_space<smem>>
    %1777 = vector.broadcast %1776 : f32 to vector<16x16xf32>
    %1778 = arith.addf %1775, %1777 : vector<16x16xf32>
    %c165_651 = arith.constant 165 : index
    %1779 = memref.load %arg2[%c165_651] : memref<187xf32, #tpu.memory_space<smem>>
    %1780 = vector.broadcast %1779 : f32 to vector<16x16xf32>
    %1781 = arith.mulf %1780, %1618 : vector<16x16xf32>
    %1782 = arith.addf %1778, %1781 : vector<16x16xf32>
    %c166_652 = arith.constant 166 : index
    %1783 = memref.load %arg2[%c166_652] : memref<187xf32, #tpu.memory_space<smem>>
    %1784 = vector.broadcast %1783 : f32 to vector<16x16xf32>
    %1785 = arith.mulf %1784, %1620 : vector<16x16xf32>
    %1786 = arith.addf %1782, %1785 : vector<16x16xf32>
    %c167_653 = arith.constant 167 : index
    %1787 = memref.load %arg2[%c167_653] : memref<187xf32, #tpu.memory_space<smem>>
    %1788 = vector.broadcast %1787 : f32 to vector<16x16xf32>
    %1789 = arith.mulf %1788, %1622 : vector<16x16xf32>
    %1790 = arith.addf %1786, %1789 : vector<16x16xf32>
    %c168_654 = arith.constant 168 : index
    %1791 = memref.load %arg2[%c168_654] : memref<187xf32, #tpu.memory_space<smem>>
    %1792 = vector.broadcast %1791 : f32 to vector<16x16xf32>
    %1793 = arith.mulf %1792, %1624 : vector<16x16xf32>
    %1794 = arith.addf %1790, %1793 : vector<16x16xf32>
    %c169_655 = arith.constant 169 : index
    %1795 = memref.load %arg2[%c169_655] : memref<187xf32, #tpu.memory_space<smem>>
    %1796 = vector.broadcast %1795 : f32 to vector<16x16xf32>
    %1797 = arith.mulf %1796, %1626 : vector<16x16xf32>
    %1798 = arith.addf %1794, %1797 : vector<16x16xf32>
    %c170_656 = arith.constant 170 : index
    %1799 = memref.load %arg2[%c170_656] : memref<187xf32, #tpu.memory_space<smem>>
    %1800 = vector.broadcast %1799 : f32 to vector<16x16xf32>
    %1801 = arith.mulf %1800, %1628 : vector<16x16xf32>
    %1802 = arith.addf %1798, %1801 : vector<16x16xf32>
    %c171_657 = arith.constant 171 : index
    %1803 = memref.load %arg2[%c171_657] : memref<187xf32, #tpu.memory_space<smem>>
    %1804 = vector.broadcast %1803 : f32 to vector<16x16xf32>
    %1805 = arith.mulf %1804, %1630 : vector<16x16xf32>
    %1806 = arith.addf %1802, %1805 : vector<16x16xf32>
    %c172_658 = arith.constant 172 : index
    %1807 = memref.load %arg2[%c172_658] : memref<187xf32, #tpu.memory_space<smem>>
    %1808 = vector.broadcast %1807 : f32 to vector<16x16xf32>
    %1809 = arith.mulf %1808, %1632 : vector<16x16xf32>
    %1810 = arith.addf %1806, %1809 : vector<16x16xf32>
    %c173_659 = arith.constant 173 : index
    %1811 = memref.load %arg2[%c173_659] : memref<187xf32, #tpu.memory_space<smem>>
    %1812 = vector.broadcast %1811 : f32 to vector<16x16xf32>
    %1813 = arith.mulf %1812, %1634 : vector<16x16xf32>
    %1814 = arith.addf %1810, %1813 : vector<16x16xf32>
    %c174_660 = arith.constant 174 : index
    %1815 = memref.load %arg2[%c174_660] : memref<187xf32, #tpu.memory_space<smem>>
    %1816 = vector.broadcast %1815 : f32 to vector<16x16xf32>
    %1817 = arith.mulf %1816, %1636 : vector<16x16xf32>
    %1818 = arith.addf %1814, %1817 : vector<16x16xf32>
    %c175_661 = arith.constant 175 : index
    %1819 = memref.load %arg2[%c175_661] : memref<187xf32, #tpu.memory_space<smem>>
    %1820 = vector.broadcast %1819 : f32 to vector<16x16xf32>
    %1821 = arith.mulf %1820, %1638 : vector<16x16xf32>
    %1822 = arith.addf %1818, %1821 : vector<16x16xf32>
    %c176_662 = arith.constant 176 : index
    %1823 = memref.load %arg2[%c176_662] : memref<187xf32, #tpu.memory_space<smem>>
    %1824 = vector.broadcast %1823 : f32 to vector<16x16xf32>
    %1825 = arith.mulf %1824, %1640 : vector<16x16xf32>
    %1826 = arith.addf %1822, %1825 : vector<16x16xf32>
    %c177_663 = arith.constant 177 : index
    %1827 = memref.load %arg2[%c177_663] : memref<187xf32, #tpu.memory_space<smem>>
    %1828 = vector.broadcast %1827 : f32 to vector<16x16xf32>
    %1829 = arith.mulf %1828, %1642 : vector<16x16xf32>
    %1830 = arith.addf %1826, %1829 : vector<16x16xf32>
    %c178_664 = arith.constant 178 : index
    %1831 = memref.load %arg2[%c178_664] : memref<187xf32, #tpu.memory_space<smem>>
    %1832 = vector.broadcast %1831 : f32 to vector<16x16xf32>
    %1833 = arith.mulf %1832, %1644 : vector<16x16xf32>
    %1834 = arith.addf %1830, %1833 : vector<16x16xf32>
    %c179_665 = arith.constant 179 : index
    %1835 = memref.load %arg2[%c179_665] : memref<187xf32, #tpu.memory_space<smem>>
    %1836 = vector.broadcast %1835 : f32 to vector<16x16xf32>
    %1837 = arith.mulf %1836, %1646 : vector<16x16xf32>
    %1838 = arith.addf %1834, %1837 : vector<16x16xf32>
    %cst_666 = arith.constant 0.000000e+00 : f32
    %1839 = vector.broadcast %cst_666 : f32 to vector<16x16xf32>
    %c186_667 = arith.constant 186 : index
    %1840 = memref.load %arg2[%c186_667] : memref<187xf32, #tpu.memory_space<smem>>
    %1841 = vector.broadcast %1840 : f32 to vector<16x16xf32>
    %1842 = arith.addf %1839, %1841 : vector<16x16xf32>
    %c183_668 = arith.constant 183 : index
    %1843 = memref.load %arg2[%c183_668] : memref<187xf32, #tpu.memory_space<smem>>
    %1844 = vector.broadcast %1843 : f32 to vector<16x16xf32>
    %1845 = arith.mulf %1844, %1710 : vector<16x16xf32>
    %1846 = arith.addf %1842, %1845 : vector<16x16xf32>
    %c184_669 = arith.constant 184 : index
    %1847 = memref.load %arg2[%c184_669] : memref<187xf32, #tpu.memory_space<smem>>
    %1848 = vector.broadcast %1847 : f32 to vector<16x16xf32>
    %1849 = arith.mulf %1848, %1774 : vector<16x16xf32>
    %1850 = arith.addf %1846, %1849 : vector<16x16xf32>
    %c185_670 = arith.constant 185 : index
    %1851 = memref.load %arg2[%c185_670] : memref<187xf32, #tpu.memory_space<smem>>
    %1852 = vector.broadcast %1851 : f32 to vector<16x16xf32>
    %1853 = arith.mulf %1852, %1838 : vector<16x16xf32>
    %1854 = arith.addf %1850, %1853 : vector<16x16xf32>
    %c0_671 = arith.constant 0 : index
    %c9_672 = arith.constant 9 : index
    %c0_673 = arith.constant 0 : index
    %c0_674 = arith.constant 0 : index
    %1855 = vector.load %arg3[%c0_671, %c9_672, %c0_673, %c0_674] : memref<1x10x16x16xf32, #tpu.memory_space<vmem>>, vector<1x1x16x16xf32>
    %1856 = vector.shape_cast %1855 : vector<1x1x16x16xf32> to vector<16x16xf32>
    %1857 = vector.shape_cast %1854 : vector<16x16xf32> to vector<1x1x16x16xf32>
    tpu.vector_store %arg3[%c0_671, %c9_672, %c0_673, %c0_674], %1857 {strides = array<i32>} : memref<1x10x16x16xf32, #tpu.memory_space<vmem>>, vector<1x1x16x16xf32>,
    return
  }
  func.func @transform_0(%arg0: i32) -> (i32, i32, i32, i32) {
    %c0_i32 = arith.constant 0 : i32
    %c0_i32_0 = arith.constant 0 : i32
    %c0_i32_1 = arith.constant 0 : i32
    %c0_i32_2 = arith.constant 0 : i32
    return %arg0, %c0_i32, %c0_i32_0, %c0_i32_1 : i32, i32, i32, i32
  }
  func.func @transform_1(%arg0: i32) -> i32 {
    %c0_i32 = arith.constant 0 : i32
    %c0_i32_0 = arith.constant 0 : i32
    return %c0_i32 : i32
  }
  func.func @transform_2(%arg0: i32) -> (i32, i32, i32, i32) {
    %c0_i32 = arith.constant 0 : i32
    %c0_i32_0 = arith.constant 0 : i32
    %c0_i32_1 = arith.constant 0 : i32
    %c0_i32_2 = arith.constant 0 : i32
    return %arg0, %c0_i32, %c0_i32_0, %c0_i32_1 : i32, i32, i32, i32
  }
}

</mosaic_0001>

<llo_original>
// kernel: textnet_apply.1
$region0: #{textnet_apply.1}
  #allocation0 [shape = 'u32[]', space=smem, size = 0x4, offset = 0x4, fixed_abs, tag = 'smem constant byte address 0x4 - core index']
  #allocation1 [shape = 'u32[144,128]{1,0:T(1,128)}', space=vmem, size = 0x12000, scoped, tag = 'internal scratch']
  #allocation2 [shape = 'f32[3,18,18]{2,1,0:T(8,128)}', space=vmem, size = 0x9000, scoped, tag = 'scratch operand']
  #allocation3 [shape = 'f32[3,16,20]{2,1,0:T(8,128)}', space=vmem, size = 0x6000, scoped, tag = 'scratch operand']
  %s0 = inlined_call_operand.hbm [shape: f32[2,4,16,16], index: 0, kind: input, shape index: {}]
  %s1 = inlined_call_operand.vmem [shape: f32[187], index: 1, kind: input, shape index: {}]
  %s2 = inlined_call_operand.vmem [shape: f32[2,10,16,16], index: 2, kind: output, shape index: {}]
  %s3 = sld [smem:[#allocation0]]
  $region49: #{textnet_apply.1} parent=0
    _
  %s5 = ssub.s32 1, %s3
  %s6 = scalar_select 0, %s5, %s3
  $region1: #{textnet_apply.1} parent=0
    #allocation4 [shape = 'u8[65536]{0}', space=vmem, size = 0x10000, scoped, tag = 'input window, operand 0']
    #allocation5 [shape = 's32[2]{0}', space=sflag, size = 0x8, scoped, tag = 'scoped memory for textnet_apply.1']
    #allocation6 [shape = 's32[2]{0}', space=sflag, size = 0x8, scoped, tag = 'scoped memory for textnet_apply.1']
    #allocation7 [shape = 'u8[1024]{0}', space=smem, size = 0x400, scoped, tag = 'input window, operand 1, single buffered']
    %7 = vsyncpa [#allocation5], 0
    %s8 = scalar_lea.sflag [#allocation5], 1
    %9 = vsyncpa %s8, 0
    %10 = vsyncpa [#allocation6], 0
    loop: start=0, step=1, limit=4
    $region2: #{textnet_apply.1} parent=1 // loop_pre_header
      _
    $region3: #{textnet_apply.1} parent=1 // loop_header
      %s12 = sphi 0, %s16
      %p13 = scmp.ge.s32.totalorder %s12, 4
      %s22 = sphi 0, %s24
      %s25 = sphi 0, %s22
      %s26 = sphi 0, %s25
      %s42 = sphi 0, %s26
      %s46 = sphi 0, %s46
      %s48 = sphi 0, %s46
      %s49 = sphi 0, %s48
      %s63 = sphi 0, %s49
      %s69 = sphi 0, %s71
      %s72 = sphi 0, %s69
      %s73 = sphi 0, %s72
      %s89 = sphi 0, %s73
    $region4: #{textnet_apply.1} parent=1 // loop_header_branch
      %15 = sbr.rel (%p13) target = $region8
    $region5: #{textnet_apply.1} parent=1 // loop_body
      %s17 = ssub.s32 %s12, 1
      %s18 = ssub.s32 %s12, 2
      %s19 = sadd.s32 %s12, 1
      %s20 = ssub.s32 %s12, %s19
      %p21 = scmp.eq.s32.totalorder %s20, 0
      %s23 = sadd.s32 %s22, 1
      %s24 = scalar_select %p21, %s22, %s23
      %p27 = pneg %p21
      %p28 = scmp.eq.s32.totalorder %s12, 1
      %p29 = por %p27, %p28
      %p30 = scmp.ne.s32.totalorder %s22, %s25
      %p31 = scmp.eq.s32.totalorder %s12, 0
      %p32 = por %p30, %p31
      %p33 = scmp.ne.s32.totalorder %s22, %s25
      %p34 = scmp.eq.s32.totalorder %s17, 1
      %p35 = por %p33, %p34
      %p36 = scmp.ne.s32.totalorder %s25, %s26
      %p37 = scmp.eq.s32.totalorder %s17, 0
      %p38 = por %p36, %p37
      %p39 = scmp.ne.s32.totalorder %s25, %s26
      %p40 = scmp.eq.s32.totalorder %s18, 1
      %p41 = por %p39, %p40
      %p43 = scmp.ne.s32.totalorder %s26, %s42
      %p44 = scmp.eq.s32.totalorder %s18, 0
      %p45 = por %p43, %p44
      %s47 = sadd.s32 %s46, 1
      %p50 = scmp.eq.s32.totalorder %s12, 1
      %p51 = scmp.ne.s32.totalorder %s46, %s48
      %p52 = scmp.eq.s32.totalorder %s12, 0
      %p53 = por %p51, %p52
      %p54 = scmp.ne.s32.totalorder %s46, %s48
      %p55 = scmp.eq.s32.totalorder %s17, 1
      %p56 = por %p54, %p55
      %p57 = scmp.ne.s32.totalorder %s48, %s49
      %p58 = scmp.eq.s32.totalorder %s17, 0
      %p59 = por %p57, %p58
      %p60 = scmp.ne.s32.totalorder %s48, %s49
      %p61 = scmp.eq.s32.totalorder %s18, 1
      %p62 = por %p60, %p61
      %p64 = scmp.ne.s32.totalorder %s49, %s63
      %p65 = scmp.eq.s32.totalorder %s18, 0
      %p66 = por %p64, %p65
      %s67 = ssub.s32 %s12, %s19
      %p68 = scmp.eq.s32.totalorder %s67, 0
      %s70 = sadd.s32 %s69, 1
      %s71 = scalar_select %p68, %s69, %s70
      %p74 = pneg %p68
      %p75 = scmp.eq.s32.totalorder %s12, 1
      %p76 = por %p74, %p75
      %p77 = scmp.ne.s32.totalorder %s69, %s72
      %p78 = scmp.eq.s32.totalorder %s12, 0
      %p79 = por %p77, %p78
      %p80 = scmp.ne.s32.totalorder %s69, %s72
      %p81 = scmp.eq.s32.totalorder %s17, 1
      %p82 = por %p80, %p81
      %p83 = scmp.ne.s32.totalorder %s72, %s73
      %p84 = scmp.eq.s32.totalorder %s17, 0
      %p85 = por %p83, %p84
      %p86 = scmp.ne.s32.totalorder %s72, %s73
      %p87 = scmp.eq.s32.totalorder %s18, 1
      %p88 = por %p86, %p87
      %p90 = scmp.ne.s32.totalorder %s73, %s89
      %p91 = scmp.eq.s32.totalorder %s18, 0
      %p92 = por %p90, %p91
      %p93 = scmp.le.s32.totalorder 1, %s12
      %p94 = scmp.lt.s32.totalorder %s12, 3
      %p95 = pnand %p93, %p94
      %p96 = pneg %p95
      // Predicated region
      $region9: #{textnet_apply.1} parent=5 // pred_check
        _
      $region10: #{textnet_apply.1} parent=5 // pred_check_branch
        %98 = sbr.rel (%p95) target = $region12
      $region11: #{textnet_apply.1} parent=5 // pred_region
        %s99 = ssub.s32 %s12, 1
        // Predicated region
        $region13: #{textnet_apply.1} parent=11 // pred_check
          %p100 = pneg %p59
        $region14: #{textnet_apply.1} parent=11 // pred_check_branch
          %102 = sbr.rel (%p100) target = $region16
        $region15: #{textnet_apply.1} parent=11 // pred_region
          %s104 = ssub.s32 32, 32
          %105 = vsyncadd [#allocation6], %s104
          %s107 = sshll.u32 %s1, 4
          %s108 = int_to_ptr.vmem [resolvable:$true] %s107
          %110 = dma.vmem_to_smem %s108, 32, [#allocation7], [#allocation6]
        $region16: #{textnet_apply.1} parent=11 // pred_fallthru
          _
      $region12: #{textnet_apply.1} parent=5 // pred_fallthru
        _
      %p111 = scmp.lt.s32.totalorder %s12, 2
      // Predicated region
      $region17: #{textnet_apply.1} parent=5 // pred_check
        %p112 = pneg %p111
      $region18: #{textnet_apply.1} parent=5 // pred_check_branch
        %114 = sbr.rel (%p112) target = $region20
      $region19: #{textnet_apply.1} parent=5 // pred_region
        // Predicated region
        $region21: #{textnet_apply.1} parent=19 // pred_check
          %p115 = pneg %p32
        $region22: #{textnet_apply.1} parent=19 // pred_check_branch
          %117 = sbr.rel (%p115) target = $region24
        $region23: #{textnet_apply.1} parent=19 // pred_region
          %s118 = sand.u32 %s22, 1
          %s119 = scalar_lea.sflag [#allocation5], %s118
          %s120 = sand.u32 %s22, 1
          %s121 = smul.addr %s120, 64
          %s122 = scalar_lea.vmem [#allocation4], %s121
          %s124 = ssub.s32 1024, 1024
          %125 = vsyncadd %s119, %s124
          %s126 = smul.addr %s12, 8
          %s127 = smul.addr %s126, 128
          %s128 = scalar_lea.hbm %s0, %s127
          %s129 = sshll.u32 %s122, 4
          %s130 = int_to_ptr.vmem [resolvable:$true] %s129
          %135 = dma.hbm_to_vmem [thread:$0]  %s128, 1024, %s130, %s119, 128, 128, 8
        $region24: #{textnet_apply.1} parent=19 // pred_fallthru
          _
      $region20: #{textnet_apply.1} parent=5 // pred_fallthru
        _
      %p136 = scmp.le.s32.totalorder 1, %s12
      %p137 = scmp.lt.s32.totalorder %s12, 3
      %p138 = pnand %p136, %p137
      %p139 = pneg %p138
      // Predicated region
      $region25: #{textnet_apply.1} parent=5 // pred_check
        _
      $region26: #{textnet_apply.1} parent=5 // pred_check_branch
        %141 = sbr.rel (%p138) target = $region28
      $region27: #{textnet_apply.1} parent=5 // pred_region
        %s142 = ssub.s32 %s12, 1
        %s143 = sand.u32 %s25, 1
        %s144 = scalar_lea.sflag [#allocation5], %s143
        %s145 = sand.u32 %s25, 1
        %s146 = smul.addr %s145, 64
        %s147 = scalar_lea.vmem [#allocation4], %s146
        // Predicated region
        $region29: #{textnet_apply.1} parent=27 // pred_check
          %p148 = pneg %p38
        $region30: #{textnet_apply.1} parent=27 // pred_check_branch
          %150 = sbr.rel (%p148) target = $region32
        $region31: #{textnet_apply.1} parent=27 // pred_region
          %151 = dma.done %s144, 1024
        $region32: #{textnet_apply.1} parent=27 // pred_fallthru
          _
        // Predicated region
        $region33: #{textnet_apply.1} parent=27 // pred_check
          %p152 = pneg %p59
        $region34: #{textnet_apply.1} parent=27 // pred_check_branch
          %154 = sbr.rel (%p152) target = $region36
        $region35: #{textnet_apply.1} parent=27 // pred_region
          %155 = dma.done [#allocation6], 32
        $region36: #{textnet_apply.1} parent=27 // pred_fallthru
          _
        %156 = sfence
        %s157 = sand.u32 %s25, 1
        %s158 = scalar_lea.sflag [#allocation5], %s157
        %s159 = sand.u32 %s25, 1
        %s160 = smul.addr %s159, 64
        %s161 = scalar_lea.vmem [#allocation4], %s160
        %p162 = pneg %p38
        %p163 = pneg %p35
        %p164 = pneg %p59
        %p165 = pneg %p56
        %p166 = pneg %p85
        %p167 = pneg %p82
        %p168 = scmp.lt.s32.totalorder %s17, 1
        %s169 = scalar_select %p168, %s17, 1
        %s170 = smul.addr %s169, 20
        %s171 = smul.addr %s170, 8
        %s172 = scalar_lea.vmem %s2, %s171
        %p173 = scmp.lt.s32.totalorder %s17, 1
        %s174 = scalar_select %p173, %s17, 1
        %s175 = smul.addr %s174, 20
        %s176 = smul.addr %s175, 8
        %s177 = scalar_lea.vmem %s2, %s176
        %v178 = vld [vmem:[%s147] sm:$0xff]
        %v179 = vld [vmem:[%s147 + $0x8] sm:$0xff]
        %s180 = scalar_lea.vmem %s147, 16 [#allocation4]
        %v181 = vld [vmem:[%s180] sm:$0xff]
        %v182 = vld [vmem:[%s180 + $0x8] sm:$0xff]
        %s183 = scalar_lea.vmem %s147, 32 [#allocation4]
        %v184 = vld [vmem:[%s183] sm:$0xff]
        %v185 = vld [vmem:[%s183 + $0x8] sm:$0xff]
        %s186 = scalar_lea.vmem %s147, 48 [#allocation4]
        %v187 = vld [vmem:[%s186] sm:$0xff]
        %v188 = vld [vmem:[%s186 + $0x8] sm:$0xff]
        %s189 = sld [smem:[#allocation7 + $0x20]]
        %v190 = vstv %s189
        %v191 = vadd.f32 %v190, 0.0
        %s192 = sld [smem:[#allocation7]]
        %v193 = vstv %s192
        %v194 = vmul.f32 %v193, %v178
        %v195 = vmul.f32 %v193, %v179
        %v196 = vadd.f32 %v191, %v194
        %v197 = vadd.f32 %v191, %v195
        %s198 = sld [smem:[#allocation7 + $0x1]]
        %v199 = vstv %s198
        %v200 = vmul.f32 %v199, %v181
        %v201 = vmul.f32 %v199, %v182
        %v202 = vadd.f32 %v196, %v200
        %v203 = vadd.f32 %v197, %v201
        %s204 = sld [smem:[#allocation7 + $0x2]]
        %v205 = vstv %s204
        %v206 = vmul.f32 %v205, %v184
        %v207 = vmul.f32 %v205, %v185
        %v208 = vadd.f32 %v202, %v206
        %v209 = vadd.f32 %v203, %v207
        %s210 = sld [smem:[#allocation7 + $0x3]]
        %v211 = vstv %s210
        %v212 = vmul.f32 %v211, %v187
        %v213 = vmul.f32 %v211, %v188
        %v214 = vadd.f32 %v208, %v212
        %v215 = vadd.f32 %v209, %v213
        %vm216 = vcmask 130048
        %217 = vst.msk [vmem:[%s177] sm:$0xff] %vm216, %v214
        %218 = vst.msk [vmem:[%s177 + $0x8] sm:$0xff] %vm216, %v215
        %s219 = sld [smem:[#allocation7 + $0x21]]
        %v220 = vstv %s219
        %v221 = vadd.f32 %v220, 0.0
        %s222 = sld [smem:[#allocation7 + $0x4]]
        %v223 = vstv %s222
        %v224 = vmul.f32 %v223, %v178
        %v225 = vmul.f32 %v223, %v179
        %v226 = vadd.f32 %v221, %v224
        %v227 = vadd.f32 %v221, %v225
        %s228 = sld [smem:[#allocation7 + $0x5]]
        %v229 = vstv %s228
        %v230 = vmul.f32 %v229, %v181
        %v231 = vmul.f32 %v229, %v182
        %v232 = vadd.f32 %v226, %v230
        %v233 = vadd.f32 %v227, %v231
        %s234 = sld [smem:[#allocation7 + $0x6]]
        %v235 = vstv %s234
        %v236 = vmul.f32 %v235, %v184
        %v237 = vmul.f32 %v235, %v185
        %v238 = vadd.f32 %v232, %v236
        %v239 = vadd.f32 %v233, %v237
        %s240 = sld [smem:[#allocation7 + $0x7]]
        %v241 = vstv %s240
        %v242 = vmul.f32 %v241, %v187
        %v243 = vmul.f32 %v241, %v188
        %v244 = vadd.f32 %v238, %v242
        %v245 = vadd.f32 %v239, %v243
        %s246 = scalar_lea.vmem %s177, 16
        %247 = vst.msk [vmem:[%s246] sm:$0xff] %vm216, %v244
        %248 = vst.msk [vmem:[%s246 + $0x8] sm:$0xff] %vm216, %v245
        %s249 = sld [smem:[#allocation7 + $0x24]]
        %v250 = vstv %s249
        %v251 = vadd.f32 %v250, 0.0
        %s252 = sld [smem:[#allocation7 + $0x10]]
        %v253 = vstv %s252
        %v254 = vmul.f32 %v253, %v178
        %v255 = vmul.f32 %v253, %v179
        %v256 = vadd.f32 %v251, %v254
        %v257 = vadd.f32 %v251, %v255
        %s258 = sld [smem:[#allocation7 + $0x11]]
        %v259 = vstv %s258
        %v260 = vmul.f32 %v259, %v181
        %v261 = vmul.f32 %v259, %v182
        %v262 = vadd.f32 %v256, %v260
        %v263 = vadd.f32 %v257, %v261
        %s264 = sld [smem:[#allocation7 + $0x12]]
        %v265 = vstv %s264
        %v266 = vmul.f32 %v265, %v184
        %v267 = vmul.f32 %v265, %v185
        %v268 = vadd.f32 %v262, %v266
        %v269 = vadd.f32 %v263, %v267
        %s270 = sld [smem:[#allocation7 + $0x13]]
        %v271 = vstv %s270
        %v272 = vmul.f32 %v271, %v187
        %v273 = vmul.f32 %v271, %v188
        %v274 = vadd.f32 %v268, %v272
        %v275 = vadd.f32 %v269, %v273
        %s276 = scalar_lea.vmem %s177, 32
        %277 = vst.msk [vmem:[%s276] sm:$0xff] %vm216, %v274
        %278 = vst.msk [vmem:[%s276 + $0x8] sm:$0xff] %vm216, %v275
        %s279 = sld [smem:[#allocation7 + $0x25]]
        %v280 = vstv %s279
        %v281 = vadd.f32 %v280, 0.0
        %s282 = sld [smem:[#allocation7 + $0x14]]
        %v283 = vstv %s282
        %v284 = vmul.f32 %v283, %v178
        %v285 = vmul.f32 %v283, %v179
        %v286 = vadd.f32 %v281, %v284
        %v287 = vadd.f32 %v281, %v285
        %s288 = sld [smem:[#allocation7 + $0x15]]
        %v289 = vstv %s288
        %v290 = vmul.f32 %v289, %v181
        %v291 = vmul.f32 %v289, %v182
        %v292 = vadd.f32 %v286, %v290
        %v293 = vadd.f32 %v287, %v291
        %s294 = sld [smem:[#allocation7 + $0x16]]
        %v295 = vstv %s294
        %v296 = vmul.f32 %v295, %v184
        %v297 = vmul.f32 %v295, %v185
        %v298 = vadd.f32 %v292, %v296
        %v299 = vadd.f32 %v293, %v297
        %s300 = sld [smem:[#allocation7 + $0x17]]
        %v301 = vstv %s300
        %v302 = vmul.f32 %v301, %v187
        %v303 = vmul.f32 %v301, %v188
        %v304 = vadd.f32 %v298, %v302
        %v305 = vadd.f32 %v299, %v303
        %s306 = scalar_lea.vmem %s177, 48
        %307 = vst.msk [vmem:[%s306] sm:$0xff] %vm216, %v304
        %308 = vst.msk [vmem:[%s306 + $0x8] sm:$0xff] %vm216, %v305
        %s309 = sld [smem:[#allocation7 + $0x26]]
        %v310 = vstv %s309
        %v311 = vadd.f32 %v310, 0.0
        %s312 = sld [smem:[#allocation7 + $0x18]]
        %v313 = vstv %s312
        %v314 = vmul.f32 %v313, %v178
        %v315 = vmul.f32 %v313, %v179
        %v316 = vadd.f32 %v311, %v314
        %v317 = vadd.f32 %v311, %v315
        %s318 = sld [smem:[#allocation7 + $0x19]]
        %v319 = vstv %s318
        %v320 = vmul.f32 %v319, %v181
        %v321 = vmul.f32 %v319, %v182
        %v322 = vadd.f32 %v316, %v320
        %v323 = vadd.f32 %v317, %v321
        %s324 = sld [smem:[#allocation7 + $0x1a]]
        %v325 = vstv %s324
        %v326 = vmul.f32 %v325, %v184
        %v327 = vmul.f32 %v325, %v185
        %v328 = vadd.f32 %v322, %v326
        %v329 = vadd.f32 %v323, %v327
        %s330 = sld [smem:[#allocation7 + $0x1b]]
        %v331 = vstv %s330
        %v332 = vmul.f32 %v331, %v187
        %v333 = vmul.f32 %v331, %v188
        %v334 = vadd.f32 %v328, %v332
        %v335 = vadd.f32 %v329, %v333
        %s336 = scalar_lea.vmem %s177, 64
        %337 = vst.msk [vmem:[%s336] sm:$0xff] %vm216, %v334
        %338 = vst.msk [vmem:[%s336 + $0x8] sm:$0xff] %vm216, %v335
        %s339 = sld [smem:[#allocation7 + $0x27]]
        %v340 = vstv %s339
        %v341 = vadd.f32 %v340, 0.0
        %s342 = sld [smem:[#allocation7 + $0x1c]]
        %v343 = vstv %s342
        %v344 = vmul.f32 %v343, %v178
        %v345 = vmul.f32 %v343, %v179
        %v346 = vadd.f32 %v341, %v344
        %v347 = vadd.f32 %v341, %v345
        %s348 = sld [smem:[#allocation7 + $0x1d]]
        %v349 = vstv %s348
        %v350 = vmul.f32 %v349, %v181
        %v351 = vmul.f32 %v349, %v182
        %v352 = vadd.f32 %v346, %v350
        %v353 = vadd.f32 %v347, %v351
        %s354 = sld [smem:[#allocation7 + $0x1e]]
        %v355 = vstv %s354
        %v356 = vmul.f32 %v355, %v184
        %v357 = vmul.f32 %v355, %v185
        %v358 = vadd.f32 %v352, %v356
        %v359 = vadd.f32 %v353, %v357
        %s360 = sld [smem:[#allocation7 + $0x1f]]
        %v361 = vstv %s360
        %v362 = vmul.f32 %v361, %v187
        %v363 = vmul.f32 %v361, %v188
        %v364 = vadd.f32 %v358, %v362
        %v365 = vadd.f32 %v359, %v363
        %s366 = scalar_lea.vmem %s177, 80
        %367 = vst.msk [vmem:[%s366] sm:$0xff] %vm216, %v364
        %368 = vst.msk [vmem:[%s366 + $0x8] sm:$0xff] %vm216, %v365
        %s369 = sld [smem:[#allocation7 + $0x22]]
        %v370 = vstv %s369
        %v371 = vadd.f32 %v370, 0.0
        %s372 = sld [smem:[#allocation7 + $0x8]]
        %v373 = vstv %s372
        %v374 = vmul.f32 %v373, %v178
        %v375 = vmul.f32 %v373, %v179
        %v376 = vadd.f32 %v371, %v374
        %v377 = vadd.f32 %v371, %v375
        %s378 = sld [smem:[#allocation7 + $0x9]]
        %v379 = vstv %s378
        %v380 = vmul.f32 %v379, %v181
        %v381 = vmul.f32 %v379, %v182
        %v382 = vadd.f32 %v376, %v380
        %v383 = vadd.f32 %v377, %v381
        %s384 = sld [smem:[#allocation7 + $0xa]]
        %v385 = vstv %s384
        %v386 = vmul.f32 %v385, %v184
        %v387 = vmul.f32 %v385, %v185
        %v388 = vadd.f32 %v382, %v386
        %v389 = vadd.f32 %v383, %v387
        %s390 = sld [smem:[#allocation7 + $0xb]]
        %v391 = vstv %s390
        %v392 = vmul.f32 %v391, %v187
        %v393 = vmul.f32 %v391, %v188
        %v394 = vadd.f32 %v388, %v392
        %v395 = vadd.f32 %v389, %v393
        %s396 = sld [smem:[#allocation7 + $0x23]]
        %v397 = vstv %s396
        %v398 = vadd.f32 %v397, 0.0
        %s399 = sld [smem:[#allocation7 + $0xc]]
        %v400 = vstv %s399
        %v401 = vmul.f32 %v400, %v178
        %v402 = vmul.f32 %v400, %v179
        %v403 = vadd.f32 %v398, %v401
        %v404 = vadd.f32 %v398, %v402
        %s405 = sld [smem:[#allocation7 + $0xd]]
        %v406 = vstv %s405
        %v407 = vmul.f32 %v406, %v181
        %v408 = vmul.f32 %v406, %v182
        %v409 = vadd.f32 %v403, %v407
        %v410 = vadd.f32 %v404, %v408
        %s411 = sld [smem:[#allocation7 + $0xe]]
        %v412 = vstv %s411
        %v413 = vmul.f32 %v412, %v184
        %v414 = vmul.f32 %v412, %v185
        %v415 = vadd.f32 %v409, %v413
        %v416 = vadd.f32 %v410, %v414
        %s417 = sld [smem:[#allocation7 + $0xf]]
        %v418 = vstv %s417
        %v419 = vmul.f32 %v418, %v187
        %v420 = vmul.f32 %v418, %v188
        %v421 = vadd.f32 %v415, %v419
        %v422 = vadd.f32 %v416, %v420
        %vm423 = vcmask 146432
        %424 = vst.msk [vmem:[#allocation2] sm:$0xff] %vm423, 0.0
        %425 = vst.msk [vmem:[#allocation2 + $0x8] sm:$0xff] %vm423, 0.0
        %vm426 = vcmask 140288
        %427 = vst.msk [vmem:[#allocation2 + $0x10] sm:$0x3] %vm426, 0.0
        %428 = vst.msk [vmem:[#allocation2 + $0x18] sm:$0xff] %vm423, 0.0
        %429 = vst.msk [vmem:[#allocation2 + $0x20] sm:$0xff] %vm423, 0.0
        %430 = vst.msk [vmem:[#allocation2 + $0x28] sm:$0x3] %vm426, 0.0
        %431 = vst.msk [vmem:[#allocation2 + $0x30] sm:$0xff] %vm423, 0.0
        %432 = vst.msk [vmem:[#allocation2 + $0x38] sm:$0xff] %vm423, 0.0
        %433 = vst.msk [vmem:[#allocation2 + $0x40] sm:$0x3] %vm426, 0.0
        %vm434 = vcmask 162816
        %435 = vst.msk [vmem:[#allocation3] sm:$0xff] %vm434, 0.0
        %436 = vst.msk [vmem:[#allocation3 + $0x8] sm:$0xff] %vm434, 0.0
        %437 = vst.msk [vmem:[#allocation3 + $0x10] sm:$0xff] %vm434, 0.0
        %438 = vst.msk [vmem:[#allocation3 + $0x18] sm:$0xff] %vm434, 0.0
        %439 = vst.msk [vmem:[#allocation3 + $0x20] sm:$0xff] %vm434, 0.0
        %440 = vst.msk [vmem:[#allocation3 + $0x28] sm:$0xff] %vm434, 0.0
        %443 = vrot.lane.b32.xlu0 %v394, 1
        %v444 = vpop.permute.xlu0 %443
        %445 = vrot.lane.b32.xlu0 %v395, 1
        %v446 = vpop.permute.xlu0 %445
        %vm449 = vcmask 138248
        %450 = vst.msk [vmem:[#allocation2 + $0x1] sm:$0xff] %vm449, %v444
        %451 = vst.msk [vmem:[#allocation2 + $0x9] sm:$0xff] %vm449, %v446
        %454 = vrot.lane.b32.xlu0 %v421, 1
        %v455 = vpop.permute.xlu0 %454
        %456 = vrot.lane.b32.xlu0 %v422, 1
        %v457 = vpop.permute.xlu0 %456
        %s460 = scalar_lea.vmem [#allocation2], 24
        %461 = vst.msk [vmem:[%s460 + $0x1] sm:$0xff] %vm449, %v455
        %462 = vst.msk [vmem:[%s460 + $0x9] sm:$0xff] %vm449, %v457
        %v463 = vld [vmem:[#allocation2] sm:$0xff]
        %v464 = vld [vmem:[#allocation2 + $0x8] sm:$0x3f]
        %v465 = vld [vmem:[#allocation2 + $0x1] sm:$0xff]
        %v466 = vld [vmem:[#allocation2 + $0x9] sm:$0x3f]
        %v467 = vld [vmem:[#allocation2 + $0x2] sm:$0xff]
        %v468 = vld [vmem:[#allocation2 + $0xa] sm:$0x3f]
        %v469 = vld [vmem:[#allocation2 + $0x3] sm:$0xff]
        %v470 = vld [vmem:[#allocation2 + $0xb] sm:$0x3f]
        %v471 = vld [vmem:[#allocation2 + $0x4] sm:$0xff]
        %v472 = vld [vmem:[#allocation2 + $0xc] sm:$0x3f]
        %v473 = vld [vmem:[%s460] sm:$0xff]
        %v474 = vld [vmem:[%s460 + $0x8] sm:$0x3f]
        %v475 = vld [vmem:[%s460 + $0x1] sm:$0xff]
        %v476 = vld [vmem:[%s460 + $0x9] sm:$0x3f]
        %v477 = vld [vmem:[%s460 + $0x2] sm:$0xff]
        %v478 = vld [vmem:[%s460 + $0xa] sm:$0x3f]
        %v479 = vld [vmem:[%s460 + $0x3] sm:$0xff]
        %v480 = vld [vmem:[%s460 + $0xb] sm:$0x3f]
        %v481 = vld [vmem:[%s460 + $0x4] sm:$0xff]
        %v482 = vld [vmem:[%s460 + $0xc] sm:$0x3f]
        %s483 = sld [smem:[#allocation7 + $0x3c]]
        %v484 = vstv %s483
        %v485 = vadd.f32 %v484, 0.0
        %s486 = sld [smem:[#allocation7 + $0x28]]
        %v487 = vstv %s486
        %v488 = vmul.f32 %v487, %v463
        %v489 = vmul.f32 %v487, %v464
        %v490 = vadd.f32 %v485, %v488
        %v491 = vadd.f32 %v485, %v489
        %s492 = sld [smem:[#allocation7 + $0x29]]
        %v493 = vstv %s492
        %v494 = vmul.f32 %v493, %v465
        %v495 = vmul.f32 %v493, %v466
        %v496 = vadd.f32 %v490, %v494
        %v497 = vadd.f32 %v491, %v495
        %s498 = sld [smem:[#allocation7 + $0x2a]]
        %v499 = vstv %s498
        %v500 = vmul.f32 %v499, %v467
        %v501 = vmul.f32 %v499, %v468
        %v502 = vadd.f32 %v496, %v500
        %v503 = vadd.f32 %v497, %v501
        %s504 = sld [smem:[#allocation7 + $0x2b]]
        %v505 = vstv %s504
        %v506 = vmul.f32 %v505, %v469
        %v507 = vmul.f32 %v505, %v470
        %v508 = vadd.f32 %v502, %v506
        %v509 = vadd.f32 %v503, %v507
        %s510 = sld [smem:[#allocation7 + $0x2c]]
        %v511 = vstv %s510
        %v512 = vmul.f32 %v511, %v471
        %v513 = vmul.f32 %v511, %v472
        %v514 = vadd.f32 %v508, %v512
        %v515 = vadd.f32 %v509, %v513
        %s516 = sld [smem:[#allocation7 + $0x2d]]
        %v517 = vstv %s516
        %v518 = vmul.f32 %v517, %v473
        %v519 = vmul.f32 %v517, %v474
        %v520 = vadd.f32 %v514, %v518
        %v521 = vadd.f32 %v515, %v519
        %s522 = sld [smem:[#allocation7 + $0x2e]]
        %v523 = vstv %s522
        %v524 = vmul.f32 %v523, %v475
        %v525 = vmul.f32 %v523, %v476
        %v526 = vadd.f32 %v520, %v524
        %v527 = vadd.f32 %v521, %v525
        %s528 = sld [smem:[#allocation7 + $0x2f]]
        %v529 = vstv %s528
        %v530 = vmul.f32 %v529, %v477
        %v531 = vmul.f32 %v529, %v478
        %v532 = vadd.f32 %v526, %v530
        %v533 = vadd.f32 %v527, %v531
        %s534 = sld [smem:[#allocation7 + $0x30]]
        %v535 = vstv %s534
        %v536 = vmul.f32 %v535, %v479
        %v537 = vmul.f32 %v535, %v480
        %v538 = vadd.f32 %v532, %v536
        %v539 = vadd.f32 %v533, %v537
        %s540 = sld [smem:[#allocation7 + $0x31]]
        %v541 = vstv %s540
        %v542 = vmul.f32 %v541, %v481
        %v543 = vmul.f32 %v541, %v482
        %v544 = vadd.f32 %v538, %v542
        %v545 = vadd.f32 %v539, %v543
        %548 = vrot.lane.b32.xlu0 %v544, 1
        %v549 = vpop.permute.xlu0 %548
        %550 = vrot.lane.b32.xlu0 %v545, 1
        %v551 = vpop.permute.xlu0 %550
        %vm554 = vcmask 154632
        %555 = vst.msk [vmem:[#allocation3 + $0x1] sm:$0xff] %vm554, %v549
        %vm556 = vcmask 152584
        %557 = vst.msk [vmem:[#allocation3 + $0x9] sm:$0x3f] %vm556, %v551
        %s558 = sld [smem:[#allocation7 + $0x3d]]
        %v559 = vstv %s558
        %v560 = vadd.f32 %v559, 0.0
        %s561 = sld [smem:[#allocation7 + $0x32]]
        %v562 = vstv %s561
        %v563 = vmul.f32 %v562, %v463
        %v564 = vmul.f32 %v562, %v464
        %v565 = vadd.f32 %v560, %v563
        %v566 = vadd.f32 %v560, %v564
        %s567 = sld [smem:[#allocation7 + $0x33]]
        %v568 = vstv %s567
        %v569 = vmul.f32 %v568, %v465
        %v570 = vmul.f32 %v568, %v466
        %v571 = vadd.f32 %v565, %v569
        %v572 = vadd.f32 %v566, %v570
        %s573 = sld [smem:[#allocation7 + $0x34]]
        %v574 = vstv %s573
        %v575 = vmul.f32 %v574, %v467
        %v576 = vmul.f32 %v574, %v468
        %v577 = vadd.f32 %v571, %v575
        %v578 = vadd.f32 %v572, %v576
        %s579 = sld [smem:[#allocation7 + $0x35]]
        %v580 = vstv %s579
        %v581 = vmul.f32 %v580, %v469
        %v582 = vmul.f32 %v580, %v470
        %v583 = vadd.f32 %v577, %v581
        %v584 = vadd.f32 %v578, %v582
        %s585 = sld [smem:[#allocation7 + $0x36]]
        %v586 = vstv %s585
        %v587 = vmul.f32 %v586, %v471
        %v588 = vmul.f32 %v586, %v472
        %v589 = vadd.f32 %v583, %v587
        %v590 = vadd.f32 %v584, %v588
        %s591 = sld [smem:[#allocation7 + $0x37]]
        %v592 = vstv %s591
        %v593 = vmul.f32 %v592, %v473
        %v594 = vmul.f32 %v592, %v474
        %v595 = vadd.f32 %v589, %v593
        %v596 = vadd.f32 %v590, %v594
        %s597 = sld [smem:[#allocation7 + $0x38]]
        %v598 = vstv %s597
        %v599 = vmul.f32 %v598, %v475
        %v600 = vmul.f32 %v598, %v476
        %v601 = vadd.f32 %v595, %v599
        %v602 = vadd.f32 %v596, %v600
        %s603 = sld [smem:[#allocation7 + $0x39]]
        %v604 = vstv %s603
        %v605 = vmul.f32 %v604, %v477
        %v606 = vmul.f32 %v604, %v478
        %v607 = vadd.f32 %v601, %v605
        %v608 = vadd.f32 %v602, %v606
        %s609 = sld [smem:[#allocation7 + $0x3a]]
        %v610 = vstv %s609
        %v611 = vmul.f32 %v610, %v479
        %v612 = vmul.f32 %v610, %v480
        %v613 = vadd.f32 %v607, %v611
        %v614 = vadd.f32 %v608, %v612
        %s615 = sld [smem:[#allocation7 + $0x3b]]
        %v616 = vstv %s615
        %v617 = vmul.f32 %v616, %v481
        %v618 = vmul.f32 %v616, %v482
        %v619 = vadd.f32 %v613, %v617
        %v620 = vadd.f32 %v614, %v618
        %623 = vrot.lane.b32.xlu0 %v619, 1
        %v624 = vpop.permute.xlu0 %623
        %625 = vrot.lane.b32.xlu0 %v620, 1
        %v626 = vpop.permute.xlu0 %625
        %s629 = scalar_lea.vmem [#allocation3], 16
        %630 = vst.msk [vmem:[%s629 + $0x1] sm:$0xff] %vm554, %v624
        %631 = vst.msk [vmem:[%s629 + $0x9] sm:$0x3f] %vm556, %v626
        %v632 = vld [vmem:[#allocation3] sm:$0xff]
        %v633 = vld [vmem:[#allocation3 + $0x8] sm:$0xff]
        %v634 = vld [vmem:[%s629] sm:$0xff]
        %v635 = vld [vmem:[%s629 + $0x8] sm:$0xff]
        %s636 = sld [smem:[#allocation7 + $0x52]]
        %v637 = vstv %s636
        %v638 = vadd.f32 %v637, 0.0
        %s639 = sld [smem:[#allocation7 + $0x3e]]
        %v640 = vstv %s639
        %v641 = vmul.f32 %v640, %v632
        %v642 = vmul.f32 %v640, %v633
        %v643 = vadd.f32 %v638, %v641
        %v644 = vadd.f32 %v638, %v642
        %s645 = sld [smem:[#allocation7 + $0x3f]]
        %v646 = vstv %s645
        %v647 = vmul.f32 %v646, %v632
        %v648 = vmul.f32 %v646, %v633
        %651 = vrot.lane.b32.xlu0 %v647, 127
        %v652 = vpop.permute.xlu0 %651
        %653 = vrot.lane.b32.xlu0 %v648, 127
        %v654 = vpop.permute.xlu0 %653
        %v657 = vadd.f32 %v643, %v652
        %v658 = vadd.f32 %v644, %v654
        %s659 = sld [smem:[#allocation7 + $0x40]]
        %v660 = vstv %s659
        %v661 = vmul.f32 %v660, %v632
        %v662 = vmul.f32 %v660, %v633
        %665 = vrot.lane.b32.xlu0 %v661, 126
        %v666 = vpop.permute.xlu0 %665
        %667 = vrot.lane.b32.xlu0 %v662, 126
        %v668 = vpop.permute.xlu0 %667
        %v671 = vadd.f32 %v657, %v666
        %v672 = vadd.f32 %v658, %v668
        %s673 = sld [smem:[#allocation7 + $0x41]]
        %v674 = vstv %s673
        %v675 = vmul.f32 %v674, %v632
        %v676 = vmul.f32 %v674, %v633
        %679 = vrot.lane.b32.xlu0 %v675, 125
        %v680 = vpop.permute.xlu0 %679
        %681 = vrot.lane.b32.xlu0 %v676, 125
        %v682 = vpop.permute.xlu0 %681
        %v685 = vadd.f32 %v671, %v680
        %v686 = vadd.f32 %v672, %v682
        %s687 = sld [smem:[#allocation7 + $0x42]]
        %v688 = vstv %s687
        %v689 = vmul.f32 %v688, %v632
        %v690 = vmul.f32 %v688, %v633
        %693 = vrot.lane.b32.xlu0 %v689, 124
        %v694 = vpop.permute.xlu0 %693
        %695 = vrot.lane.b32.xlu0 %v690, 124
        %v696 = vpop.permute.xlu0 %695
        %v699 = vadd.f32 %v685, %v694
        %v700 = vadd.f32 %v686, %v696
        %s701 = sld [smem:[#allocation7 + $0x43]]
        %v702 = vstv %s701
        %v703 = vmul.f32 %v702, %v634
        %v704 = vmul.f32 %v702, %v635
        %v705 = vadd.f32 %v699, %v703
        %v706 = vadd.f32 %v700, %v704
        %s707 = sld [smem:[#allocation7 + $0x44]]
        %v708 = vstv %s707
        %v709 = vmul.f32 %v708, %v634
        %v710 = vmul.f32 %v708, %v635
        %713 = vrot.lane.b32.xlu0 %v709, 127
        %v714 = vpop.permute.xlu0 %713
        %715 = vrot.lane.b32.xlu0 %v710, 127
        %v716 = vpop.permute.xlu0 %715
        %v719 = vadd.f32 %v705, %v714
        %v720 = vadd.f32 %v706, %v716
        %s721 = sld [smem:[#allocation7 + $0x45]]
        %v722 = vstv %s721
        %v723 = vmul.f32 %v722, %v634
        %v724 = vmul.f32 %v722, %v635
        %727 = vrot.lane.b32.xlu0 %v723, 126
        %v728 = vpop.permute.xlu0 %727
        %729 = vrot.lane.b32.xlu0 %v724, 126
        %v730 = vpop.permute.xlu0 %729
        %v733 = vadd.f32 %v719, %v728
        %v734 = vadd.f32 %v720, %v730
        %s735 = sld [smem:[#allocation7 + $0x46]]
        %v736 = vstv %s735
        %v737 = vmul.f32 %v736, %v634
        %v738 = vmul.f32 %v736, %v635
        %741 = vrot.lane.b32.xlu0 %v737, 125
        %v742 = vpop.permute.xlu0 %741
        %743 = vrot.lane.b32.xlu0 %v738, 125
        %v744 = vpop.permute.xlu0 %743
        %v747 = vadd.f32 %v733, %v742
        %v748 = vadd.f32 %v734, %v744
        %s749 = sld [smem:[#allocation7 + $0x47]]
        %v750 = vstv %s749
        %v751 = vmul.f32 %v750, %v634
        %v752 = vmul.f32 %v750, %v635
        %755 = vrot.lane.b32.xlu0 %v751, 124
        %v756 = vpop.permute.xlu0 %755
        %757 = vrot.lane.b32.xlu0 %v752, 124
        %v758 = vpop.permute.xlu0 %757
        %v761 = vadd.f32 %v747, %v756
        %v762 = vadd.f32 %v748, %v758
        %s763 = sld [smem:[#allocation7 + $0x53]]
        %v764 = vstv %s763
        %v765 = vadd.f32 %v764, 0.0
        %s766 = sld [smem:[#allocation7 + $0x48]]
        %v767 = vstv %s766
        %v768 = vmul.f32 %v767, %v632
        %v769 = vmul.f32 %v767, %v633
        %v770 = vadd.f32 %v765, %v768
        %v771 = vadd.f32 %v765, %v769
        %s772 = sld [smem:[#allocation7 + $0x49]]
        %v773 = vstv %s772
        %v774 = vmul.f32 %v773, %v632
        %v775 = vmul.f32 %v773, %v633
        %778 = vrot.lane.b32.xlu0 %v774, 127
        %v779 = vpop.permute.xlu0 %778
        %780 = vrot.lane.b32.xlu0 %v775, 127
        %v781 = vpop.permute.xlu0 %780
        %v784 = vadd.f32 %v770, %v779
        %v785 = vadd.f32 %v771, %v781
        %s786 = sld [smem:[#allocation7 + $0x4a]]
        %v787 = vstv %s786
        %v788 = vmul.f32 %v787, %v632
        %v789 = vmul.f32 %v787, %v633
        %792 = vrot.lane.b32.xlu0 %v788, 126
        %v793 = vpop.permute.xlu0 %792
        %794 = vrot.lane.b32.xlu0 %v789, 126
        %v795 = vpop.permute.xlu0 %794
        %v798 = vadd.f32 %v784, %v793
        %v799 = vadd.f32 %v785, %v795
        %s800 = sld [smem:[#allocation7 + $0x4b]]
        %v801 = vstv %s800
        %v802 = vmul.f32 %v801, %v632
        %v803 = vmul.f32 %v801, %v633
        %806 = vrot.lane.b32.xlu0 %v802, 125
        %v807 = vpop.permute.xlu0 %806
        %808 = vrot.lane.b32.xlu0 %v803, 125
        %v809 = vpop.permute.xlu0 %808
        %v812 = vadd.f32 %v798, %v807
        %v813 = vadd.f32 %v799, %v809
        %s814 = sld [smem:[#allocation7 + $0x4c]]
        %v815 = vstv %s814
        %v816 = vmul.f32 %v815, %v632
        %v817 = vmul.f32 %v815, %v633
        %820 = vrot.lane.b32.xlu0 %v816, 124
        %v821 = vpop.permute.xlu0 %820
        %822 = vrot.lane.b32.xlu0 %v817, 124
        %v823 = vpop.permute.xlu0 %822
        %v826 = vadd.f32 %v812, %v821
        %v827 = vadd.f32 %v813, %v823
        %s828 = sld [smem:[#allocation7 + $0x4d]]
        %v829 = vstv %s828
        %v830 = vmul.f32 %v829, %v634
        %v831 = vmul.f32 %v829, %v635
        %v832 = vadd.f32 %v826, %v830
        %v833 = vadd.f32 %v827, %v831
        %s834 = sld [smem:[#allocation7 + $0x4e]]
        %v835 = vstv %s834
        %v836 = vmul.f32 %v835, %v634
        %v837 = vmul.f32 %v835, %v635
        %840 = vrot.lane.b32.xlu0 %v836, 127
        %v841 = vpop.permute.xlu0 %840
        %842 = vrot.lane.b32.xlu0 %v837, 127
        %v843 = vpop.permute.xlu0 %842
        %v846 = vadd.f32 %v832, %v841
        %v847 = vadd.f32 %v833, %v843
        %s848 = sld [smem:[#allocation7 + $0x4f]]
        %v849 = vstv %s848
        %v850 = vmul.f32 %v849, %v634
        %v851 = vmul.f32 %v849, %v635
        %854 = vrot.lane.b32.xlu0 %v850, 126
        %v855 = vpop.permute.xlu0 %854
        %856 = vrot.lane.b32.xlu0 %v851, 126
        %v857 = vpop.permute.xlu0 %856
        %v860 = vadd.f32 %v846, %v855
        %v861 = vadd.f32 %v847, %v857
        %s862 = sld [smem:[#allocation7 + $0x50]]
        %v863 = vstv %s862
        %v864 = vmul.f32 %v863, %v634
        %v865 = vmul.f32 %v863, %v635
        %868 = vrot.lane.b32.xlu0 %v864, 125
        %v869 = vpop.permute.xlu0 %868
        %870 = vrot.lane.b32.xlu0 %v865, 125
        %v871 = vpop.permute.xlu0 %870
        %v874 = vadd.f32 %v860, %v869
        %v875 = vadd.f32 %v861, %v871
        %s876 = sld [smem:[#allocation7 + $0x51]]
        %v877 = vstv %s876
        %v878 = vmul.f32 %v877, %v634
        %v879 = vmul.f32 %v877, %v635
        %882 = vrot.lane.b32.xlu0 %v878, 124
        %v883 = vpop.permute.xlu0 %882
        %884 = vrot.lane.b32.xlu0 %v879, 124
        %v885 = vpop.permute.xlu0 %884
        %v888 = vadd.f32 %v874, %v883
        %v889 = vadd.f32 %v875, %v885
        %s890 = sld [smem:[#allocation7 + $0x56]]
        %v891 = vstv %s890
        %v892 = vadd.f32 %v891, 0.0
        %s893 = sld [smem:[#allocation7 + $0x54]]
        %v894 = vstv %s893
        %v895 = vmul.f32 %v894, %v761
        %v896 = vmul.f32 %v894, %v762
        %v897 = vadd.f32 %v892, %v895
        %v898 = vadd.f32 %v892, %v896
        %s899 = sld [smem:[#allocation7 + $0x55]]
        %v900 = vstv %s899
        %v901 = vmul.f32 %v900, %v888
        %v902 = vmul.f32 %v900, %v889
        %v903 = vadd.f32 %v897, %v901
        %v904 = vadd.f32 %v898, %v902
        %s905 = scalar_lea.vmem %s177, 96
        %906 = vst.msk [vmem:[%s905] sm:$0xff] %vm216, %v903
        %907 = vst.msk [vmem:[%s905 + $0x8] sm:$0xff] %vm216, %v904
        %910 = vrot.lane.b32.xlu0 %v903, 1
        %v911 = vpop.permute.xlu0 %910
        %912 = vrot.lane.b32.xlu0 %v904, 1
        %v913 = vpop.permute.xlu0 %912
        %s916 = scalar_lea.vmem [#allocation2], 48
        %917 = vst.msk [vmem:[%s916 + $0x1] sm:$0xff] %vm449, %v911
        %918 = vst.msk [vmem:[%s916 + $0x9] sm:$0xff] %vm449, %v913
        %v919 = vld [vmem:[#allocation2] sm:$0xff]
        %v920 = vld [vmem:[#allocation2 + $0x8] sm:$0x3f]
        %v921 = vld [vmem:[#allocation2 + $0x1] sm:$0xff]
        %v922 = vld [vmem:[#allocation2 + $0x9] sm:$0x3f]
        %v923 = vld [vmem:[#allocation2 + $0x2] sm:$0xff]
        %v924 = vld [vmem:[#allocation2 + $0xa] sm:$0x3f]
        %v925 = vld [vmem:[#allocation2 + $0x3] sm:$0xff]
        %v926 = vld [vmem:[#allocation2 + $0xb] sm:$0x3f]
        %v927 = vld [vmem:[#allocation2 + $0x4] sm:$0xff]
        %v928 = vld [vmem:[#allocation2 + $0xc] sm:$0x3f]
        %v929 = vld [vmem:[%s460] sm:$0xff]
        %v930 = vld [vmem:[%s460 + $0x8] sm:$0x3f]
        %v931 = vld [vmem:[%s460 + $0x1] sm:$0xff]
        %v932 = vld [vmem:[%s460 + $0x9] sm:$0x3f]
        %v933 = vld [vmem:[%s460 + $0x2] sm:$0xff]
        %v934 = vld [vmem:[%s460 + $0xa] sm:$0x3f]
        %v935 = vld [vmem:[%s460 + $0x3] sm:$0xff]
        %v936 = vld [vmem:[%s460 + $0xb] sm:$0x3f]
        %v937 = vld [vmem:[%s460 + $0x4] sm:$0xff]
        %v938 = vld [vmem:[%s460 + $0xc] sm:$0x3f]
        %v939 = vld [vmem:[%s916] sm:$0xff]
        %v940 = vld [vmem:[%s916 + $0x8] sm:$0x3f]
        %v941 = vld [vmem:[%s916 + $0x1] sm:$0xff]
        %v942 = vld [vmem:[%s916 + $0x9] sm:$0x3f]
        %v943 = vld [vmem:[%s916 + $0x2] sm:$0xff]
        %v944 = vld [vmem:[%s916 + $0xa] sm:$0x3f]
        %v945 = vld [vmem:[%s916 + $0x3] sm:$0xff]
        %v946 = vld [vmem:[%s916 + $0xb] sm:$0x3f]
        %v947 = vld [vmem:[%s916 + $0x4] sm:$0xff]
        %v948 = vld [vmem:[%s916 + $0xc] sm:$0x3f]
        %s949 = sld [smem:[#allocation7 + $0x84]]
        %v950 = vstv %s949
        %v951 = vadd.f32 %v950, 0.0
        %s952 = sld [smem:[#allocation7 + $0x57]]
        %v953 = vstv %s952
        %v954 = vmul.f32 %v953, %v919
        %v955 = vmul.f32 %v953, %v920
        %v956 = vadd.f32 %v951, %v954
        %v957 = vadd.f32 %v951, %v955
        %s958 = sld [smem:[#allocation7 + $0x58]]
        %v959 = vstv %s958
        %v960 = vmul.f32 %v959, %v921
        %v961 = vmul.f32 %v959, %v922
        %v962 = vadd.f32 %v956, %v960
        %v963 = vadd.f32 %v957, %v961
        %s964 = sld [smem:[#allocation7 + $0x59]]
        %v965 = vstv %s964
        %v966 = vmul.f32 %v965, %v923
        %v967 = vmul.f32 %v965, %v924
        %v968 = vadd.f32 %v962, %v966
        %v969 = vadd.f32 %v963, %v967
        %s970 = sld [smem:[#allocation7 + $0x5a]]
        %v971 = vstv %s970
        %v972 = vmul.f32 %v971, %v925
        %v973 = vmul.f32 %v971, %v926
        %v974 = vadd.f32 %v968, %v972
        %v975 = vadd.f32 %v969, %v973
        %s976 = sld [smem:[#allocation7 + $0x5b]]
        %v977 = vstv %s976
        %v978 = vmul.f32 %v977, %v927
        %v979 = vmul.f32 %v977, %v928
        %v980 = vadd.f32 %v974, %v978
        %v981 = vadd.f32 %v975, %v979
        %s982 = sld [smem:[#allocation7 + $0x5c]]
        %v983 = vstv %s982
        %v984 = vmul.f32 %v983, %v929
        %v985 = vmul.f32 %v983, %v930
        %v986 = vadd.f32 %v980, %v984
        %v987 = vadd.f32 %v981, %v985
        %s988 = sld [smem:[#allocation7 + $0x5d]]
        %v989 = vstv %s988
        %v990 = vmul.f32 %v989, %v931
        %v991 = vmul.f32 %v989, %v932
        %v992 = vadd.f32 %v986, %v990
        %v993 = vadd.f32 %v987, %v991
        %s994 = sld [smem:[#allocation7 + $0x5e]]
        %v995 = vstv %s994
        %v996 = vmul.f32 %v995, %v933
        %v997 = vmul.f32 %v995, %v934
        %v998 = vadd.f32 %v992, %v996
        %v999 = vadd.f32 %v993, %v997
        %s1000 = sld [smem:[#allocation7 + $0x5f]]
        %v1001 = vstv %s1000
        %v1002 = vmul.f32 %v1001, %v935
        %v1003 = vmul.f32 %v1001, %v936
        %v1004 = vadd.f32 %v998, %v1002
        %v1005 = vadd.f32 %v999, %v1003
        %s1006 = sld [smem:[#allocation7 + $0x60]]
        %v1007 = vstv %s1006
        %v1008 = vmul.f32 %v1007, %v937
        %v1009 = vmul.f32 %v1007, %v938
        %v1010 = vadd.f32 %v1004, %v1008
        %v1011 = vadd.f32 %v1005, %v1009
        %s1012 = sld [smem:[#allocation7 + $0x61]]
        %v1013 = vstv %s1012
        %v1014 = vmul.f32 %v1013, %v939
        %v1015 = vmul.f32 %v1013, %v940
        %v1016 = vadd.f32 %v1010, %v1014
        %v1017 = vadd.f32 %v1011, %v1015
        %s1018 = sld [smem:[#allocation7 + $0x62]]
        %v1019 = vstv %s1018
        %v1020 = vmul.f32 %v1019, %v941
        %v1021 = vmul.f32 %v1019, %v942
        %v1022 = vadd.f32 %v1016, %v1020
        %v1023 = vadd.f32 %v1017, %v1021
        %s1024 = sld [smem:[#allocation7 + $0x63]]
        %v1025 = vstv %s1024
        %v1026 = vmul.f32 %v1025, %v943
        %v1027 = vmul.f32 %v1025, %v944
        %v1028 = vadd.f32 %v1022, %v1026
        %v1029 = vadd.f32 %v1023, %v1027
        %s1030 = sld [smem:[#allocation7 + $0x64]]
        %v1031 = vstv %s1030
        %v1032 = vmul.f32 %v1031, %v945
        %v1033 = vmul.f32 %v1031, %v946
        %v1034 = vadd.f32 %v1028, %v1032
        %v1035 = vadd.f32 %v1029, %v1033
        %s1036 = sld [smem:[#allocation7 + $0x65]]
        %v1037 = vstv %s1036
        %v1038 = vmul.f32 %v1037, %v947
        %v1039 = vmul.f32 %v1037, %v948
        %v1040 = vadd.f32 %v1034, %v1038
        %v1041 = vadd.f32 %v1035, %v1039
        %1044 = vrot.lane.b32.xlu0 %v1040, 1
        %v1045 = vpop.permute.xlu0 %1044
        %1046 = vrot.lane.b32.xlu0 %v1041, 1
        %v1047 = vpop.permute.xlu0 %1046
        %1050 = vst.msk [vmem:[#allocation3 + $0x1] sm:$0xff] %vm554, %v1045
        %1051 = vst.msk [vmem:[#allocation3 + $0x9] sm:$0x3f] %vm556, %v1047
        %s1052 = sld [smem:[#allocation7 + $0x85]]
        %v1053 = vstv %s1052
        %v1054 = vadd.f32 %v1053, 0.0
        %s1055 = sld [smem:[#allocation7 + $0x66]]
        %v1056 = vstv %s1055
        %v1057 = vmul.f32 %v1056, %v919
        %v1058 = vmul.f32 %v1056, %v920
        %v1059 = vadd.f32 %v1054, %v1057
        %v1060 = vadd.f32 %v1054, %v1058
        %s1061 = sld [smem:[#allocation7 + $0x67]]
        %v1062 = vstv %s1061
        %v1063 = vmul.f32 %v1062, %v921
        %v1064 = vmul.f32 %v1062, %v922
        %v1065 = vadd.f32 %v1059, %v1063
        %v1066 = vadd.f32 %v1060, %v1064
        %s1067 = sld [smem:[#allocation7 + $0x68]]
        %v1068 = vstv %s1067
        %v1069 = vmul.f32 %v1068, %v923
        %v1070 = vmul.f32 %v1068, %v924
        %v1071 = vadd.f32 %v1065, %v1069
        %v1072 = vadd.f32 %v1066, %v1070
        %s1073 = sld [smem:[#allocation7 + $0x69]]
        %v1074 = vstv %s1073
        %v1075 = vmul.f32 %v1074, %v925
        %v1076 = vmul.f32 %v1074, %v926
        %v1077 = vadd.f32 %v1071, %v1075
        %v1078 = vadd.f32 %v1072, %v1076
        %s1079 = sld [smem:[#allocation7 + $0x6a]]
        %v1080 = vstv %s1079
        %v1081 = vmul.f32 %v1080, %v927
        %v1082 = vmul.f32 %v1080, %v928
        %v1083 = vadd.f32 %v1077, %v1081
        %v1084 = vadd.f32 %v1078, %v1082
        %s1085 = sld [smem:[#allocation7 + $0x6b]]
        %v1086 = vstv %s1085
        %v1087 = vmul.f32 %v1086, %v929
        %v1088 = vmul.f32 %v1086, %v930
        %v1089 = vadd.f32 %v1083, %v1087
        %v1090 = vadd.f32 %v1084, %v1088
        %s1091 = sld [smem:[#allocation7 + $0x6c]]
        %v1092 = vstv %s1091
        %v1093 = vmul.f32 %v1092, %v931
        %v1094 = vmul.f32 %v1092, %v932
        %v1095 = vadd.f32 %v1089, %v1093
        %v1096 = vadd.f32 %v1090, %v1094
        %s1097 = sld [smem:[#allocation7 + $0x6d]]
        %v1098 = vstv %s1097
        %v1099 = vmul.f32 %v1098, %v933
        %v1100 = vmul.f32 %v1098, %v934
        %v1101 = vadd.f32 %v1095, %v1099
        %v1102 = vadd.f32 %v1096, %v1100
        %s1103 = sld [smem:[#allocation7 + $0x6e]]
        %v1104 = vstv %s1103
        %v1105 = vmul.f32 %v1104, %v935
        %v1106 = vmul.f32 %v1104, %v936
        %v1107 = vadd.f32 %v1101, %v1105
        %v1108 = vadd.f32 %v1102, %v1106
        %s1109 = sld [smem:[#allocation7 + $0x6f]]
        %v1110 = vstv %s1109
        %v1111 = vmul.f32 %v1110, %v937
        %v1112 = vmul.f32 %v1110, %v938
        %v1113 = vadd.f32 %v1107, %v1111
        %v1114 = vadd.f32 %v1108, %v1112
        %s1115 = sld [smem:[#allocation7 + $0x70]]
        %v1116 = vstv %s1115
        %v1117 = vmul.f32 %v1116, %v939
        %v1118 = vmul.f32 %v1116, %v940
        %v1119 = vadd.f32 %v1113, %v1117
        %v1120 = vadd.f32 %v1114, %v1118
        %s1121 = sld [smem:[#allocation7 + $0x71]]
        %v1122 = vstv %s1121
        %v1123 = vmul.f32 %v1122, %v941
        %v1124 = vmul.f32 %v1122, %v942
        %v1125 = vadd.f32 %v1119, %v1123
        %v1126 = vadd.f32 %v1120, %v1124
        %s1127 = sld [smem:[#allocation7 + $0x72]]
        %v1128 = vstv %s1127
        %v1129 = vmul.f32 %v1128, %v943
        %v1130 = vmul.f32 %v1128, %v944
        %v1131 = vadd.f32 %v1125, %v1129
        %v1132 = vadd.f32 %v1126, %v1130
        %s1133 = sld [smem:[#allocation7 + $0x73]]
        %v1134 = vstv %s1133
        %v1135 = vmul.f32 %v1134, %v945
        %v1136 = vmul.f32 %v1134, %v946
        %v1137 = vadd.f32 %v1131, %v1135
        %v1138 = vadd.f32 %v1132, %v1136
        %s1139 = sld [smem:[#allocation7 + $0x74]]
        %v1140 = vstv %s1139
        %v1141 = vmul.f32 %v1140, %v947
        %v1142 = vmul.f32 %v1140, %v948
        %v1143 = vadd.f32 %v1137, %v1141
        %v1144 = vadd.f32 %v1138, %v1142
        %1147 = vrot.lane.b32.xlu0 %v1143, 1
        %v1148 = vpop.permute.xlu0 %1147
        %1149 = vrot.lane.b32.xlu0 %v1144, 1
        %v1150 = vpop.permute.xlu0 %1149
        %1153 = vst.msk [vmem:[%s629 + $0x1] sm:$0xff] %vm554, %v1148
        %1154 = vst.msk [vmem:[%s629 + $0x9] sm:$0x3f] %vm556, %v1150
        %s1155 = sld [smem:[#allocation7 + $0x86]]
        %v1156 = vstv %s1155
        %v1157 = vadd.f32 %v1156, 0.0
        %s1158 = sld [smem:[#allocation7 + $0x75]]
        %v1159 = vstv %s1158
        %v1160 = vmul.f32 %v1159, %v919
        %v1161 = vmul.f32 %v1159, %v920
        %v1162 = vadd.f32 %v1157, %v1160
        %v1163 = vadd.f32 %v1157, %v1161
        %s1164 = sld [smem:[#allocation7 + $0x76]]
        %v1165 = vstv %s1164
        %v1166 = vmul.f32 %v1165, %v921
        %v1167 = vmul.f32 %v1165, %v922
        %v1168 = vadd.f32 %v1162, %v1166
        %v1169 = vadd.f32 %v1163, %v1167
        %s1170 = sld [smem:[#allocation7 + $0x77]]
        %v1171 = vstv %s1170
        %v1172 = vmul.f32 %v1171, %v923
        %v1173 = vmul.f32 %v1171, %v924
        %v1174 = vadd.f32 %v1168, %v1172
        %v1175 = vadd.f32 %v1169, %v1173
        %s1176 = sld [smem:[#allocation7 + $0x78]]
        %v1177 = vstv %s1176
        %v1178 = vmul.f32 %v1177, %v925
        %v1179 = vmul.f32 %v1177, %v926
        %v1180 = vadd.f32 %v1174, %v1178
        %v1181 = vadd.f32 %v1175, %v1179
        %s1182 = sld [smem:[#allocation7 + $0x79]]
        %v1183 = vstv %s1182
        %v1184 = vmul.f32 %v1183, %v927
        %v1185 = vmul.f32 %v1183, %v928
        %v1186 = vadd.f32 %v1180, %v1184
        %v1187 = vadd.f32 %v1181, %v1185
        %s1188 = sld [smem:[#allocation7 + $0x7a]]
        %v1189 = vstv %s1188
        %v1190 = vmul.f32 %v1189, %v929
        %v1191 = vmul.f32 %v1189, %v930
        %v1192 = vadd.f32 %v1186, %v1190
        %v1193 = vadd.f32 %v1187, %v1191
        %s1194 = sld [smem:[#allocation7 + $0x7b]]
        %v1195 = vstv %s1194
        %v1196 = vmul.f32 %v1195, %v931
        %v1197 = vmul.f32 %v1195, %v932
        %v1198 = vadd.f32 %v1192, %v1196
        %v1199 = vadd.f32 %v1193, %v1197
        %s1200 = sld [smem:[#allocation7 + $0x7c]]
        %v1201 = vstv %s1200
        %v1202 = vmul.f32 %v1201, %v933
        %v1203 = vmul.f32 %v1201, %v934
        %v1204 = vadd.f32 %v1198, %v1202
        %v1205 = vadd.f32 %v1199, %v1203
        %s1206 = sld [smem:[#allocation7 + $0x7d]]
        %v1207 = vstv %s1206
        %v1208 = vmul.f32 %v1207, %v935
        %v1209 = vmul.f32 %v1207, %v936
        %v1210 = vadd.f32 %v1204, %v1208
        %v1211 = vadd.f32 %v1205, %v1209
        %s1212 = sld [smem:[#allocation7 + $0x7e]]
        %v1213 = vstv %s1212
        %v1214 = vmul.f32 %v1213, %v937
        %v1215 = vmul.f32 %v1213, %v938
        %v1216 = vadd.f32 %v1210, %v1214
        %v1217 = vadd.f32 %v1211, %v1215
        %s1218 = sld [smem:[#allocation7 + $0x7f]]
        %v1219 = vstv %s1218
        %v1220 = vmul.f32 %v1219, %v939
        %v1221 = vmul.f32 %v1219, %v940
        %v1222 = vadd.f32 %v1216, %v1220
        %v1223 = vadd.f32 %v1217, %v1221
        %s1224 = sld [smem:[#allocation7 + $0x80]]
        %v1225 = vstv %s1224
        %v1226 = vmul.f32 %v1225, %v941
        %v1227 = vmul.f32 %v1225, %v942
        %v1228 = vadd.f32 %v1222, %v1226
        %v1229 = vadd.f32 %v1223, %v1227
        %s1230 = sld [smem:[#allocation7 + $0x81]]
        %v1231 = vstv %s1230
        %v1232 = vmul.f32 %v1231, %v943
        %v1233 = vmul.f32 %v1231, %v944
        %v1234 = vadd.f32 %v1228, %v1232
        %v1235 = vadd.f32 %v1229, %v1233
        %s1236 = sld [smem:[#allocation7 + $0x82]]
        %v1237 = vstv %s1236
        %v1238 = vmul.f32 %v1237, %v945
        %v1239 = vmul.f32 %v1237, %v946
        %v1240 = vadd.f32 %v1234, %v1238
        %v1241 = vadd.f32 %v1235, %v1239
        %s1242 = sld [smem:[#allocation7 + $0x83]]
        %v1243 = vstv %s1242
        %v1244 = vmul.f32 %v1243, %v947
        %v1245 = vmul.f32 %v1243, %v948
        %v1246 = vadd.f32 %v1240, %v1244
        %v1247 = vadd.f32 %v1241, %v1245
        %1250 = vrot.lane.b32.xlu0 %v1246, 1
        %v1251 = vpop.permute.xlu0 %1250
        %1252 = vrot.lane.b32.xlu0 %v1247, 1
        %v1253 = vpop.permute.xlu0 %1252
        %s1256 = scalar_lea.vmem [#allocation3], 32
        %1257 = vst.msk [vmem:[%s1256 + $0x1] sm:$0xff] %vm554, %v1251
        %1258 = vst.msk [vmem:[%s1256 + $0x9] sm:$0x3f] %vm556, %v1253
        %v1259 = vld [vmem:[#allocation3] sm:$0xff]
        %v1260 = vld [vmem:[#allocation3 + $0x8] sm:$0xff]
        %v1261 = vld [vmem:[%s629] sm:$0xff]
        %v1262 = vld [vmem:[%s629 + $0x8] sm:$0xff]
        %v1263 = vld [vmem:[%s1256] sm:$0xff]
        %v1264 = vld [vmem:[%s1256 + $0x8] sm:$0xff]
        %s1265 = sld [smem:[#allocation7 + $0xb4]]
        %v1266 = vstv %s1265
        %v1267 = vadd.f32 %v1266, 0.0
        %s1268 = sld [smem:[#allocation7 + $0x87]]
        %v1269 = vstv %s1268
        %v1270 = vmul.f32 %v1269, %v1259
        %v1271 = vmul.f32 %v1269, %v1260
        %v1272 = vadd.f32 %v1267, %v1270
        %v1273 = vadd.f32 %v1267, %v1271
        %s1274 = sld [smem:[#allocation7 + $0x88]]
        %v1275 = vstv %s1274
        %v1276 = vmul.f32 %v1275, %v1259
        %v1277 = vmul.f32 %v1275, %v1260
        %1280 = vrot.lane.b32.xlu0 %v1276, 127
        %v1281 = vpop.permute.xlu0 %1280
        %1282 = vrot.lane.b32.xlu0 %v1277, 127
        %v1283 = vpop.permute.xlu0 %1282
        %v1286 = vadd.f32 %v1272, %v1281
        %v1287 = vadd.f32 %v1273, %v1283
        %s1288 = sld [smem:[#allocation7 + $0x89]]
        %v1289 = vstv %s1288
        %v1290 = vmul.f32 %v1289, %v1259
        %v1291 = vmul.f32 %v1289, %v1260
        %1294 = vrot.lane.b32.xlu0 %v1290, 126
        %v1295 = vpop.permute.xlu0 %1294
        %1296 = vrot.lane.b32.xlu0 %v1291, 126
        %v1297 = vpop.permute.xlu0 %1296
        %v1300 = vadd.f32 %v1286, %v1295
        %v1301 = vadd.f32 %v1287, %v1297
        %s1302 = sld [smem:[#allocation7 + $0x8a]]
        %v1303 = vstv %s1302
        %v1304 = vmul.f32 %v1303, %v1259
        %v1305 = vmul.f32 %v1303, %v1260
        %1308 = vrot.lane.b32.xlu0 %v1304, 125
        %v1309 = vpop.permute.xlu0 %1308
        %1310 = vrot.lane.b32.xlu0 %v1305, 125
        %v1311 = vpop.permute.xlu0 %1310
        %v1314 = vadd.f32 %v1300, %v1309
        %v1315 = vadd.f32 %v1301, %v1311
        %s1316 = sld [smem:[#allocation7 + $0x8b]]
        %v1317 = vstv %s1316
        %v1318 = vmul.f32 %v1317, %v1259
        %v1319 = vmul.f32 %v1317, %v1260
        %1322 = vrot.lane.b32.xlu0 %v1318, 124
        %v1323 = vpop.permute.xlu0 %1322
        %1324 = vrot.lane.b32.xlu0 %v1319, 124
        %v1325 = vpop.permute.xlu0 %1324
        %v1328 = vadd.f32 %v1314, %v1323
        %v1329 = vadd.f32 %v1315, %v1325
        %s1330 = sld [smem:[#allocation7 + $0x8c]]
        %v1331 = vstv %s1330
        %v1332 = vmul.f32 %v1331, %v1261
        %v1333 = vmul.f32 %v1331, %v1262
        %v1334 = vadd.f32 %v1328, %v1332
        %v1335 = vadd.f32 %v1329, %v1333
        %s1336 = sld [smem:[#allocation7 + $0x8d]]
        %v1337 = vstv %s1336
        %v1338 = vmul.f32 %v1337, %v1261
        %v1339 = vmul.f32 %v1337, %v1262
        %1342 = vrot.lane.b32.xlu0 %v1338, 127
        %v1343 = vpop.permute.xlu0 %1342
        %1344 = vrot.lane.b32.xlu0 %v1339, 127
        %v1345 = vpop.permute.xlu0 %1344
        %v1348 = vadd.f32 %v1334, %v1343
        %v1349 = vadd.f32 %v1335, %v1345
        %s1350 = sld [smem:[#allocation7 + $0x8e]]
        %v1351 = vstv %s1350
        %v1352 = vmul.f32 %v1351, %v1261
        %v1353 = vmul.f32 %v1351, %v1262
        %1356 = vrot.lane.b32.xlu0 %v1352, 126
        %v1357 = vpop.permute.xlu0 %1356
        %1358 = vrot.lane.b32.xlu0 %v1353, 126
        %v1359 = vpop.permute.xlu0 %1358
        %v1362 = vadd.f32 %v1348, %v1357
        %v1363 = vadd.f32 %v1349, %v1359
        %s1364 = sld [smem:[#allocation7 + $0x8f]]
        %v1365 = vstv %s1364
        %v1366 = vmul.f32 %v1365, %v1261
        %v1367 = vmul.f32 %v1365, %v1262
        %1370 = vrot.lane.b32.xlu0 %v1366, 125
        %v1371 = vpop.permute.xlu0 %1370
        %1372 = vrot.lane.b32.xlu0 %v1367, 125
        %v1373 = vpop.permute.xlu0 %1372
        %v1376 = vadd.f32 %v1362, %v1371
        %v1377 = vadd.f32 %v1363, %v1373
        %s1378 = sld [smem:[#allocation7 + $0x90]]
        %v1379 = vstv %s1378
        %v1380 = vmul.f32 %v1379, %v1261
        %v1381 = vmul.f32 %v1379, %v1262
        %1384 = vrot.lane.b32.xlu0 %v1380, 124
        %v1385 = vpop.permute.xlu0 %1384
        %1386 = vrot.lane.b32.xlu0 %v1381, 124
        %v1387 = vpop.permute.xlu0 %1386
        %v1390 = vadd.f32 %v1376, %v1385
        %v1391 = vadd.f32 %v1377, %v1387
        %s1392 = sld [smem:[#allocation7 + $0x91]]
        %v1393 = vstv %s1392
        %v1394 = vmul.f32 %v1393, %v1263
        %v1395 = vmul.f32 %v1393, %v1264
        %v1396 = vadd.f32 %v1390, %v1394
        %v1397 = vadd.f32 %v1391, %v1395
        %s1398 = sld [smem:[#allocation7 + $0x92]]
        %v1399 = vstv %s1398
        %v1400 = vmul.f32 %v1399, %v1263
        %v1401 = vmul.f32 %v1399, %v1264
        %1404 = vrot.lane.b32.xlu0 %v1400, 127
        %v1405 = vpop.permute.xlu0 %1404
        %1406 = vrot.lane.b32.xlu0 %v1401, 127
        %v1407 = vpop.permute.xlu0 %1406
        %v1410 = vadd.f32 %v1396, %v1405
        %v1411 = vadd.f32 %v1397, %v1407
        %s1412 = sld [smem:[#allocation7 + $0x93]]
        %v1413 = vstv %s1412
        %v1414 = vmul.f32 %v1413, %v1263
        %v1415 = vmul.f32 %v1413, %v1264
        %1418 = vrot.lane.b32.xlu0 %v1414, 126
        %v1419 = vpop.permute.xlu0 %1418
        %1420 = vrot.lane.b32.xlu0 %v1415, 126
        %v1421 = vpop.permute.xlu0 %1420
        %v1424 = vadd.f32 %v1410, %v1419
        %v1425 = vadd.f32 %v1411, %v1421
        %s1426 = sld [smem:[#allocation7 + $0x94]]
        %v1427 = vstv %s1426
        %v1428 = vmul.f32 %v1427, %v1263
        %v1429 = vmul.f32 %v1427, %v1264
        %1432 = vrot.lane.b32.xlu0 %v1428, 125
        %v1433 = vpop.permute.xlu0 %1432
        %1434 = vrot.lane.b32.xlu0 %v1429, 125
        %v1435 = vpop.permute.xlu0 %1434
        %v1438 = vadd.f32 %v1424, %v1433
        %v1439 = vadd.f32 %v1425, %v1435
        %s1440 = sld [smem:[#allocation7 + $0x95]]
        %v1441 = vstv %s1440
        %v1442 = vmul.f32 %v1441, %v1263
        %v1443 = vmul.f32 %v1441, %v1264
        %1446 = vrot.lane.b32.xlu0 %v1442, 124
        %v1447 = vpop.permute.xlu0 %1446
        %1448 = vrot.lane.b32.xlu0 %v1443, 124
        %v1449 = vpop.permute.xlu0 %1448
        %v1452 = vadd.f32 %v1438, %v1447
        %v1453 = vadd.f32 %v1439, %v1449
        %s1454 = sld [smem:[#allocation7 + $0xb5]]
        %v1455 = vstv %s1454
        %v1456 = vadd.f32 %v1455, 0.0
        %s1457 = sld [smem:[#allocation7 + $0x96]]
        %v1458 = vstv %s1457
        %v1459 = vmul.f32 %v1458, %v1259
        %v1460 = vmul.f32 %v1458, %v1260
        %v1461 = vadd.f32 %v1456, %v1459
        %v1462 = vadd.f32 %v1456, %v1460
        %s1463 = sld [smem:[#allocation7 + $0x97]]
        %v1464 = vstv %s1463
        %v1465 = vmul.f32 %v1464, %v1259
        %v1466 = vmul.f32 %v1464, %v1260
        %1469 = vrot.lane.b32.xlu0 %v1465, 127
        %v1470 = vpop.permute.xlu0 %1469
        %1471 = vrot.lane.b32.xlu0 %v1466, 127
        %v1472 = vpop.permute.xlu0 %1471
        %v1475 = vadd.f32 %v1461, %v1470
        %v1476 = vadd.f32 %v1462, %v1472
        %s1477 = sld [smem:[#allocation7 + $0x98]]
        %v1478 = vstv %s1477
        %v1479 = vmul.f32 %v1478, %v1259
        %v1480 = vmul.f32 %v1478, %v1260
        %1483 = vrot.lane.b32.xlu0 %v1479, 126
        %v1484 = vpop.permute.xlu0 %1483
        %1485 = vrot.lane.b32.xlu0 %v1480, 126
        %v1486 = vpop.permute.xlu0 %1485
        %v1489 = vadd.f32 %v1475, %v1484
        %v1490 = vadd.f32 %v1476, %v1486
        %s1491 = sld [smem:[#allocation7 + $0x99]]
        %v1492 = vstv %s1491
        %v1493 = vmul.f32 %v1492, %v1259
        %v1494 = vmul.f32 %v1492, %v1260
        %1497 = vrot.lane.b32.xlu0 %v1493, 125
        %v1498 = vpop.permute.xlu0 %1497
        %1499 = vrot.lane.b32.xlu0 %v1494, 125
        %v1500 = vpop.permute.xlu0 %1499
        %v1503 = vadd.f32 %v1489, %v1498
        %v1504 = vadd.f32 %v1490, %v1500
        %s1505 = sld [smem:[#allocation7 + $0x9a]]
        %v1506 = vstv %s1505
        %v1507 = vmul.f32 %v1506, %v1259
        %v1508 = vmul.f32 %v1506, %v1260
        %1511 = vrot.lane.b32.xlu0 %v1507, 124
        %v1512 = vpop.permute.xlu0 %1511
        %1513 = vrot.lane.b32.xlu0 %v1508, 124
        %v1514 = vpop.permute.xlu0 %1513
        %v1517 = vadd.f32 %v1503, %v1512
        %v1518 = vadd.f32 %v1504, %v1514
        %s1519 = sld [smem:[#allocation7 + $0x9b]]
        %v1520 = vstv %s1519
        %v1521 = vmul.f32 %v1520, %v1261
        %v1522 = vmul.f32 %v1520, %v1262
        %v1523 = vadd.f32 %v1517, %v1521
        %v1524 = vadd.f32 %v1518, %v1522
        %s1525 = sld [smem:[#allocation7 + $0x9c]]
        %v1526 = vstv %s1525
        %v1527 = vmul.f32 %v1526, %v1261
        %v1528 = vmul.f32 %v1526, %v1262
        %1531 = vrot.lane.b32.xlu0 %v1527, 127
        %v1532 = vpop.permute.xlu0 %1531
        %1533 = vrot.lane.b32.xlu0 %v1528, 127
        %v1534 = vpop.permute.xlu0 %1533
        %v1537 = vadd.f32 %v1523, %v1532
        %v1538 = vadd.f32 %v1524, %v1534
        %s1539 = sld [smem:[#allocation7 + $0x9d]]
        %v1540 = vstv %s1539
        %v1541 = vmul.f32 %v1540, %v1261
        %v1542 = vmul.f32 %v1540, %v1262
        %1545 = vrot.lane.b32.xlu0 %v1541, 126
        %v1546 = vpop.permute.xlu0 %1545
        %1547 = vrot.lane.b32.xlu0 %v1542, 126
        %v1548 = vpop.permute.xlu0 %1547
        %v1551 = vadd.f32 %v1537, %v1546
        %v1552 = vadd.f32 %v1538, %v1548
        %s1553 = sld [smem:[#allocation7 + $0x9e]]
        %v1554 = vstv %s1553
        %v1555 = vmul.f32 %v1554, %v1261
        %v1556 = vmul.f32 %v1554, %v1262
        %1559 = vrot.lane.b32.xlu0 %v1555, 125
        %v1560 = vpop.permute.xlu0 %1559
        %1561 = vrot.lane.b32.xlu0 %v1556, 125
        %v1562 = vpop.permute.xlu0 %1561
        %v1565 = vadd.f32 %v1551, %v1560
        %v1566 = vadd.f32 %v1552, %v1562
        %s1567 = sld [smem:[#allocation7 + $0x9f]]
        %v1568 = vstv %s1567
        %v1569 = vmul.f32 %v1568, %v1261
        %v1570 = vmul.f32 %v1568, %v1262
        %1573 = vrot.lane.b32.xlu0 %v1569, 124
        %v1574 = vpop.permute.xlu0 %1573
        %1575 = vrot.lane.b32.xlu0 %v1570, 124
        %v1576 = vpop.permute.xlu0 %1575
        %v1579 = vadd.f32 %v1565, %v1574
        %v1580 = vadd.f32 %v1566, %v1576
        %s1581 = sld [smem:[#allocation7 + $0xa0]]
        %v1582 = vstv %s1581
        %v1583 = vmul.f32 %v1582, %v1263
        %v1584 = vmul.f32 %v1582, %v1264
        %v1585 = vadd.f32 %v1579, %v1583
        %v1586 = vadd.f32 %v1580, %v1584
        %s1587 = sld [smem:[#allocation7 + $0xa1]]
        %v1588 = vstv %s1587
        %v1589 = vmul.f32 %v1588, %v1263
        %v1590 = vmul.f32 %v1588, %v1264
        %1593 = vrot.lane.b32.xlu0 %v1589, 127
        %v1594 = vpop.permute.xlu0 %1593
        %1595 = vrot.lane.b32.xlu0 %v1590, 127
        %v1596 = vpop.permute.xlu0 %1595
        %v1599 = vadd.f32 %v1585, %v1594
        %v1600 = vadd.f32 %v1586, %v1596
        %s1601 = sld [smem:[#allocation7 + $0xa2]]
        %v1602 = vstv %s1601
        %v1603 = vmul.f32 %v1602, %v1263
        %v1604 = vmul.f32 %v1602, %v1264
        %1607 = vrot.lane.b32.xlu0 %v1603, 126
        %v1608 = vpop.permute.xlu0 %1607
        %1609 = vrot.lane.b32.xlu0 %v1604, 126
        %v1610 = vpop.permute.xlu0 %1609
        %v1613 = vadd.f32 %v1599, %v1608
        %v1614 = vadd.f32 %v1600, %v1610
        %s1615 = sld [smem:[#allocation7 + $0xa3]]
        %v1616 = vstv %s1615
        %v1617 = vmul.f32 %v1616, %v1263
        %v1618 = vmul.f32 %v1616, %v1264
        %1621 = vrot.lane.b32.xlu0 %v1617, 125
        %v1622 = vpop.permute.xlu0 %1621
        %1623 = vrot.lane.b32.xlu0 %v1618, 125
        %v1624 = vpop.permute.xlu0 %1623
        %v1627 = vadd.f32 %v1613, %v1622
        %v1628 = vadd.f32 %v1614, %v1624
        %s1629 = sld [smem:[#allocation7 + $0xa4]]
        %v1630 = vstv %s1629
        %v1631 = vmul.f32 %v1630, %v1263
        %v1632 = vmul.f32 %v1630, %v1264
        %1635 = vrot.lane.b32.xlu0 %v1631, 124
        %v1636 = vpop.permute.xlu0 %1635
        %1637 = vrot.lane.b32.xlu0 %v1632, 124
        %v1638 = vpop.permute.xlu0 %1637
        %v1641 = vadd.f32 %v1627, %v1636
        %v1642 = vadd.f32 %v1628, %v1638
        %s1643 = sld [smem:[#allocation7 + $0xb6]]
        %v1644 = vstv %s1643
        %v1645 = vadd.f32 %v1644, 0.0
        %s1646 = sld [smem:[#allocation7 + $0xa5]]
        %v1647 = vstv %s1646
        %v1648 = vmul.f32 %v1647, %v1259
        %v1649 = vmul.f32 %v1647, %v1260
        %v1650 = vadd.f32 %v1645, %v1648
        %v1651 = vadd.f32 %v1645, %v1649
        %s1652 = sld [smem:[#allocation7 + $0xa6]]
        %v1653 = vstv %s1652
        %v1654 = vmul.f32 %v1653, %v1259
        %v1655 = vmul.f32 %v1653, %v1260
        %1658 = vrot.lane.b32.xlu0 %v1654, 127
        %v1659 = vpop.permute.xlu0 %1658
        %1660 = vrot.lane.b32.xlu0 %v1655, 127
        %v1661 = vpop.permute.xlu0 %1660
        %v1664 = vadd.f32 %v1650, %v1659
        %v1665 = vadd.f32 %v1651, %v1661
        %s1666 = sld [smem:[#allocation7 + $0xa7]]
        %v1667 = vstv %s1666
        %v1668 = vmul.f32 %v1667, %v1259
        %v1669 = vmul.f32 %v1667, %v1260
        %1672 = vrot.lane.b32.xlu0 %v1668, 126
        %v1673 = vpop.permute.xlu0 %1672
        %1674 = vrot.lane.b32.xlu0 %v1669, 126
        %v1675 = vpop.permute.xlu0 %1674
        %v1678 = vadd.f32 %v1664, %v1673
        %v1679 = vadd.f32 %v1665, %v1675
        %s1680 = sld [smem:[#allocation7 + $0xa8]]
        %v1681 = vstv %s1680
        %v1682 = vmul.f32 %v1681, %v1259
        %v1683 = vmul.f32 %v1681, %v1260
        %1686 = vrot.lane.b32.xlu0 %v1682, 125
        %v1687 = vpop.permute.xlu0 %1686
        %1688 = vrot.lane.b32.xlu0 %v1683, 125
        %v1689 = vpop.permute.xlu0 %1688
        %v1692 = vadd.f32 %v1678, %v1687
        %v1693 = vadd.f32 %v1679, %v1689
        %s1694 = sld [smem:[#allocation7 + $0xa9]]
        %v1695 = vstv %s1694
        %v1696 = vmul.f32 %v1695, %v1259
        %v1697 = vmul.f32 %v1695, %v1260
        %1700 = vrot.lane.b32.xlu0 %v1696, 124
        %v1701 = vpop.permute.xlu0 %1700
        %1702 = vrot.lane.b32.xlu0 %v1697, 124
        %v1703 = vpop.permute.xlu0 %1702
        %v1706 = vadd.f32 %v1692, %v1701
        %v1707 = vadd.f32 %v1693, %v1703
        %s1708 = sld [smem:[#allocation7 + $0xaa]]
        %v1709 = vstv %s1708
        %v1710 = vmul.f32 %v1709, %v1261
        %v1711 = vmul.f32 %v1709, %v1262
        %v1712 = vadd.f32 %v1706, %v1710
        %v1713 = vadd.f32 %v1707, %v1711
        %s1714 = sld [smem:[#allocation7 + $0xab]]
        %v1715 = vstv %s1714
        %v1716 = vmul.f32 %v1715, %v1261
        %v1717 = vmul.f32 %v1715, %v1262
        %1720 = vrot.lane.b32.xlu0 %v1716, 127
        %v1721 = vpop.permute.xlu0 %1720
        %1722 = vrot.lane.b32.xlu0 %v1717, 127
        %v1723 = vpop.permute.xlu0 %1722
        %v1726 = vadd.f32 %v1712, %v1721
        %v1727 = vadd.f32 %v1713, %v1723
        %s1728 = sld [smem:[#allocation7 + $0xac]]
        %v1729 = vstv %s1728
        %v1730 = vmul.f32 %v1729, %v1261
        %v1731 = vmul.f32 %v1729, %v1262
        %1734 = vrot.lane.b32.xlu0 %v1730, 126
        %v1735 = vpop.permute.xlu0 %1734
        %1736 = vrot.lane.b32.xlu0 %v1731, 126
        %v1737 = vpop.permute.xlu0 %1736
        %v1740 = vadd.f32 %v1726, %v1735
        %v1741 = vadd.f32 %v1727, %v1737
        %s1742 = sld [smem:[#allocation7 + $0xad]]
        %v1743 = vstv %s1742
        %v1744 = vmul.f32 %v1743, %v1261
        %v1745 = vmul.f32 %v1743, %v1262
        %1748 = vrot.lane.b32.xlu0 %v1744, 125
        %v1749 = vpop.permute.xlu0 %1748
        %1750 = vrot.lane.b32.xlu0 %v1745, 125
        %v1751 = vpop.permute.xlu0 %1750
        %v1754 = vadd.f32 %v1740, %v1749
        %v1755 = vadd.f32 %v1741, %v1751
        %s1756 = sld [smem:[#allocation7 + $0xae]]
        %v1757 = vstv %s1756
        %v1758 = vmul.f32 %v1757, %v1261
        %v1759 = vmul.f32 %v1757, %v1262
        %1762 = vrot.lane.b32.xlu0 %v1758, 124
        %v1763 = vpop.permute.xlu0 %1762
        %1764 = vrot.lane.b32.xlu0 %v1759, 124
        %v1765 = vpop.permute.xlu0 %1764
        %v1768 = vadd.f32 %v1754, %v1763
        %v1769 = vadd.f32 %v1755, %v1765
        %s1770 = sld [smem:[#allocation7 + $0xaf]]
        %v1771 = vstv %s1770
        %v1772 = vmul.f32 %v1771, %v1263
        %v1773 = vmul.f32 %v1771, %v1264
        %v1774 = vadd.f32 %v1768, %v1772
        %v1775 = vadd.f32 %v1769, %v1773
        %s1776 = sld [smem:[#allocation7 + $0xb0]]
        %v1777 = vstv %s1776
        %v1778 = vmul.f32 %v1777, %v1263
        %v1779 = vmul.f32 %v1777, %v1264
        %1782 = vrot.lane.b32.xlu0 %v1778, 127
        %v1783 = vpop.permute.xlu0 %1782
        %1784 = vrot.lane.b32.xlu0 %v1779, 127
        %v1785 = vpop.permute.xlu0 %1784
        %v1788 = vadd.f32 %v1774, %v1783
        %v1789 = vadd.f32 %v1775, %v1785
        %s1790 = sld [smem:[#allocation7 + $0xb1]]
        %v1791 = vstv %s1790
        %v1792 = vmul.f32 %v1791, %v1263
        %v1793 = vmul.f32 %v1791, %v1264
        %1796 = vrot.lane.b32.xlu0 %v1792, 126
        %v1797 = vpop.permute.xlu0 %1796
        %1798 = vrot.lane.b32.xlu0 %v1793, 126
        %v1799 = vpop.permute.xlu0 %1798
        %v1802 = vadd.f32 %v1788, %v1797
        %v1803 = vadd.f32 %v1789, %v1799
        %s1804 = sld [smem:[#allocation7 + $0xb2]]
        %v1805 = vstv %s1804
        %v1806 = vmul.f32 %v1805, %v1263
        %v1807 = vmul.f32 %v1805, %v1264
        %1810 = vrot.lane.b32.xlu0 %v1806, 125
        %v1811 = vpop.permute.xlu0 %1810
        %1812 = vrot.lane.b32.xlu0 %v1807, 125
        %v1813 = vpop.permute.xlu0 %1812
        %v1816 = vadd.f32 %v1802, %v1811
        %v1817 = vadd.f32 %v1803, %v1813
        %s1818 = sld [smem:[#allocation7 + $0xb3]]
        %v1819 = vstv %s1818
        %v1820 = vmul.f32 %v1819, %v1263
        %v1821 = vmul.f32 %v1819, %v1264
        %1824 = vrot.lane.b32.xlu0 %v1820, 124
        %v1825 = vpop.permute.xlu0 %1824
        %1826 = vrot.lane.b32.xlu0 %v1821, 124
        %v1827 = vpop.permute.xlu0 %1826
        %v1830 = vadd.f32 %v1816, %v1825
        %v1831 = vadd.f32 %v1817, %v1827
        %s1832 = sld [smem:[#allocation7 + $0xba]]
        %v1833 = vstv %s1832
        %v1834 = vadd.f32 %v1833, 0.0
        %s1835 = sld [smem:[#allocation7 + $0xb7]]
        %v1836 = vstv %s1835
        %v1837 = vmul.f32 %v1836, %v1452
        %v1838 = vmul.f32 %v1836, %v1453
        %v1839 = vadd.f32 %v1834, %v1837
        %v1840 = vadd.f32 %v1834, %v1838
        %s1841 = sld [smem:[#allocation7 + $0xb8]]
        %v1842 = vstv %s1841
        %v1843 = vmul.f32 %v1842, %v1641
        %v1844 = vmul.f32 %v1842, %v1642
        %v1845 = vadd.f32 %v1839, %v1843
        %v1846 = vadd.f32 %v1840, %v1844
        %s1847 = sld [smem:[#allocation7 + $0xb9]]
        %v1848 = vstv %s1847
        %v1849 = vmul.f32 %v1848, %v1830
        %v1850 = vmul.f32 %v1848, %v1831
        %v1851 = vadd.f32 %v1845, %v1849
        %v1852 = vadd.f32 %v1846, %v1850
        %s1853 = scalar_lea.vmem %s177, 112
        %1854 = vst.msk [vmem:[%s1853] sm:$0xff] %vm216, %v1851
        %1855 = vst.msk [vmem:[%s1853 + $0x8] sm:$0xff] %vm216, %v1852
        %1858 = vrot.lane.b32.xlu0 %v1851, 1
        %v1859 = vpop.permute.xlu0 %1858
        %1860 = vrot.lane.b32.xlu0 %v1852, 1
        %v1861 = vpop.permute.xlu0 %1860
        %1864 = vst.msk [vmem:[%s916 + $0x1] sm:$0xff] %vm449, %v1859
        %1865 = vst.msk [vmem:[%s916 + $0x9] sm:$0xff] %vm449, %v1861
        %v1866 = vld [vmem:[#allocation2] sm:$0xff]
        %v1867 = vld [vmem:[#allocation2 + $0x8] sm:$0x3f]
        %v1868 = vld [vmem:[#allocation2 + $0x1] sm:$0xff]
        %v1869 = vld [vmem:[#allocation2 + $0x9] sm:$0x3f]
        %v1870 = vld [vmem:[#allocation2 + $0x2] sm:$0xff]
        %v1871 = vld [vmem:[#allocation2 + $0xa] sm:$0x3f]
        %v1872 = vld [vmem:[#allocation2 + $0x3] sm:$0xff]
        %v1873 = vld [vmem:[#allocation2 + $0xb] sm:$0x3f]
        %v1874 = vld [vmem:[#allocation2 + $0x4] sm:$0xff]
        %v1875 = vld [vmem:[#allocation2 + $0xc] sm:$0x3f]
        %v1876 = vld [vmem:[%s460] sm:$0xff]
        %v1877 = vld [vmem:[%s460 + $0x8] sm:$0x3f]
        %v1878 = vld [vmem:[%s460 + $0x1] sm:$0xff]
        %v1879 = vld [vmem:[%s460 + $0x9] sm:$0x3f]
        %v1880 = vld [vmem:[%s460 + $0x2] sm:$0xff]
        %v1881 = vld [vmem:[%s460 + $0xa] sm:$0x3f]
        %v1882 = vld [vmem:[%s460 + $0x3] sm:$0xff]
        %v1883 = vld [vmem:[%s460 + $0xb] sm:$0x3f]
        %v1884 = vld [vmem:[%s460 + $0x4] sm:$0xff]
        %v1885 = vld [vmem:[%s460 + $0xc] sm:$0x3f]
        %v1886 = vld [vmem:[%s916] sm:$0xff]
        %v1887 = vld [vmem:[%s916 + $0x8] sm:$0x3f]
        %v1888 = vld [vmem:[%s916 + $0x1] sm:$0xff]
        %v1889 = vld [vmem:[%s916 + $0x9] sm:$0x3f]
        %v1890 = vld [vmem:[%s916 + $0x2] sm:$0xff]
        %v1891 = vld [vmem:[%s916 + $0xa] sm:$0x3f]
        %v1892 = vld [vmem:[%s916 + $0x3] sm:$0xff]
        %v1893 = vld [vmem:[%s916 + $0xb] sm:$0x3f]
        %v1894 = vld [vmem:[%s916 + $0x4] sm:$0xff]
        %v1895 = vld [vmem:[%s916 + $0xc] sm:$0x3f]
        %s1896 = sld [smem:[#allocation7 + $0x84]]
        %v1897 = vstv %s1896
        %v1898 = vadd.f32 %v1897, 0.0
        %s1899 = sld [smem:[#allocation7 + $0x57]]
        %v1900 = vstv %s1899
        %v1901 = vmul.f32 %v1900, %v1866
        %v1902 = vmul.f32 %v1900, %v1867
        %v1903 = vadd.f32 %v1898, %v1901
        %v1904 = vadd.f32 %v1898, %v1902
        %s1905 = sld [smem:[#allocation7 + $0x58]]
        %v1906 = vstv %s1905
        %v1907 = vmul.f32 %v1906, %v1868
        %v1908 = vmul.f32 %v1906, %v1869
        %v1909 = vadd.f32 %v1903, %v1907
        %v1910 = vadd.f32 %v1904, %v1908
        %s1911 = sld [smem:[#allocation7 + $0x59]]
        %v1912 = vstv %s1911
        %v1913 = vmul.f32 %v1912, %v1870
        %v1914 = vmul.f32 %v1912, %v1871
        %v1915 = vadd.f32 %v1909, %v1913
        %v1916 = vadd.f32 %v1910, %v1914
        %s1917 = sld [smem:[#allocation7 + $0x5a]]
        %v1918 = vstv %s1917
        %v1919 = vmul.f32 %v1918, %v1872
        %v1920 = vmul.f32 %v1918, %v1873
        %v1921 = vadd.f32 %v1915, %v1919
        %v1922 = vadd.f32 %v1916, %v1920
        %s1923 = sld [smem:[#allocation7 + $0x5b]]
        %v1924 = vstv %s1923
        %v1925 = vmul.f32 %v1924, %v1874
        %v1926 = vmul.f32 %v1924, %v1875
        %v1927 = vadd.f32 %v1921, %v1925
        %v1928 = vadd.f32 %v1922, %v1926
        %s1929 = sld [smem:[#allocation7 + $0x5c]]
        %v1930 = vstv %s1929
        %v1931 = vmul.f32 %v1930, %v1876
        %v1932 = vmul.f32 %v1930, %v1877
        %v1933 = vadd.f32 %v1927, %v1931
        %v1934 = vadd.f32 %v1928, %v1932
        %s1935 = sld [smem:[#allocation7 + $0x5d]]
        %v1936 = vstv %s1935
        %v1937 = vmul.f32 %v1936, %v1878
        %v1938 = vmul.f32 %v1936, %v1879
        %v1939 = vadd.f32 %v1933, %v1937
        %v1940 = vadd.f32 %v1934, %v1938
        %s1941 = sld [smem:[#allocation7 + $0x5e]]
        %v1942 = vstv %s1941
        %v1943 = vmul.f32 %v1942, %v1880
        %v1944 = vmul.f32 %v1942, %v1881
        %v1945 = vadd.f32 %v1939, %v1943
        %v1946 = vadd.f32 %v1940, %v1944
        %s1947 = sld [smem:[#allocation7 + $0x5f]]
        %v1948 = vstv %s1947
        %v1949 = vmul.f32 %v1948, %v1882
        %v1950 = vmul.f32 %v1948, %v1883
        %v1951 = vadd.f32 %v1945, %v1949
        %v1952 = vadd.f32 %v1946, %v1950
        %s1953 = sld [smem:[#allocation7 + $0x60]]
        %v1954 = vstv %s1953
        %v1955 = vmul.f32 %v1954, %v1884
        %v1956 = vmul.f32 %v1954, %v1885
        %v1957 = vadd.f32 %v1951, %v1955
        %v1958 = vadd.f32 %v1952, %v1956
        %s1959 = sld [smem:[#allocation7 + $0x61]]
        %v1960 = vstv %s1959
        %v1961 = vmul.f32 %v1960, %v1886
        %v1962 = vmul.f32 %v1960, %v1887
        %v1963 = vadd.f32 %v1957, %v1961
        %v1964 = vadd.f32 %v1958, %v1962
        %s1965 = sld [smem:[#allocation7 + $0x62]]
        %v1966 = vstv %s1965
        %v1967 = vmul.f32 %v1966, %v1888
        %v1968 = vmul.f32 %v1966, %v1889
        %v1969 = vadd.f32 %v1963, %v1967
        %v1970 = vadd.f32 %v1964, %v1968
        %s1971 = sld [smem:[#allocation7 + $0x63]]
        %v1972 = vstv %s1971
        %v1973 = vmul.f32 %v1972, %v1890
        %v1974 = vmul.f32 %v1972, %v1891
        %v1975 = vadd.f32 %v1969, %v1973
        %v1976 = vadd.f32 %v1970, %v1974
        %s1977 = sld [smem:[#allocation7 + $0x64]]
        %v1978 = vstv %s1977
        %v1979 = vmul.f32 %v1978, %v1892
        %v1980 = vmul.f32 %v1978, %v1893
        %v1981 = vadd.f32 %v1975, %v1979
        %v1982 = vadd.f32 %v1976, %v1980
        %s1983 = sld [smem:[#allocation7 + $0x65]]
        %v1984 = vstv %s1983
        %v1985 = vmul.f32 %v1984, %v1894
        %v1986 = vmul.f32 %v1984, %v1895
        %v1987 = vadd.f32 %v1981, %v1985
        %v1988 = vadd.f32 %v1982, %v1986
        %1991 = vrot.lane.b32.xlu0 %v1987, 1
        %v1992 = vpop.permute.xlu0 %1991
        %1993 = vrot.lane.b32.xlu0 %v1988, 1
        %v1994 = vpop.permute.xlu0 %1993
        %1997 = vst.msk [vmem:[#allocation3 + $0x1] sm:$0xff] %vm554, %v1992
        %1998 = vst.msk [vmem:[#allocation3 + $0x9] sm:$0x3f] %vm556, %v1994
        %s1999 = sld [smem:[#allocation7 + $0x85]]
        %v2000 = vstv %s1999
        %v2001 = vadd.f32 %v2000, 0.0
        %s2002 = sld [smem:[#allocation7 + $0x66]]
        %v2003 = vstv %s2002
        %v2004 = vmul.f32 %v2003, %v1866
        %v2005 = vmul.f32 %v2003, %v1867
        %v2006 = vadd.f32 %v2001, %v2004
        %v2007 = vadd.f32 %v2001, %v2005
        %s2008 = sld [smem:[#allocation7 + $0x67]]
        %v2009 = vstv %s2008
        %v2010 = vmul.f32 %v2009, %v1868
        %v2011 = vmul.f32 %v2009, %v1869
        %v2012 = vadd.f32 %v2006, %v2010
        %v2013 = vadd.f32 %v2007, %v2011
        %s2014 = sld [smem:[#allocation7 + $0x68]]
        %v2015 = vstv %s2014
        %v2016 = vmul.f32 %v2015, %v1870
        %v2017 = vmul.f32 %v2015, %v1871
        %v2018 = vadd.f32 %v2012, %v2016
        %v2019 = vadd.f32 %v2013, %v2017
        %s2020 = sld [smem:[#allocation7 + $0x69]]
        %v2021 = vstv %s2020
        %v2022 = vmul.f32 %v2021, %v1872
        %v2023 = vmul.f32 %v2021, %v1873
        %v2024 = vadd.f32 %v2018, %v2022
        %v2025 = vadd.f32 %v2019, %v2023
        %s2026 = sld [smem:[#allocation7 + $0x6a]]
        %v2027 = vstv %s2026
        %v2028 = vmul.f32 %v2027, %v1874
        %v2029 = vmul.f32 %v2027, %v1875
        %v2030 = vadd.f32 %v2024, %v2028
        %v2031 = vadd.f32 %v2025, %v2029
        %s2032 = sld [smem:[#allocation7 + $0x6b]]
        %v2033 = vstv %s2032
        %v2034 = vmul.f32 %v2033, %v1876
        %v2035 = vmul.f32 %v2033, %v1877
        %v2036 = vadd.f32 %v2030, %v2034
        %v2037 = vadd.f32 %v2031, %v2035
        %s2038 = sld [smem:[#allocation7 + $0x6c]]
        %v2039 = vstv %s2038
        %v2040 = vmul.f32 %v2039, %v1878
        %v2041 = vmul.f32 %v2039, %v1879
        %v2042 = vadd.f32 %v2036, %v2040
        %v2043 = vadd.f32 %v2037, %v2041
        %s2044 = sld [smem:[#allocation7 + $0x6d]]
        %v2045 = vstv %s2044
        %v2046 = vmul.f32 %v2045, %v1880
        %v2047 = vmul.f32 %v2045, %v1881
        %v2048 = vadd.f32 %v2042, %v2046
        %v2049 = vadd.f32 %v2043, %v2047
        %s2050 = sld [smem:[#allocation7 + $0x6e]]
        %v2051 = vstv %s2050
        %v2052 = vmul.f32 %v2051, %v1882
        %v2053 = vmul.f32 %v2051, %v1883
        %v2054 = vadd.f32 %v2048, %v2052
        %v2055 = vadd.f32 %v2049, %v2053
        %s2056 = sld [smem:[#allocation7 + $0x6f]]
        %v2057 = vstv %s2056
        %v2058 = vmul.f32 %v2057, %v1884
        %v2059 = vmul.f32 %v2057, %v1885
        %v2060 = vadd.f32 %v2054, %v2058
        %v2061 = vadd.f32 %v2055, %v2059
        %s2062 = sld [smem:[#allocation7 + $0x70]]
        %v2063 = vstv %s2062
        %v2064 = vmul.f32 %v2063, %v1886
        %v2065 = vmul.f32 %v2063, %v1887
        %v2066 = vadd.f32 %v2060, %v2064
        %v2067 = vadd.f32 %v2061, %v2065
        %s2068 = sld [smem:[#allocation7 + $0x71]]
        %v2069 = vstv %s2068
        %v2070 = vmul.f32 %v2069, %v1888
        %v2071 = vmul.f32 %v2069, %v1889
        %v2072 = vadd.f32 %v2066, %v2070
        %v2073 = vadd.f32 %v2067, %v2071
        %s2074 = sld [smem:[#allocation7 + $0x72]]
        %v2075 = vstv %s2074
        %v2076 = vmul.f32 %v2075, %v1890
        %v2077 = vmul.f32 %v2075, %v1891
        %v2078 = vadd.f32 %v2072, %v2076
        %v2079 = vadd.f32 %v2073, %v2077
        %s2080 = sld [smem:[#allocation7 + $0x73]]
        %v2081 = vstv %s2080
        %v2082 = vmul.f32 %v2081, %v1892
        %v2083 = vmul.f32 %v2081, %v1893
        %v2084 = vadd.f32 %v2078, %v2082
        %v2085 = vadd.f32 %v2079, %v2083
        %s2086 = sld [smem:[#allocation7 + $0x74]]
        %v2087 = vstv %s2086
        %v2088 = vmul.f32 %v2087, %v1894
        %v2089 = vmul.f32 %v2087, %v1895
        %v2090 = vadd.f32 %v2084, %v2088
        %v2091 = vadd.f32 %v2085, %v2089
        %2094 = vrot.lane.b32.xlu0 %v2090, 1
        %v2095 = vpop.permute.xlu0 %2094
        %2096 = vrot.lane.b32.xlu0 %v2091, 1
        %v2097 = vpop.permute.xlu0 %2096
        %2100 = vst.msk [vmem:[%s629 + $0x1] sm:$0xff] %vm554, %v2095
        %2101 = vst.msk [vmem:[%s629 + $0x9] sm:$0x3f] %vm556, %v2097
        %s2102 = sld [smem:[#allocation7 + $0x86]]
        %v2103 = vstv %s2102
        %v2104 = vadd.f32 %v2103, 0.0
        %s2105 = sld [smem:[#allocation7 + $0x75]]
        %v2106 = vstv %s2105
        %v2107 = vmul.f32 %v2106, %v1866
        %v2108 = vmul.f32 %v2106, %v1867
        %v2109 = vadd.f32 %v2104, %v2107
        %v2110 = vadd.f32 %v2104, %v2108
        %s2111 = sld [smem:[#allocation7 + $0x76]]
        %v2112 = vstv %s2111
        %v2113 = vmul.f32 %v2112, %v1868
        %v2114 = vmul.f32 %v2112, %v1869
        %v2115 = vadd.f32 %v2109, %v2113
        %v2116 = vadd.f32 %v2110, %v2114
        %s2117 = sld [smem:[#allocation7 + $0x77]]
        %v2118 = vstv %s2117
        %v2119 = vmul.f32 %v2118, %v1870
        %v2120 = vmul.f32 %v2118, %v1871
        %v2121 = vadd.f32 %v2115, %v2119
        %v2122 = vadd.f32 %v2116, %v2120
        %s2123 = sld [smem:[#allocation7 + $0x78]]
        %v2124 = vstv %s2123
        %v2125 = vmul.f32 %v2124, %v1872
        %v2126 = vmul.f32 %v2124, %v1873
        %v2127 = vadd.f32 %v2121, %v2125
        %v2128 = vadd.f32 %v2122, %v2126
        %s2129 = sld [smem:[#allocation7 + $0x79]]
        %v2130 = vstv %s2129
        %v2131 = vmul.f32 %v2130, %v1874
        %v2132 = vmul.f32 %v2130, %v1875
        %v2133 = vadd.f32 %v2127, %v2131
        %v2134 = vadd.f32 %v2128, %v2132
        %s2135 = sld [smem:[#allocation7 + $0x7a]]
        %v2136 = vstv %s2135
        %v2137 = vmul.f32 %v2136, %v1876
        %v2138 = vmul.f32 %v2136, %v1877
        %v2139 = vadd.f32 %v2133, %v2137
        %v2140 = vadd.f32 %v2134, %v2138
        %s2141 = sld [smem:[#allocation7 + $0x7b]]
        %v2142 = vstv %s2141
        %v2143 = vmul.f32 %v2142, %v1878
        %v2144 = vmul.f32 %v2142, %v1879
        %v2145 = vadd.f32 %v2139, %v2143
        %v2146 = vadd.f32 %v2140, %v2144
        %s2147 = sld [smem:[#allocation7 + $0x7c]]
        %v2148 = vstv %s2147
        %v2149 = vmul.f32 %v2148, %v1880
        %v2150 = vmul.f32 %v2148, %v1881
        %v2151 = vadd.f32 %v2145, %v2149
        %v2152 = vadd.f32 %v2146, %v2150
        %s2153 = sld [smem:[#allocation7 + $0x7d]]
        %v2154 = vstv %s2153
        %v2155 = vmul.f32 %v2154, %v1882
        %v2156 = vmul.f32 %v2154, %v1883
        %v2157 = vadd.f32 %v2151, %v2155
        %v2158 = vadd.f32 %v2152, %v2156
        %s2159 = sld [smem:[#allocation7 + $0x7e]]
        %v2160 = vstv %s2159
        %v2161 = vmul.f32 %v2160, %v1884
        %v2162 = vmul.f32 %v2160, %v1885
        %v2163 = vadd.f32 %v2157, %v2161
        %v2164 = vadd.f32 %v2158, %v2162
        %s2165 = sld [smem:[#allocation7 + $0x7f]]
        %v2166 = vstv %s2165
        %v2167 = vmul.f32 %v2166, %v1886
        %v2168 = vmul.f32 %v2166, %v1887
        %v2169 = vadd.f32 %v2163, %v2167
        %v2170 = vadd.f32 %v2164, %v2168
        %s2171 = sld [smem:[#allocation7 + $0x80]]
        %v2172 = vstv %s2171
        %v2173 = vmul.f32 %v2172, %v1888
        %v2174 = vmul.f32 %v2172, %v1889
        %v2175 = vadd.f32 %v2169, %v2173
        %v2176 = vadd.f32 %v2170, %v2174
        %s2177 = sld [smem:[#allocation7 + $0x81]]
        %v2178 = vstv %s2177
        %v2179 = vmul.f32 %v2178, %v1890
        %v2180 = vmul.f32 %v2178, %v1891
        %v2181 = vadd.f32 %v2175, %v2179
        %v2182 = vadd.f32 %v2176, %v2180
        %s2183 = sld [smem:[#allocation7 + $0x82]]
        %v2184 = vstv %s2183
        %v2185 = vmul.f32 %v2184, %v1892
        %v2186 = vmul.f32 %v2184, %v1893
        %v2187 = vadd.f32 %v2181, %v2185
        %v2188 = vadd.f32 %v2182, %v2186
        %s2189 = sld [smem:[#allocation7 + $0x83]]
        %v2190 = vstv %s2189
        %v2191 = vmul.f32 %v2190, %v1894
        %v2192 = vmul.f32 %v2190, %v1895
        %v2193 = vadd.f32 %v2187, %v2191
        %v2194 = vadd.f32 %v2188, %v2192
        %2197 = vrot.lane.b32.xlu0 %v2193, 1
        %v2198 = vpop.permute.xlu0 %2197
        %2199 = vrot.lane.b32.xlu0 %v2194, 1
        %v2200 = vpop.permute.xlu0 %2199
        %2203 = vst.msk [vmem:[%s1256 + $0x1] sm:$0xff] %vm554, %v2198
        %2204 = vst.msk [vmem:[%s1256 + $0x9] sm:$0x3f] %vm556, %v2200
        %v2205 = vld [vmem:[#allocation3] sm:$0xff]
        %v2206 = vld [vmem:[#allocation3 + $0x8] sm:$0xff]
        %v2207 = vld [vmem:[%s629] sm:$0xff]
        %v2208 = vld [vmem:[%s629 + $0x8] sm:$0xff]
        %v2209 = vld [vmem:[%s1256] sm:$0xff]
        %v2210 = vld [vmem:[%s1256 + $0x8] sm:$0xff]
        %s2211 = sld [smem:[#allocation7 + $0xb4]]
        %v2212 = vstv %s2211
        %v2213 = vadd.f32 %v2212, 0.0
        %s2214 = sld [smem:[#allocation7 + $0x87]]
        %v2215 = vstv %s2214
        %v2216 = vmul.f32 %v2215, %v2205
        %v2217 = vmul.f32 %v2215, %v2206
        %v2218 = vadd.f32 %v2213, %v2216
        %v2219 = vadd.f32 %v2213, %v2217
        %s2220 = sld [smem:[#allocation7 + $0x88]]
        %v2221 = vstv %s2220
        %v2222 = vmul.f32 %v2221, %v2205
        %v2223 = vmul.f32 %v2221, %v2206
        %2226 = vrot.lane.b32.xlu0 %v2222, 127
        %v2227 = vpop.permute.xlu0 %2226
        %2228 = vrot.lane.b32.xlu0 %v2223, 127
        %v2229 = vpop.permute.xlu0 %2228
        %v2232 = vadd.f32 %v2218, %v2227
        %v2233 = vadd.f32 %v2219, %v2229
        %s2234 = sld [smem:[#allocation7 + $0x89]]
        %v2235 = vstv %s2234
        %v2236 = vmul.f32 %v2235, %v2205
        %v2237 = vmul.f32 %v2235, %v2206
        %2240 = vrot.lane.b32.xlu0 %v2236, 126
        %v2241 = vpop.permute.xlu0 %2240
        %2242 = vrot.lane.b32.xlu0 %v2237, 126
        %v2243 = vpop.permute.xlu0 %2242
        %v2246 = vadd.f32 %v2232, %v2241
        %v2247 = vadd.f32 %v2233, %v2243
        %s2248 = sld [smem:[#allocation7 + $0x8a]]
        %v2249 = vstv %s2248
        %v2250 = vmul.f32 %v2249, %v2205
        %v2251 = vmul.f32 %v2249, %v2206
        %2254 = vrot.lane.b32.xlu0 %v2250, 125
        %v2255 = vpop.permute.xlu0 %2254
        %2256 = vrot.lane.b32.xlu0 %v2251, 125
        %v2257 = vpop.permute.xlu0 %2256
        %v2260 = vadd.f32 %v2246, %v2255
        %v2261 = vadd.f32 %v2247, %v2257
        %s2262 = sld [smem:[#allocation7 + $0x8b]]
        %v2263 = vstv %s2262
        %v2264 = vmul.f32 %v2263, %v2205
        %v2265 = vmul.f32 %v2263, %v2206
        %2268 = vrot.lane.b32.xlu0 %v2264, 124
        %v2269 = vpop.permute.xlu0 %2268
        %2270 = vrot.lane.b32.xlu0 %v2265, 124
        %v2271 = vpop.permute.xlu0 %2270
        %v2274 = vadd.f32 %v2260, %v2269
        %v2275 = vadd.f32 %v2261, %v2271
        %s2276 = sld [smem:[#allocation7 + $0x8c]]
        %v2277 = vstv %s2276
        %v2278 = vmul.f32 %v2277, %v2207
        %v2279 = vmul.f32 %v2277, %v2208
        %v2280 = vadd.f32 %v2274, %v2278
        %v2281 = vadd.f32 %v2275, %v2279
        %s2282 = sld [smem:[#allocation7 + $0x8d]]
        %v2283 = vstv %s2282
        %v2284 = vmul.f32 %v2283, %v2207
        %v2285 = vmul.f32 %v2283, %v2208
        %2288 = vrot.lane.b32.xlu0 %v2284, 127
        %v2289 = vpop.permute.xlu0 %2288
        %2290 = vrot.lane.b32.xlu0 %v2285, 127
        %v2291 = vpop.permute.xlu0 %2290
        %v2294 = vadd.f32 %v2280, %v2289
        %v2295 = vadd.f32 %v2281, %v2291
        %s2296 = sld [smem:[#allocation7 + $0x8e]]
        %v2297 = vstv %s2296
        %v2298 = vmul.f32 %v2297, %v2207
        %v2299 = vmul.f32 %v2297, %v2208
        %2302 = vrot.lane.b32.xlu0 %v2298, 126
        %v2303 = vpop.permute.xlu0 %2302
        %2304 = vrot.lane.b32.xlu0 %v2299, 126
        %v2305 = vpop.permute.xlu0 %2304
        %v2308 = vadd.f32 %v2294, %v2303
        %v2309 = vadd.f32 %v2295, %v2305
        %s2310 = sld [smem:[#allocation7 + $0x8f]]
        %v2311 = vstv %s2310
        %v2312 = vmul.f32 %v2311, %v2207
        %v2313 = vmul.f32 %v2311, %v2208
        %2316 = vrot.lane.b32.xlu0 %v2312, 125
        %v2317 = vpop.permute.xlu0 %2316
        %2318 = vrot.lane.b32.xlu0 %v2313, 125
        %v2319 = vpop.permute.xlu0 %2318
        %v2322 = vadd.f32 %v2308, %v2317
        %v2323 = vadd.f32 %v2309, %v2319
        %s2324 = sld [smem:[#allocation7 + $0x90]]
        %v2325 = vstv %s2324
        %v2326 = vmul.f32 %v2325, %v2207
        %v2327 = vmul.f32 %v2325, %v2208
        %2330 = vrot.lane.b32.xlu0 %v2326, 124
        %v2331 = vpop.permute.xlu0 %2330
        %2332 = vrot.lane.b32.xlu0 %v2327, 124
        %v2333 = vpop.permute.xlu0 %2332
        %v2336 = vadd.f32 %v2322, %v2331
        %v2337 = vadd.f32 %v2323, %v2333
        %s2338 = sld [smem:[#allocation7 + $0x91]]
        %v2339 = vstv %s2338
        %v2340 = vmul.f32 %v2339, %v2209
        %v2341 = vmul.f32 %v2339, %v2210
        %v2342 = vadd.f32 %v2336, %v2340
        %v2343 = vadd.f32 %v2337, %v2341
        %s2344 = sld [smem:[#allocation7 + $0x92]]
        %v2345 = vstv %s2344
        %v2346 = vmul.f32 %v2345, %v2209
        %v2347 = vmul.f32 %v2345, %v2210
        %2350 = vrot.lane.b32.xlu0 %v2346, 127
        %v2351 = vpop.permute.xlu0 %2350
        %2352 = vrot.lane.b32.xlu0 %v2347, 127
        %v2353 = vpop.permute.xlu0 %2352
        %v2356 = vadd.f32 %v2342, %v2351
        %v2357 = vadd.f32 %v2343, %v2353
        %s2358 = sld [smem:[#allocation7 + $0x93]]
        %v2359 = vstv %s2358
        %v2360 = vmul.f32 %v2359, %v2209
        %v2361 = vmul.f32 %v2359, %v2210
        %2364 = vrot.lane.b32.xlu0 %v2360, 126
        %v2365 = vpop.permute.xlu0 %2364
        %2366 = vrot.lane.b32.xlu0 %v2361, 126
        %v2367 = vpop.permute.xlu0 %2366
        %v2370 = vadd.f32 %v2356, %v2365
        %v2371 = vadd.f32 %v2357, %v2367
        %s2372 = sld [smem:[#allocation7 + $0x94]]
        %v2373 = vstv %s2372
        %v2374 = vmul.f32 %v2373, %v2209
        %v2375 = vmul.f32 %v2373, %v2210
        %2378 = vrot.lane.b32.xlu0 %v2374, 125
        %v2379 = vpop.permute.xlu0 %2378
        %2380 = vrot.lane.b32.xlu0 %v2375, 125
        %v2381 = vpop.permute.xlu0 %2380
        %v2384 = vadd.f32 %v2370, %v2379
        %v2385 = vadd.f32 %v2371, %v2381
        %s2386 = sld [smem:[#allocation7 + $0x95]]
        %v2387 = vstv %s2386
        %v2388 = vmul.f32 %v2387, %v2209
        %v2389 = vmul.f32 %v2387, %v2210
        %2392 = vrot.lane.b32.xlu0 %v2388, 124
        %v2393 = vpop.permute.xlu0 %2392
        %2394 = vrot.lane.b32.xlu0 %v2389, 124
        %v2395 = vpop.permute.xlu0 %2394
        %v2398 = vadd.f32 %v2384, %v2393
        %v2399 = vadd.f32 %v2385, %v2395
        %s2400 = sld [smem:[#allocation7 + $0xb5]]
        %v2401 = vstv %s2400
        %v2402 = vadd.f32 %v2401, 0.0
        %s2403 = sld [smem:[#allocation7 + $0x96]]
        %v2404 = vstv %s2403
        %v2405 = vmul.f32 %v2404, %v2205
        %v2406 = vmul.f32 %v2404, %v2206
        %v2407 = vadd.f32 %v2402, %v2405
        %v2408 = vadd.f32 %v2402, %v2406
        %s2409 = sld [smem:[#allocation7 + $0x97]]
        %v2410 = vstv %s2409
        %v2411 = vmul.f32 %v2410, %v2205
        %v2412 = vmul.f32 %v2410, %v2206
        %2415 = vrot.lane.b32.xlu0 %v2411, 127
        %v2416 = vpop.permute.xlu0 %2415
        %2417 = vrot.lane.b32.xlu0 %v2412, 127
        %v2418 = vpop.permute.xlu0 %2417
        %v2421 = vadd.f32 %v2407, %v2416
        %v2422 = vadd.f32 %v2408, %v2418
        %s2423 = sld [smem:[#allocation7 + $0x98]]
        %v2424 = vstv %s2423
        %v2425 = vmul.f32 %v2424, %v2205
        %v2426 = vmul.f32 %v2424, %v2206
        %2429 = vrot.lane.b32.xlu0 %v2425, 126
        %v2430 = vpop.permute.xlu0 %2429
        %2431 = vrot.lane.b32.xlu0 %v2426, 126
        %v2432 = vpop.permute.xlu0 %2431
        %v2435 = vadd.f32 %v2421, %v2430
        %v2436 = vadd.f32 %v2422, %v2432
        %s2437 = sld [smem:[#allocation7 + $0x99]]
        %v2438 = vstv %s2437
        %v2439 = vmul.f32 %v2438, %v2205
        %v2440 = vmul.f32 %v2438, %v2206
        %2443 = vrot.lane.b32.xlu0 %v2439, 125
        %v2444 = vpop.permute.xlu0 %2443
        %2445 = vrot.lane.b32.xlu0 %v2440, 125
        %v2446 = vpop.permute.xlu0 %2445
        %v2449 = vadd.f32 %v2435, %v2444
        %v2450 = vadd.f32 %v2436, %v2446
        %s2451 = sld [smem:[#allocation7 + $0x9a]]
        %v2452 = vstv %s2451
        %v2453 = vmul.f32 %v2452, %v2205
        %v2454 = vmul.f32 %v2452, %v2206
        %2457 = vrot.lane.b32.xlu0 %v2453, 124
        %v2458 = vpop.permute.xlu0 %2457
        %2459 = vrot.lane.b32.xlu0 %v2454, 124
        %v2460 = vpop.permute.xlu0 %2459
        %v2463 = vadd.f32 %v2449, %v2458
        %v2464 = vadd.f32 %v2450, %v2460
        %s2465 = sld [smem:[#allocation7 + $0x9b]]
        %v2466 = vstv %s2465
        %v2467 = vmul.f32 %v2466, %v2207
        %v2468 = vmul.f32 %v2466, %v2208
        %v2469 = vadd.f32 %v2463, %v2467
        %v2470 = vadd.f32 %v2464, %v2468
        %s2471 = sld [smem:[#allocation7 + $0x9c]]
        %v2472 = vstv %s2471
        %v2473 = vmul.f32 %v2472, %v2207
        %v2474 = vmul.f32 %v2472, %v2208
        %2477 = vrot.lane.b32.xlu0 %v2473, 127
        %v2478 = vpop.permute.xlu0 %2477
        %2479 = vrot.lane.b32.xlu0 %v2474, 127
        %v2480 = vpop.permute.xlu0 %2479
        %v2483 = vadd.f32 %v2469, %v2478
        %v2484 = vadd.f32 %v2470, %v2480
        %s2485 = sld [smem:[#allocation7 + $0x9d]]
        %v2486 = vstv %s2485
        %v2487 = vmul.f32 %v2486, %v2207
        %v2488 = vmul.f32 %v2486, %v2208
        %2491 = vrot.lane.b32.xlu0 %v2487, 126
        %v2492 = vpop.permute.xlu0 %2491
        %2493 = vrot.lane.b32.xlu0 %v2488, 126
        %v2494 = vpop.permute.xlu0 %2493
        %v2497 = vadd.f32 %v2483, %v2492
        %v2498 = vadd.f32 %v2484, %v2494
        %s2499 = sld [smem:[#allocation7 + $0x9e]]
        %v2500 = vstv %s2499
        %v2501 = vmul.f32 %v2500, %v2207
        %v2502 = vmul.f32 %v2500, %v2208
        %2505 = vrot.lane.b32.xlu0 %v2501, 125
        %v2506 = vpop.permute.xlu0 %2505
        %2507 = vrot.lane.b32.xlu0 %v2502, 125
        %v2508 = vpop.permute.xlu0 %2507
        %v2511 = vadd.f32 %v2497, %v2506
        %v2512 = vadd.f32 %v2498, %v2508
        %s2513 = sld [smem:[#allocation7 + $0x9f]]
        %v2514 = vstv %s2513
        %v2515 = vmul.f32 %v2514, %v2207
        %v2516 = vmul.f32 %v2514, %v2208
        %2519 = vrot.lane.b32.xlu0 %v2515, 124
        %v2520 = vpop.permute.xlu0 %2519
        %2521 = vrot.lane.b32.xlu0 %v2516, 124
        %v2522 = vpop.permute.xlu0 %2521
        %v2525 = vadd.f32 %v2511, %v2520
        %v2526 = vadd.f32 %v2512, %v2522
        %s2527 = sld [smem:[#allocation7 + $0xa0]]
        %v2528 = vstv %s2527
        %v2529 = vmul.f32 %v2528, %v2209
        %v2530 = vmul.f32 %v2528, %v2210
        %v2531 = vadd.f32 %v2525, %v2529
        %v2532 = vadd.f32 %v2526, %v2530
        %s2533 = sld [smem:[#allocation7 + $0xa1]]
        %v2534 = vstv %s2533
        %v2535 = vmul.f32 %v2534, %v2209
        %v2536 = vmul.f32 %v2534, %v2210
        %2539 = vrot.lane.b32.xlu0 %v2535, 127
        %v2540 = vpop.permute.xlu0 %2539
        %2541 = vrot.lane.b32.xlu0 %v2536, 127
        %v2542 = vpop.permute.xlu0 %2541
        %v2545 = vadd.f32 %v2531, %v2540
        %v2546 = vadd.f32 %v2532, %v2542
        %s2547 = sld [smem:[#allocation7 + $0xa2]]
        %v2548 = vstv %s2547
        %v2549 = vmul.f32 %v2548, %v2209
        %v2550 = vmul.f32 %v2548, %v2210
        %2553 = vrot.lane.b32.xlu0 %v2549, 126
        %v2554 = vpop.permute.xlu0 %2553
        %2555 = vrot.lane.b32.xlu0 %v2550, 126
        %v2556 = vpop.permute.xlu0 %2555
        %v2559 = vadd.f32 %v2545, %v2554
        %v2560 = vadd.f32 %v2546, %v2556
        %s2561 = sld [smem:[#allocation7 + $0xa3]]
        %v2562 = vstv %s2561
        %v2563 = vmul.f32 %v2562, %v2209
        %v2564 = vmul.f32 %v2562, %v2210
        %2567 = vrot.lane.b32.xlu0 %v2563, 125
        %v2568 = vpop.permute.xlu0 %2567
        %2569 = vrot.lane.b32.xlu0 %v2564, 125
        %v2570 = vpop.permute.xlu0 %2569
        %v2573 = vadd.f32 %v2559, %v2568
        %v2574 = vadd.f32 %v2560, %v2570
        %s2575 = sld [smem:[#allocation7 + $0xa4]]
        %v2576 = vstv %s2575
        %v2577 = vmul.f32 %v2576, %v2209
        %v2578 = vmul.f32 %v2576, %v2210
        %2581 = vrot.lane.b32.xlu0 %v2577, 124
        %v2582 = vpop.permute.xlu0 %2581
        %2583 = vrot.lane.b32.xlu0 %v2578, 124
        %v2584 = vpop.permute.xlu0 %2583
        %v2587 = vadd.f32 %v2573, %v2582
        %v2588 = vadd.f32 %v2574, %v2584
        %s2589 = sld [smem:[#allocation7 + $0xb6]]
        %v2590 = vstv %s2589
        %v2591 = vadd.f32 %v2590, 0.0
        %s2592 = sld [smem:[#allocation7 + $0xa5]]
        %v2593 = vstv %s2592
        %v2594 = vmul.f32 %v2593, %v2205
        %v2595 = vmul.f32 %v2593, %v2206
        %v2596 = vadd.f32 %v2591, %v2594
        %v2597 = vadd.f32 %v2591, %v2595
        %s2598 = sld [smem:[#allocation7 + $0xa6]]
        %v2599 = vstv %s2598
        %v2600 = vmul.f32 %v2599, %v2205
        %v2601 = vmul.f32 %v2599, %v2206
        %2604 = vrot.lane.b32.xlu0 %v2600, 127
        %v2605 = vpop.permute.xlu0 %2604
        %2606 = vrot.lane.b32.xlu0 %v2601, 127
        %v2607 = vpop.permute.xlu0 %2606
        %v2610 = vadd.f32 %v2596, %v2605
        %v2611 = vadd.f32 %v2597, %v2607
        %s2612 = sld [smem:[#allocation7 + $0xa7]]
        %v2613 = vstv %s2612
        %v2614 = vmul.f32 %v2613, %v2205
        %v2615 = vmul.f32 %v2613, %v2206
        %2618 = vrot.lane.b32.xlu0 %v2614, 126
        %v2619 = vpop.permute.xlu0 %2618
        %2620 = vrot.lane.b32.xlu0 %v2615, 126
        %v2621 = vpop.permute.xlu0 %2620
        %v2624 = vadd.f32 %v2610, %v2619
        %v2625 = vadd.f32 %v2611, %v2621
        %s2626 = sld [smem:[#allocation7 + $0xa8]]
        %v2627 = vstv %s2626
        %v2628 = vmul.f32 %v2627, %v2205
        %v2629 = vmul.f32 %v2627, %v2206
        %2632 = vrot.lane.b32.xlu0 %v2628, 125
        %v2633 = vpop.permute.xlu0 %2632
        %2634 = vrot.lane.b32.xlu0 %v2629, 125
        %v2635 = vpop.permute.xlu0 %2634
        %v2638 = vadd.f32 %v2624, %v2633
        %v2639 = vadd.f32 %v2625, %v2635
        %s2640 = sld [smem:[#allocation7 + $0xa9]]
        %v2641 = vstv %s2640
        %v2642 = vmul.f32 %v2641, %v2205
        %v2643 = vmul.f32 %v2641, %v2206
        %2646 = vrot.lane.b32.xlu0 %v2642, 124
        %v2647 = vpop.permute.xlu0 %2646
        %2648 = vrot.lane.b32.xlu0 %v2643, 124
        %v2649 = vpop.permute.xlu0 %2648
        %v2652 = vadd.f32 %v2638, %v2647
        %v2653 = vadd.f32 %v2639, %v2649
        %s2654 = sld [smem:[#allocation7 + $0xaa]]
        %v2655 = vstv %s2654
        %v2656 = vmul.f32 %v2655, %v2207
        %v2657 = vmul.f32 %v2655, %v2208
        %v2658 = vadd.f32 %v2652, %v2656
        %v2659 = vadd.f32 %v2653, %v2657
        %s2660 = sld [smem:[#allocation7 + $0xab]]
        %v2661 = vstv %s2660
        %v2662 = vmul.f32 %v2661, %v2207
        %v2663 = vmul.f32 %v2661, %v2208
        %2666 = vrot.lane.b32.xlu0 %v2662, 127
        %v2667 = vpop.permute.xlu0 %2666
        %2668 = vrot.lane.b32.xlu0 %v2663, 127
        %v2669 = vpop.permute.xlu0 %2668
        %v2672 = vadd.f32 %v2658, %v2667
        %v2673 = vadd.f32 %v2659, %v2669
        %s2674 = sld [smem:[#allocation7 + $0xac]]
        %v2675 = vstv %s2674
        %v2676 = vmul.f32 %v2675, %v2207
        %v2677 = vmul.f32 %v2675, %v2208
        %2680 = vrot.lane.b32.xlu0 %v2676, 126
        %v2681 = vpop.permute.xlu0 %2680
        %2682 = vrot.lane.b32.xlu0 %v2677, 126
        %v2683 = vpop.permute.xlu0 %2682
        %v2686 = vadd.f32 %v2672, %v2681
        %v2687 = vadd.f32 %v2673, %v2683
        %s2688 = sld [smem:[#allocation7 + $0xad]]
        %v2689 = vstv %s2688
        %v2690 = vmul.f32 %v2689, %v2207
        %v2691 = vmul.f32 %v2689, %v2208
        %2694 = vrot.lane.b32.xlu0 %v2690, 125
        %v2695 = vpop.permute.xlu0 %2694
        %2696 = vrot.lane.b32.xlu0 %v2691, 125
        %v2697 = vpop.permute.xlu0 %2696
        %v2700 = vadd.f32 %v2686, %v2695
        %v2701 = vadd.f32 %v2687, %v2697
        %s2702 = sld [smem:[#allocation7 + $0xae]]
        %v2703 = vstv %s2702
        %v2704 = vmul.f32 %v2703, %v2207
        %v2705 = vmul.f32 %v2703, %v2208
        %2708 = vrot.lane.b32.xlu0 %v2704, 124
        %v2709 = vpop.permute.xlu0 %2708
        %2710 = vrot.lane.b32.xlu0 %v2705, 124
        %v2711 = vpop.permute.xlu0 %2710
        %v2714 = vadd.f32 %v2700, %v2709
        %v2715 = vadd.f32 %v2701, %v2711
        %s2716 = sld [smem:[#allocation7 + $0xaf]]
        %v2717 = vstv %s2716
        %v2718 = vmul.f32 %v2717, %v2209
        %v2719 = vmul.f32 %v2717, %v2210
        %v2720 = vadd.f32 %v2714, %v2718
        %v2721 = vadd.f32 %v2715, %v2719
        %s2722 = sld [smem:[#allocation7 + $0xb0]]
        %v2723 = vstv %s2722
        %v2724 = vmul.f32 %v2723, %v2209
        %v2725 = vmul.f32 %v2723, %v2210
        %2728 = vrot.lane.b32.xlu0 %v2724, 127
        %v2729 = vpop.permute.xlu0 %2728
        %2730 = vrot.lane.b32.xlu0 %v2725, 127
        %v2731 = vpop.permute.xlu0 %2730
        %v2734 = vadd.f32 %v2720, %v2729
        %v2735 = vadd.f32 %v2721, %v2731
        %s2736 = sld [smem:[#allocation7 + $0xb1]]
        %v2737 = vstv %s2736
        %v2738 = vmul.f32 %v2737, %v2209
        %v2739 = vmul.f32 %v2737, %v2210
        %2742 = vrot.lane.b32.xlu0 %v2738, 126
        %v2743 = vpop.permute.xlu0 %2742
        %2744 = vrot.lane.b32.xlu0 %v2739, 126
        %v2745 = vpop.permute.xlu0 %2744
        %v2748 = vadd.f32 %v2734, %v2743
        %v2749 = vadd.f32 %v2735, %v2745
        %s2750 = sld [smem:[#allocation7 + $0xb2]]
        %v2751 = vstv %s2750
        %v2752 = vmul.f32 %v2751, %v2209
        %v2753 = vmul.f32 %v2751, %v2210
        %2756 = vrot.lane.b32.xlu0 %v2752, 125
        %v2757 = vpop.permute.xlu0 %2756
        %2758 = vrot.lane.b32.xlu0 %v2753, 125
        %v2759 = vpop.permute.xlu0 %2758
        %v2762 = vadd.f32 %v2748, %v2757
        %v2763 = vadd.f32 %v2749, %v2759
        %s2764 = sld [smem:[#allocation7 + $0xb3]]
        %v2765 = vstv %s2764
        %v2766 = vmul.f32 %v2765, %v2209
        %v2767 = vmul.f32 %v2765, %v2210
        %2770 = vrot.lane.b32.xlu0 %v2766, 124
        %v2771 = vpop.permute.xlu0 %2770
        %2772 = vrot.lane.b32.xlu0 %v2767, 124
        %v2773 = vpop.permute.xlu0 %2772
        %v2776 = vadd.f32 %v2762, %v2771
        %v2777 = vadd.f32 %v2763, %v2773
        %s2778 = sld [smem:[#allocation7 + $0xba]]
        %v2779 = vstv %s2778
        %v2780 = vadd.f32 %v2779, 0.0
        %s2781 = sld [smem:[#allocation7 + $0xb7]]
        %v2782 = vstv %s2781
        %v2783 = vmul.f32 %v2782, %v2398
        %v2784 = vmul.f32 %v2782, %v2399
        %v2785 = vadd.f32 %v2780, %v2783
        %v2786 = vadd.f32 %v2780, %v2784
        %s2787 = sld [smem:[#allocation7 + $0xb8]]
        %v2788 = vstv %s2787
        %v2789 = vmul.f32 %v2788, %v2587
        %v2790 = vmul.f32 %v2788, %v2588
        %v2791 = vadd.f32 %v2785, %v2789
        %v2792 = vadd.f32 %v2786, %v2790
        %s2793 = sld [smem:[#allocation7 + $0xb9]]
        %v2794 = vstv %s2793
        %v2795 = vmul.f32 %v2794, %v2776
        %v2796 = vmul.f32 %v2794, %v2777
        %v2797 = vadd.f32 %v2791, %v2795
        %v2798 = vadd.f32 %v2792, %v2796
        %s2799 = scalar_lea.vmem %s177, 128
        %2800 = vst.msk [vmem:[%s2799] sm:$0xff] %vm216, %v2797
        %2801 = vst.msk [vmem:[%s2799 + $0x8] sm:$0xff] %vm216, %v2798
        %2804 = vrot.lane.b32.xlu0 %v2797, 1
        %v2805 = vpop.permute.xlu0 %2804
        %2806 = vrot.lane.b32.xlu0 %v2798, 1
        %v2807 = vpop.permute.xlu0 %2806
        %2810 = vst.msk [vmem:[%s916 + $0x1] sm:$0xff] %vm449, %v2805
        %2811 = vst.msk [vmem:[%s916 + $0x9] sm:$0xff] %vm449, %v2807
        %v2812 = vld [vmem:[#allocation2] sm:$0xff]
        %v2813 = vld [vmem:[#allocation2 + $0x8] sm:$0x3f]
        %v2814 = vld [vmem:[#allocation2 + $0x1] sm:$0xff]
        %v2815 = vld [vmem:[#allocation2 + $0x9] sm:$0x3f]
        %v2816 = vld [vmem:[#allocation2 + $0x2] sm:$0xff]
        %v2817 = vld [vmem:[#allocation2 + $0xa] sm:$0x3f]
        %v2818 = vld [vmem:[#allocation2 + $0x3] sm:$0xff]
        %v2819 = vld [vmem:[#allocation2 + $0xb] sm:$0x3f]
        %v2820 = vld [vmem:[#allocation2 + $0x4] sm:$0xff]
        %v2821 = vld [vmem:[#allocation2 + $0xc] sm:$0x3f]
        %v2822 = vld [vmem:[%s460] sm:$0xff]
        %v2823 = vld [vmem:[%s460 + $0x8] sm:$0x3f]
        %v2824 = vld [vmem:[%s460 + $0x1] sm:$0xff]
        %v2825 = vld [vmem:[%s460 + $0x9] sm:$0x3f]
        %v2826 = vld [vmem:[%s460 + $0x2] sm:$0xff]
        %v2827 = vld [vmem:[%s460 + $0xa] sm:$0x3f]
        %v2828 = vld [vmem:[%s460 + $0x3] sm:$0xff]
        %v2829 = vld [vmem:[%s460 + $0xb] sm:$0x3f]
        %v2830 = vld [vmem:[%s460 + $0x4] sm:$0xff]
        %v2831 = vld [vmem:[%s460 + $0xc] sm:$0x3f]
        %v2832 = vld [vmem:[%s916] sm:$0xff]
        %v2833 = vld [vmem:[%s916 + $0x8] sm:$0x3f]
        %v2834 = vld [vmem:[%s916 + $0x1] sm:$0xff]
        %v2835 = vld [vmem:[%s916 + $0x9] sm:$0x3f]
        %v2836 = vld [vmem:[%s916 + $0x2] sm:$0xff]
        %v2837 = vld [vmem:[%s916 + $0xa] sm:$0x3f]
        %v2838 = vld [vmem:[%s916 + $0x3] sm:$0xff]
        %v2839 = vld [vmem:[%s916 + $0xb] sm:$0x3f]
        %v2840 = vld [vmem:[%s916 + $0x4] sm:$0xff]
        %v2841 = vld [vmem:[%s916 + $0xc] sm:$0x3f]
        %s2842 = sld [smem:[#allocation7 + $0x84]]
        %v2843 = vstv %s2842
        %v2844 = vadd.f32 %v2843, 0.0
        %s2845 = sld [smem:[#allocation7 + $0x57]]
        %v2846 = vstv %s2845
        %v2847 = vmul.f32 %v2846, %v2812
        %v2848 = vmul.f32 %v2846, %v2813
        %v2849 = vadd.f32 %v2844, %v2847
        %v2850 = vadd.f32 %v2844, %v2848
        %s2851 = sld [smem:[#allocation7 + $0x58]]
        %v2852 = vstv %s2851
        %v2853 = vmul.f32 %v2852, %v2814
        %v2854 = vmul.f32 %v2852, %v2815
        %v2855 = vadd.f32 %v2849, %v2853
        %v2856 = vadd.f32 %v2850, %v2854
        %s2857 = sld [smem:[#allocation7 + $0x59]]
        %v2858 = vstv %s2857
        %v2859 = vmul.f32 %v2858, %v2816
        %v2860 = vmul.f32 %v2858, %v2817
        %v2861 = vadd.f32 %v2855, %v2859
        %v2862 = vadd.f32 %v2856, %v2860
        %s2863 = sld [smem:[#allocation7 + $0x5a]]
        %v2864 = vstv %s2863
        %v2865 = vmul.f32 %v2864, %v2818
        %v2866 = vmul.f32 %v2864, %v2819
        %v2867 = vadd.f32 %v2861, %v2865
        %v2868 = vadd.f32 %v2862, %v2866
        %s2869 = sld [smem:[#allocation7 + $0x5b]]
        %v2870 = vstv %s2869
        %v2871 = vmul.f32 %v2870, %v2820
        %v2872 = vmul.f32 %v2870, %v2821
        %v2873 = vadd.f32 %v2867, %v2871
        %v2874 = vadd.f32 %v2868, %v2872
        %s2875 = sld [smem:[#allocation7 + $0x5c]]
        %v2876 = vstv %s2875
        %v2877 = vmul.f32 %v2876, %v2822
        %v2878 = vmul.f32 %v2876, %v2823
        %v2879 = vadd.f32 %v2873, %v2877
        %v2880 = vadd.f32 %v2874, %v2878
        %s2881 = sld [smem:[#allocation7 + $0x5d]]
        %v2882 = vstv %s2881
        %v2883 = vmul.f32 %v2882, %v2824
        %v2884 = vmul.f32 %v2882, %v2825
        %v2885 = vadd.f32 %v2879, %v2883
        %v2886 = vadd.f32 %v2880, %v2884
        %s2887 = sld [smem:[#allocation7 + $0x5e]]
        %v2888 = vstv %s2887
        %v2889 = vmul.f32 %v2888, %v2826
        %v2890 = vmul.f32 %v2888, %v2827
        %v2891 = vadd.f32 %v2885, %v2889
        %v2892 = vadd.f32 %v2886, %v2890
        %s2893 = sld [smem:[#allocation7 + $0x5f]]
        %v2894 = vstv %s2893
        %v2895 = vmul.f32 %v2894, %v2828
        %v2896 = vmul.f32 %v2894, %v2829
        %v2897 = vadd.f32 %v2891, %v2895
        %v2898 = vadd.f32 %v2892, %v2896
        %s2899 = sld [smem:[#allocation7 + $0x60]]
        %v2900 = vstv %s2899
        %v2901 = vmul.f32 %v2900, %v2830
        %v2902 = vmul.f32 %v2900, %v2831
        %v2903 = vadd.f32 %v2897, %v2901
        %v2904 = vadd.f32 %v2898, %v2902
        %s2905 = sld [smem:[#allocation7 + $0x61]]
        %v2906 = vstv %s2905
        %v2907 = vmul.f32 %v2906, %v2832
        %v2908 = vmul.f32 %v2906, %v2833
        %v2909 = vadd.f32 %v2903, %v2907
        %v2910 = vadd.f32 %v2904, %v2908
        %s2911 = sld [smem:[#allocation7 + $0x62]]
        %v2912 = vstv %s2911
        %v2913 = vmul.f32 %v2912, %v2834
        %v2914 = vmul.f32 %v2912, %v2835
        %v2915 = vadd.f32 %v2909, %v2913
        %v2916 = vadd.f32 %v2910, %v2914
        %s2917 = sld [smem:[#allocation7 + $0x63]]
        %v2918 = vstv %s2917
        %v2919 = vmul.f32 %v2918, %v2836
        %v2920 = vmul.f32 %v2918, %v2837
        %v2921 = vadd.f32 %v2915, %v2919
        %v2922 = vadd.f32 %v2916, %v2920
        %s2923 = sld [smem:[#allocation7 + $0x64]]
        %v2924 = vstv %s2923
        %v2925 = vmul.f32 %v2924, %v2838
        %v2926 = vmul.f32 %v2924, %v2839
        %v2927 = vadd.f32 %v2921, %v2925
        %v2928 = vadd.f32 %v2922, %v2926
        %s2929 = sld [smem:[#allocation7 + $0x65]]
        %v2930 = vstv %s2929
        %v2931 = vmul.f32 %v2930, %v2840
        %v2932 = vmul.f32 %v2930, %v2841
        %v2933 = vadd.f32 %v2927, %v2931
        %v2934 = vadd.f32 %v2928, %v2932
        %2937 = vrot.lane.b32.xlu0 %v2933, 1
        %v2938 = vpop.permute.xlu0 %2937
        %2939 = vrot.lane.b32.xlu0 %v2934, 1
        %v2940 = vpop.permute.xlu0 %2939
        %2943 = vst.msk [vmem:[#allocation3 + $0x1] sm:$0xff] %vm554, %v2938
        %2944 = vst.msk [vmem:[#allocation3 + $0x9] sm:$0x3f] %vm556, %v2940
        %s2945 = sld [smem:[#allocation7 + $0x85]]
        %v2946 = vstv %s2945
        %v2947 = vadd.f32 %v2946, 0.0
        %s2948 = sld [smem:[#allocation7 + $0x66]]
        %v2949 = vstv %s2948
        %v2950 = vmul.f32 %v2949, %v2812
        %v2951 = vmul.f32 %v2949, %v2813
        %v2952 = vadd.f32 %v2947, %v2950
        %v2953 = vadd.f32 %v2947, %v2951
        %s2954 = sld [smem:[#allocation7 + $0x67]]
        %v2955 = vstv %s2954
        %v2956 = vmul.f32 %v2955, %v2814
        %v2957 = vmul.f32 %v2955, %v2815
        %v2958 = vadd.f32 %v2952, %v2956
        %v2959 = vadd.f32 %v2953, %v2957
        %s2960 = sld [smem:[#allocation7 + $0x68]]
        %v2961 = vstv %s2960
        %v2962 = vmul.f32 %v2961, %v2816
        %v2963 = vmul.f32 %v2961, %v2817
        %v2964 = vadd.f32 %v2958, %v2962
        %v2965 = vadd.f32 %v2959, %v2963
        %s2966 = sld [smem:[#allocation7 + $0x69]]
        %v2967 = vstv %s2966
        %v2968 = vmul.f32 %v2967, %v2818
        %v2969 = vmul.f32 %v2967, %v2819
        %v2970 = vadd.f32 %v2964, %v2968
        %v2971 = vadd.f32 %v2965, %v2969
        %s2972 = sld [smem:[#allocation7 + $0x6a]]
        %v2973 = vstv %s2972
        %v2974 = vmul.f32 %v2973, %v2820
        %v2975 = vmul.f32 %v2973, %v2821
        %v2976 = vadd.f32 %v2970, %v2974
        %v2977 = vadd.f32 %v2971, %v2975
        %s2978 = sld [smem:[#allocation7 + $0x6b]]
        %v2979 = vstv %s2978
        %v2980 = vmul.f32 %v2979, %v2822
        %v2981 = vmul.f32 %v2979, %v2823
        %v2982 = vadd.f32 %v2976, %v2980
        %v2983 = vadd.f32 %v2977, %v2981
        %s2984 = sld [smem:[#allocation7 + $0x6c]]
        %v2985 = vstv %s2984
        %v2986 = vmul.f32 %v2985, %v2824
        %v2987 = vmul.f32 %v2985, %v2825
        %v2988 = vadd.f32 %v2982, %v2986
        %v2989 = vadd.f32 %v2983, %v2987
        %s2990 = sld [smem:[#allocation7 + $0x6d]]
        %v2991 = vstv %s2990
        %v2992 = vmul.f32 %v2991, %v2826
        %v2993 = vmul.f32 %v2991, %v2827
        %v2994 = vadd.f32 %v2988, %v2992
        %v2995 = vadd.f32 %v2989, %v2993
        %s2996 = sld [smem:[#allocation7 + $0x6e]]
        %v2997 = vstv %s2996
        %v2998 = vmul.f32 %v2997, %v2828
        %v2999 = vmul.f32 %v2997, %v2829
        %v3000 = vadd.f32 %v2994, %v2998
        %v3001 = vadd.f32 %v2995, %v2999
        %s3002 = sld [smem:[#allocation7 + $0x6f]]
        %v3003 = vstv %s3002
        %v3004 = vmul.f32 %v3003, %v2830
        %v3005 = vmul.f32 %v3003, %v2831
        %v3006 = vadd.f32 %v3000, %v3004
        %v3007 = vadd.f32 %v3001, %v3005
        %s3008 = sld [smem:[#allocation7 + $0x70]]
        %v3009 = vstv %s3008
        %v3010 = vmul.f32 %v3009, %v2832
        %v3011 = vmul.f32 %v3009, %v2833
        %v3012 = vadd.f32 %v3006, %v3010
        %v3013 = vadd.f32 %v3007, %v3011
        %s3014 = sld [smem:[#allocation7 + $0x71]]
        %v3015 = vstv %s3014
        %v3016 = vmul.f32 %v3015, %v2834
        %v3017 = vmul.f32 %v3015, %v2835
        %v3018 = vadd.f32 %v3012, %v3016
        %v3019 = vadd.f32 %v3013, %v3017
        %s3020 = sld [smem:[#allocation7 + $0x72]]
        %v3021 = vstv %s3020
        %v3022 = vmul.f32 %v3021, %v2836
        %v3023 = vmul.f32 %v3021, %v2837
        %v3024 = vadd.f32 %v3018, %v3022
        %v3025 = vadd.f32 %v3019, %v3023
        %s3026 = sld [smem:[#allocation7 + $0x73]]
        %v3027 = vstv %s3026
        %v3028 = vmul.f32 %v3027, %v2838
        %v3029 = vmul.f32 %v3027, %v2839
        %v3030 = vadd.f32 %v3024, %v3028
        %v3031 = vadd.f32 %v3025, %v3029
        %s3032 = sld [smem:[#allocation7 + $0x74]]
        %v3033 = vstv %s3032
        %v3034 = vmul.f32 %v3033, %v2840
        %v3035 = vmul.f32 %v3033, %v2841
        %v3036 = vadd.f32 %v3030, %v3034
        %v3037 = vadd.f32 %v3031, %v3035
        %3040 = vrot.lane.b32.xlu0 %v3036, 1
        %v3041 = vpop.permute.xlu0 %3040
        %3042 = vrot.lane.b32.xlu0 %v3037, 1
        %v3043 = vpop.permute.xlu0 %3042
        %3046 = vst.msk [vmem:[%s629 + $0x1] sm:$0xff] %vm554, %v3041
        %3047 = vst.msk [vmem:[%s629 + $0x9] sm:$0x3f] %vm556, %v3043
        %s3048 = sld [smem:[#allocation7 + $0x86]]
        %v3049 = vstv %s3048
        %v3050 = vadd.f32 %v3049, 0.0
        %s3051 = sld [smem:[#allocation7 + $0x75]]
        %v3052 = vstv %s3051
        %v3053 = vmul.f32 %v3052, %v2812
        %v3054 = vmul.f32 %v3052, %v2813
        %v3055 = vadd.f32 %v3050, %v3053
        %v3056 = vadd.f32 %v3050, %v3054
        %s3057 = sld [smem:[#allocation7 + $0x76]]
        %v3058 = vstv %s3057
        %v3059 = vmul.f32 %v3058, %v2814
        %v3060 = vmul.f32 %v3058, %v2815
        %v3061 = vadd.f32 %v3055, %v3059
        %v3062 = vadd.f32 %v3056, %v3060
        %s3063 = sld [smem:[#allocation7 + $0x77]]
        %v3064 = vstv %s3063
        %v3065 = vmul.f32 %v3064, %v2816
        %v3066 = vmul.f32 %v3064, %v2817
        %v3067 = vadd.f32 %v3061, %v3065
        %v3068 = vadd.f32 %v3062, %v3066
        %s3069 = sld [smem:[#allocation7 + $0x78]]
        %v3070 = vstv %s3069
        %v3071 = vmul.f32 %v3070, %v2818
        %v3072 = vmul.f32 %v3070, %v2819
        %v3073 = vadd.f32 %v3067, %v3071
        %v3074 = vadd.f32 %v3068, %v3072
        %s3075 = sld [smem:[#allocation7 + $0x79]]
        %v3076 = vstv %s3075
        %v3077 = vmul.f32 %v3076, %v2820
        %v3078 = vmul.f32 %v3076, %v2821
        %v3079 = vadd.f32 %v3073, %v3077
        %v3080 = vadd.f32 %v3074, %v3078
        %s3081 = sld [smem:[#allocation7 + $0x7a]]
        %v3082 = vstv %s3081
        %v3083 = vmul.f32 %v3082, %v2822
        %v3084 = vmul.f32 %v3082, %v2823
        %v3085 = vadd.f32 %v3079, %v3083
        %v3086 = vadd.f32 %v3080, %v3084
        %s3087 = sld [smem:[#allocation7 + $0x7b]]
        %v3088 = vstv %s3087
        %v3089 = vmul.f32 %v3088, %v2824
        %v3090 = vmul.f32 %v3088, %v2825
        %v3091 = vadd.f32 %v3085, %v3089
        %v3092 = vadd.f32 %v3086, %v3090
        %s3093 = sld [smem:[#allocation7 + $0x7c]]
        %v3094 = vstv %s3093
        %v3095 = vmul.f32 %v3094, %v2826
        %v3096 = vmul.f32 %v3094, %v2827
        %v3097 = vadd.f32 %v3091, %v3095
        %v3098 = vadd.f32 %v3092, %v3096
        %s3099 = sld [smem:[#allocation7 + $0x7d]]
        %v3100 = vstv %s3099
        %v3101 = vmul.f32 %v3100, %v2828
        %v3102 = vmul.f32 %v3100, %v2829
        %v3103 = vadd.f32 %v3097, %v3101
        %v3104 = vadd.f32 %v3098, %v3102
        %s3105 = sld [smem:[#allocation7 + $0x7e]]
        %v3106 = vstv %s3105
        %v3107 = vmul.f32 %v3106, %v2830
        %v3108 = vmul.f32 %v3106, %v2831
        %v3109 = vadd.f32 %v3103, %v3107
        %v3110 = vadd.f32 %v3104, %v3108
        %s3111 = sld [smem:[#allocation7 + $0x7f]]
        %v3112 = vstv %s3111
        %v3113 = vmul.f32 %v3112, %v2832
        %v3114 = vmul.f32 %v3112, %v2833
        %v3115 = vadd.f32 %v3109, %v3113
        %v3116 = vadd.f32 %v3110, %v3114
        %s3117 = sld [smem:[#allocation7 + $0x80]]
        %v3118 = vstv %s3117
        %v3119 = vmul.f32 %v3118, %v2834
        %v3120 = vmul.f32 %v3118, %v2835
        %v3121 = vadd.f32 %v3115, %v3119
        %v3122 = vadd.f32 %v3116, %v3120
        %s3123 = sld [smem:[#allocation7 + $0x81]]
        %v3124 = vstv %s3123
        %v3125 = vmul.f32 %v3124, %v2836
        %v3126 = vmul.f32 %v3124, %v2837
        %v3127 = vadd.f32 %v3121, %v3125
        %v3128 = vadd.f32 %v3122, %v3126
        %s3129 = sld [smem:[#allocation7 + $0x82]]
        %v3130 = vstv %s3129
        %v3131 = vmul.f32 %v3130, %v2838
        %v3132 = vmul.f32 %v3130, %v2839
        %v3133 = vadd.f32 %v3127, %v3131
        %v3134 = vadd.f32 %v3128, %v3132
        %s3135 = sld [smem:[#allocation7 + $0x83]]
        %v3136 = vstv %s3135
        %v3137 = vmul.f32 %v3136, %v2840
        %v3138 = vmul.f32 %v3136, %v2841
        %v3139 = vadd.f32 %v3133, %v3137
        %v3140 = vadd.f32 %v3134, %v3138
        %3143 = vrot.lane.b32.xlu0 %v3139, 1
        %v3144 = vpop.permute.xlu0 %3143
        %3145 = vrot.lane.b32.xlu0 %v3140, 1
        %v3146 = vpop.permute.xlu0 %3145
        %3149 = vst.msk [vmem:[%s1256 + $0x1] sm:$0xff] %vm554, %v3144
        %3150 = vst.msk [vmem:[%s1256 + $0x9] sm:$0x3f] %vm556, %v3146
        %v3151 = vld [vmem:[#allocation3] sm:$0xff]
        %v3152 = vld [vmem:[#allocation3 + $0x8] sm:$0xff]
        %v3153 = vld [vmem:[%s629] sm:$0xff]
        %v3154 = vld [vmem:[%s629 + $0x8] sm:$0xff]
        %v3155 = vld [vmem:[%s1256] sm:$0xff]
        %v3156 = vld [vmem:[%s1256 + $0x8] sm:$0xff]
        %s3157 = sld [smem:[#allocation7 + $0xb4]]
        %v3158 = vstv %s3157
        %v3159 = vadd.f32 %v3158, 0.0
        %s3160 = sld [smem:[#allocation7 + $0x87]]
        %v3161 = vstv %s3160
        %v3162 = vmul.f32 %v3161, %v3151
        %v3163 = vmul.f32 %v3161, %v3152
        %v3164 = vadd.f32 %v3159, %v3162
        %v3165 = vadd.f32 %v3159, %v3163
        %s3166 = sld [smem:[#allocation7 + $0x88]]
        %v3167 = vstv %s3166
        %v3168 = vmul.f32 %v3167, %v3151
        %v3169 = vmul.f32 %v3167, %v3152
        %3172 = vrot.lane.b32.xlu0 %v3168, 127
        %v3173 = vpop.permute.xlu0 %3172
        %3174 = vrot.lane.b32.xlu0 %v3169, 127
        %v3175 = vpop.permute.xlu0 %3174
        %v3178 = vadd.f32 %v3164, %v3173
        %v3179 = vadd.f32 %v3165, %v3175
        %s3180 = sld [smem:[#allocation7 + $0x89]]
        %v3181 = vstv %s3180
        %v3182 = vmul.f32 %v3181, %v3151
        %v3183 = vmul.f32 %v3181, %v3152
        %3186 = vrot.lane.b32.xlu0 %v3182, 126
        %v3187 = vpop.permute.xlu0 %3186
        %3188 = vrot.lane.b32.xlu0 %v3183, 126
        %v3189 = vpop.permute.xlu0 %3188
        %v3192 = vadd.f32 %v3178, %v3187
        %v3193 = vadd.f32 %v3179, %v3189
        %s3194 = sld [smem:[#allocation7 + $0x8a]]
        %v3195 = vstv %s3194
        %v3196 = vmul.f32 %v3195, %v3151
        %v3197 = vmul.f32 %v3195, %v3152
        %3200 = vrot.lane.b32.xlu0 %v3196, 125
        %v3201 = vpop.permute.xlu0 %3200
        %3202 = vrot.lane.b32.xlu0 %v3197, 125
        %v3203 = vpop.permute.xlu0 %3202
        %v3206 = vadd.f32 %v3192, %v3201
        %v3207 = vadd.f32 %v3193, %v3203
        %s3208 = sld [smem:[#allocation7 + $0x8b]]
        %v3209 = vstv %s3208
        %v3210 = vmul.f32 %v3209, %v3151
        %v3211 = vmul.f32 %v3209, %v3152
        %3214 = vrot.lane.b32.xlu0 %v3210, 124
        %v3215 = vpop.permute.xlu0 %3214
        %3216 = vrot.lane.b32.xlu0 %v3211, 124
        %v3217 = vpop.permute.xlu0 %3216
        %v3220 = vadd.f32 %v3206, %v3215
        %v3221 = vadd.f32 %v3207, %v3217
        %s3222 = sld [smem:[#allocation7 + $0x8c]]
        %v3223 = vstv %s3222
        %v3224 = vmul.f32 %v3223, %v3153
        %v3225 = vmul.f32 %v3223, %v3154
        %v3226 = vadd.f32 %v3220, %v3224
        %v3227 = vadd.f32 %v3221, %v3225
        %s3228 = sld [smem:[#allocation7 + $0x8d]]
        %v3229 = vstv %s3228
        %v3230 = vmul.f32 %v3229, %v3153
        %v3231 = vmul.f32 %v3229, %v3154
        %3234 = vrot.lane.b32.xlu0 %v3230, 127
        %v3235 = vpop.permute.xlu0 %3234
        %3236 = vrot.lane.b32.xlu0 %v3231, 127
        %v3237 = vpop.permute.xlu0 %3236
        %v3240 = vadd.f32 %v3226, %v3235
        %v3241 = vadd.f32 %v3227, %v3237
        %s3242 = sld [smem:[#allocation7 + $0x8e]]
        %v3243 = vstv %s3242
        %v3244 = vmul.f32 %v3243, %v3153
        %v3245 = vmul.f32 %v3243, %v3154
        %3248 = vrot.lane.b32.xlu0 %v3244, 126
        %v3249 = vpop.permute.xlu0 %3248
        %3250 = vrot.lane.b32.xlu0 %v3245, 126
        %v3251 = vpop.permute.xlu0 %3250
        %v3254 = vadd.f32 %v3240, %v3249
        %v3255 = vadd.f32 %v3241, %v3251
        %s3256 = sld [smem:[#allocation7 + $0x8f]]
        %v3257 = vstv %s3256
        %v3258 = vmul.f32 %v3257, %v3153
        %v3259 = vmul.f32 %v3257, %v3154
        %3262 = vrot.lane.b32.xlu0 %v3258, 125
        %v3263 = vpop.permute.xlu0 %3262
        %3264 = vrot.lane.b32.xlu0 %v3259, 125
        %v3265 = vpop.permute.xlu0 %3264
        %v3268 = vadd.f32 %v3254, %v3263
        %v3269 = vadd.f32 %v3255, %v3265
        %s3270 = sld [smem:[#allocation7 + $0x90]]
        %v3271 = vstv %s3270
        %v3272 = vmul.f32 %v3271, %v3153
        %v3273 = vmul.f32 %v3271, %v3154
        %3276 = vrot.lane.b32.xlu0 %v3272, 124
        %v3277 = vpop.permute.xlu0 %3276
        %3278 = vrot.lane.b32.xlu0 %v3273, 124
        %v3279 = vpop.permute.xlu0 %3278
        %v3282 = vadd.f32 %v3268, %v3277
        %v3283 = vadd.f32 %v3269, %v3279
        %s3284 = sld [smem:[#allocation7 + $0x91]]
        %v3285 = vstv %s3284
        %v3286 = vmul.f32 %v3285, %v3155
        %v3287 = vmul.f32 %v3285, %v3156
        %v3288 = vadd.f32 %v3282, %v3286
        %v3289 = vadd.f32 %v3283, %v3287
        %s3290 = sld [smem:[#allocation7 + $0x92]]
        %v3291 = vstv %s3290
        %v3292 = vmul.f32 %v3291, %v3155
        %v3293 = vmul.f32 %v3291, %v3156
        %3296 = vrot.lane.b32.xlu0 %v3292, 127
        %v3297 = vpop.permute.xlu0 %3296
        %3298 = vrot.lane.b32.xlu0 %v3293, 127
        %v3299 = vpop.permute.xlu0 %3298
        %v3302 = vadd.f32 %v3288, %v3297
        %v3303 = vadd.f32 %v3289, %v3299
        %s3304 = sld [smem:[#allocation7 + $0x93]]
        %v3305 = vstv %s3304
        %v3306 = vmul.f32 %v3305, %v3155
        %v3307 = vmul.f32 %v3305, %v3156
        %3310 = vrot.lane.b32.xlu0 %v3306, 126
        %v3311 = vpop.permute.xlu0 %3310
        %3312 = vrot.lane.b32.xlu0 %v3307, 126
        %v3313 = vpop.permute.xlu0 %3312
        %v3316 = vadd.f32 %v3302, %v3311
        %v3317 = vadd.f32 %v3303, %v3313
        %s3318 = sld [smem:[#allocation7 + $0x94]]
        %v3319 = vstv %s3318
        %v3320 = vmul.f32 %v3319, %v3155
        %v3321 = vmul.f32 %v3319, %v3156
        %3324 = vrot.lane.b32.xlu0 %v3320, 125
        %v3325 = vpop.permute.xlu0 %3324
        %3326 = vrot.lane.b32.xlu0 %v3321, 125
        %v3327 = vpop.permute.xlu0 %3326
        %v3330 = vadd.f32 %v3316, %v3325
        %v3331 = vadd.f32 %v3317, %v3327
        %s3332 = sld [smem:[#allocation7 + $0x95]]
        %v3333 = vstv %s3332
        %v3334 = vmul.f32 %v3333, %v3155
        %v3335 = vmul.f32 %v3333, %v3156
        %3338 = vrot.lane.b32.xlu0 %v3334, 124
        %v3339 = vpop.permute.xlu0 %3338
        %3340 = vrot.lane.b32.xlu0 %v3335, 124
        %v3341 = vpop.permute.xlu0 %3340
        %v3344 = vadd.f32 %v3330, %v3339
        %v3345 = vadd.f32 %v3331, %v3341
        %s3346 = sld [smem:[#allocation7 + $0xb5]]
        %v3347 = vstv %s3346
        %v3348 = vadd.f32 %v3347, 0.0
        %s3349 = sld [smem:[#allocation7 + $0x96]]
        %v3350 = vstv %s3349
        %v3351 = vmul.f32 %v3350, %v3151
        %v3352 = vmul.f32 %v3350, %v3152
        %v3353 = vadd.f32 %v3348, %v3351
        %v3354 = vadd.f32 %v3348, %v3352
        %s3355 = sld [smem:[#allocation7 + $0x97]]
        %v3356 = vstv %s3355
        %v3357 = vmul.f32 %v3356, %v3151
        %v3358 = vmul.f32 %v3356, %v3152
        %3361 = vrot.lane.b32.xlu0 %v3357, 127
        %v3362 = vpop.permute.xlu0 %3361
        %3363 = vrot.lane.b32.xlu0 %v3358, 127
        %v3364 = vpop.permute.xlu0 %3363
        %v3367 = vadd.f32 %v3353, %v3362
        %v3368 = vadd.f32 %v3354, %v3364
        %s3369 = sld [smem:[#allocation7 + $0x98]]
        %v3370 = vstv %s3369
        %v3371 = vmul.f32 %v3370, %v3151
        %v3372 = vmul.f32 %v3370, %v3152
        %3375 = vrot.lane.b32.xlu0 %v3371, 126
        %v3376 = vpop.permute.xlu0 %3375
        %3377 = vrot.lane.b32.xlu0 %v3372, 126
        %v3378 = vpop.permute.xlu0 %3377
        %v3381 = vadd.f32 %v3367, %v3376
        %v3382 = vadd.f32 %v3368, %v3378
        %s3383 = sld [smem:[#allocation7 + $0x99]]
        %v3384 = vstv %s3383
        %v3385 = vmul.f32 %v3384, %v3151
        %v3386 = vmul.f32 %v3384, %v3152
        %3389 = vrot.lane.b32.xlu0 %v3385, 125
        %v3390 = vpop.permute.xlu0 %3389
        %3391 = vrot.lane.b32.xlu0 %v3386, 125
        %v3392 = vpop.permute.xlu0 %3391
        %v3395 = vadd.f32 %v3381, %v3390
        %v3396 = vadd.f32 %v3382, %v3392
        %s3397 = sld [smem:[#allocation7 + $0x9a]]
        %v3398 = vstv %s3397
        %v3399 = vmul.f32 %v3398, %v3151
        %v3400 = vmul.f32 %v3398, %v3152
        %3403 = vrot.lane.b32.xlu0 %v3399, 124
        %v3404 = vpop.permute.xlu0 %3403
        %3405 = vrot.lane.b32.xlu0 %v3400, 124
        %v3406 = vpop.permute.xlu0 %3405
        %v3409 = vadd.f32 %v3395, %v3404
        %v3410 = vadd.f32 %v3396, %v3406
        %s3411 = sld [smem:[#allocation7 + $0x9b]]
        %v3412 = vstv %s3411
        %v3413 = vmul.f32 %v3412, %v3153
        %v3414 = vmul.f32 %v3412, %v3154
        %v3415 = vadd.f32 %v3409, %v3413
        %v3416 = vadd.f32 %v3410, %v3414
        %s3417 = sld [smem:[#allocation7 + $0x9c]]
        %v3418 = vstv %s3417
        %v3419 = vmul.f32 %v3418, %v3153
        %v3420 = vmul.f32 %v3418, %v3154
        %3423 = vrot.lane.b32.xlu0 %v3419, 127
        %v3424 = vpop.permute.xlu0 %3423
        %3425 = vrot.lane.b32.xlu0 %v3420, 127
        %v3426 = vpop.permute.xlu0 %3425
        %v3429 = vadd.f32 %v3415, %v3424
        %v3430 = vadd.f32 %v3416, %v3426
        %s3431 = sld [smem:[#allocation7 + $0x9d]]
        %v3432 = vstv %s3431
        %v3433 = vmul.f32 %v3432, %v3153
        %v3434 = vmul.f32 %v3432, %v3154
        %3437 = vrot.lane.b32.xlu0 %v3433, 126
        %v3438 = vpop.permute.xlu0 %3437
        %3439 = vrot.lane.b32.xlu0 %v3434, 126
        %v3440 = vpop.permute.xlu0 %3439
        %v3443 = vadd.f32 %v3429, %v3438
        %v3444 = vadd.f32 %v3430, %v3440
        %s3445 = sld [smem:[#allocation7 + $0x9e]]
        %v3446 = vstv %s3445
        %v3447 = vmul.f32 %v3446, %v3153
        %v3448 = vmul.f32 %v3446, %v3154
        %3451 = vrot.lane.b32.xlu0 %v3447, 125
        %v3452 = vpop.permute.xlu0 %3451
        %3453 = vrot.lane.b32.xlu0 %v3448, 125
        %v3454 = vpop.permute.xlu0 %3453
        %v3457 = vadd.f32 %v3443, %v3452
        %v3458 = vadd.f32 %v3444, %v3454
        %s3459 = sld [smem:[#allocation7 + $0x9f]]
        %v3460 = vstv %s3459
        %v3461 = vmul.f32 %v3460, %v3153
        %v3462 = vmul.f32 %v3460, %v3154
        %3465 = vrot.lane.b32.xlu0 %v3461, 124
        %v3466 = vpop.permute.xlu0 %3465
        %3467 = vrot.lane.b32.xlu0 %v3462, 124
        %v3468 = vpop.permute.xlu0 %3467
        %v3471 = vadd.f32 %v3457, %v3466
        %v3472 = vadd.f32 %v3458, %v3468
        %s3473 = sld [smem:[#allocation7 + $0xa0]]
        %v3474 = vstv %s3473
        %v3475 = vmul.f32 %v3474, %v3155
        %v3476 = vmul.f32 %v3474, %v3156
        %v3477 = vadd.f32 %v3471, %v3475
        %v3478 = vadd.f32 %v3472, %v3476
        %s3479 = sld [smem:[#allocation7 + $0xa1]]
        %v3480 = vstv %s3479
        %v3481 = vmul.f32 %v3480, %v3155
        %v3482 = vmul.f32 %v3480, %v3156
        %3485 = vrot.lane.b32.xlu0 %v3481, 127
        %v3486 = vpop.permute.xlu0 %3485
        %3487 = vrot.lane.b32.xlu0 %v3482, 127
        %v3488 = vpop.permute.xlu0 %3487
        %v3491 = vadd.f32 %v3477, %v3486
        %v3492 = vadd.f32 %v3478, %v3488
        %s3493 = sld [smem:[#allocation7 + $0xa2]]
        %v3494 = vstv %s3493
        %v3495 = vmul.f32 %v3494, %v3155
        %v3496 = vmul.f32 %v3494, %v3156
        %3499 = vrot.lane.b32.xlu0 %v3495, 126
        %v3500 = vpop.permute.xlu0 %3499
        %3501 = vrot.lane.b32.xlu0 %v3496, 126
        %v3502 = vpop.permute.xlu0 %3501
        %v3505 = vadd.f32 %v3491, %v3500
        %v3506 = vadd.f32 %v3492, %v3502
        %s3507 = sld [smem:[#allocation7 + $0xa3]]
        %v3508 = vstv %s3507
        %v3509 = vmul.f32 %v3508, %v3155
        %v3510 = vmul.f32 %v3508, %v3156
        %3513 = vrot.lane.b32.xlu0 %v3509, 125
        %v3514 = vpop.permute.xlu0 %3513
        %3515 = vrot.lane.b32.xlu0 %v3510, 125
        %v3516 = vpop.permute.xlu0 %3515
        %v3519 = vadd.f32 %v3505, %v3514
        %v3520 = vadd.f32 %v3506, %v3516
        %s3521 = sld [smem:[#allocation7 + $0xa4]]
        %v3522 = vstv %s3521
        %v3523 = vmul.f32 %v3522, %v3155
        %v3524 = vmul.f32 %v3522, %v3156
        %3527 = vrot.lane.b32.xlu0 %v3523, 124
        %v3528 = vpop.permute.xlu0 %3527
        %3529 = vrot.lane.b32.xlu0 %v3524, 124
        %v3530 = vpop.permute.xlu0 %3529
        %v3533 = vadd.f32 %v3519, %v3528
        %v3534 = vadd.f32 %v3520, %v3530
        %s3535 = sld [smem:[#allocation7 + $0xb6]]
        %v3536 = vstv %s3535
        %v3537 = vadd.f32 %v3536, 0.0
        %s3538 = sld [smem:[#allocation7 + $0xa5]]
        %v3539 = vstv %s3538
        %v3540 = vmul.f32 %v3539, %v3151
        %v3541 = vmul.f32 %v3539, %v3152
        %v3542 = vadd.f32 %v3537, %v3540
        %v3543 = vadd.f32 %v3537, %v3541
        %s3544 = sld [smem:[#allocation7 + $0xa6]]
        %v3545 = vstv %s3544
        %v3546 = vmul.f32 %v3545, %v3151
        %v3547 = vmul.f32 %v3545, %v3152
        %3550 = vrot.lane.b32.xlu0 %v3546, 127
        %v3551 = vpop.permute.xlu0 %3550
        %3552 = vrot.lane.b32.xlu0 %v3547, 127
        %v3553 = vpop.permute.xlu0 %3552
        %v3556 = vadd.f32 %v3542, %v3551
        %v3557 = vadd.f32 %v3543, %v3553
        %s3558 = sld [smem:[#allocation7 + $0xa7]]
        %v3559 = vstv %s3558
        %v3560 = vmul.f32 %v3559, %v3151
        %v3561 = vmul.f32 %v3559, %v3152
        %3564 = vrot.lane.b32.xlu0 %v3560, 126
        %v3565 = vpop.permute.xlu0 %3564
        %3566 = vrot.lane.b32.xlu0 %v3561, 126
        %v3567 = vpop.permute.xlu0 %3566
        %v3570 = vadd.f32 %v3556, %v3565
        %v3571 = vadd.f32 %v3557, %v3567
        %s3572 = sld [smem:[#allocation7 + $0xa8]]
        %v3573 = vstv %s3572
        %v3574 = vmul.f32 %v3573, %v3151
        %v3575 = vmul.f32 %v3573, %v3152
        %3578 = vrot.lane.b32.xlu0 %v3574, 125
        %v3579 = vpop.permute.xlu0 %3578
        %3580 = vrot.lane.b32.xlu0 %v3575, 125
        %v3581 = vpop.permute.xlu0 %3580
        %v3584 = vadd.f32 %v3570, %v3579
        %v3585 = vadd.f32 %v3571, %v3581
        %s3586 = sld [smem:[#allocation7 + $0xa9]]
        %v3587 = vstv %s3586
        %v3588 = vmul.f32 %v3587, %v3151
        %v3589 = vmul.f32 %v3587, %v3152
        %3592 = vrot.lane.b32.xlu0 %v3588, 124
        %v3593 = vpop.permute.xlu0 %3592
        %3594 = vrot.lane.b32.xlu0 %v3589, 124
        %v3595 = vpop.permute.xlu0 %3594
        %v3598 = vadd.f32 %v3584, %v3593
        %v3599 = vadd.f32 %v3585, %v3595
        %s3600 = sld [smem:[#allocation7 + $0xaa]]
        %v3601 = vstv %s3600
        %v3602 = vmul.f32 %v3601, %v3153
        %v3603 = vmul.f32 %v3601, %v3154
        %v3604 = vadd.f32 %v3598, %v3602
        %v3605 = vadd.f32 %v3599, %v3603
        %s3606 = sld [smem:[#allocation7 + $0xab]]
        %v3607 = vstv %s3606
        %v3608 = vmul.f32 %v3607, %v3153
        %v3609 = vmul.f32 %v3607, %v3154
        %3612 = vrot.lane.b32.xlu0 %v3608, 127
        %v3613 = vpop.permute.xlu0 %3612
        %3614 = vrot.lane.b32.xlu0 %v3609, 127
        %v3615 = vpop.permute.xlu0 %3614
        %v3618 = vadd.f32 %v3604, %v3613
        %v3619 = vadd.f32 %v3605, %v3615
        %s3620 = sld [smem:[#allocation7 + $0xac]]
        %v3621 = vstv %s3620
        %v3622 = vmul.f32 %v3621, %v3153
        %v3623 = vmul.f32 %v3621, %v3154
        %3626 = vrot.lane.b32.xlu0 %v3622, 126
        %v3627 = vpop.permute.xlu0 %3626
        %3628 = vrot.lane.b32.xlu0 %v3623, 126
        %v3629 = vpop.permute.xlu0 %3628
        %v3632 = vadd.f32 %v3618, %v3627
        %v3633 = vadd.f32 %v3619, %v3629
        %s3634 = sld [smem:[#allocation7 + $0xad]]
        %v3635 = vstv %s3634
        %v3636 = vmul.f32 %v3635, %v3153
        %v3637 = vmul.f32 %v3635, %v3154
        %3640 = vrot.lane.b32.xlu0 %v3636, 125
        %v3641 = vpop.permute.xlu0 %3640
        %3642 = vrot.lane.b32.xlu0 %v3637, 125
        %v3643 = vpop.permute.xlu0 %3642
        %v3646 = vadd.f32 %v3632, %v3641
        %v3647 = vadd.f32 %v3633, %v3643
        %s3648 = sld [smem:[#allocation7 + $0xae]]
        %v3649 = vstv %s3648
        %v3650 = vmul.f32 %v3649, %v3153
        %v3651 = vmul.f32 %v3649, %v3154
        %3654 = vrot.lane.b32.xlu0 %v3650, 124
        %v3655 = vpop.permute.xlu0 %3654
        %3656 = vrot.lane.b32.xlu0 %v3651, 124
        %v3657 = vpop.permute.xlu0 %3656
        %v3660 = vadd.f32 %v3646, %v3655
        %v3661 = vadd.f32 %v3647, %v3657
        %s3662 = sld [smem:[#allocation7 + $0xaf]]
        %v3663 = vstv %s3662
        %v3664 = vmul.f32 %v3663, %v3155
        %v3665 = vmul.f32 %v3663, %v3156
        %v3666 = vadd.f32 %v3660, %v3664
        %v3667 = vadd.f32 %v3661, %v3665
        %s3668 = sld [smem:[#allocation7 + $0xb0]]
        %v3669 = vstv %s3668
        %v3670 = vmul.f32 %v3669, %v3155
        %v3671 = vmul.f32 %v3669, %v3156
        %3674 = vrot.lane.b32.xlu0 %v3670, 127
        %v3675 = vpop.permute.xlu0 %3674
        %3676 = vrot.lane.b32.xlu0 %v3671, 127
        %v3677 = vpop.permute.xlu0 %3676
        %v3680 = vadd.f32 %v3666, %v3675
        %v3681 = vadd.f32 %v3667, %v3677
        %s3682 = sld [smem:[#allocation7 + $0xb1]]
        %v3683 = vstv %s3682
        %v3684 = vmul.f32 %v3683, %v3155
        %v3685 = vmul.f32 %v3683, %v3156
        %3688 = vrot.lane.b32.xlu0 %v3684, 126
        %v3689 = vpop.permute.xlu0 %3688
        %3690 = vrot.lane.b32.xlu0 %v3685, 126
        %v3691 = vpop.permute.xlu0 %3690
        %v3694 = vadd.f32 %v3680, %v3689
        %v3695 = vadd.f32 %v3681, %v3691
        %s3696 = sld [smem:[#allocation7 + $0xb2]]
        %v3697 = vstv %s3696
        %v3698 = vmul.f32 %v3697, %v3155
        %v3699 = vmul.f32 %v3697, %v3156
        %3702 = vrot.lane.b32.xlu0 %v3698, 125
        %v3703 = vpop.permute.xlu0 %3702
        %3704 = vrot.lane.b32.xlu0 %v3699, 125
        %v3705 = vpop.permute.xlu0 %3704
        %v3708 = vadd.f32 %v3694, %v3703
        %v3709 = vadd.f32 %v3695, %v3705
        %s3710 = sld [smem:[#allocation7 + $0xb3]]
        %v3711 = vstv %s3710
        %v3712 = vmul.f32 %v3711, %v3155
        %v3713 = vmul.f32 %v3711, %v3156
        %3716 = vrot.lane.b32.xlu0 %v3712, 124
        %v3717 = vpop.permute.xlu0 %3716
        %3718 = vrot.lane.b32.xlu0 %v3713, 124
        %v3719 = vpop.permute.xlu0 %3718
        %v3722 = vadd.f32 %v3708, %v3717
        %v3723 = vadd.f32 %v3709, %v3719
        %s3724 = sld [smem:[#allocation7 + $0xba]]
        %v3725 = vstv %s3724
        %v3726 = vadd.f32 %v3725, 0.0
        %s3727 = sld [smem:[#allocation7 + $0xb7]]
        %v3728 = vstv %s3727
        %v3729 = vmul.f32 %v3728, %v3344
        %v3730 = vmul.f32 %v3728, %v3345
        %v3731 = vadd.f32 %v3726, %v3729
        %v3732 = vadd.f32 %v3726, %v3730
        %s3733 = sld [smem:[#allocation7 + $0xb8]]
        %v3734 = vstv %s3733
        %v3735 = vmul.f32 %v3734, %v3533
        %v3736 = vmul.f32 %v3734, %v3534
        %v3737 = vadd.f32 %v3731, %v3735
        %v3738 = vadd.f32 %v3732, %v3736
        %s3739 = sld [smem:[#allocation7 + $0xb9]]
        %v3740 = vstv %s3739
        %v3741 = vmul.f32 %v3740, %v3722
        %v3742 = vmul.f32 %v3740, %v3723
        %v3743 = vadd.f32 %v3737, %v3741
        %v3744 = vadd.f32 %v3738, %v3742
        %s3745 = scalar_lea.vmem %s177, 144
        %3746 = vst.msk [vmem:[%s3745] sm:$0xff] %vm216, %v3743
        %3747 = vst.msk [vmem:[%s3745 + $0x8] sm:$0xff] %vm216, %v3744
        %p3748 = scmp.lt.s32.totalorder %s17, 1
        %s3749 = scalar_select %p3748, %s17, 1
        %s3750 = smul.addr %s3749, 20
        %s3751 = smul.addr %s3750, 8
        %s3752 = scalar_lea.vmem %s2, %s3751
        // Predicated region
        $region37: #{textnet_apply.1} parent=27 // pred_check
          %p3753 = pneg %p82
        $region38: #{textnet_apply.1} parent=27 // pred_check_branch
          %3755 = sbr.rel (%p3753) target = $region40
        $region39: #{textnet_apply.1} parent=27 // pred_region
          _
        $region40: #{textnet_apply.1} parent=27 // pred_fallthru
          _
      $region28: #{textnet_apply.1} parent=5 // pred_fallthru
        _
      %p3756 = scmp.le.s32.totalorder 2, %s12
      // Predicated region
      $region41: #{textnet_apply.1} parent=5 // pred_check
        %p3757 = pneg %p3756
      $region42: #{textnet_apply.1} parent=5 // pred_check_branch
        %3759 = sbr.rel (%p3757) target = $region44
      $region43: #{textnet_apply.1} parent=5 // pred_region
        %s3760 = ssub.s32 %s12, 2
        // Predicated region
        $region45: #{textnet_apply.1} parent=43 // pred_check
          %p3761 = pneg %p88
        $region46: #{textnet_apply.1} parent=43 // pred_check_branch
          %3763 = sbr.rel (%p3761) target = $region48
        $region47: #{textnet_apply.1} parent=43 // pred_region
          %p3764 = scmp.lt.s32.totalorder %s18, 1
          %s3765 = scalar_select %p3764, %s18, 1
          %s3766 = smul.addr %s3765, 20
          %s3767 = smul.addr %s3766, 8
          %s3768 = scalar_lea.vmem %s2, %s3767
        $region48: #{textnet_apply.1} parent=43 // pred_fallthru
          _
      $region44: #{textnet_apply.1} parent=5 // pred_fallthru
        _
    $region6: #{textnet_apply.1} parent=1 // loop_footer
      %s16 = sadd.s32 1, %s12
    $region7: #{textnet_apply.1} parent=1 // loop_footer_branch
      %11 = sbr.rel target = $region3
    $region8: #{textnet_apply.1} parent=1 // loop_exit
      _
    %3769 = vsyncpa [#allocation5], 1
    %s3770 = scalar_lea.sflag [#allocation5], 1
    %3771 = vsyncpa %s3770, 1
    %3772 = vsyncpa [#allocation6], 1
    %s3773 = scalar_lea.sflag [#allocation6], 1
    %3774 = vsyncpa %s3773, 1

</llo_original>
